<compile_context>
chip_gen: v6e
topology: v6e:2x2x1
jax: 0.10.0
libtpu: 0.0.40
codegen_flags: <defaults>
</compile_context>

<pallas_src>
import functools
import math

import jax
import jax.numpy as jnp
from jax import lax
from jax.experimental import pallas as pl
from jax.experimental.pallas import tpu as pltpu

_EPS = 1e-5


def _round_up(x, m):
    return ((x + m - 1) // m) * m


# ----------------------------------------------------------------------------
# In-kernel helpers
# ----------------------------------------------------------------------------
def _fill_scratch(scr_ref, values, P, Rg):
    """Zero the halo scratch and place `values` ((Rg, C)) at row offset P."""
    scr_ref[...] = jnp.zeros(scr_ref.shape, scr_ref.dtype)
    scr_ref[pl.ds(P, Rg), :] = values


def _conv3x3_from_scratch(scr_ref, w_ref, P, Rg, Wp):
    """3x3 / stride-1 conv over the flattened padded grid held in `scr_ref`.

    scr_ref : VMEM (Rg + 2P, Cin); rows [P, P+Rg) hold the zero-bordered
              activation, halo rows are zero.
    w_ref   : (9, Cin, Cout) tap weights, row-major over (kh, kw).
    Returns : (Rg, Cout) f32 conv value at every padded-grid position
              (only interior positions are meaningful).
    """
    acc = None
    t = 0
    for dh in (-1, 0, 1):
        for dw in (-1, 0, 1):
            delta = dh * Wp + dw
            a = scr_ref[pl.ds(P + delta, Rg), :]          # shifted window
            c = jnp.dot(a, w_ref[t], preferred_element_type=jnp.float32)
            acc = c if acc is None else acc + c
            t += 1
    return acc


# ----------------------------------------------------------------------------
# Kernels
# ----------------------------------------------------------------------------
def _fused_block_body(x_ref, mask_ref, s1_ref, b1_ref, w1_ref,
                      s2_ref, b2_ref, w2_ref, wsc_ref,
                      out_ref, h_scr, h2_scr, *, Wp, P, Rg):
    """Whole BasicBlock (stride == 1) for one image, fully VMEM resident."""
    x = x_ref[...]                                        # (Rg, Cin)
    m = mask_ref[...]                                     # (Rg, 1)
    # BN1 + ReLU prologue; re-zero the padding border afterwards.
    h = jnp.maximum(x * s1_ref[...] + b1_ref[...], 0.0) * m
    _fill_scratch(h_scr, h, P, Rg)
    # conv1: 9 shifted MXU matmuls accumulated in f32.
    acc1 = _conv3x3_from_scratch(h_scr, w1_ref, P, Rg, Wp)
    # Shortcut: identity (equalInOut) or fused 1x1 conv on relu(bn1(x)).
    if wsc_ref is None:
        shortcut = x
    else:
        shortcut = jnp.dot(h, wsc_ref[...], preferred_element_type=jnp.float32)
    # BN2 + ReLU epilogue of conv1 (dropRate == 0.0 -> dropout is identity).
    h2 = jnp.maximum(acc1 * s2_ref[...] + b2_ref[...], 0.0) * m
    _fill_scratch(h2_scr, h2, P, Rg)
    # conv2 + residual-add epilogue.
    acc2 = _conv3x3_from_scratch(h2_scr, w2_ref, P, Rg, Wp)
    out_ref[...] = (shortcut + acc2).astype(out_ref.dtype)


def _fused_block_kernel_eq(x_ref, mask_ref, s1, b1, w1, s2, b2, w2,
                           out_ref, h_scr, h2_scr, *, Wp, P, Rg):
    _fused_block_body(x_ref, mask_ref, s1, b1, w1, s2, b2, w2, None,
                      out_ref, h_scr, h2_scr, Wp=Wp, P=P, Rg=Rg)


def _fused_block_kernel_sc(x_ref, mask_ref, s1, b1, w1, s2, b2, w2, wsc,
                           out_ref, h_scr, h2_scr, *, Wp, P, Rg):
    _fused_block_body(x_ref, mask_ref, s1, b1, w1, s2, b2, w2, wsc,
                      out_ref, h_scr, h2_scr, Wp=Wp, P=P, Rg=Rg)


def _front_kernel(x_ref, mask_ref, s1, b1, w1, s2, b2, wsc,
                  h2_ref, sc_ref, h_scr, *, Wp, P, Rg):
    """stride>1 path, part 1: bn1+relu -> dense conv1 -> bn2+relu, + 1x1
    shortcut on relu(bn1(x)).  The caller subsamples both outputs."""
    x = x_ref[...]
    m = mask_ref[...]
    h = jnp.maximum(x * s1[...] + b1[...], 0.0) * m
    _fill_scratch(h_scr, h, P, Rg)
    acc1 = _conv3x3_from_scratch(h_scr, w1, P, Rg, Wp)
    h2_ref[...] = jnp.maximum(acc1 * s2[...] + b2[...], 0.0).astype(h2_ref.dtype)
    sc_ref[...] = jnp.dot(h, wsc[...],
                          preferred_element_type=jnp.float32).astype(sc_ref.dtype)


def _back_kernel(h2_ref, sc_ref, w2_ref, out_ref, scr, *, Wp, P, Rg):
    """stride>1 path, part 2: conv2 (3x3, stride 1) + residual-add epilogue."""
    _fill_scratch(scr, h2_ref[...], P, Rg)
    acc2 = _conv3x3_from_scratch(scr, w2_ref, P, Rg, Wp)
    out_ref[...] = (sc_ref[...] + acc2).astype(out_ref.dtype)


# ----------------------------------------------------------------------------
# pallas_call wrappers / layout glue
# ----------------------------------------------------------------------------
def _full_spec(shape):
    nd = len(shape)
    return pl.BlockSpec(shape, lambda *_: (0,) * nd)


def _batched_spec(rows, ch):
    return pl.BlockSpec((None, rows, ch), lambda b: (b, 0, 0))


def _border_mask(H, W):
    Hp, Wp = H + 2, W + 2
    ii = jnp.arange(Hp)[:, None]
    jj = jnp.arange(Wp)[None, :]
    valid = (ii >= 1) & (ii <= H) & (jj >= 1) & (jj <= W)
    return valid.astype(jnp.float32).reshape(Hp * Wp, 1)


def _pad_and_flatten(x_nhwc):
    b, h, w, c = x_nhwc.shape
    xp = jnp.pad(x_nhwc, ((0, 0), (1, 1), (1, 1), (0, 0)))
    return xp.reshape(b, (h + 2) * (w + 2), c)


def basic_block_forward(x_nchw, params, *, stride):
    """BasicBlock forward.  x_nchw: (B, Cin, H, W) float32 (PyTorch layout)."""
    equal = "wsc" not in params                   # equalInOut  <=>  Cin == Cout
    if stride != 1 and equal:
        raise ValueError("stride > 1 requires the convShortcut path")

    x = jnp.transpose(x_nchw, (0, 2, 3, 1)).astype(jnp.float32)   # -> NHWC
    B, H, W, Cin = x.shape
    Cout = params["w1"].shape[-1]
    Hp, Wp = H + 2, W + 2
    Rg = Hp * Wp                                  # rows per padded image grid
    P = _round_up(Wp + 1, 8)                      # halo rows (sublane aligned)
    Rx = Rg + 2 * P

    x3 = _pad_and_flatten(x)                      # (B, Rg, Cin)
    mask = _border_mask(H, W)                     # (Rg, 1)
    w1 = params["w1"].reshape(9, Cin, Cout)
    w2 = params["w2"].reshape(9, Cout, Cout)
    s1, b1 = params["bn1_scale"], params["bn1_bias"]
    s2, b2 = params["bn2_scale"], params["bn2_bias"]

    common_specs = [
        _batched_spec(Rg, Cin),                                   # x
        _full_spec((Rg, 1)),                                      # border mask
        _full_spec((1, Cin)), _full_spec((1, Cin)),               # bn1
        _full_spec((9, Cin, Cout)),                               # w1
        _full_spec((1, Cout)), _full_spec((1, Cout)),             # bn2
    ]
    cparams = pltpu.CompilerParams(dimension_semantics=("parallel",))

    if stride == 1:
        # Whole residual block in a single pallas_call.
        if equal:
            kernel = functools.partial(_fused_block_kernel_eq, Wp=Wp, P=P, Rg=Rg)
            in_specs = common_specs + [_full_spec((9, Cout, Cout))]
            args = (x3, mask, s1, b1, w1, s2, b2, w2)
        else:
            kernel = functools.partial(_fused_block_kernel_sc, Wp=Wp, P=P, Rg=Rg)
            in_specs = common_specs + [_full_spec((9, Cout, Cout)),
                                       _full_spec((Cin, Cout))]
            args = (x3, mask, s1, b1, w1, s2, b2, w2, params["wsc"])
        out3 = pl.pallas_call(
            kernel,
            out_shape=jax.ShapeDtypeStruct((B, Rg, Cout), jnp.float32),
            grid=(B,),
            in_specs=in_specs,
            out_specs=_batched_spec(Rg, Cout),
            scratch_shapes=[pltpu.VMEM((Rx, Cin), jnp.float32),
                            pltpu.VMEM((Rx, Cout), jnp.float32)],
            compiler_params=cparams,
        )(*args)
        out = out3.reshape(B, Hp, Wp, Cout)[:, 1:1 + H, 1:1 + W, :]
    else:
        # Part 1: bn1+relu + dense conv1 + bn2+relu + 1x1 shortcut, fused.
        front = functools.partial(_front_kernel, Wp=Wp, P=P, Rg=Rg)
        h2_full, sc_full = pl.pallas_call(
            front,
            out_shape=(jax.ShapeDtypeStruct((B, Rg, Cout), jnp.float32),
                       jax.ShapeDtypeStruct((B, Rg, Cout), jnp.float32)),
            grid=(B,),
            in_specs=common_specs + [_full_spec((Cin, Cout))],
            out_specs=(_batched_spec(Rg, Cout), _batched_spec(Rg, Cout)),
            scratch_shapes=[pltpu.VMEM((Rx, Cin), jnp.float32)],
            compiler_params=cparams,
        )(x3, mask, s1, b1, w1, s2, b2, params["wsc"])

        # Tiny XLA glue: pick the strided output positions and re-pad by 1.
        h2 = h2_full.reshape(B, Hp, Wp, Cout)[:, 1:1 + H:stride, 1:1 + W:stride, :]
        sc = sc_full.reshape(B, Hp, Wp, Cout)[:, 1:1 + H:stride, 1:1 + W:stride, :]
        Ho, Wo = h2.shape[1], h2.shape[2]
        Wp2 = Wo + 2
        Rg2 = (Ho + 2) * Wp2
        P2 = _round_up(Wp2 + 1, 8)
        Rx2 = Rg2 + 2 * P2
        h2p = _pad_and_flatten(h2)                # zero border; values >= 0
        scp = _pad_and_flatten(sc)

        # Part 2: conv2 + residual add, fused.
        back = functools.partial(_back_kernel, Wp=Wp2, P=P2, Rg=Rg2)
        out3 = pl.pallas_call(
            back,
            out_shape=jax.ShapeDtypeStruct((B, Rg2, Cout), jnp.float32),
            grid=(B,),
            in_specs=[_batched_spec(Rg2, Cout), _batched_spec(Rg2, Cout),
                      _full_spec((9, Cout, Cout))],
            out_specs=_batched_spec(Rg2, Cout),
            scratch_shapes=[pltpu.VMEM((Rx2, Cout), jnp.float32)],
            compiler_params=cparams,
        )(h2p, scp, w2)
        out = out3.reshape(B, Ho + 2, Wo + 2, Cout)[:, 1:1 + Ho, 1:1 + Wo, :]

    return jnp.transpose(out, (0, 3, 1, 2))       # back to NCHW


# ----------------------------------------------------------------------------
# Parameters (deterministic; mirrors the PyTorch module, eval-mode BN)
# ----------------------------------------------------------------------------
def init_block_params(key, in_planes, out_planes):
    ks = jax.random.split(key, 8)
    n = 3 * 3 * out_planes
    p = {
        "w1": jax.random.normal(ks[0], (3, 3, in_planes, out_planes),
                                jnp.float32) * math.sqrt(2.0 / n),
        "w2": jax.random.normal(ks[1], (3, 3, out_planes, out_planes),
                                jnp.float32) * math.sqrt(2.0 / n),
    }
    if in_planes != out_planes:
        p["wsc"] = jax.random.normal(ks[2], (in_planes, out_planes),
                                     jnp.float32) * math.sqrt(2.0 / out_planes)

    def bn(k, c):
        k1, k2, k3, k4 = jax.random.split(k, 4)
        gamma = 1.0 + 0.1 * jax.random.normal(k1, (c,), jnp.float32)
        beta = 0.1 * jax.random.normal(k2, (c,), jnp.float32)
        mean = 0.1 * jax.random.normal(k3, (c,), jnp.float32)
        var = jax.random.uniform(k4, (c,), jnp.float32, 0.5, 1.5)
        scale = gamma / jnp.sqrt(var + _EPS)       # eval-mode BN folded
        bias = beta - mean * scale
        return scale.reshape(1, c), bias.reshape(1, c)

    p["bn1_scale"], p["bn1_bias"] = bn(ks[3], in_planes)
    p["bn2_scale"], p["bn2_bias"] = bn(ks[4], out_planes)
    return p


# ----------------------------------------------------------------------------
# Pure-JAX reference (for correctness checking only)
# ----------------------------------------------------------------------------
def reference_block(x_nchw, params, *, stride):
    equal = "wsc" not in params
    x = jnp.transpose(x_nchw, (0, 2, 3, 1)).astype(jnp.float32)
    dn = ("NHWC", "HWIO", "NHWC")
    s1 = params["bn1_scale"].reshape(1, 1, 1, -1)
    b1 = params["bn1_bias"].reshape(1, 1, 1, -1)
    s2 = params["bn2_scale"].reshape(1, 1, 1, -1)
    b2 = params["bn2_bias"].reshape(1, 1, 1, -1)

    h = jnp.maximum(x * s1 + b1, 0.0)
    out = lax.conv_general_dilated(h, params["w1"], (stride, stride),
                                   ((1, 1), (1, 1)), dimension_numbers=dn)
    out = jnp.maximum(out * s2 + b2, 0.0)
    out = lax.conv_general_dilated(out, params["w2"], (1, 1),
                                   ((1, 1), (1, 1)), dimension_numbers=dn)
    if equal:
        res = x + out
    else:
        cin, cout = params["wsc"].shape
        wsc = params["wsc"].reshape(1, 1, cin, cout)
        sc = lax.conv_general_dilated(h, wsc, (stride, stride),
                                      ((0, 0), (0, 0)), dimension_numbers=dn)
        res = sc + out
    return jnp.transpose(res, (0, 3, 1, 2))


# ----------------------------------------------------------------------------
# Main
# ----------------------------------------------------------------------------
def _run_case(x, params, stride, expect_shape):
    fwd = jax.jit(functools.partial(basic_block_forward, stride=stride))
    out = fwd(x, params)
    jax.block_until_ready(out)
    ref = jax.jit(functools.partial(reference_block, stride=stride))(x, params)
    assert out.shape == expect_shape, (out.shape, expect_shape)
    err = float(jnp.max(jnp.abs(out - ref)))
    assert err < 5e-2, f"max abs err {err}"
    return out


if __name__ == "__main__":
    key = jax.random.PRNGKey(0)
    kx, ka, kb, kc = jax.random.split(key, 4)
    # NCHW input, matching the PyTorch module convention.
    x = jax.random.normal(kx, (2, 4, 16, 16), jnp.float32)

    # (a) equalInOut: in=out=4, stride=1  -> whole block is ONE pallas_call.
    _run_case(x, init_block_params(ka, 4, 4), 1, (2, 4, 16, 16))
    # (b) convShortcut: in=4 -> out=8, stride=2 -> two fused pallas_calls.
    _run_case(x, init_block_params(kb, 4, 8), 2, (2, 8, 8, 8))
    # (c) convShortcut, stride=1: in=4 -> out=8 -> ONE pallas_call incl. 1x1.
    _run_case(x, init_block_params(kc, 4, 8), 1, (2, 8, 16, 16))

    print("KERNEL_OK")
</pallas_src>

<mosaic_0001>
module attributes {stable_mosaic.version = 11 : i64} {
  func.func @_fused_block_kernel_eq(%arg0: i32, %arg1: memref<1x324x4xf32, #tpu.memory_space<vmem>>, %arg2: memref<324x1xf32, #tpu.memory_space<vmem>>, %arg3: memref<1x4xf32, #tpu.memory_space<vmem>>, %arg4: memref<1x4xf32, #tpu.memory_space<vmem>>, %arg5: memref<9x4x4xf32, #tpu.memory_space<vmem>>, %arg6: memref<1x4xf32, #tpu.memory_space<vmem>>, %arg7: memref<1x4xf32, #tpu.memory_space<vmem>>, %arg8: memref<9x4x4xf32, #tpu.memory_space<vmem>>, %arg9: memref<1x324x4xf32, #tpu.memory_space<vmem>>, %arg10: memref<372x4xf32, #tpu.memory_space<vmem>>, %arg11: memref<372x4xf32, #tpu.memory_space<vmem>>) attributes {dimension_semantics = [#tpu.dimension_semantics<parallel>], iteration_bounds = array<i64: 2>, scalar_prefetch = 0 : i64, scratch_operands = 2 : i64, tpu.core_type = #tpu.core_type<tc>, window_params = [{transform_indices = @transform_0, window_bounds = array<i64: 1, 324, 4>}, {pipeline_mode = #tpu.pipeline_mode<synchronous>, transform_indices = @transform_1, window_bounds = array<i64: 324, 1>}, {pipeline_mode = #tpu.pipeline_mode<synchronous>, transform_indices = @transform_2, window_bounds = array<i64: 1, 4>}, {pipeline_mode = #tpu.pipeline_mode<synchronous>, transform_indices = @transform_3, window_bounds = array<i64: 1, 4>}, {pipeline_mode = #tpu.pipeline_mode<synchronous>, transform_indices = @transform_4, window_bounds = array<i64: 9, 4, 4>}, {pipeline_mode = #tpu.pipeline_mode<synchronous>, transform_indices = @transform_5, window_bounds = array<i64: 1, 4>}, {pipeline_mode = #tpu.pipeline_mode<synchronous>, transform_indices = @transform_6, window_bounds = array<i64: 1, 4>}, {pipeline_mode = #tpu.pipeline_mode<synchronous>, transform_indices = @transform_7, window_bounds = array<i64: 9, 4, 4>}, {transform_indices = @transform_8, window_bounds = array<i64: 1, 324, 4>}]} {
    %c0 = arith.constant 0 : index
    %c0_0 = arith.constant 0 : index
    %c0_1 = arith.constant 0 : index
    %0 = vector.load %arg1[%c0, %c0_0, %c0_1] : memref<1x324x4xf32, #tpu.memory_space<vmem>>, vector<1x324x4xf32>
    %1 = vector.shape_cast %0 : vector<1x324x4xf32> to vector<324x4xf32>
    %c0_2 = arith.constant 0 : index
    %c0_3 = arith.constant 0 : index
    %2 = vector.load %arg2[%c0_2, %c0_3] : memref<324x1xf32, #tpu.memory_space<vmem>>, vector<324x1xf32>
    %c0_4 = arith.constant 0 : index
    %c0_5 = arith.constant 0 : index
    %3 = vector.load %arg3[%c0_4, %c0_5] : memref<1x4xf32, #tpu.memory_space<vmem>>, vector<1x4xf32>
    %4 = vector.broadcast %3 : vector<1x4xf32> to vector<324x4xf32>
    %5 = arith.mulf %1, %4 : vector<324x4xf32>
    %c0_6 = arith.constant 0 : index
    %c0_7 = arith.constant 0 : index
    %6 = vector.load %arg4[%c0_6, %c0_7] : memref<1x4xf32, #tpu.memory_space<vmem>>, vector<1x4xf32>
    %7 = vector.broadcast %6 : vector<1x4xf32> to vector<324x4xf32>
    %8 = arith.addf %5, %7 : vector<324x4xf32>
    %cst = arith.constant 0.000000e+00 : f32
    %9 = vector.broadcast %cst : f32 to vector<324x4xf32>
    %10 = arith.maximumf %8, %9 : vector<324x4xf32>
    %11 = vector.broadcast %2 : vector<324x1xf32> to vector<324x4xf32>
    %12 = arith.mulf %10, %11 : vector<324x4xf32>
    %cst_8 = arith.constant 0.000000e+00 : f32
    %13 = vector.broadcast %cst_8 : f32 to vector<372x4xf32>
    %c0_9 = arith.constant 0 : index
    %c0_10 = arith.constant 0 : index
    %14 = vector.load %arg10[%c0_9, %c0_10] : memref<372x4xf32, #tpu.memory_space<vmem>>, vector<372x4xf32>
    tpu.vector_store %arg10[%c0_9, %c0_10], %13 {strides = array<i32>} : memref<372x4xf32, #tpu.memory_space<vmem>>, vector<372x4xf32>,
    %c24 = arith.constant 24 : index
    %c0_11 = arith.constant 0 : index
    %15 = vector.load %arg10[%c24, %c0_11] : memref<372x4xf32, #tpu.memory_space<vmem>>, vector<324x4xf32>
    tpu.vector_store %arg10[%c24, %c0_11], %12 {strides = array<i32>} : memref<372x4xf32, #tpu.memory_space<vmem>>, vector<324x4xf32>,
    %c5 = arith.constant 5 : index
    %c0_12 = arith.constant 0 : index
    %16 = vector.load %arg10[%c5, %c0_12] : memref<372x4xf32, #tpu.memory_space<vmem>>, vector<324x4xf32>
    %c0_13 = arith.constant 0 : index
    %c0_14 = arith.constant 0 : index
    %c0_15 = arith.constant 0 : index
    %17 = vector.load %arg5[%c0_13, %c0_14, %c0_15] : memref<9x4x4xf32, #tpu.memory_space<vmem>>, vector<1x4x4xf32>
    %18 = vector.shape_cast %17 : vector<1x4x4xf32> to vector<4x4xf32>
    %cst_16 = arith.constant dense<0.000000e+00> : vector<324x4xf32>
    %19 = tpu.matmul %16, %18, %cst_16 {dimension_numbers = #tpu.dot_dimension_numbers<[1], [0], [0], [1], [0, 0, 1, 1], [], []>} : vector<324x4xf32>, vector<4x4xf32>, vector<324x4xf32> -> vector<324x4xf32>
    %c6 = arith.constant 6 : index
    %c0_17 = arith.constant 0 : index
    %20 = vector.load %arg10[%c6, %c0_17] : memref<372x4xf32, #tpu.memory_space<vmem>>, vector<324x4xf32>
    %c1 = arith.constant 1 : index
    %c0_18 = arith.constant 0 : index
    %c0_19 = arith.constant 0 : index
    %21 = vector.load %arg5[%c1, %c0_18, %c0_19] : memref<9x4x4xf32, #tpu.memory_space<vmem>>, vector<1x4x4xf32>
    %22 = vector.shape_cast %21 : vector<1x4x4xf32> to vector<4x4xf32>
    %cst_20 = arith.constant dense<0.000000e+00> : vector<324x4xf32>
    %23 = tpu.matmul %20, %22, %cst_20 {dimension_numbers = #tpu.dot_dimension_numbers<[1], [0], [0], [1], [0, 0, 1, 1], [], []>} : vector<324x4xf32>, vector<4x4xf32>, vector<324x4xf32> -> vector<324x4xf32>
    %24 = arith.addf %19, %23 : vector<324x4xf32>
    %c7 = arith.constant 7 : index
    %c0_21 = arith.constant 0 : index
    %25 = vector.load %arg10[%c7, %c0_21] : memref<372x4xf32, #tpu.memory_space<vmem>>, vector<324x4xf32>
    %c2 = arith.constant 2 : index
    %c0_22 = arith.constant 0 : index
    %c0_23 = arith.constant 0 : index
    %26 = vector.load %arg5[%c2, %c0_22, %c0_23] : memref<9x4x4xf32, #tpu.memory_space<vmem>>, vector<1x4x4xf32>
    %27 = vector.shape_cast %26 : vector<1x4x4xf32> to vector<4x4xf32>
    %cst_24 = arith.constant dense<0.000000e+00> : vector<324x4xf32>
    %28 = tpu.matmul %25, %27, %cst_24 {dimension_numbers = #tpu.dot_dimension_numbers<[1], [0], [0], [1], [0, 0, 1, 1], [], []>} : vector<324x4xf32>, vector<4x4xf32>, vector<324x4xf32> -> vector<324x4xf32>
    %29 = arith.addf %24, %28 : vector<324x4xf32>
    %c23 = arith.constant 23 : index
    %c0_25 = arith.constant 0 : index
    %30 = vector.load %arg10[%c23, %c0_25] : memref<372x4xf32, #tpu.memory_space<vmem>>, vector<324x4xf32>
    %c3 = arith.constant 3 : index
    %c0_26 = arith.constant 0 : index
    %c0_27 = arith.constant 0 : index
    %31 = vector.load %arg5[%c3, %c0_26, %c0_27] : memref<9x4x4xf32, #tpu.memory_space<vmem>>, vector<1x4x4xf32>
    %32 = vector.shape_cast %31 : vector<1x4x4xf32> to vector<4x4xf32>
    %cst_28 = arith.constant dense<0.000000e+00> : vector<324x4xf32>
    %33 = tpu.matmul %30, %32, %cst_28 {dimension_numbers = #tpu.dot_dimension_numbers<[1], [0], [0], [1], [0, 0, 1, 1], [], []>} : vector<324x4xf32>, vector<4x4xf32>, vector<324x4xf32> -> vector<324x4xf32>
    %34 = arith.addf %29, %33 : vector<324x4xf32>
    %c24_29 = arith.constant 24 : index
    %c0_30 = arith.constant 0 : index
    %35 = vector.load %arg10[%c24_29, %c0_30] : memref<372x4xf32, #tpu.memory_space<vmem>>, vector<324x4xf32>
    %c4 = arith.constant 4 : index
    %c0_31 = arith.constant 0 : index
    %c0_32 = arith.constant 0 : index
    %36 = vector.load %arg5[%c4, %c0_31, %c0_32] : memref<9x4x4xf32, #tpu.memory_space<vmem>>, vector<1x4x4xf32>
    %37 = vector.shape_cast %36 : vector<1x4x4xf32> to vector<4x4xf32>
    %cst_33 = arith.constant dense<0.000000e+00> : vector<324x4xf32>
    %38 = tpu.matmul %35, %37, %cst_33 {dimension_numbers = #tpu.dot_dimension_numbers<[1], [0], [0], [1], [0, 0, 1, 1], [], []>} : vector<324x4xf32>, vector<4x4xf32>, vector<324x4xf32> -> vector<324x4xf32>
    %39 = arith.addf %34, %38 : vector<324x4xf32>
    %c25 = arith.constant 25 : index
    %c0_34 = arith.constant 0 : index
    %40 = vector.load %arg10[%c25, %c0_34] : memref<372x4xf32, #tpu.memory_space<vmem>>, vector<324x4xf32>
    %c5_35 = arith.constant 5 : index
    %c0_36 = arith.constant 0 : index
    %c0_37 = arith.constant 0 : index
    %41 = vector.load %arg5[%c5_35, %c0_36, %c0_37] : memref<9x4x4xf32, #tpu.memory_space<vmem>>, vector<1x4x4xf32>
    %42 = vector.shape_cast %41 : vector<1x4x4xf32> to vector<4x4xf32>
    %cst_38 = arith.constant dense<0.000000e+00> : vector<324x4xf32>
    %43 = tpu.matmul %40, %42, %cst_38 {dimension_numbers = #tpu.dot_dimension_numbers<[1], [0], [0], [1], [0, 0, 1, 1], [], []>} : vector<324x4xf32>, vector<4x4xf32>, vector<324x4xf32> -> vector<324x4xf32>
    %44 = arith.addf %39, %43 : vector<324x4xf32>
    %c41 = arith.constant 41 : index
    %c0_39 = arith.constant 0 : index
    %45 = vector.load %arg10[%c41, %c0_39] : memref<372x4xf32, #tpu.memory_space<vmem>>, vector<324x4xf32>
    %c6_40 = arith.constant 6 : index
    %c0_41 = arith.constant 0 : index
    %c0_42 = arith.constant 0 : index
    %46 = vector.load %arg5[%c6_40, %c0_41, %c0_42] : memref<9x4x4xf32, #tpu.memory_space<vmem>>, vector<1x4x4xf32>
    %47 = vector.shape_cast %46 : vector<1x4x4xf32> to vector<4x4xf32>
    %cst_43 = arith.constant dense<0.000000e+00> : vector<324x4xf32>
    %48 = tpu.matmul %45, %47, %cst_43 {dimension_numbers = #tpu.dot_dimension_numbers<[1], [0], [0], [1], [0, 0, 1, 1], [], []>} : vector<324x4xf32>, vector<4x4xf32>, vector<324x4xf32> -> vector<324x4xf32>
    %49 = arith.addf %44, %48 : vector<324x4xf32>
    %c42 = arith.constant 42 : index
    %c0_44 = arith.constant 0 : index
    %50 = vector.load %arg10[%c42, %c0_44] : memref<372x4xf32, #tpu.memory_space<vmem>>, vector<324x4xf32>
    %c7_45 = arith.constant 7 : index
    %c0_46 = arith.constant 0 : index
    %c0_47 = arith.constant 0 : index
    %51 = vector.load %arg5[%c7_45, %c0_46, %c0_47] : memref<9x4x4xf32, #tpu.memory_space<vmem>>, vector<1x4x4xf32>
    %52 = vector.shape_cast %51 : vector<1x4x4xf32> to vector<4x4xf32>
    %cst_48 = arith.constant dense<0.000000e+00> : vector<324x4xf32>
    %53 = tpu.matmul %50, %52, %cst_48 {dimension_numbers = #tpu.dot_dimension_numbers<[1], [0], [0], [1], [0, 0, 1, 1], [], []>} : vector<324x4xf32>, vector<4x4xf32>, vector<324x4xf32> -> vector<324x4xf32>
    %54 = arith.addf %49, %53 : vector<324x4xf32>
    %c43 = arith.constant 43 : index
    %c0_49 = arith.constant 0 : index
    %55 = vector.load %arg10[%c43, %c0_49] : memref<372x4xf32, #tpu.memory_space<vmem>>, vector<324x4xf32>
    %c8 = arith.constant 8 : index
    %c0_50 = arith.constant 0 : index
    %c0_51 = arith.constant 0 : index
    %56 = vector.load %arg5[%c8, %c0_50, %c0_51] : memref<9x4x4xf32, #tpu.memory_space<vmem>>, vector<1x4x4xf32>
    %57 = vector.shape_cast %56 : vector<1x4x4xf32> to vector<4x4xf32>
    %cst_52 = arith.constant dense<0.000000e+00> : vector<324x4xf32>
    %58 = tpu.matmul %55, %57, %cst_52 {dimension_numbers = #tpu.dot_dimension_numbers<[1], [0], [0], [1], [0, 0, 1, 1], [], []>} : vector<324x4xf32>, vector<4x4xf32>, vector<324x4xf32> -> vector<324x4xf32>
    %59 = arith.addf %54, %58 : vector<324x4xf32>
    %c0_53 = arith.constant 0 : index
    %c0_54 = arith.constant 0 : index
    %60 = vector.load %arg6[%c0_53, %c0_54] : memref<1x4xf32, #tpu.memory_space<vmem>>, vector<1x4xf32>
    %61 = vector.broadcast %60 : vector<1x4xf32> to vector<324x4xf32>
    %62 = arith.mulf %59, %61 : vector<324x4xf32>
    %c0_55 = arith.constant 0 : index
    %c0_56 = arith.constant 0 : index
    %63 = vector.load %arg7[%c0_55, %c0_56] : memref<1x4xf32, #tpu.memory_space<vmem>>, vector<1x4xf32>
    %64 = vector.broadcast %63 : vector<1x4xf32> to vector<324x4xf32>
    %65 = arith.addf %62, %64 : vector<324x4xf32>
    %cst_57 = arith.constant 0.000000e+00 : f32
    %66 = vector.broadcast %cst_57 : f32 to vector<324x4xf32>
    %67 = arith.maximumf %65, %66 : vector<324x4xf32>
    %68 = vector.broadcast %2 : vector<324x1xf32> to vector<324x4xf32>
    %69 = arith.mulf %67, %68 : vector<324x4xf32>
    %cst_58 = arith.constant 0.000000e+00 : f32
    %70 = vector.broadcast %cst_58 : f32 to vector<372x4xf32>
    %c0_59 = arith.constant 0 : index
    %c0_60 = arith.constant 0 : index
    %71 = vector.load %arg11[%c0_59, %c0_60] : memref<372x4xf32, #tpu.memory_space<vmem>>, vector<372x4xf32>
    tpu.vector_store %arg11[%c0_59, %c0_60], %70 {strides = array<i32>} : memref<372x4xf32, #tpu.memory_space<vmem>>, vector<372x4xf32>,
    %c24_61 = arith.constant 24 : index
    %c0_62 = arith.constant 0 : index
    %72 = vector.load %arg11[%c24_61, %c0_62] : memref<372x4xf32, #tpu.memory_space<vmem>>, vector<324x4xf32>
    tpu.vector_store %arg11[%c24_61, %c0_62], %69 {strides = array<i32>} : memref<372x4xf32, #tpu.memory_space<vmem>>, vector<324x4xf32>,
    %c5_63 = arith.constant 5 : index
    %c0_64 = arith.constant 0 : index
    %73 = vector.load %arg11[%c5_63, %c0_64] : memref<372x4xf32, #tpu.memory_space<vmem>>, vector<324x4xf32>
    %c0_65 = arith.constant 0 : index
    %c0_66 = arith.constant 0 : index
    %c0_67 = arith.constant 0 : index
    %74 = vector.load %arg8[%c0_65, %c0_66, %c0_67] : memref<9x4x4xf32, #tpu.memory_space<vmem>>, vector<1x4x4xf32>
    %75 = vector.shape_cast %74 : vector<1x4x4xf32> to vector<4x4xf32>
    %cst_68 = arith.constant dense<0.000000e+00> : vector<324x4xf32>
    %76 = tpu.matmul %73, %75, %cst_68 {dimension_numbers = #tpu.dot_dimension_numbers<[1], [0], [0], [1], [0, 0, 1, 1], [], []>} : vector<324x4xf32>, vector<4x4xf32>, vector<324x4xf32> -> vector<324x4xf32>
    %c6_69 = arith.constant 6 : index
    %c0_70 = arith.constant 0 : index
    %77 = vector.load %arg11[%c6_69, %c0_70] : memref<372x4xf32, #tpu.memory_space<vmem>>, vector<324x4xf32>
    %c1_71 = arith.constant 1 : index
    %c0_72 = arith.constant 0 : index
    %c0_73 = arith.constant 0 : index
    %78 = vector.load %arg8[%c1_71, %c0_72, %c0_73] : memref<9x4x4xf32, #tpu.memory_space<vmem>>, vector<1x4x4xf32>
    %79 = vector.shape_cast %78 : vector<1x4x4xf32> to vector<4x4xf32>
    %cst_74 = arith.constant dense<0.000000e+00> : vector<324x4xf32>
    %80 = tpu.matmul %77, %79, %cst_74 {dimension_numbers = #tpu.dot_dimension_numbers<[1], [0], [0], [1], [0, 0, 1, 1], [], []>} : vector<324x4xf32>, vector<4x4xf32>, vector<324x4xf32> -> vector<324x4xf32>
    %81 = arith.addf %76, %80 : vector<324x4xf32>
    %c7_75 = arith.constant 7 : index
    %c0_76 = arith.constant 0 : index
    %82 = vector.load %arg11[%c7_75, %c0_76] : memref<372x4xf32, #tpu.memory_space<vmem>>, vector<324x4xf32>
    %c2_77 = arith.constant 2 : index
    %c0_78 = arith.constant 0 : index
    %c0_79 = arith.constant 0 : index
    %83 = vector.load %arg8[%c2_77, %c0_78, %c0_79] : memref<9x4x4xf32, #tpu.memory_space<vmem>>, vector<1x4x4xf32>
    %84 = vector.shape_cast %83 : vector<1x4x4xf32> to vector<4x4xf32>
    %cst_80 = arith.constant dense<0.000000e+00> : vector<324x4xf32>
    %85 = tpu.matmul %82, %84, %cst_80 {dimension_numbers = #tpu.dot_dimension_numbers<[1], [0], [0], [1], [0, 0, 1, 1], [], []>} : vector<324x4xf32>, vector<4x4xf32>, vector<324x4xf32> -> vector<324x4xf32>
    %86 = arith.addf %81, %85 : vector<324x4xf32>
    %c23_81 = arith.constant 23 : index
    %c0_82 = arith.constant 0 : index
    %87 = vector.load %arg11[%c23_81, %c0_82] : memref<372x4xf32, #tpu.memory_space<vmem>>, vector<324x4xf32>
    %c3_83 = arith.constant 3 : index
    %c0_84 = arith.constant 0 : index
    %c0_85 = arith.constant 0 : index
    %88 = vector.load %arg8[%c3_83, %c0_84, %c0_85] : memref<9x4x4xf32, #tpu.memory_space<vmem>>, vector<1x4x4xf32>
    %89 = vector.shape_cast %88 : vector<1x4x4xf32> to vector<4x4xf32>
    %cst_86 = arith.constant dense<0.000000e+00> : vector<324x4xf32>
    %90 = tpu.matmul %87, %89, %cst_86 {dimension_numbers = #tpu.dot_dimension_numbers<[1], [0], [0], [1], [0, 0, 1, 1], [], []>} : vector<324x4xf32>, vector<4x4xf32>, vector<324x4xf32> -> vector<324x4xf32>
    %91 = arith.addf %86, %90 : vector<324x4xf32>
    %c24_87 = arith.constant 24 : index
    %c0_88 = arith.constant 0 : index
    %92 = vector.load %arg11[%c24_87, %c0_88] : memref<372x4xf32, #tpu.memory_space<vmem>>, vector<324x4xf32>
    %c4_89 = arith.constant 4 : index
    %c0_90 = arith.constant 0 : index
    %c0_91 = arith.constant 0 : index
    %93 = vector.load %arg8[%c4_89, %c0_90, %c0_91] : memref<9x4x4xf32, #tpu.memory_space<vmem>>, vector<1x4x4xf32>
    %94 = vector.shape_cast %93 : vector<1x4x4xf32> to vector<4x4xf32>
    %cst_92 = arith.constant dense<0.000000e+00> : vector<324x4xf32>
    %95 = tpu.matmul %92, %94, %cst_92 {dimension_numbers = #tpu.dot_dimension_numbers<[1], [0], [0], [1], [0, 0, 1, 1], [], []>} : vector<324x4xf32>, vector<4x4xf32>, vector<324x4xf32> -> vector<324x4xf32>
    %96 = arith.addf %91, %95 : vector<324x4xf32>
    %c25_93 = arith.constant 25 : index
    %c0_94 = arith.constant 0 : index
    %97 = vector.load %arg11[%c25_93, %c0_94] : memref<372x4xf32, #tpu.memory_space<vmem>>, vector<324x4xf32>
    %c5_95 = arith.constant 5 : index
    %c0_96 = arith.constant 0 : index
    %c0_97 = arith.constant 0 : index
    %98 = vector.load %arg8[%c5_95, %c0_96, %c0_97] : memref<9x4x4xf32, #tpu.memory_space<vmem>>, vector<1x4x4xf32>
    %99 = vector.shape_cast %98 : vector<1x4x4xf32> to vector<4x4xf32>
    %cst_98 = arith.constant dense<0.000000e+00> : vector<324x4xf32>
    %100 = tpu.matmul %97, %99, %cst_98 {dimension_numbers = #tpu.dot_dimension_numbers<[1], [0], [0], [1], [0, 0, 1, 1], [], []>} : vector<324x4xf32>, vector<4x4xf32>, vector<324x4xf32> -> vector<324x4xf32>
    %101 = arith.addf %96, %100 : vector<324x4xf32>
    %c41_99 = arith.constant 41 : index
    %c0_100 = arith.constant 0 : index
    %102 = vector.load %arg11[%c41_99, %c0_100] : memref<372x4xf32, #tpu.memory_space<vmem>>, vector<324x4xf32>
    %c6_101 = arith.constant 6 : index
    %c0_102 = arith.constant 0 : index
    %c0_103 = arith.constant 0 : index
    %103 = vector.load %arg8[%c6_101, %c0_102, %c0_103] : memref<9x4x4xf32, #tpu.memory_space<vmem>>, vector<1x4x4xf32>
    %104 = vector.shape_cast %103 : vector<1x4x4xf32> to vector<4x4xf32>
    %cst_104 = arith.constant dense<0.000000e+00> : vector<324x4xf32>
    %105 = tpu.matmul %102, %104, %cst_104 {dimension_numbers = #tpu.dot_dimension_numbers<[1], [0], [0], [1], [0, 0, 1, 1], [], []>} : vector<324x4xf32>, vector<4x4xf32>, vector<324x4xf32> -> vector<324x4xf32>
    %106 = arith.addf %101, %105 : vector<324x4xf32>
    %c42_105 = arith.constant 42 : index
    %c0_106 = arith.constant 0 : index
    %107 = vector.load %arg11[%c42_105, %c0_106] : memref<372x4xf32, #tpu.memory_space<vmem>>, vector<324x4xf32>
    %c7_107 = arith.constant 7 : index
    %c0_108 = arith.constant 0 : index
    %c0_109 = arith.constant 0 : index
    %108 = vector.load %arg8[%c7_107, %c0_108, %c0_109] : memref<9x4x4xf32, #tpu.memory_space<vmem>>, vector<1x4x4xf32>
    %109 = vector.shape_cast %108 : vector<1x4x4xf32> to vector<4x4xf32>
    %cst_110 = arith.constant dense<0.000000e+00> : vector<324x4xf32>
    %110 = tpu.matmul %107, %109, %cst_110 {dimension_numbers = #tpu.dot_dimension_numbers<[1], [0], [0], [1], [0, 0, 1, 1], [], []>} : vector<324x4xf32>, vector<4x4xf32>, vector<324x4xf32> -> vector<324x4xf32>
    %111 = arith.addf %106, %110 : vector<324x4xf32>
    %c43_111 = arith.constant 43 : index
    %c0_112 = arith.constant 0 : index
    %112 = vector.load %arg11[%c43_111, %c0_112] : memref<372x4xf32, #tpu.memory_space<vmem>>, vector<324x4xf32>
    %c8_113 = arith.constant 8 : index
    %c0_114 = arith.constant 0 : index
    %c0_115 = arith.constant 0 : index
    %113 = vector.load %arg8[%c8_113, %c0_114, %c0_115] : memref<9x4x4xf32, #tpu.memory_space<vmem>>, vector<1x4x4xf32>
    %114 = vector.shape_cast %113 : vector<1x4x4xf32> to vector<4x4xf32>
    %cst_116 = arith.constant dense<0.000000e+00> : vector<324x4xf32>
    %115 = tpu.matmul %112, %114, %cst_116 {dimension_numbers = #tpu.dot_dimension_numbers<[1], [0], [0], [1], [0, 0, 1, 1], [], []>} : vector<324x4xf32>, vector<4x4xf32>, vector<324x4xf32> -> vector<324x4xf32>
    %116 = arith.addf %111, %115 : vector<324x4xf32>
    %117 = arith.addf %1, %116 : vector<324x4xf32>
    %c0_117 = arith.constant 0 : index
    %c0_118 = arith.constant 0 : index
    %c0_119 = arith.constant 0 : index
    %118 = vector.load %arg9[%c0_117, %c0_118, %c0_119] : memref<1x324x4xf32, #tpu.memory_space<vmem>>, vector<1x324x4xf32>
    %119 = vector.shape_cast %118 : vector<1x324x4xf32> to vector<324x4xf32>
    %120 = vector.shape_cast %117 : vector<324x4xf32> to vector<1x324x4xf32>
    tpu.vector_store %arg9[%c0_117, %c0_118, %c0_119], %120 {strides = array<i32>} : memref<1x324x4xf32, #tpu.memory_space<vmem>>, vector<1x324x4xf32>,
    return
  }
  func.func @transform_0(%arg0: i32) -> (i32, i32, i32) {
    %c0_i32 = arith.constant 0 : i32
    %c0_i32_0 = arith.constant 0 : i32
    %c0_i32_1 = arith.constant 0 : i32
    return %arg0, %c0_i32, %c0_i32_0 : i32, i32, i32
  }
  func.func @transform_1(%arg0: i32) -> (i32, i32) {
    %c0_i32 = arith.constant 0 : i32
    %c0_i32_0 = arith.constant 0 : i32
    %c0_i32_1 = arith.constant 0 : i32
    return %c0_i32, %c0_i32_0 : i32, i32
  }
  func.func @transform_2(%arg0: i32) -> (i32, i32) {
    %c0_i32 = arith.constant 0 : i32
    %c0_i32_0 = arith.constant 0 : i32
    %c0_i32_1 = arith.constant 0 : i32
    return %c0_i32, %c0_i32_0 : i32, i32
  }
  func.func @transform_3(%arg0: i32) -> (i32, i32) {
    %c0_i32 = arith.constant 0 : i32
    %c0_i32_0 = arith.constant 0 : i32
    %c0_i32_1 = arith.constant 0 : i32
    return %c0_i32, %c0_i32_0 : i32, i32
  }
  func.func @transform_4(%arg0: i32) -> (i32, i32, i32) {
    %c0_i32 = arith.constant 0 : i32
    %c0_i32_0 = arith.constant 0 : i32
    %c0_i32_1 = arith.constant 0 : i32
    %c0_i32_2 = arith.constant 0 : i32
    return %c0_i32, %c0_i32_0, %c0_i32_1 : i32, i32, i32
  }
  func.func @transform_5(%arg0: i32) -> (i32, i32) {
    %c0_i32 = arith.constant 0 : i32
    %c0_i32_0 = arith.constant 0 : i32
    %c0_i32_1 = arith.constant 0 : i32
    return %c0_i32, %c0_i32_0 : i32, i32
  }
  func.func @transform_6(%arg0: i32) -> (i32, i32) {
    %c0_i32 = arith.constant 0 : i32
    %c0_i32_0 = arith.constant 0 : i32
    %c0_i32_1 = arith.constant 0 : i32
    return %c0_i32, %c0_i32_0 : i32, i32
  }
  func.func @transform_7(%arg0: i32) -> (i32, i32, i32) {
    %c0_i32 = arith.constant 0 : i32
    %c0_i32_0 = arith.constant 0 : i32
    %c0_i32_1 = arith.constant 0 : i32
    %c0_i32_2 = arith.constant 0 : i32
    return %c0_i32, %c0_i32_0, %c0_i32_1 : i32, i32, i32
  }
  func.func @transform_8(%arg0: i32) -> (i32, i32, i32) {
    %c0_i32 = arith.constant 0 : i32
    %c0_i32_0 = arith.constant 0 : i32
    %c0_i32_1 = arith.constant 0 : i32
    return %arg0, %c0_i32, %c0_i32_0 : i32, i32, i32
  }
}

</mosaic_0001>

<llo_original>
// kernel: basic_block_forward.1
$region0: #{basic_block_forward.1}
  #allocation0 [shape = 'u32[]', space=smem, size = 0x4, offset = 0x4, fixed_abs, tag = 'smem constant byte address 0x4 - core index']
  #allocation1 [shape = 'u32[144,128]{1,0:T(1,128)}', space=vmem, size = 0x12000, scoped, tag = 'internal scratch']
  #allocation2 [shape = 'f32[372,4]{1,0:T(8,128)}', space=vmem, size = 0x2f000, scoped, tag = 'scratch operand']
  #allocation3 [shape = 'f32[372,4]{1,0:T(8,128)}', space=vmem, size = 0x2f000, scoped, tag = 'scratch operand']
  %s0 = inlined_call_operand.vmem [shape: f32[2,324,4], index: 0, kind: input, shape index: {}]
  %s1 = inlined_call_operand.vmem [shape: f32[324,1], index: 1, kind: input, shape index: {}]
  %s2 = inlined_call_operand.vmem [shape: f32[1,4], index: 2, kind: input, shape index: {}]
  %s3 = inlined_call_operand.vmem [shape: f32[1,4], index: 3, kind: input, shape index: {}]
  %s4 = inlined_call_operand.vmem [shape: f32[9,4,4], index: 4, kind: input, shape index: {}]
  %s5 = inlined_call_operand.vmem [shape: f32[1,4], index: 5, kind: input, shape index: {}]
  %s6 = inlined_call_operand.vmem [shape: f32[1,4], index: 6, kind: input, shape index: {}]
  %s7 = inlined_call_operand.vmem [shape: f32[9,4,4], index: 7, kind: input, shape index: {}]
  %s8 = inlined_call_operand.vmem [shape: f32[2,324,4], index: 8, kind: output, shape index: {}]
  %s9 = sld [smem:[#allocation0]]
  $region65: #{basic_block_forward.1} parent=0
    _
  %s11 = ssub.s32 1, %s9
  %s12 = scalar_select 0, %s11, %s9
  loop: start=0, step=1, limit=4
  $region2: #{basic_block_forward.1} parent=0 // loop_pre_header
    _
  $region3: #{basic_block_forward.1} parent=0 // loop_header
    %s14 = sphi 0, %s18
    %p15 = scmp.ge.s32.totalorder %s14, 4
    %s24 = sphi 0, %s26
    %s27 = sphi 0, %s24
    %s28 = sphi 0, %s27
    %s44 = sphi 0, %s28
    %s48 = sphi 0, %s48
    %s50 = sphi 0, %s48
    %s51 = sphi 0, %s50
    %s65 = sphi 0, %s51
    %s69 = sphi 0, %s69
    %s71 = sphi 0, %s69
    %s72 = sphi 0, %s71
    %s86 = sphi 0, %s72
    %s90 = sphi 0, %s90
    %s92 = sphi 0, %s90
    %s93 = sphi 0, %s92
    %s107 = sphi 0, %s93
    %s111 = sphi 0, %s111
    %s113 = sphi 0, %s111
    %s114 = sphi 0, %s113
    %s128 = sphi 0, %s114
    %s132 = sphi 0, %s132
    %s134 = sphi 0, %s132
    %s135 = sphi 0, %s134
    %s149 = sphi 0, %s135
    %s153 = sphi 0, %s153
    %s155 = sphi 0, %s153
    %s156 = sphi 0, %s155
    %s170 = sphi 0, %s156
    %s174 = sphi 0, %s174
    %s176 = sphi 0, %s174
    %s177 = sphi 0, %s176
    %s191 = sphi 0, %s177
    %s197 = sphi 0, %s199
    %s200 = sphi 0, %s197
    %s201 = sphi 0, %s200
    %s217 = sphi 0, %s201
  $region4: #{basic_block_forward.1} parent=0 // loop_header_branch
    %17 = sbr.rel (%p15) target = $region8
  $region5: #{basic_block_forward.1} parent=0 // loop_body
    %s19 = ssub.s32 %s14, 1
    %s20 = ssub.s32 %s14, 2
    %s21 = sadd.s32 %s14, 1
    %s22 = ssub.s32 %s14, %s21
    %p23 = scmp.eq.s32.totalorder %s22, 0
    %s25 = sadd.s32 %s24, 1
    %s26 = scalar_select %p23, %s24, %s25
    %p29 = pneg %p23
    %p30 = scmp.eq.s32.totalorder %s14, 1
    %p31 = por %p29, %p30
    %p32 = scmp.ne.s32.totalorder %s24, %s27
    %p33 = scmp.eq.s32.totalorder %s14, 0
    %p34 = por %p32, %p33
    %p35 = scmp.ne.s32.totalorder %s24, %s27
    %p36 = scmp.eq.s32.totalorder %s19, 1
    %p37 = por %p35, %p36
    %p38 = scmp.ne.s32.totalorder %s27, %s28
    %p39 = scmp.eq.s32.totalorder %s19, 0
    %p40 = por %p38, %p39
    %p41 = scmp.ne.s32.totalorder %s27, %s28
    %p42 = scmp.eq.s32.totalorder %s20, 1
    %p43 = por %p41, %p42
    %p45 = scmp.ne.s32.totalorder %s28, %s44
    %p46 = scmp.eq.s32.totalorder %s20, 0
    %p47 = por %p45, %p46
    %s49 = sadd.s32 %s48, 1
    %p52 = scmp.eq.s32.totalorder %s14, 1
    %p53 = scmp.ne.s32.totalorder %s48, %s50
    %p54 = scmp.eq.s32.totalorder %s14, 0
    %p55 = por %p53, %p54
    %p56 = scmp.ne.s32.totalorder %s48, %s50
    %p57 = scmp.eq.s32.totalorder %s19, 1
    %p58 = por %p56, %p57
    %p59 = scmp.ne.s32.totalorder %s50, %s51
    %p60 = scmp.eq.s32.totalorder %s19, 0
    %p61 = por %p59, %p60
    %p62 = scmp.ne.s32.totalorder %s50, %s51
    %p63 = scmp.eq.s32.totalorder %s20, 1
    %p64 = por %p62, %p63
    %p66 = scmp.ne.s32.totalorder %s51, %s65
    %p67 = scmp.eq.s32.totalorder %s20, 0
    %p68 = por %p66, %p67
    %s70 = sadd.s32 %s69, 1
    %p73 = scmp.eq.s32.totalorder %s14, 1
    %p74 = scmp.ne.s32.totalorder %s69, %s71
    %p75 = scmp.eq.s32.totalorder %s14, 0
    %p76 = por %p74, %p75
    %p77 = scmp.ne.s32.totalorder %s69, %s71
    %p78 = scmp.eq.s32.totalorder %s19, 1
    %p79 = por %p77, %p78
    %p80 = scmp.ne.s32.totalorder %s71, %s72
    %p81 = scmp.eq.s32.totalorder %s19, 0
    %p82 = por %p80, %p81
    %p83 = scmp.ne.s32.totalorder %s71, %s72
    %p84 = scmp.eq.s32.totalorder %s20, 1
    %p85 = por %p83, %p84
    %p87 = scmp.ne.s32.totalorder %s72, %s86
    %p88 = scmp.eq.s32.totalorder %s20, 0
    %p89 = por %p87, %p88
    %s91 = sadd.s32 %s90, 1
    %p94 = scmp.eq.s32.totalorder %s14, 1
    %p95 = scmp.ne.s32.totalorder %s90, %s92
    %p96 = scmp.eq.s32.totalorder %s14, 0
    %p97 = por %p95, %p96
    %p98 = scmp.ne.s32.totalorder %s90, %s92
    %p99 = scmp.eq.s32.totalorder %s19, 1
    %p100 = por %p98, %p99
    %p101 = scmp.ne.s32.totalorder %s92, %s93
    %p102 = scmp.eq.s32.totalorder %s19, 0
    %p103 = por %p101, %p102
    %p104 = scmp.ne.s32.totalorder %s92, %s93
    %p105 = scmp.eq.s32.totalorder %s20, 1
    %p106 = por %p104, %p105
    %p108 = scmp.ne.s32.totalorder %s93, %s107
    %p109 = scmp.eq.s32.totalorder %s20, 0
    %p110 = por %p108, %p109
    %s112 = sadd.s32 %s111, 1
    %p115 = scmp.eq.s32.totalorder %s14, 1
    %p116 = scmp.ne.s32.totalorder %s111, %s113
    %p117 = scmp.eq.s32.totalorder %s14, 0
    %p118 = por %p116, %p117
    %p119 = scmp.ne.s32.totalorder %s111, %s113
    %p120 = scmp.eq.s32.totalorder %s19, 1
    %p121 = por %p119, %p120
    %p122 = scmp.ne.s32.totalorder %s113, %s114
    %p123 = scmp.eq.s32.totalorder %s19, 0
    %p124 = por %p122, %p123
    %p125 = scmp.ne.s32.totalorder %s113, %s114
    %p126 = scmp.eq.s32.totalorder %s20, 1
    %p127 = por %p125, %p126
    %p129 = scmp.ne.s32.totalorder %s114, %s128
    %p130 = scmp.eq.s32.totalorder %s20, 0
    %p131 = por %p129, %p130
    %s133 = sadd.s32 %s132, 1
    %p136 = scmp.eq.s32.totalorder %s14, 1
    %p137 = scmp.ne.s32.totalorder %s132, %s134
    %p138 = scmp.eq.s32.totalorder %s14, 0
    %p139 = por %p137, %p138
    %p140 = scmp.ne.s32.totalorder %s132, %s134
    %p141 = scmp.eq.s32.totalorder %s19, 1
    %p142 = por %p140, %p141
    %p143 = scmp.ne.s32.totalorder %s134, %s135
    %p144 = scmp.eq.s32.totalorder %s19, 0
    %p145 = por %p143, %p144
    %p146 = scmp.ne.s32.totalorder %s134, %s135
    %p147 = scmp.eq.s32.totalorder %s20, 1
    %p148 = por %p146, %p147
    %p150 = scmp.ne.s32.totalorder %s135, %s149
    %p151 = scmp.eq.s32.totalorder %s20, 0
    %p152 = por %p150, %p151
    %s154 = sadd.s32 %s153, 1
    %p157 = scmp.eq.s32.totalorder %s14, 1
    %p158 = scmp.ne.s32.totalorder %s153, %s155
    %p159 = scmp.eq.s32.totalorder %s14, 0
    %p160 = por %p158, %p159
    %p161 = scmp.ne.s32.totalorder %s153, %s155
    %p162 = scmp.eq.s32.totalorder %s19, 1
    %p163 = por %p161, %p162
    %p164 = scmp.ne.s32.totalorder %s155, %s156
    %p165 = scmp.eq.s32.totalorder %s19, 0
    %p166 = por %p164, %p165
    %p167 = scmp.ne.s32.totalorder %s155, %s156
    %p168 = scmp.eq.s32.totalorder %s20, 1
    %p169 = por %p167, %p168
    %p171 = scmp.ne.s32.totalorder %s156, %s170
    %p172 = scmp.eq.s32.totalorder %s20, 0
    %p173 = por %p171, %p172
    %s175 = sadd.s32 %s174, 1
    %p178 = scmp.eq.s32.totalorder %s14, 1
    %p179 = scmp.ne.s32.totalorder %s174, %s176
    %p180 = scmp.eq.s32.totalorder %s14, 0
    %p181 = por %p179, %p180
    %p182 = scmp.ne.s32.totalorder %s174, %s176
    %p183 = scmp.eq.s32.totalorder %s19, 1
    %p184 = por %p182, %p183
    %p185 = scmp.ne.s32.totalorder %s176, %s177
    %p186 = scmp.eq.s32.totalorder %s19, 0
    %p187 = por %p185, %p186
    %p188 = scmp.ne.s32.totalorder %s176, %s177
    %p189 = scmp.eq.s32.totalorder %s20, 1
    %p190 = por %p188, %p189
    %p192 = scmp.ne.s32.totalorder %s177, %s191
    %p193 = scmp.eq.s32.totalorder %s20, 0
    %p194 = por %p192, %p193
    %s195 = ssub.s32 %s14, %s21
    %p196 = scmp.eq.s32.totalorder %s195, 0
    %s198 = sadd.s32 %s197, 1
    %s199 = scalar_select %p196, %s197, %s198
    %p202 = pneg %p196
    %p203 = scmp.eq.s32.totalorder %s14, 1
    %p204 = por %p202, %p203
    %p205 = scmp.ne.s32.totalorder %s197, %s200
    %p206 = scmp.eq.s32.totalorder %s14, 0
    %p207 = por %p205, %p206
    %p208 = scmp.ne.s32.totalorder %s197, %s200
    %p209 = scmp.eq.s32.totalorder %s19, 1
    %p210 = por %p208, %p209
    %p211 = scmp.ne.s32.totalorder %s200, %s201
    %p212 = scmp.eq.s32.totalorder %s19, 0
    %p213 = por %p211, %p212
    %p214 = scmp.ne.s32.totalorder %s200, %s201
    %p215 = scmp.eq.s32.totalorder %s20, 1
    %p216 = por %p214, %p215
    %p218 = scmp.ne.s32.totalorder %s201, %s217
    %p219 = scmp.eq.s32.totalorder %s20, 0
    %p220 = por %p218, %p219
    %p221 = scmp.le.s32.totalorder 1, %s14
    %p222 = scmp.lt.s32.totalorder %s14, 3
    %p223 = pnand %p221, %p222
    %p224 = pneg %p223
    // Predicated region
    $region9: #{basic_block_forward.1} parent=5 // pred_check
      _
    $region10: #{basic_block_forward.1} parent=5 // pred_check_branch
      %226 = sbr.rel (%p223) target = $region12
    $region11: #{basic_block_forward.1} parent=5 // pred_region
      %s227 = ssub.s32 %s14, 1
      // Predicated region
      $region13: #{basic_block_forward.1} parent=11 // pred_check
        %p228 = pneg %p61
      $region14: #{basic_block_forward.1} parent=11 // pred_check_branch
        %230 = sbr.rel (%p228) target = $region16
      $region15: #{basic_block_forward.1} parent=11 // pred_region
        _
      $region16: #{basic_block_forward.1} parent=11 // pred_fallthru
        _
      // Predicated region
      $region17: #{basic_block_forward.1} parent=11 // pred_check
        %p231 = pneg %p82
      $region18: #{basic_block_forward.1} parent=11 // pred_check_branch
        %233 = sbr.rel (%p231) target = $region20
      $region19: #{basic_block_forward.1} parent=11 // pred_region
        _
      $region20: #{basic_block_forward.1} parent=11 // pred_fallthru
        _
      // Predicated region
      $region21: #{basic_block_forward.1} parent=11 // pred_check
        %p234 = pneg %p103
      $region22: #{basic_block_forward.1} parent=11 // pred_check_branch
        %236 = sbr.rel (%p234) target = $region24
      $region23: #{basic_block_forward.1} parent=11 // pred_region
        _
      $region24: #{basic_block_forward.1} parent=11 // pred_fallthru
        _
      // Predicated region
      $region25: #{basic_block_forward.1} parent=11 // pred_check
        %p237 = pneg %p124
      $region26: #{basic_block_forward.1} parent=11 // pred_check_branch
        %239 = sbr.rel (%p237) target = $region28
      $region27: #{basic_block_forward.1} parent=11 // pred_region
        _
      $region28: #{basic_block_forward.1} parent=11 // pred_fallthru
        _
      // Predicated region
      $region29: #{basic_block_forward.1} parent=11 // pred_check
        %p240 = pneg %p145
      $region30: #{basic_block_forward.1} parent=11 // pred_check_branch
        %242 = sbr.rel (%p240) target = $region32
      $region31: #{basic_block_forward.1} parent=11 // pred_region
        _
      $region32: #{basic_block_forward.1} parent=11 // pred_fallthru
        _
      // Predicated region
      $region33: #{basic_block_forward.1} parent=11 // pred_check
        %p243 = pneg %p166
      $region34: #{basic_block_forward.1} parent=11 // pred_check_branch
        %245 = sbr.rel (%p243) target = $region36
      $region35: #{basic_block_forward.1} parent=11 // pred_region
        _
      $region36: #{basic_block_forward.1} parent=11 // pred_fallthru
        _
      // Predicated region
      $region37: #{basic_block_forward.1} parent=11 // pred_check
        %p246 = pneg %p187
      $region38: #{basic_block_forward.1} parent=11 // pred_check_branch
        %248 = sbr.rel (%p246) target = $region40
      $region39: #{basic_block_forward.1} parent=11 // pred_region
        _
      $region40: #{basic_block_forward.1} parent=11 // pred_fallthru
        _
    $region12: #{basic_block_forward.1} parent=5 // pred_fallthru
      _
    %p249 = scmp.lt.s32.totalorder %s14, 2
    // Predicated region
    $region41: #{basic_block_forward.1} parent=5 // pred_check
      %p250 = pneg %p249
    $region42: #{basic_block_forward.1} parent=5 // pred_check_branch
      %252 = sbr.rel (%p250) target = $region44
    $region43: #{basic_block_forward.1} parent=5 // pred_region
      // Predicated region
      $region45: #{basic_block_forward.1} parent=43 // pred_check
        %p253 = pneg %p34
      $region46: #{basic_block_forward.1} parent=43 // pred_check_branch
        %255 = sbr.rel (%p253) target = $region48
      $region47: #{basic_block_forward.1} parent=43 // pred_region
        %p256 = scmp.lt.s32.totalorder %s14, 1
        %s257 = scalar_select %p256, %s14, 1
        %s258 = smul.addr %s257, 41
        %s259 = smul.addr %s258, 8
        %s260 = scalar_lea.vmem %s0, %s259
      $region48: #{basic_block_forward.1} parent=43 // pred_fallthru
        _
    $region44: #{basic_block_forward.1} parent=5 // pred_fallthru
      _
    %p261 = scmp.le.s32.totalorder 1, %s14
    %p262 = scmp.lt.s32.totalorder %s14, 3
    %p263 = pnand %p261, %p262
    %p264 = pneg %p263
    // Predicated region
    $region49: #{basic_block_forward.1} parent=5 // pred_check
      _
    $region50: #{basic_block_forward.1} parent=5 // pred_check_branch
      %266 = sbr.rel (%p263) target = $region52
    $region51: #{basic_block_forward.1} parent=5 // pred_region
      %s267 = ssub.s32 %s14, 1
      %p268 = scmp.lt.s32.totalorder %s19, 1
      %s269 = scalar_select %p268, %s19, 1
      %s270 = smul.addr %s269, 41
      %s271 = smul.addr %s270, 8
      %s272 = scalar_lea.vmem %s0, %s271
      %p273 = pneg %p40
      %p274 = pneg %p37
      %p275 = pneg %p61
      %p276 = pneg %p58
      %p277 = pneg %p82
      %p278 = pneg %p79
      %p279 = pneg %p103
      %p280 = pneg %p100
      %p281 = pneg %p124
      %p282 = pneg %p121
      %p283 = pneg %p145
      %p284 = pneg %p142
      %p285 = pneg %p166
      %p286 = pneg %p163
      %p287 = pneg %p187
      %p288 = pneg %p184
      %p289 = pneg %p213
      %p290 = pneg %p210
      %p291 = scmp.lt.s32.totalorder %s19, 1
      %s292 = scalar_select %p291, %s19, 1
      %s293 = smul.addr %s292, 41
      %s294 = smul.addr %s293, 8
      %s295 = scalar_lea.vmem %s8, %s294
      %p296 = scmp.lt.s32.totalorder %s19, 1
      %s297 = scalar_select %p296, %s19, 1
      %s298 = smul.addr %s297, 41
      %s299 = smul.addr %s298, 8
      %s300 = scalar_lea.vmem %s0, %s299
      %p301 = scmp.lt.s32.totalorder %s19, 1
      %s302 = scalar_select %p301, %s19, 1
      %s303 = smul.addr %s302, 41
      %s304 = smul.addr %s303, 8
      %s305 = scalar_lea.vmem %s8, %s304
      %v306 = vld [vmem:[%s300] sm:$0xff]
      %v307 = vld [vmem:[%s300 + $0x8] sm:$0xff]
      %v308 = vld [vmem:[%s300 + $0x10] sm:$0xff]
      %v309 = vld [vmem:[%s300 + $0x18] sm:$0xff]
      %v310 = vld [vmem:[%s300 + $0x20] sm:$0xff]
      %v311 = vld [vmem:[%s300 + $0x28] sm:$0xff]
      %v312 = vld [vmem:[%s300 + $0x30] sm:$0xff]
      %v313 = vld [vmem:[%s300 + $0x38] sm:$0xff]
      %v314 = vld [vmem:[%s300 + $0x40] sm:$0xff]
      %v315 = vld [vmem:[%s300 + $0x48] sm:$0xff]
      %v316 = vld [vmem:[%s300 + $0x50] sm:$0xff]
      %v317 = vld [vmem:[%s300 + $0x58] sm:$0xff]
      %v318 = vld [vmem:[%s300 + $0x60] sm:$0xff]
      %v319 = vld [vmem:[%s300 + $0x68] sm:$0xff]
      %v320 = vld [vmem:[%s300 + $0x70] sm:$0xff]
      %v321 = vld [vmem:[%s300 + $0x78] sm:$0xff]
      %v322 = vld [vmem:[%s300 + $0x80] sm:$0xff]
      %v323 = vld [vmem:[%s300 + $0x88] sm:$0xff]
      %v324 = vld [vmem:[%s300 + $0x90] sm:$0xff]
      %v325 = vld [vmem:[%s300 + $0x98] sm:$0xff]
      %v326 = vld [vmem:[%s300 + $0xa0] sm:$0xff]
      %v327 = vld [vmem:[%s300 + $0xa8] sm:$0xff]
      %v328 = vld [vmem:[%s300 + $0xb0] sm:$0xff]
      %v329 = vld [vmem:[%s300 + $0xb8] sm:$0xff]
      %v330 = vld [vmem:[%s300 + $0xc0] sm:$0xff]
      %v331 = vld [vmem:[%s300 + $0xc8] sm:$0xff]
      %v332 = vld [vmem:[%s300 + $0xd0] sm:$0xff]
      %v333 = vld [vmem:[%s300 + $0xd8] sm:$0xff]
      %v334 = vld [vmem:[%s300 + $0xe0] sm:$0xff]
      %v335 = vld [vmem:[%s300 + $0xe8] sm:$0xff]
      %v336 = vld [vmem:[%s300 + $0xf0] sm:$0xff]
      %v337 = vld [vmem:[%s300 + $0xf8] sm:$0xff]
      %v338 = vld [vmem:[%s300 + $0x100] sm:$0xff]
      %v339 = vld [vmem:[%s300 + $0x108] sm:$0xff]
      %v340 = vld [vmem:[%s300 + $0x110] sm:$0xff]
      %v341 = vld [vmem:[%s300 + $0x118] sm:$0xff]
      %v342 = vld [vmem:[%s300 + $0x120] sm:$0xff]
      %v343 = vld [vmem:[%s300 + $0x128] sm:$0xff]
      %v344 = vld [vmem:[%s300 + $0x130] sm:$0xff]
      %v345 = vld [vmem:[%s300 + $0x138] sm:$0xff]
      %v346 = vld [vmem:[%s300 + $0x140] sm:$0xf]
      %v347 = vld [vmem:[%s1] sm:$0xff]
      %v348 = vld [vmem:[%s1 + $0x8] sm:$0xff]
      %v349 = vld [vmem:[%s1 + $0x10] sm:$0xff]
      %v350 = vld [vmem:[%s1 + $0x18] sm:$0xff]
      %v351 = vld [vmem:[%s1 + $0x20] sm:$0xff]
      %v352 = vld [vmem:[%s1 + $0x28] sm:$0xff]
      %v353 = vld [vmem:[%s1 + $0x30] sm:$0xff]
      %v354 = vld [vmem:[%s1 + $0x38] sm:$0xff]
      %v355 = vld [vmem:[%s1 + $0x40] sm:$0xff]
      %v356 = vld [vmem:[%s1 + $0x48] sm:$0xff]
      %v357 = vld [vmem:[%s1 + $0x50] sm:$0xff]
      %v358 = vld [vmem:[%s1 + $0x58] sm:$0xff]
      %v359 = vld [vmem:[%s1 + $0x60] sm:$0xff]
      %v360 = vld [vmem:[%s1 + $0x68] sm:$0xff]
      %v361 = vld [vmem:[%s1 + $0x70] sm:$0xff]
      %v362 = vld [vmem:[%s1 + $0x78] sm:$0xff]
      %v363 = vld [vmem:[%s1 + $0x80] sm:$0xff]
      %v364 = vld [vmem:[%s1 + $0x88] sm:$0xff]
      %v365 = vld [vmem:[%s1 + $0x90] sm:$0xff]
      %v366 = vld [vmem:[%s1 + $0x98] sm:$0xff]
      %v367 = vld [vmem:[%s1 + $0xa0] sm:$0xff]
      %v368 = vld [vmem:[%s1 + $0xa8] sm:$0xff]
      %v369 = vld [vmem:[%s1 + $0xb0] sm:$0xff]
      %v370 = vld [vmem:[%s1 + $0xb8] sm:$0xff]
      %v371 = vld [vmem:[%s1 + $0xc0] sm:$0xff]
      %v372 = vld [vmem:[%s1 + $0xc8] sm:$0xff]
      %v373 = vld [vmem:[%s1 + $0xd0] sm:$0xff]
      %v374 = vld [vmem:[%s1 + $0xd8] sm:$0xff]
      %v375 = vld [vmem:[%s1 + $0xe0] sm:$0xff]
      %v376 = vld [vmem:[%s1 + $0xe8] sm:$0xff]
      %v377 = vld [vmem:[%s1 + $0xf0] sm:$0xff]
      %v378 = vld [vmem:[%s1 + $0xf8] sm:$0xff]
      %v379 = vld [vmem:[%s1 + $0x100] sm:$0xff]
      %v380 = vld [vmem:[%s1 + $0x108] sm:$0xff]
      %v381 = vld [vmem:[%s1 + $0x110] sm:$0xff]
      %v382 = vld [vmem:[%s1 + $0x118] sm:$0xff]
      %v383 = vld [vmem:[%s1 + $0x120] sm:$0xff]
      %v384 = vld [vmem:[%s1 + $0x128] sm:$0xff]
      %v385 = vld [vmem:[%s1 + $0x130] sm:$0xff]
      %v386 = vld [vmem:[%s1 + $0x138] sm:$0xff]
      %v387 = vld [vmem:[%s1 + $0x140] sm:$0xf]
      %v388 = vld [vmem:[%s2] sm:$0x1]
      %v390 = vlaneseq
      %v391 = vshrl.u32 %v390, 7
      %v392 = vsub.s32 0, %v391
      %v393 = vrot.slane %v388, %v392
      %v395 = vmul.f32 %v306, %v393
      %v396 = vmul.f32 %v307, %v393
      %v397 = vmul.f32 %v308, %v393
      %v398 = vmul.f32 %v309, %v393
      %v399 = vmul.f32 %v310, %v393
      %v400 = vmul.f32 %v311, %v393
      %v401 = vmul.f32 %v312, %v393
      %v402 = vmul.f32 %v313, %v393
      %v403 = vmul.f32 %v314, %v393
      %v404 = vmul.f32 %v315, %v393
      %v405 = vmul.f32 %v316, %v393
      %v406 = vmul.f32 %v317, %v393
      %v407 = vmul.f32 %v318, %v393
      %v408 = vmul.f32 %v319, %v393
      %v409 = vmul.f32 %v320, %v393
      %v410 = vmul.f32 %v321, %v393
      %v411 = vmul.f32 %v322, %v393
      %v412 = vmul.f32 %v323, %v393
      %v413 = vmul.f32 %v324, %v393
      %v414 = vmul.f32 %v325, %v393
      %v415 = vmul.f32 %v326, %v393
      %v416 = vmul.f32 %v327, %v393
      %v417 = vmul.f32 %v328, %v393
      %v418 = vmul.f32 %v329, %v393
      %v419 = vmul.f32 %v330, %v393
      %v420 = vmul.f32 %v331, %v393
      %v421 = vmul.f32 %v332, %v393
      %v422 = vmul.f32 %v333, %v393
      %v423 = vmul.f32 %v334, %v393
      %v424 = vmul.f32 %v335, %v393
      %v425 = vmul.f32 %v336, %v393
      %v426 = vmul.f32 %v337, %v393
      %v427 = vmul.f32 %v338, %v393
      %v428 = vmul.f32 %v339, %v393
      %v429 = vmul.f32 %v340, %v393
      %v430 = vmul.f32 %v341, %v393
      %v431 = vmul.f32 %v342, %v393
      %v432 = vmul.f32 %v343, %v393
      %v433 = vmul.f32 %v344, %v393
      %v434 = vmul.f32 %v345, %v393
      %v435 = vmul.f32 %v346, %v393
      %v436 = vld [vmem:[%s3] sm:$0x1]
      %v438 = vlaneseq
      %v439 = vshrl.u32 %v438, 7
      %v440 = vsub.s32 0, %v439
      %v441 = vrot.slane %v436, %v440
      %v443 = vadd.f32 %v395, %v441
      %v444 = vadd.f32 %v396, %v441
      %v445 = vadd.f32 %v397, %v441
      %v446 = vadd.f32 %v398, %v441
      %v447 = vadd.f32 %v399, %v441
      %v448 = vadd.f32 %v400, %v441
      %v449 = vadd.f32 %v401, %v441
      %v450 = vadd.f32 %v402, %v441
      %v451 = vadd.f32 %v403, %v441
      %v452 = vadd.f32 %v404, %v441
      %v453 = vadd.f32 %v405, %v441
      %v454 = vadd.f32 %v406, %v441
      %v455 = vadd.f32 %v407, %v441
      %v456 = vadd.f32 %v408, %v441
      %v457 = vadd.f32 %v409, %v441
      %v458 = vadd.f32 %v410, %v441
      %v459 = vadd.f32 %v411, %v441
      %v460 = vadd.f32 %v412, %v441
      %v461 = vadd.f32 %v413, %v441
      %v462 = vadd.f32 %v414, %v441
      %v463 = vadd.f32 %v415, %v441
      %v464 = vadd.f32 %v416, %v441
      %v465 = vadd.f32 %v417, %v441
      %v466 = vadd.f32 %v418, %v441
      %v467 = vadd.f32 %v419, %v441
      %v468 = vadd.f32 %v420, %v441
      %v469 = vadd.f32 %v421, %v441
      %v470 = vadd.f32 %v422, %v441
      %v471 = vadd.f32 %v423, %v441
      %v472 = vadd.f32 %v424, %v441
      %v473 = vadd.f32 %v425, %v441
      %v474 = vadd.f32 %v426, %v441
      %v475 = vadd.f32 %v427, %v441
      %v476 = vadd.f32 %v428, %v441
      %v477 = vadd.f32 %v429, %v441
      %v478 = vadd.f32 %v430, %v441
      %v479 = vadd.f32 %v431, %v441
      %v480 = vadd.f32 %v432, %v441
      %v481 = vadd.f32 %v433, %v441
      %v482 = vadd.f32 %v434, %v441
      %v483 = vadd.f32 %v435, %v441
      %v484 = vmax.f32 %v443, 0.0
      %v485 = vmax.f32 %v444, 0.0
      %v486 = vmax.f32 %v445, 0.0
      %v487 = vmax.f32 %v446, 0.0
      %v488 = vmax.f32 %v447, 0.0
      %v489 = vmax.f32 %v448, 0.0
      %v490 = vmax.f32 %v449, 0.0
      %v491 = vmax.f32 %v450, 0.0
      %v492 = vmax.f32 %v451, 0.0
      %v493 = vmax.f32 %v452, 0.0
      %v494 = vmax.f32 %v453, 0.0
      %v495 = vmax.f32 %v454, 0.0
      %v496 = vmax.f32 %v455, 0.0
      %v497 = vmax.f32 %v456, 0.0
      %v498 = vmax.f32 %v457, 0.0
      %v499 = vmax.f32 %v458, 0.0
      %v500 = vmax.f32 %v459, 0.0
      %v501 = vmax.f32 %v460, 0.0
      %v502 = vmax.f32 %v461, 0.0
      %v503 = vmax.f32 %v462, 0.0
      %v504 = vmax.f32 %v463, 0.0
      %v505 = vmax.f32 %v464, 0.0
      %v506 = vmax.f32 %v465, 0.0
      %v507 = vmax.f32 %v466, 0.0
      %v508 = vmax.f32 %v467, 0.0
      %v509 = vmax.f32 %v468, 0.0
      %v510 = vmax.f32 %v469, 0.0
      %v511 = vmax.f32 %v470, 0.0
      %v512 = vmax.f32 %v471, 0.0
      %v513 = vmax.f32 %v472, 0.0
      %v514 = vmax.f32 %v473, 0.0
      %v515 = vmax.f32 %v474, 0.0
      %v516 = vmax.f32 %v475, 0.0
      %v517 = vmax.f32 %v476, 0.0
      %v518 = vmax.f32 %v477, 0.0
      %v519 = vmax.f32 %v478, 0.0
      %v520 = vmax.f32 %v479, 0.0
      %v521 = vmax.f32 %v480, 0.0
      %v522 = vmax.f32 %v481, 0.0
      %v523 = vmax.f32 %v482, 0.0
      %v524 = vmax.f32 %v483, 0.0
      %526 = vset.pattern.permute.xlu0 0
      %527 = vperm.xlu0 %526, %v347
      %v528 = vpop.permute.xlu0 %527
      %531 = vset.pattern.permute.xlu0 0
      %532 = vperm.xlu0 %531, %v348
      %v533 = vpop.permute.xlu0 %532
      %536 = vset.pattern.permute.xlu0 0
      %537 = vperm.xlu0 %536, %v349
      %v538 = vpop.permute.xlu0 %537
      %541 = vset.pattern.permute.xlu0 0
      %542 = vperm.xlu0 %541, %v350
      %v543 = vpop.permute.xlu0 %542
      %546 = vset.pattern.permute.xlu0 0
      %547 = vperm.xlu0 %546, %v351
      %v548 = vpop.permute.xlu0 %547
      %551 = vset.pattern.permute.xlu0 0
      %552 = vperm.xlu0 %551, %v352
      %v553 = vpop.permute.xlu0 %552
      %556 = vset.pattern.permute.xlu0 0
      %557 = vperm.xlu0 %556, %v353
      %v558 = vpop.permute.xlu0 %557
      %561 = vset.pattern.permute.xlu0 0
      %562 = vperm.xlu0 %561, %v354
      %v563 = vpop.permute.xlu0 %562
      %566 = vset.pattern.permute.xlu0 0
      %567 = vperm.xlu0 %566, %v355
      %v568 = vpop.permute.xlu0 %567
      %571 = vset.pattern.permute.xlu0 0
      %572 = vperm.xlu0 %571, %v356
      %v573 = vpop.permute.xlu0 %572
      %576 = vset.pattern.permute.xlu0 0
      %577 = vperm.xlu0 %576, %v357
      %v578 = vpop.permute.xlu0 %577
      %581 = vset.pattern.permute.xlu0 0
      %582 = vperm.xlu0 %581, %v358
      %v583 = vpop.permute.xlu0 %582
      %586 = vset.pattern.permute.xlu0 0
      %587 = vperm.xlu0 %586, %v359
      %v588 = vpop.permute.xlu0 %587
      %591 = vset.pattern.permute.xlu0 0
      %592 = vperm.xlu0 %591, %v360
      %v593 = vpop.permute.xlu0 %592
      %596 = vset.pattern.permute.xlu0 0
      %597 = vperm.xlu0 %596, %v361
      %v598 = vpop.permute.xlu0 %597
      %601 = vset.pattern.permute.xlu0 0
      %602 = vperm.xlu0 %601, %v362
      %v603 = vpop.permute.xlu0 %602
      %606 = vset.pattern.permute.xlu0 0
      %607 = vperm.xlu0 %606, %v363
      %v608 = vpop.permute.xlu0 %607
      %611 = vset.pattern.permute.xlu0 0
      %612 = vperm.xlu0 %611, %v364
      %v613 = vpop.permute.xlu0 %612
      %616 = vset.pattern.permute.xlu0 0
      %617 = vperm.xlu0 %616, %v365
      %v618 = vpop.permute.xlu0 %617
      %621 = vset.pattern.permute.xlu0 0
      %622 = vperm.xlu0 %621, %v366
      %v623 = vpop.permute.xlu0 %622
      %626 = vset.pattern.permute.xlu0 0
      %627 = vperm.xlu0 %626, %v367
      %v628 = vpop.permute.xlu0 %627
      %631 = vset.pattern.permute.xlu0 0
      %632 = vperm.xlu0 %631, %v368
      %v633 = vpop.permute.xlu0 %632
      %636 = vset.pattern.permute.xlu0 0
      %637 = vperm.xlu0 %636, %v369
      %v638 = vpop.permute.xlu0 %637
      %641 = vset.pattern.permute.xlu0 0
      %642 = vperm.xlu0 %641, %v370
      %v643 = vpop.permute.xlu0 %642
      %646 = vset.pattern.permute.xlu0 0
      %647 = vperm.xlu0 %646, %v371
      %v648 = vpop.permute.xlu0 %647
      %651 = vset.pattern.permute.xlu0 0
      %652 = vperm.xlu0 %651, %v372
      %v653 = vpop.permute.xlu0 %652
      %656 = vset.pattern.permute.xlu0 0
      %657 = vperm.xlu0 %656, %v373
      %v658 = vpop.permute.xlu0 %657
      %661 = vset.pattern.permute.xlu0 0
      %662 = vperm.xlu0 %661, %v374
      %v663 = vpop.permute.xlu0 %662
      %666 = vset.pattern.permute.xlu0 0
      %667 = vperm.xlu0 %666, %v375
      %v668 = vpop.permute.xlu0 %667
      %671 = vset.pattern.permute.xlu0 0
      %672 = vperm.xlu0 %671, %v376
      %v673 = vpop.permute.xlu0 %672
      %676 = vset.pattern.permute.xlu0 0
      %677 = vperm.xlu0 %676, %v377
      %v678 = vpop.permute.xlu0 %677
      %681 = vset.pattern.permute.xlu0 0
      %682 = vperm.xlu0 %681, %v378
      %v683 = vpop.permute.xlu0 %682
      %686 = vset.pattern.permute.xlu0 0
      %687 = vperm.xlu0 %686, %v379
      %v688 = vpop.permute.xlu0 %687
      %691 = vset.pattern.permute.xlu0 0
      %692 = vperm.xlu0 %691, %v380
      %v693 = vpop.permute.xlu0 %692
      %696 = vset.pattern.permute.xlu0 0
      %697 = vperm.xlu0 %696, %v381
      %v698 = vpop.permute.xlu0 %697
      %701 = vset.pattern.permute.xlu0 0
      %702 = vperm.xlu0 %701, %v382
      %v703 = vpop.permute.xlu0 %702
      %706 = vset.pattern.permute.xlu0 0
      %707 = vperm.xlu0 %706, %v383
      %v708 = vpop.permute.xlu0 %707
      %711 = vset.pattern.permute.xlu0 0
      %712 = vperm.xlu0 %711, %v384
      %v713 = vpop.permute.xlu0 %712
      %716 = vset.pattern.permute.xlu0 0
      %717 = vperm.xlu0 %716, %v385
      %v718 = vpop.permute.xlu0 %717
      %721 = vset.pattern.permute.xlu0 0
      %722 = vperm.xlu0 %721, %v386
      %v723 = vpop.permute.xlu0 %722
      %726 = vset.pattern.permute.xlu0 0
      %727 = vperm.xlu0 %726, %v387
      %v728 = vpop.permute.xlu0 %727
      %v730 = vmul.f32 %v484, %v528
      %v731 = vmul.f32 %v485, %v533
      %v732 = vmul.f32 %v486, %v538
      %v733 = vmul.f32 %v487, %v543
      %v734 = vmul.f32 %v488, %v548
      %v735 = vmul.f32 %v489, %v553
      %v736 = vmul.f32 %v490, %v558
      %v737 = vmul.f32 %v491, %v563
      %v738 = vmul.f32 %v492, %v568
      %v739 = vmul.f32 %v493, %v573
      %v740 = vmul.f32 %v494, %v578
      %v741 = vmul.f32 %v495, %v583
      %v742 = vmul.f32 %v496, %v588
      %v743 = vmul.f32 %v497, %v593
      %v744 = vmul.f32 %v498, %v598
      %v745 = vmul.f32 %v499, %v603
      %v746 = vmul.f32 %v500, %v608
      %v747 = vmul.f32 %v501, %v613
      %v748 = vmul.f32 %v502, %v618
      %v749 = vmul.f32 %v503, %v623
      %v750 = vmul.f32 %v504, %v628
      %v751 = vmul.f32 %v505, %v633
      %v752 = vmul.f32 %v506, %v638
      %v753 = vmul.f32 %v507, %v643
      %v754 = vmul.f32 %v508, %v648
      %v755 = vmul.f32 %v509, %v653
      %v756 = vmul.f32 %v510, %v658
      %v757 = vmul.f32 %v511, %v663
      %v758 = vmul.f32 %v512, %v668
      %v759 = vmul.f32 %v513, %v673
      %v760 = vmul.f32 %v514, %v678
      %v761 = vmul.f32 %v515, %v683
      %v762 = vmul.f32 %v516, %v688
      %v763 = vmul.f32 %v517, %v693
      %v764 = vmul.f32 %v518, %v698
      %v765 = vmul.f32 %v519, %v703
      %v766 = vmul.f32 %v520, %v708
      %v767 = vmul.f32 %v521, %v713
      %v768 = vmul.f32 %v522, %v718
      %v769 = vmul.f32 %v523, %v723
      %v770 = vmul.f32 %v524, %v728
      %vm771 = vcmask 31744
      %772 = vst.msk [vmem:[#allocation2] sm:$0xff] %vm771, 0.0
      %773 = vst.msk [vmem:[#allocation2 + $0x8] sm:$0xff] %vm771, 0.0
      %774 = vst.msk [vmem:[#allocation2 + $0x10] sm:$0xff] %vm771, 0.0
      %775 = vst.msk [vmem:[#allocation2 + $0x18] sm:$0xff] %vm771, 0.0
      %776 = vst.msk [vmem:[#allocation2 + $0x20] sm:$0xff] %vm771, 0.0
      %777 = vst.msk [vmem:[#allocation2 + $0x28] sm:$0xff] %vm771, 0.0
      %778 = vst.msk [vmem:[#allocation2 + $0x30] sm:$0xff] %vm771, 0.0
      %779 = vst.msk [vmem:[#allocation2 + $0x38] sm:$0xff] %vm771, 0.0
      %780 = vst.msk [vmem:[#allocation2 + $0x40] sm:$0xff] %vm771, 0.0
      %781 = vst.msk [vmem:[#allocation2 + $0x48] sm:$0xff] %vm771, 0.0
      %782 = vst.msk [vmem:[#allocation2 + $0x50] sm:$0xff] %vm771, 0.0
      %783 = vst.msk [vmem:[#allocation2 + $0x58] sm:$0xff] %vm771, 0.0
      %784 = vst.msk [vmem:[#allocation2 + $0x60] sm:$0xff] %vm771, 0.0
      %785 = vst.msk [vmem:[#allocation2 + $0x68] sm:$0xff] %vm771, 0.0
      %786 = vst.msk [vmem:[#allocation2 + $0x70] sm:$0xff] %vm771, 0.0
      %787 = vst.msk [vmem:[#allocation2 + $0x78] sm:$0xff] %vm771, 0.0
      %788 = vst.msk [vmem:[#allocation2 + $0x80] sm:$0xff] %vm771, 0.0
      %789 = vst.msk [vmem:[#allocation2 + $0x88] sm:$0xff] %vm771, 0.0
      %790 = vst.msk [vmem:[#allocation2 + $0x90] sm:$0xff] %vm771, 0.0
      %791 = vst.msk [vmem:[#allocation2 + $0x98] sm:$0xff] %vm771, 0.0
      %792 = vst.msk [vmem:[#allocation2 + $0xa0] sm:$0xff] %vm771, 0.0
      %793 = vst.msk [vmem:[#allocation2 + $0xa8] sm:$0xff] %vm771, 0.0
      %794 = vst.msk [vmem:[#allocation2 + $0xb0] sm:$0xff] %vm771, 0.0
      %795 = vst.msk [vmem:[#allocation2 + $0xb8] sm:$0xff] %vm771, 0.0
      %796 = vst.msk [vmem:[#allocation2 + $0xc0] sm:$0xff] %vm771, 0.0
      %797 = vst.msk [vmem:[#allocation2 + $0xc8] sm:$0xff] %vm771, 0.0
      %798 = vst.msk [vmem:[#allocation2 + $0xd0] sm:$0xff] %vm771, 0.0
      %799 = vst.msk [vmem:[#allocation2 + $0xd8] sm:$0xff] %vm771, 0.0
      %800 = vst.msk [vmem:[#allocation2 + $0xe0] sm:$0xff] %vm771, 0.0
      %801 = vst.msk [vmem:[#allocation2 + $0xe8] sm:$0xff] %vm771, 0.0
      %802 = vst.msk [vmem:[#allocation2 + $0xf0] sm:$0xff] %vm771, 0.0
      %803 = vst.msk [vmem:[#allocation2 + $0xf8] sm:$0xff] %vm771, 0.0
      %804 = vst.msk [vmem:[#allocation2 + $0x100] sm:$0xff] %vm771, 0.0
      %805 = vst.msk [vmem:[#allocation2 + $0x108] sm:$0xff] %vm771, 0.0
      %806 = vst.msk [vmem:[#allocation2 + $0x110] sm:$0xff] %vm771, 0.0
      %807 = vst.msk [vmem:[#allocation2 + $0x118] sm:$0xff] %vm771, 0.0
      %808 = vst.msk [vmem:[#allocation2 + $0x120] sm:$0xff] %vm771, 0.0
      %809 = vst.msk [vmem:[#allocation2 + $0x128] sm:$0xff] %vm771, 0.0
      %810 = vst.msk [vmem:[#allocation2 + $0x130] sm:$0xff] %vm771, 0.0
      %811 = vst.msk [vmem:[#allocation2 + $0x138] sm:$0xff] %vm771, 0.0
      %812 = vst.msk [vmem:[#allocation2 + $0x140] sm:$0xff] %vm771, 0.0
      %813 = vst.msk [vmem:[#allocation2 + $0x148] sm:$0xff] %vm771, 0.0
      %814 = vst.msk [vmem:[#allocation2 + $0x150] sm:$0xff] %vm771, 0.0
      %815 = vst.msk [vmem:[#allocation2 + $0x158] sm:$0xff] %vm771, 0.0
      %816 = vst.msk [vmem:[#allocation2 + $0x160] sm:$0xff] %vm771, 0.0
      %817 = vst.msk [vmem:[#allocation2 + $0x168] sm:$0xff] %vm771, 0.0
      %vm818 = vcmask 27648
      %819 = vst.msk [vmem:[#allocation2 + $0x170] sm:$0xf] %vm818, 0.0
      %820 = vst.msk [vmem:[#allocation2 + $0x18] sm:$0xff] %vm771, %v730
      %821 = vst.msk [vmem:[#allocation2 + $0x20] sm:$0xff] %vm771, %v731
      %822 = vst.msk [vmem:[#allocation2 + $0x28] sm:$0xff] %vm771, %v732
      %823 = vst.msk [vmem:[#allocation2 + $0x30] sm:$0xff] %vm771, %v733
      %824 = vst.msk [vmem:[#allocation2 + $0x38] sm:$0xff] %vm771, %v734
      %825 = vst.msk [vmem:[#allocation2 + $0x40] sm:$0xff] %vm771, %v735
      %826 = vst.msk [vmem:[#allocation2 + $0x48] sm:$0xff] %vm771, %v736
      %827 = vst.msk [vmem:[#allocation2 + $0x50] sm:$0xff] %vm771, %v737
      %828 = vst.msk [vmem:[#allocation2 + $0x58] sm:$0xff] %vm771, %v738
      %829 = vst.msk [vmem:[#allocation2 + $0x60] sm:$0xff] %vm771, %v739
      %830 = vst.msk [vmem:[#allocation2 + $0x68] sm:$0xff] %vm771, %v740
      %831 = vst.msk [vmem:[#allocation2 + $0x70] sm:$0xff] %vm771, %v741
      %832 = vst.msk [vmem:[#allocation2 + $0x78] sm:$0xff] %vm771, %v742
      %833 = vst.msk [vmem:[#allocation2 + $0x80] sm:$0xff] %vm771, %v743
      %834 = vst.msk [vmem:[#allocation2 + $0x88] sm:$0xff] %vm771, %v744
      %835 = vst.msk [vmem:[#allocation2 + $0x90] sm:$0xff] %vm771, %v745
      %836 = vst.msk [vmem:[#allocation2 + $0x98] sm:$0xff] %vm771, %v746
      %837 = vst.msk [vmem:[#allocation2 + $0xa0] sm:$0xff] %vm771, %v747
      %838 = vst.msk [vmem:[#allocation2 + $0xa8] sm:$0xff] %vm771, %v748
      %839 = vst.msk [vmem:[#allocation2 + $0xb0] sm:$0xff] %vm771, %v749
      %840 = vst.msk [vmem:[#allocation2 + $0xb8] sm:$0xff] %vm771, %v750
      %841 = vst.msk [vmem:[#allocation2 + $0xc0] sm:$0xff] %vm771, %v751
      %842 = vst.msk [vmem:[#allocation2 + $0xc8] sm:$0xff] %vm771, %v752
      %843 = vst.msk [vmem:[#allocation2 + $0xd0] sm:$0xff] %vm771, %v753
      %844 = vst.msk [vmem:[#allocation2 + $0xd8] sm:$0xff] %vm771, %v754
      %845 = vst.msk [vmem:[#allocation2 + $0xe0] sm:$0xff] %vm771, %v755
      %846 = vst.msk [vmem:[#allocation2 + $0xe8] sm:$0xff] %vm771, %v756
      %847 = vst.msk [vmem:[#allocation2 + $0xf0] sm:$0xff] %vm771, %v757
      %848 = vst.msk [vmem:[#allocation2 + $0xf8] sm:$0xff] %vm771, %v758
      %849 = vst.msk [vmem:[#allocation2 + $0x100] sm:$0xff] %vm771, %v759
      %850 = vst.msk [vmem:[#allocation2 + $0x108] sm:$0xff] %vm771, %v760
      %851 = vst.msk [vmem:[#allocation2 + $0x110] sm:$0xff] %vm771, %v761
      %852 = vst.msk [vmem:[#allocation2 + $0x118] sm:$0xff] %vm771, %v762
      %853 = vst.msk [vmem:[#allocation2 + $0x120] sm:$0xff] %vm771, %v763
      %854 = vst.msk [vmem:[#allocation2 + $0x128] sm:$0xff] %vm771, %v764
      %855 = vst.msk [vmem:[#allocation2 + $0x130] sm:$0xff] %vm771, %v765
      %856 = vst.msk [vmem:[#allocation2 + $0x138] sm:$0xff] %vm771, %v766
      %857 = vst.msk [vmem:[#allocation2 + $0x140] sm:$0xff] %vm771, %v767
      %858 = vst.msk [vmem:[#allocation2 + $0x148] sm:$0xff] %vm771, %v768
      %859 = vst.msk [vmem:[#allocation2 + $0x150] sm:$0xff] %vm771, %v769
      %860 = vst.msk [vmem:[#allocation2 + $0x158] sm:$0xf] %vm818, %v770
      %v861 = vld [vmem:[#allocation2 + $0x5] sm:$0xff]
      %v862 = vld [vmem:[#allocation2 + $0xd] sm:$0xff]
      %v863 = vld [vmem:[#allocation2 + $0x15] sm:$0xff]
      %v864 = vld [vmem:[#allocation2 + $0x1d] sm:$0xff]
      %v865 = vld [vmem:[#allocation2 + $0x25] sm:$0xff]
      %v866 = vld [vmem:[#allocation2 + $0x2d] sm:$0xff]
      %v867 = vld [vmem:[#allocation2 + $0x35] sm:$0xff]
      %v868 = vld [vmem:[#allocation2 + $0x3d] sm:$0xff]
      %v869 = vld [vmem:[#allocation2 + $0x45] sm:$0xff]
      %v870 = vld [vmem:[#allocation2 + $0x4d] sm:$0xff]
      %v871 = vld [vmem:[#allocation2 + $0x55] sm:$0xff]
      %v872 = vld [vmem:[#allocation2 + $0x5d] sm:$0xff]
      %v873 = vld [vmem:[#allocation2 + $0x65] sm:$0xff]
      %v874 = vld [vmem:[#allocation2 + $0x6d] sm:$0xff]
      %v875 = vld [vmem:[#allocation2 + $0x75] sm:$0xff]
      %v876 = vld [vmem:[#allocation2 + $0x7d] sm:$0xff]
      %v877 = vld [vmem:[#allocation2 + $0x85] sm:$0xff]
      %v878 = vld [vmem:[#allocation2 + $0x8d] sm:$0xff]
      %v879 = vld [vmem:[#allocation2 + $0x95] sm:$0xff]
      %v880 = vld [vmem:[#allocation2 + $0x9d] sm:$0xff]
      %v881 = vld [vmem:[#allocation2 + $0xa5] sm:$0xff]
      %v882 = vld [vmem:[#allocation2 + $0xad] sm:$0xff]
      %v883 = vld [vmem:[#allocation2 + $0xb5] sm:$0xff]
      %v884 = vld [vmem:[#allocation2 + $0xbd] sm:$0xff]
      %v885 = vld [vmem:[#allocation2 + $0xc5] sm:$0xff]
      %v886 = vld [vmem:[#allocation2 + $0xcd] sm:$0xff]
      %v887 = vld [vmem:[#allocation2 + $0xd5] sm:$0xff]
      %v888 = vld [vmem:[#allocation2 + $0xdd] sm:$0xff]
      %v889 = vld [vmem:[#allocation2 + $0xe5] sm:$0xff]
      %v890 = vld [vmem:[#allocation2 + $0xed] sm:$0xff]
      %v891 = vld [vmem:[#allocation2 + $0xf5] sm:$0xff]
      %v892 = vld [vmem:[#allocation2 + $0xfd] sm:$0xff]
      %v893 = vld [vmem:[#allocation2 + $0x105] sm:$0xff]
      %v894 = vld [vmem:[#allocation2 + $0x10d] sm:$0xff]
      %v895 = vld [vmem:[#allocation2 + $0x115] sm:$0xff]
      %v896 = vld [vmem:[#allocation2 + $0x11d] sm:$0xff]
      %v897 = vld [vmem:[#allocation2 + $0x125] sm:$0xff]
      %v898 = vld [vmem:[#allocation2 + $0x12d] sm:$0xff]
      %v899 = vld [vmem:[#allocation2 + $0x135] sm:$0xff]
      %v900 = vld [vmem:[#allocation2 + $0x13d] sm:$0xff]
      %v901 = vld [vmem:[#allocation2 + $0x145] sm:$0xf]
      %v902 = vld [vmem:[%s4] sm:$0xf]
      %v903 = vld [vmem:[#allocation2 + $0x6] sm:$0xff]
      %v904 = vld [vmem:[#allocation2 + $0xe] sm:$0xff]
      %v905 = vld [vmem:[#allocation2 + $0x16] sm:$0xff]
      %v906 = vld [vmem:[#allocation2 + $0x1e] sm:$0xff]
      %v907 = vld [vmem:[#allocation2 + $0x26] sm:$0xff]
      %v908 = vld [vmem:[#allocation2 + $0x2e] sm:$0xff]
      %v909 = vld [vmem:[#allocation2 + $0x36] sm:$0xff]
      %v910 = vld [vmem:[#allocation2 + $0x3e] sm:$0xff]
      %v911 = vld [vmem:[#allocation2 + $0x46] sm:$0xff]
      %v912 = vld [vmem:[#allocation2 + $0x4e] sm:$0xff]
      %v913 = vld [vmem:[#allocation2 + $0x56] sm:$0xff]
      %v914 = vld [vmem:[#allocation2 + $0x5e] sm:$0xff]
      %v915 = vld [vmem:[#allocation2 + $0x66] sm:$0xff]
      %v916 = vld [vmem:[#allocation2 + $0x6e] sm:$0xff]
      %v917 = vld [vmem:[#allocation2 + $0x76] sm:$0xff]
      %v918 = vld [vmem:[#allocation2 + $0x7e] sm:$0xff]
      %v919 = vld [vmem:[#allocation2 + $0x86] sm:$0xff]
      %v920 = vld [vmem:[#allocation2 + $0x8e] sm:$0xff]
      %v921 = vld [vmem:[#allocation2 + $0x96] sm:$0xff]
      %v922 = vld [vmem:[#allocation2 + $0x9e] sm:$0xff]
      %v923 = vld [vmem:[#allocation2 + $0xa6] sm:$0xff]
      %v924 = vld [vmem:[#allocation2 + $0xae] sm:$0xff]
      %v925 = vld [vmem:[#allocation2 + $0xb6] sm:$0xff]
      %v926 = vld [vmem:[#allocation2 + $0xbe] sm:$0xff]
      %v927 = vld [vmem:[#allocation2 + $0xc6] sm:$0xff]
      %v928 = vld [vmem:[#allocation2 + $0xce] sm:$0xff]
      %v929 = vld [vmem:[#allocation2 + $0xd6] sm:$0xff]
      %v930 = vld [vmem:[#allocation2 + $0xde] sm:$0xff]
      %v931 = vld [vmem:[#allocation2 + $0xe6] sm:$0xff]
      %v932 = vld [vmem:[#allocation2 + $0xee] sm:$0xff]
      %v933 = vld [vmem:[#allocation2 + $0xf6] sm:$0xff]
      %v934 = vld [vmem:[#allocation2 + $0xfe] sm:$0xff]
      %v935 = vld [vmem:[#allocation2 + $0x106] sm:$0xff]
      %v936 = vld [vmem:[#allocation2 + $0x10e] sm:$0xff]
      %v937 = vld [vmem:[#allocation2 + $0x116] sm:$0xff]
      %v938 = vld [vmem:[#allocation2 + $0x11e] sm:$0xff]
      %v939 = vld [vmem:[#allocation2 + $0x126] sm:$0xff]
      %v940 = vld [vmem:[#allocation2 + $0x12e] sm:$0xff]
      %v941 = vld [vmem:[#allocation2 + $0x136] sm:$0xff]
      %v942 = vld [vmem:[#allocation2 + $0x13e] sm:$0xff]
      %v943 = vld [vmem:[#allocation2 + $0x146] sm:$0xf]
      %s944 = scalar_lea.vmem %s4, 4
      %v945 = vld [vmem:[%s944] sm:$0xf]
      %v947 = vsel %vm771, %v903, 0
      %v950 = vsel %vm771, %v904, 0
      %v953 = vsel %vm771, %v905, 0
      %v956 = vsel %vm771, %v906, 0
      %v959 = vsel %vm771, %v907, 0
      %v962 = vsel %vm771, %v908, 0
      %v965 = vsel %vm771, %v909, 0
      %v968 = vsel %vm771, %v910, 0
      %v971 = vsel %vm771, %v911, 0
      %v974 = vsel %vm771, %v912, 0
      %v977 = vsel %vm771, %v913, 0
      %v980 = vsel %vm771, %v914, 0
      %v983 = vsel %vm771, %v915, 0
      %v986 = vsel %vm771, %v916, 0
      %v989 = vsel %vm771, %v917, 0
      %v992 = vsel %vm771, %v918, 0
      %v995 = vsel %vm771, %v919, 0
      %v998 = vsel %vm771, %v920, 0
      %v1001 = vsel %vm771, %v921, 0
      %v1004 = vsel %vm771, %v922, 0
      %v1007 = vsel %vm771, %v923, 0
      %v1010 = vsel %vm771, %v924, 0
      %v1013 = vsel %vm771, %v925, 0
      %v1016 = vsel %vm771, %v926, 0
      %v1019 = vsel %vm771, %v927, 0
      %v1022 = vsel %vm771, %v928, 0
      %v1025 = vsel %vm771, %v929, 0
      %v1028 = vsel %vm771, %v930, 0
      %v1031 = vsel %vm771, %v931, 0
      %v1034 = vsel %vm771, %v932, 0
      %v1037 = vsel %vm771, %v933, 0
      %v1040 = vsel %vm771, %v934, 0
      %v1043 = vsel %vm771, %v935, 0
      %v1046 = vsel %vm771, %v936, 0
      %v1049 = vsel %vm771, %v937, 0
      %v1052 = vsel %vm771, %v938, 0
      %v1055 = vsel %vm771, %v939, 0
      %v1058 = vsel %vm771, %v940, 0
      %v1061 = vsel %vm771, %v941, 0
      %v1064 = vsel %vm771, %v942, 0
      %v1067 = vsel %vm771, %v943, 0
      %vm1069 = vcmask 1043456
      %v1071 = vsel %vm1069, %v945, 0
      %1073 = vmatprep.subr.mxu0 0.0
      %1074 = vmatpush1.msra.mxu0 0.0
      %1075 = vmatprep.subr.mxu0 0.0
      %1076 = vmatpush1.msra.mxu0 0.0
      %1077 = vmatprep.subr.mxu0 0.0
      %1078 = vmatpush1.msra.mxu0 0.0
      %1079 = vmatprep.subr.mxu0 0.0
      %1080 = vmatpush1.msra.mxu0 0.0
      %1081 = vmatprep.subr.mxu0 0.0
      %1082 = vmatpush1.msra.mxu0 0.0
      %1083 = vmatprep.subr.mxu0 0.0
      %1084 = vmatpush1.msra.mxu0 0.0
      %1085 = vmatprep.subr.mxu0 0.0
      %1086 = vmatpush1.msra.mxu0 0.0
      %1087 = vmatprep.subr.mxu0 0.0
      %1088 = vmatpush1.msra.mxu0 0.0
      %1089 = vmatprep.subr.mxu0 0.0
      %1090 = vmatpush1.msra.mxu0 0.0
      %1091 = vmatprep.subr.mxu0 0.0
      %1092 = vmatpush1.msra.mxu0 0.0
      %1093 = vmatprep.subr.mxu0 0.0
      %1094 = vmatpush1.msra.mxu0 0.0
      %1095 = vmatprep.subr.mxu0 0.0
      %1096 = vmatpush1.msra.mxu0 0.0
      %1097 = vmatprep.subr.mxu0 0.0
      %1098 = vmatpush1.msra.mxu0 0.0
      %1099 = vmatprep.subr.mxu0 0.0
      %1100 = vmatpush1.msra.mxu0 0.0
      %1101 = vmatprep.subr.mxu0 0.0
      %1102 = vmatpush1.msra.mxu0 0.0
      %1103 = vmatprep.subr.mxu0 0.0
      %1104 = vmatpush1.msra.mxu0 %v1071
      %1105 = vmatprep.subr.mxu0 0.0
      %1106 = vmatpush2.msra.mxu0 0.0
      %1107 = vmatprep.subr.mxu0 0.0
      %1108 = vmatpush2.msra.mxu0 0.0
      %1109 = vmatprep.subr.mxu0 0.0
      %1110 = vmatpush2.msra.mxu0 0.0
      %1111 = vmatprep.subr.mxu0 0.0
      %1112 = vmatpush2.msra.mxu0 0.0
      %1113 = vmatprep.subr.mxu0 0.0
      %1114 = vmatpush2.msra.mxu0 0.0
      %1115 = vmatprep.subr.mxu0 0.0
      %1116 = vmatpush2.msra.mxu0 0.0
      %1117 = vmatprep.subr.mxu0 0.0
      %1118 = vmatpush2.msra.mxu0 0.0
      %1119 = vmatprep.subr.mxu0 0.0
      %1120 = vmatpush2.msra.mxu0 0.0
      %1121 = vmatprep.subr.mxu0 0.0
      %1122 = vmatpush2.msra.mxu0 0.0
      %1123 = vmatprep.subr.mxu0 0.0
      %1124 = vmatpush2.msra.mxu0 0.0
      %1125 = vmatprep.subr.mxu0 0.0
      %1126 = vmatpush2.msra.mxu0 0.0
      %1127 = vmatprep.subr.mxu0 0.0
      %1128 = vmatpush2.msra.mxu0 0.0
      %1129 = vmatprep.subr.mxu0 0.0
      %1130 = vmatpush2.msra.mxu0 0.0
      %1131 = vmatprep.subr.mxu0 0.0
      %1132 = vmatpush2.msra.mxu0 0.0
      %1133 = vmatprep.subr.mxu0 0.0
      %1134 = vmatpush2.msra.mxu0 0.0
      %1135 = vmatprep.subr.mxu0 0.0
      %1136 = vmatpush2.msra.mxu0 0.0
      %1137 = vmatprep.mubr.f32.mxu0 0.0
      %1138 = vmatmul.mubr.f32.gmra.mxu0 %v947
      %v1139 = vpop.f32.mrf.mxu0
      %v1140 = vadd.f32 0.0, %v1139
      %v1141 = vpop.f32.mrf.mxu0
      %1142 = vmatprep.mubr.f32.mxu0 0.0
      %1143 = vmatmul.mubr.f32.gmra.mxu0 %v950
      %v1144 = vpop.f32.mrf.mxu0
      %v1145 = vadd.f32 0.0, %v1144
      %v1146 = vpop.f32.mrf.mxu0
      %1147 = vmatprep.mubr.f32.mxu0 0.0
      %1148 = vmatmul.mubr.f32.gmra.mxu0 %v953
      %v1149 = vpop.f32.mrf.mxu0
      %v1150 = vadd.f32 0.0, %v1149
      %v1151 = vpop.f32.mrf.mxu0
      %1152 = vmatprep.mubr.f32.mxu0 0.0
      %1153 = vmatmul.mubr.f32.gmra.mxu0 %v956
      %v1154 = vpop.f32.mrf.mxu0
      %v1155 = vadd.f32 0.0, %v1154
      %v1156 = vpop.f32.mrf.mxu0
      %1157 = vmatprep.mubr.f32.mxu0 0.0
      %1158 = vmatmul.mubr.f32.gmra.mxu0 %v959
      %v1159 = vpop.f32.mrf.mxu0
      %v1160 = vadd.f32 0.0, %v1159
      %v1161 = vpop.f32.mrf.mxu0
      %1162 = vmatprep.mubr.f32.mxu0 0.0
      %1163 = vmatmul.mubr.f32.gmra.mxu0 %v962
      %v1164 = vpop.f32.mrf.mxu0
      %v1165 = vadd.f32 0.0, %v1164
      %v1166 = vpop.f32.mrf.mxu0
      %1167 = vmatprep.mubr.f32.mxu0 0.0
      %1168 = vmatmul.mubr.f32.gmra.mxu0 %v965
      %v1169 = vpop.f32.mrf.mxu0
      %v1170 = vadd.f32 0.0, %v1169
      %v1171 = vpop.f32.mrf.mxu0
      %1172 = vmatprep.mubr.f32.mxu0 0.0
      %1173 = vmatmul.mubr.f32.gmra.mxu0 %v968
      %v1174 = vpop.f32.mrf.mxu0
      %v1175 = vadd.f32 0.0, %v1174
      %v1176 = vpop.f32.mrf.mxu0
      %1177 = vmatprep.mubr.f32.mxu0 0.0
      %1178 = vmatmul.mubr.f32.gmra.mxu0 %v971
      %v1179 = vpop.f32.mrf.mxu0
      %v1180 = vadd.f32 0.0, %v1179
      %v1181 = vpop.f32.mrf.mxu0
      %1182 = vmatprep.mubr.f32.mxu0 0.0
      %1183 = vmatmul.mubr.f32.gmra.mxu0 %v974
      %v1184 = vpop.f32.mrf.mxu0
      %v1185 = vadd.f32 0.0, %v1184
      %v1186 = vpop.f32.mrf.mxu0
      %1187 = vmatprep.mubr.f32.mxu0 0.0
      %1188 = vmatmul.mubr.f32.gmra.mxu0 %v977
      %v1189 = vpop.f32.mrf.mxu0
      %v1190 = vadd.f32 0.0, %v1189
      %v1191 = vpop.f32.mrf.mxu0
      %1192 = vmatprep.mubr.f32.mxu0 0.0
      %1193 = vmatmul.mubr.f32.gmra.mxu0 %v980
      %v1194 = vpop.f32.mrf.mxu0
      %v1195 = vadd.f32 0.0, %v1194
      %v1196 = vpop.f32.mrf.mxu0
      %1197 = vmatprep.mubr.f32.mxu0 0.0
      %1198 = vmatmul.mubr.f32.gmra.mxu0 %v983
      %v1199 = vpop.f32.mrf.mxu0
      %v1200 = vadd.f32 0.0, %v1199
      %v1201 = vpop.f32.mrf.mxu0
      %1202 = vmatprep.mubr.f32.mxu0 0.0
      %1203 = vmatmul.mubr.f32.gmra.mxu0 %v986
      %v1204 = vpop.f32.mrf.mxu0
      %v1205 = vadd.f32 0.0, %v1204
      %v1206 = vpop.f32.mrf.mxu0
      %1207 = vmatprep.mubr.f32.mxu0 0.0
      %1208 = vmatmul.mubr.f32.gmra.mxu0 %v989
      %v1209 = vpop.f32.mrf.mxu0
      %v1210 = vadd.f32 0.0, %v1209
      %v1211 = vpop.f32.mrf.mxu0
      %1212 = vmatprep.mubr.f32.mxu0 0.0
      %1213 = vmatmul.mubr.f32.gmra.mxu0 %v992
      %v1214 = vpop.f32.mrf.mxu0
      %v1215 = vadd.f32 0.0, %v1214
      %v1216 = vpop.f32.mrf.mxu0
      %1217 = vmatprep.mubr.f32.mxu0 0.0
      %1218 = vmatmul.mubr.f32.gmra.mxu0 %v995
      %v1219 = vpop.f32.mrf.mxu0
      %v1220 = vadd.f32 0.0, %v1219
      %v1221 = vpop.f32.mrf.mxu0
      %1222 = vmatprep.mubr.f32.mxu0 0.0
      %1223 = vmatmul.mubr.f32.gmra.mxu0 %v998
      %v1224 = vpop.f32.mrf.mxu0
      %v1225 = vadd.f32 0.0, %v1224
      %v1226 = vpop.f32.mrf.mxu0
      %1227 = vmatprep.mubr.f32.mxu0 0.0
      %1228 = vmatmul.mubr.f32.gmra.mxu0 %v1001
      %v1229 = vpop.f32.mrf.mxu0
      %v1230 = vadd.f32 0.0, %v1229
      %v1231 = vpop.f32.mrf.mxu0
      %1232 = vmatprep.mubr.f32.mxu0 0.0
      %1233 = vmatmul.mubr.f32.gmra.mxu0 %v1004
      %v1234 = vpop.f32.mrf.mxu0
      %v1235 = vadd.f32 0.0, %v1234
      %v1236 = vpop.f32.mrf.mxu0
      %1237 = vmatprep.mubr.f32.mxu0 0.0
      %1238 = vmatmul.mubr.f32.gmra.mxu0 %v1007
      %v1239 = vpop.f32.mrf.mxu0
      %v1240 = vadd.f32 0.0, %v1239
      %v1241 = vpop.f32.mrf.mxu0
      %1242 = vmatprep.mubr.f32.mxu0 0.0
      %1243 = vmatmul.mubr.f32.gmra.mxu0 %v1010
      %v1244 = vpop.f32.mrf.mxu0
      %v1245 = vadd.f32 0.0, %v1244
      %v1246 = vpop.f32.mrf.mxu0
      %1247 = vmatprep.mubr.f32.mxu0 0.0
      %1248 = vmatmul.mubr.f32.gmra.mxu0 %v1013
      %v1249 = vpop.f32.mrf.mxu0
      %v1250 = vadd.f32 0.0, %v1249
      %v1251 = vpop.f32.mrf.mxu0
      %1252 = vmatprep.mubr.f32.mxu0 0.0
      %1253 = vmatmul.mubr.f32.gmra.mxu0 %v1016
      %v1254 = vpop.f32.mrf.mxu0
      %v1255 = vadd.f32 0.0, %v1254
      %v1256 = vpop.f32.mrf.mxu0
      %1257 = vmatprep.mubr.f32.mxu0 0.0
      %1258 = vmatmul.mubr.f32.gmra.mxu0 %v1019
      %v1259 = vpop.f32.mrf.mxu0
      %v1260 = vadd.f32 0.0, %v1259
      %v1261 = vpop.f32.mrf.mxu0
      %1262 = vmatprep.mubr.f32.mxu0 0.0
      %1263 = vmatmul.mubr.f32.gmra.mxu0 %v1022
      %v1264 = vpop.f32.mrf.mxu0
      %v1265 = vadd.f32 0.0, %v1264
      %v1266 = vpop.f32.mrf.mxu0
      %1267 = vmatprep.mubr.f32.mxu0 0.0
      %1268 = vmatmul.mubr.f32.gmra.mxu0 %v1025
      %v1269 = vpop.f32.mrf.mxu0
      %v1270 = vadd.f32 0.0, %v1269
      %v1271 = vpop.f32.mrf.mxu0
      %1272 = vmatprep.mubr.f32.mxu0 0.0
      %1273 = vmatmul.mubr.f32.gmra.mxu0 %v1028
      %v1274 = vpop.f32.mrf.mxu0
      %v1275 = vadd.f32 0.0, %v1274
      %v1276 = vpop.f32.mrf.mxu0
      %1277 = vmatprep.mubr.f32.mxu0 0.0
      %1278 = vmatmul.mubr.f32.gmra.mxu0 %v1031
      %v1279 = vpop.f32.mrf.mxu0
      %v1280 = vadd.f32 0.0, %v1279
      %v1281 = vpop.f32.mrf.mxu0
      %1282 = vmatprep.mubr.f32.mxu0 0.0
      %1283 = vmatmul.mubr.f32.gmra.mxu0 %v1034
      %v1284 = vpop.f32.mrf.mxu0
      %v1285 = vadd.f32 0.0, %v1284
      %v1286 = vpop.f32.mrf.mxu0
      %1287 = vmatprep.mubr.f32.mxu0 0.0
      %1288 = vmatmul.mubr.f32.gmra.mxu0 %v1037
      %v1289 = vpop.f32.mrf.mxu0
      %v1290 = vadd.f32 0.0, %v1289
      %v1291 = vpop.f32.mrf.mxu0
      %1292 = vmatprep.mubr.f32.mxu0 0.0
      %1293 = vmatmul.mubr.f32.gmra.mxu0 %v1040
      %v1294 = vpop.f32.mrf.mxu0
      %v1295 = vadd.f32 0.0, %v1294
      %v1296 = vpop.f32.mrf.mxu0
      %1297 = vmatprep.mubr.f32.mxu0 0.0
      %1298 = vmatmul.mubr.f32.gmra.mxu0 %v1043
      %v1299 = vpop.f32.mrf.mxu0
      %v1300 = vadd.f32 0.0, %v1299
      %v1301 = vpop.f32.mrf.mxu0
      %1302 = vmatprep.mubr.f32.mxu0 0.0
      %1303 = vmatmul.mubr.f32.gmra.mxu0 %v1046
      %v1304 = vpop.f32.mrf.mxu0
      %v1305 = vadd.f32 0.0, %v1304
      %v1306 = vpop.f32.mrf.mxu0
      %1307 = vmatprep.mubr.f32.mxu0 0.0
      %1308 = vmatmul.mubr.f32.gmra.mxu0 %v1049
      %v1309 = vpop.f32.mrf.mxu0
      %v1310 = vadd.f32 0.0, %v1309
      %v1311 = vpop.f32.mrf.mxu0
      %1312 = vmatprep.mubr.f32.mxu0 0.0
      %1313 = vmatmul.mubr.f32.gmra.mxu0 %v1052
      %v1314 = vpop.f32.mrf.mxu0
      %v1315 = vadd.f32 0.0, %v1314
      %v1316 = vpop.f32.mrf.mxu0
      %1317 = vmatprep.mubr.f32.mxu0 0.0
      %1318 = vmatmul.mubr.f32.gmra.mxu0 %v1055
      %v1319 = vpop.f32.mrf.mxu0
      %v1320 = vadd.f32 0.0, %v1319
      %v1321 = vpop.f32.mrf.mxu0
      %1322 = vmatprep.mubr.f32.mxu0 0.0
      %1323 = vmatmul.mubr.f32.gmra.mxu0 %v1058
      %v1324 = vpop.f32.mrf.mxu0
      %v1325 = vadd.f32 0.0, %v1324
      %v1326 = vpop.f32.mrf.mxu0
      %1327 = vmatprep.mubr.f32.mxu0 0.0
      %1328 = vmatmul.mubr.f32.gmra.mxu0 %v1061
      %v1329 = vpop.f32.mrf.mxu0
      %v1330 = vadd.f32 0.0, %v1329
      %v1331 = vpop.f32.mrf.mxu0
      %1332 = vmatprep.mubr.f32.mxu0 0.0
      %1333 = vmatmul.mubr.f32.gmra.mxu0 %v1064
      %v1334 = vpop.f32.mrf.mxu0
      %v1335 = vadd.f32 0.0, %v1334
      %v1336 = vpop.f32.mrf.mxu0
      %1337 = vmatprep.mubr.f32.mxu0 0.0
      %1338 = vmatmul.mubr.f32.gmra.mxu0 %v1067
      %v1339 = vpop.f32.mrf.mxu0
      %v1340 = vadd.f32 0.0, %v1339
      %v1341 = vpop.f32.mrf.mxu0
      %1342 = vdwg.mxu0
      %v1344 = vsel %vm771, %v861, 0
      %v1347 = vsel %vm771, %v862, 0
      %v1350 = vsel %vm771, %v863, 0
      %v1353 = vsel %vm771, %v864, 0
      %v1356 = vsel %vm771, %v865, 0
      %v1359 = vsel %vm771, %v866, 0
      %v1362 = vsel %vm771, %v867, 0
      %v1365 = vsel %vm771, %v868, 0
      %v1368 = vsel %vm771, %v869, 0
      %v1371 = vsel %vm771, %v870, 0
      %v1374 = vsel %vm771, %v871, 0
      %v1377 = vsel %vm771, %v872, 0
      %v1380 = vsel %vm771, %v873, 0
      %v1383 = vsel %vm771, %v874, 0
      %v1386 = vsel %vm771, %v875, 0
      %v1389 = vsel %vm771, %v876, 0
      %v1392 = vsel %vm771, %v877, 0
      %v1395 = vsel %vm771, %v878, 0
      %v1398 = vsel %vm771, %v879, 0
      %v1401 = vsel %vm771, %v880, 0
      %v1404 = vsel %vm771, %v881, 0
      %v1407 = vsel %vm771, %v882, 0
      %v1410 = vsel %vm771, %v883, 0
      %v1413 = vsel %vm771, %v884, 0
      %v1416 = vsel %vm771, %v885, 0
      %v1419 = vsel %vm771, %v886, 0
      %v1422 = vsel %vm771, %v887, 0
      %v1425 = vsel %vm771, %v888, 0
      %v1428 = vsel %vm771, %v889, 0
      %v1431 = vsel %vm771, %v890, 0
      %v1434 = vsel %vm771, %v891, 0
      %v1437 = vsel %vm771, %v892, 0
      %v1440 = vsel %vm771, %v893, 0
      %v1443 = vsel %vm771, %v894, 0
      %v1446 = vsel %vm771, %v895, 0
      %v1449 = vsel %vm771, %v896, 0
      %v1452 = vsel %vm771, %v897, 0
      %v1455 = vsel %vm771, %v898, 0
      %v1458 = vsel %vm771, %v899, 0
      %v1461 = vsel %vm771, %v900, 0
      %v1464 = vsel %vm771, %v901, 0
      %v1467 = vsel %vm1069, %v902, 0
      %1469 = vmatprep.subr.mxu0 0.0
      %1470 = vmatpush1.msra.mxu0 0.0
      %1471 = vmatprep.subr.mxu0 0.0
      %1472 = vmatpush1.msra.mxu0 0.0
      %1473 = vmatprep.subr.mxu0 0.0
      %1474 = vmatpush1.msra.mxu0 0.0
      %1475 = vmatprep.subr.mxu0 0.0
      %1476 = vmatpush1.msra.mxu0 0.0
      %1477 = vmatprep.subr.mxu0 0.0
      %1478 = vmatpush1.msra.mxu0 0.0
      %1479 = vmatprep.subr.mxu0 0.0
      %1480 = vmatpush1.msra.mxu0 0.0
      %1481 = vmatprep.subr.mxu0 0.0
      %1482 = vmatpush1.msra.mxu0 0.0
      %1483 = vmatprep.subr.mxu0 0.0
      %1484 = vmatpush1.msra.mxu0 0.0
      %1485 = vmatprep.subr.mxu0 0.0
      %1486 = vmatpush1.msra.mxu0 0.0
      %1487 = vmatprep.subr.mxu0 0.0
      %1488 = vmatpush1.msra.mxu0 0.0
      %1489 = vmatprep.subr.mxu0 0.0
      %1490 = vmatpush1.msra.mxu0 0.0
      %1491 = vmatprep.subr.mxu0 0.0
      %1492 = vmatpush1.msra.mxu0 0.0
      %1493 = vmatprep.subr.mxu0 0.0
      %1494 = vmatpush1.msra.mxu0 0.0
      %1495 = vmatprep.subr.mxu0 0.0
      %1496 = vmatpush1.msra.mxu0 0.0
      %1497 = vmatprep.subr.mxu0 0.0
      %1498 = vmatpush1.msra.mxu0 0.0
      %1499 = vmatprep.subr.mxu0 0.0
      %1500 = vmatpush1.msra.mxu0 %v1467
      %1501 = vmatprep.subr.mxu0 0.0
      %1502 = vmatpush2.msra.mxu0 0.0
      %1503 = vmatprep.subr.mxu0 0.0
      %1504 = vmatpush2.msra.mxu0 0.0
      %1505 = vmatprep.subr.mxu0 0.0
      %1506 = vmatpush2.msra.mxu0 0.0
      %1507 = vmatprep.subr.mxu0 0.0
      %1508 = vmatpush2.msra.mxu0 0.0
      %1509 = vmatprep.subr.mxu0 0.0
      %1510 = vmatpush2.msra.mxu0 0.0
      %1511 = vmatprep.subr.mxu0 0.0
      %1512 = vmatpush2.msra.mxu0 0.0
      %1513 = vmatprep.subr.mxu0 0.0
      %1514 = vmatpush2.msra.mxu0 0.0
      %1515 = vmatprep.subr.mxu0 0.0
      %1516 = vmatpush2.msra.mxu0 0.0
      %1517 = vmatprep.subr.mxu0 0.0
      %1518 = vmatpush2.msra.mxu0 0.0
      %1519 = vmatprep.subr.mxu0 0.0
      %1520 = vmatpush2.msra.mxu0 0.0
      %1521 = vmatprep.subr.mxu0 0.0
      %1522 = vmatpush2.msra.mxu0 0.0
      %1523 = vmatprep.subr.mxu0 0.0
      %1524 = vmatpush2.msra.mxu0 0.0
      %1525 = vmatprep.subr.mxu0 0.0
      %1526 = vmatpush2.msra.mxu0 0.0
      %1527 = vmatprep.subr.mxu0 0.0
      %1528 = vmatpush2.msra.mxu0 0.0
      %1529 = vmatprep.subr.mxu0 0.0
      %1530 = vmatpush2.msra.mxu0 0.0
      %1531 = vmatprep.subr.mxu0 0.0
      %1532 = vmatpush2.msra.mxu0 0.0
      %1533 = vmatprep.mubr.f32.mxu0 0.0
      %1534 = vmatmul.mubr.f32.gmra.mxu0 %v1344
      %v1535 = vpop.f32.mrf.mxu0
      %v1536 = vadd.f32 %v1140, %v1535
      %v1537 = vpop.f32.mrf.mxu0
      %1538 = vmatprep.mubr.f32.mxu0 0.0
      %1539 = vmatmul.mubr.f32.gmra.mxu0 %v1347
      %v1540 = vpop.f32.mrf.mxu0
      %v1541 = vadd.f32 %v1145, %v1540
      %v1542 = vpop.f32.mrf.mxu0
      %1543 = vmatprep.mubr.f32.mxu0 0.0
      %1544 = vmatmul.mubr.f32.gmra.mxu0 %v1350
      %v1545 = vpop.f32.mrf.mxu0
      %v1546 = vadd.f32 %v1150, %v1545
      %v1547 = vpop.f32.mrf.mxu0
      %1548 = vmatprep.mubr.f32.mxu0 0.0
      %1549 = vmatmul.mubr.f32.gmra.mxu0 %v1353
      %v1550 = vpop.f32.mrf.mxu0
      %v1551 = vadd.f32 %v1155, %v1550
      %v1552 = vpop.f32.mrf.mxu0
      %1553 = vmatprep.mubr.f32.mxu0 0.0
      %1554 = vmatmul.mubr.f32.gmra.mxu0 %v1356
      %v1555 = vpop.f32.mrf.mxu0
      %v1556 = vadd.f32 %v1160, %v1555
      %v1557 = vpop.f32.mrf.mxu0
      %1558 = vmatprep.mubr.f32.mxu0 0.0
      %1559 = vmatmul.mubr.f32.gmra.mxu0 %v1359
      %v1560 = vpop.f32.mrf.mxu0
      %v1561 = vadd.f32 %v1165, %v1560
      %v1562 = vpop.f32.mrf.mxu0
      %1563 = vmatprep.mubr.f32.mxu0 0.0
      %1564 = vmatmul.mubr.f32.gmra.mxu0 %v1362
      %v1565 = vpop.f32.mrf.mxu0
      %v1566 = vadd.f32 %v1170, %v1565
      %v1567 = vpop.f32.mrf.mxu0
      %1568 = vmatprep.mubr.f32.mxu0 0.0
      %1569 = vmatmul.mubr.f32.gmra.mxu0 %v1365
      %v1570 = vpop.f32.mrf.mxu0
      %v1571 = vadd.f32 %v1175, %v1570
      %v1572 = vpop.f32.mrf.mxu0
      %1573 = vmatprep.mubr.f32.mxu0 0.0
      %1574 = vmatmul.mubr.f32.gmra.mxu0 %v1368
      %v1575 = vpop.f32.mrf.mxu0
      %v1576 = vadd.f32 %v1180, %v1575
      %v1577 = vpop.f32.mrf.mxu0
      %1578 = vmatprep.mubr.f32.mxu0 0.0
      %1579 = vmatmul.mubr.f32.gmra.mxu0 %v1371
      %v1580 = vpop.f32.mrf.mxu0
      %v1581 = vadd.f32 %v1185, %v1580
      %v1582 = vpop.f32.mrf.mxu0
      %1583 = vmatprep.mubr.f32.mxu0 0.0
      %1584 = vmatmul.mubr.f32.gmra.mxu0 %v1374
      %v1585 = vpop.f32.mrf.mxu0
      %v1586 = vadd.f32 %v1190, %v1585
      %v1587 = vpop.f32.mrf.mxu0
      %1588 = vmatprep.mubr.f32.mxu0 0.0
      %1589 = vmatmul.mubr.f32.gmra.mxu0 %v1377
      %v1590 = vpop.f32.mrf.mxu0
      %v1591 = vadd.f32 %v1195, %v1590
      %v1592 = vpop.f32.mrf.mxu0
      %1593 = vmatprep.mubr.f32.mxu0 0.0
      %1594 = vmatmul.mubr.f32.gmra.mxu0 %v1380
      %v1595 = vpop.f32.mrf.mxu0
      %v1596 = vadd.f32 %v1200, %v1595
      %v1597 = vpop.f32.mrf.mxu0
      %1598 = vmatprep.mubr.f32.mxu0 0.0
      %1599 = vmatmul.mubr.f32.gmra.mxu0 %v1383
      %v1600 = vpop.f32.mrf.mxu0
      %v1601 = vadd.f32 %v1205, %v1600
      %v1602 = vpop.f32.mrf.mxu0
      %1603 = vmatprep.mubr.f32.mxu0 0.0
      %1604 = vmatmul.mubr.f32.gmra.mxu0 %v1386
      %v1605 = vpop.f32.mrf.mxu0
      %v1606 = vadd.f32 %v1210, %v1605
      %v1607 = vpop.f32.mrf.mxu0
      %1608 = vmatprep.mubr.f32.mxu0 0.0
      %1609 = vmatmul.mubr.f32.gmra.mxu0 %v1389
      %v1610 = vpop.f32.mrf.mxu0
      %v1611 = vadd.f32 %v1215, %v1610
      %v1612 = vpop.f32.mrf.mxu0
      %1613 = vmatprep.mubr.f32.mxu0 0.0
      %1614 = vmatmul.mubr.f32.gmra.mxu0 %v1392
      %v1615 = vpop.f32.mrf.mxu0
      %v1616 = vadd.f32 %v1220, %v1615
      %v1617 = vpop.f32.mrf.mxu0
      %1618 = vmatprep.mubr.f32.mxu0 0.0
      %1619 = vmatmul.mubr.f32.gmra.mxu0 %v1395
      %v1620 = vpop.f32.mrf.mxu0
      %v1621 = vadd.f32 %v1225, %v1620
      %v1622 = vpop.f32.mrf.mxu0
      %1623 = vmatprep.mubr.f32.mxu0 0.0
      %1624 = vmatmul.mubr.f32.gmra.mxu0 %v1398
      %v1625 = vpop.f32.mrf.mxu0
      %v1626 = vadd.f32 %v1230, %v1625
      %v1627 = vpop.f32.mrf.mxu0
      %1628 = vmatprep.mubr.f32.mxu0 0.0
      %1629 = vmatmul.mubr.f32.gmra.mxu0 %v1401
      %v1630 = vpop.f32.mrf.mxu0
      %v1631 = vadd.f32 %v1235, %v1630
      %v1632 = vpop.f32.mrf.mxu0
      %1633 = vmatprep.mubr.f32.mxu0 0.0
      %1634 = vmatmul.mubr.f32.gmra.mxu0 %v1404
      %v1635 = vpop.f32.mrf.mxu0
      %v1636 = vadd.f32 %v1240, %v1635
      %v1637 = vpop.f32.mrf.mxu0
      %1638 = vmatprep.mubr.f32.mxu0 0.0
      %1639 = vmatmul.mubr.f32.gmra.mxu0 %v1407
      %v1640 = vpop.f32.mrf.mxu0
      %v1641 = vadd.f32 %v1245, %v1640
      %v1642 = vpop.f32.mrf.mxu0
      %1643 = vmatprep.mubr.f32.mxu0 0.0
      %1644 = vmatmul.mubr.f32.gmra.mxu0 %v1410
      %v1645 = vpop.f32.mrf.mxu0
      %v1646 = vadd.f32 %v1250, %v1645
      %v1647 = vpop.f32.mrf.mxu0
      %1648 = vmatprep.mubr.f32.mxu0 0.0
      %1649 = vmatmul.mubr.f32.gmra.mxu0 %v1413
      %v1650 = vpop.f32.mrf.mxu0
      %v1651 = vadd.f32 %v1255, %v1650
      %v1652 = vpop.f32.mrf.mxu0
      %1653 = vmatprep.mubr.f32.mxu0 0.0
      %1654 = vmatmul.mubr.f32.gmra.mxu0 %v1416
      %v1655 = vpop.f32.mrf.mxu0
      %v1656 = vadd.f32 %v1260, %v1655
      %v1657 = vpop.f32.mrf.mxu0
      %1658 = vmatprep.mubr.f32.mxu0 0.0
      %1659 = vmatmul.mubr.f32.gmra.mxu0 %v1419
      %v1660 = vpop.f32.mrf.mxu0
      %v1661 = vadd.f32 %v1265, %v1660
      %v1662 = vpop.f32.mrf.mxu0
      %1663 = vmatprep.mubr.f32.mxu0 0.0
      %1664 = vmatmul.mubr.f32.gmra.mxu0 %v1422
      %v1665 = vpop.f32.mrf.mxu0
      %v1666 = vadd.f32 %v1270, %v1665
      %v1667 = vpop.f32.mrf.mxu0
      %1668 = vmatprep.mubr.f32.mxu0 0.0
      %1669 = vmatmul.mubr.f32.gmra.mxu0 %v1425
      %v1670 = vpop.f32.mrf.mxu0
      %v1671 = vadd.f32 %v1275, %v1670
      %v1672 = vpop.f32.mrf.mxu0
      %1673 = vmatprep.mubr.f32.mxu0 0.0
      %1674 = vmatmul.mubr.f32.gmra.mxu0 %v1428
      %v1675 = vpop.f32.mrf.mxu0
      %v1676 = vadd.f32 %v1280, %v1675
      %v1677 = vpop.f32.mrf.mxu0
      %1678 = vmatprep.mubr.f32.mxu0 0.0
      %1679 = vmatmul.mubr.f32.gmra.mxu0 %v1431
      %v1680 = vpop.f32.mrf.mxu0
      %v1681 = vadd.f32 %v1285, %v1680
      %v1682 = vpop.f32.mrf.mxu0
      %1683 = vmatprep.mubr.f32.mxu0 0.0
      %1684 = vmatmul.mubr.f32.gmra.mxu0 %v1434
      %v1685 = vpop.f32.mrf.mxu0
      %v1686 = vadd.f32 %v1290, %v1685
      %v1687 = vpop.f32.mrf.mxu0
      %1688 = vmatprep.mubr.f32.mxu0 0.0
      %1689 = vmatmul.mubr.f32.gmra.mxu0 %v1437
      %v1690 = vpop.f32.mrf.mxu0
      %v1691 = vadd.f32 %v1295, %v1690
      %v1692 = vpop.f32.mrf.mxu0
      %1693 = vmatprep.mubr.f32.mxu0 0.0
      %1694 = vmatmul.mubr.f32.gmra.mxu0 %v1440
      %v1695 = vpop.f32.mrf.mxu0
      %v1696 = vadd.f32 %v1300, %v1695
      %v1697 = vpop.f32.mrf.mxu0
      %1698 = vmatprep.mubr.f32.mxu0 0.0
      %1699 = vmatmul.mubr.f32.gmra.mxu0 %v1443
      %v1700 = vpop.f32.mrf.mxu0
      %v1701 = vadd.f32 %v1305, %v1700
      %v1702 = vpop.f32.mrf.mxu0
      %1703 = vmatprep.mubr.f32.mxu0 0.0
      %1704 = vmatmul.mubr.f32.gmra.mxu0 %v1446
      %v1705 = vpop.f32.mrf.mxu0
      %v1706 = vadd.f32 %v1310, %v1705
      %v1707 = vpop.f32.mrf.mxu0
      %1708 = vmatprep.mubr.f32.mxu0 0.0
      %1709 = vmatmul.mubr.f32.gmra.mxu0 %v1449
      %v1710 = vpop.f32.mrf.mxu0
      %v1711 = vadd.f32 %v1315, %v1710
      %v1712 = vpop.f32.mrf.mxu0
      %1713 = vmatprep.mubr.f32.mxu0 0.0
      %1714 = vmatmul.mubr.f32.gmra.mxu0 %v1452
      %v1715 = vpop.f32.mrf.mxu0
      %v1716 = vadd.f32 %v1320, %v1715
      %v1717 = vpop.f32.mrf.mxu0
      %1718 = vmatprep.mubr.f32.mxu0 0.0
      %1719 = vmatmul.mubr.f32.gmra.mxu0 %v1455
      %v1720 = vpop.f32.mrf.mxu0
      %v1721 = vadd.f32 %v1325, %v1720
      %v1722 = vpop.f32.mrf.mxu0
      %1723 = vmatprep.mubr.f32.mxu0 0.0
      %1724 = vmatmul.mubr.f32.gmra.mxu0 %v1458
      %v1725 = vpop.f32.mrf.mxu0
      %v1726 = vadd.f32 %v1330, %v1725
      %v1727 = vpop.f32.mrf.mxu0
      %1728 = vmatprep.mubr.f32.mxu0 0.0
      %1729 = vmatmul.mubr.f32.gmra.mxu0 %v1461
      %v1730 = vpop.f32.mrf.mxu0
      %v1731 = vadd.f32 %v1335, %v1730
      %v1732 = vpop.f32.mrf.mxu0
      %1733 = vmatprep.mubr.f32.mxu0 0.0
      %1734 = vmatmul.mubr.f32.gmra.mxu0 %v1464
      %v1735 = vpop.f32.mrf.mxu0
      %v1736 = vadd.f32 %v1340, %v1735
      %v1737 = vpop.f32.mrf.mxu0
      %1738 = vdwg.mxu0
      %v1739 = vld [vmem:[#allocation2 + $0x7] sm:$0xff]
      %v1740 = vld [vmem:[#allocation2 + $0xf] sm:$0xff]
      %v1741 = vld [vmem:[#allocation2 + $0x17] sm:$0xff]
      %v1742 = vld [vmem:[#allocation2 + $0x1f] sm:$0xff]
      %v1743 = vld [vmem:[#allocation2 + $0x27] sm:$0xff]
      %v1744 = vld [vmem:[#allocation2 + $0x2f] sm:$0xff]
      %v1745 = vld [vmem:[#allocation2 + $0x37] sm:$0xff]
      %v1746 = vld [vmem:[#allocation2 + $0x3f] sm:$0xff]
      %v1747 = vld [vmem:[#allocation2 + $0x47] sm:$0xff]
      %v1748 = vld [vmem:[#allocation2 + $0x4f] sm:$0xff]
      %v1749 = vld [vmem:[#allocation2 + $0x57] sm:$0xff]
      %v1750 = vld [vmem:[#allocation2 + $0x5f] sm:$0xff]
      %v1751 = vld [vmem:[#allocation2 + $0x67] sm:$0xff]
      %v1752 = vld [vmem:[#allocation2 + $0x6f] sm:$0xff]
      %v1753 = vld [vmem:[#allocation2 + $0x77] sm:$0xff]
      %v1754 = vld [vmem:[#allocation2 + $0x7f] sm:$0xff]
      %v1755 = vld [vmem:[#allocation2 + $0x87] sm:$0xff]
      %v1756 = vld [vmem:[#allocation2 + $0x8f] sm:$0xff]
      %v1757 = vld [vmem:[#allocation2 + $0x97] sm:$0xff]
      %v1758 = vld [vmem:[#allocation2 + $0x9f] sm:$0xff]
      %v1759 = vld [vmem:[#allocation2 + $0xa7] sm:$0xff]
      %v1760 = vld [vmem:[#allocation2 + $0xaf] sm:$0xff]
      %v1761 = vld [vmem:[#allocation2 + $0xb7] sm:$0xff]
      %v1762 = vld [vmem:[#allocation2 + $0xbf] sm:$0xff]
      %v1763 = vld [vmem:[#allocation2 + $0xc7] sm:$0xff]
      %v1764 = vld [vmem:[#allocation2 + $0xcf] sm:$0xff]
      %v1765 = vld [vmem:[#allocation2 + $0xd7] sm:$0xff]
      %v1766 = vld [vmem:[#allocation2 + $0xdf] sm:$0xff]
      %v1767 = vld [vmem:[#allocation2 + $0xe7] sm:$0xff]
      %v1768 = vld [vmem:[#allocation2 + $0xef] sm:$0xff]
      %v1769 = vld [vmem:[#allocation2 + $0xf7] sm:$0xff]
      %v1770 = vld [vmem:[#allocation2 + $0xff] sm:$0xff]
      %v1771 = vld [vmem:[#allocation2 + $0x107] sm:$0xff]
      %v1772 = vld [vmem:[#allocation2 + $0x10f] sm:$0xff]
      %v1773 = vld [vmem:[#allocation2 + $0x117] sm:$0xff]
      %v1774 = vld [vmem:[#allocation2 + $0x11f] sm:$0xff]
      %v1775 = vld [vmem:[#allocation2 + $0x127] sm:$0xff]
      %v1776 = vld [vmem:[#allocation2 + $0x12f] sm:$0xff]
      %v1777 = vld [vmem:[#allocation2 + $0x137] sm:$0xff]
      %v1778 = vld [vmem:[#allocation2 + $0x13f] sm:$0xff]
      %v1779 = vld [vmem:[#allocation2 + $0x147] sm:$0xf]
      %s1780 = scalar_lea.vmem %s4, 8
      %v1781 = vld [vmem:[%s1780] sm:$0xf]
      %v1783 = vsel %vm771, %v1739, 0
      %v1786 = vsel %vm771, %v1740, 0
      %v1789 = vsel %vm771, %v1741, 0
      %v1792 = vsel %vm771, %v1742, 0
      %v1795 = vsel %vm771, %v1743, 0
      %v1798 = vsel %vm771, %v1744, 0
      %v1801 = vsel %vm771, %v1745, 0
      %v1804 = vsel %vm771, %v1746, 0
      %v1807 = vsel %vm771, %v1747, 0
      %v1810 = vsel %vm771, %v1748, 0
      %v1813 = vsel %vm771, %v1749, 0
      %v1816 = vsel %vm771, %v1750, 0
      %v1819 = vsel %vm771, %v1751, 0
      %v1822 = vsel %vm771, %v1752, 0
      %v1825 = vsel %vm771, %v1753, 0
      %v1828 = vsel %vm771, %v1754, 0
      %v1831 = vsel %vm771, %v1755, 0
      %v1834 = vsel %vm771, %v1756, 0
      %v1837 = vsel %vm771, %v1757, 0
      %v1840 = vsel %vm771, %v1758, 0
      %v1843 = vsel %vm771, %v1759, 0
      %v1846 = vsel %vm771, %v1760, 0
      %v1849 = vsel %vm771, %v1761, 0
      %v1852 = vsel %vm771, %v1762, 0
      %v1855 = vsel %vm771, %v1763, 0
      %v1858 = vsel %vm771, %v1764, 0
      %v1861 = vsel %vm771, %v1765, 0
      %v1864 = vsel %vm771, %v1766, 0
      %v1867 = vsel %vm771, %v1767, 0
      %v1870 = vsel %vm771, %v1768, 0
      %v1873 = vsel %vm771, %v1769, 0
      %v1876 = vsel %vm771, %v1770, 0
      %v1879 = vsel %vm771, %v1771, 0
      %v1882 = vsel %vm771, %v1772, 0
      %v1885 = vsel %vm771, %v1773, 0
      %v1888 = vsel %vm771, %v1774, 0
      %v1891 = vsel %vm771, %v1775, 0
      %v1894 = vsel %vm771, %v1776, 0
      %v1897 = vsel %vm771, %v1777, 0
      %v1900 = vsel %vm771, %v1778, 0
      %v1903 = vsel %vm771, %v1779, 0
      %v1906 = vsel %vm1069, %v1781, 0
      %1908 = vmatprep.subr.mxu0 0.0
      %1909 = vmatpush1.msra.mxu0 0.0
      %1910 = vmatprep.subr.mxu0 0.0
      %1911 = vmatpush1.msra.mxu0 0.0
      %1912 = vmatprep.subr.mxu0 0.0
      %1913 = vmatpush1.msra.mxu0 0.0
      %1914 = vmatprep.subr.mxu0 0.0
      %1915 = vmatpush1.msra.mxu0 0.0
      %1916 = vmatprep.subr.mxu0 0.0
      %1917 = vmatpush1.msra.mxu0 0.0
      %1918 = vmatprep.subr.mxu0 0.0
      %1919 = vmatpush1.msra.mxu0 0.0
      %1920 = vmatprep.subr.mxu0 0.0
      %1921 = vmatpush1.msra.mxu0 0.0
      %1922 = vmatprep.subr.mxu0 0.0
      %1923 = vmatpush1.msra.mxu0 0.0
      %1924 = vmatprep.subr.mxu0 0.0
      %1925 = vmatpush1.msra.mxu0 0.0
      %1926 = vmatprep.subr.mxu0 0.0
      %1927 = vmatpush1.msra.mxu0 0.0
      %1928 = vmatprep.subr.mxu0 0.0
      %1929 = vmatpush1.msra.mxu0 0.0
      %1930 = vmatprep.subr.mxu0 0.0
      %1931 = vmatpush1.msra.mxu0 0.0
      %1932 = vmatprep.subr.mxu0 0.0
      %1933 = vmatpush1.msra.mxu0 0.0
      %1934 = vmatprep.subr.mxu0 0.0
      %1935 = vmatpush1.msra.mxu0 0.0
      %1936 = vmatprep.subr.mxu0 0.0
      %1937 = vmatpush1.msra.mxu0 0.0
      %1938 = vmatprep.subr.mxu0 0.0
      %1939 = vmatpush1.msra.mxu0 %v1906
      %1940 = vmatprep.subr.mxu0 0.0
      %1941 = vmatpush2.msra.mxu0 0.0
      %1942 = vmatprep.subr.mxu0 0.0
      %1943 = vmatpush2.msra.mxu0 0.0
      %1944 = vmatprep.subr.mxu0 0.0
      %1945 = vmatpush2.msra.mxu0 0.0
      %1946 = vmatprep.subr.mxu0 0.0
      %1947 = vmatpush2.msra.mxu0 0.0
      %1948 = vmatprep.subr.mxu0 0.0
      %1949 = vmatpush2.msra.mxu0 0.0
      %1950 = vmatprep.subr.mxu0 0.0
      %1951 = vmatpush2.msra.mxu0 0.0
      %1952 = vmatprep.subr.mxu0 0.0
      %1953 = vmatpush2.msra.mxu0 0.0
      %1954 = vmatprep.subr.mxu0 0.0
      %1955 = vmatpush2.msra.mxu0 0.0
      %1956 = vmatprep.subr.mxu0 0.0
      %1957 = vmatpush2.msra.mxu0 0.0
      %1958 = vmatprep.subr.mxu0 0.0
      %1959 = vmatpush2.msra.mxu0 0.0
      %1960 = vmatprep.subr.mxu0 0.0
      %1961 = vmatpush2.msra.mxu0 0.0
      %1962 = vmatprep.subr.mxu0 0.0
      %1963 = vmatpush2.msra.mxu0 0.0
      %1964 = vmatprep.subr.mxu0 0.0
      %1965 = vmatpush2.msra.mxu0 0.0
      %1966 = vmatprep.subr.mxu0 0.0
      %1967 = vmatpush2.msra.mxu0 0.0
      %1968 = vmatprep.subr.mxu0 0.0
      %1969 = vmatpush2.msra.mxu0 0.0
      %1970 = vmatprep.subr.mxu0 0.0
      %1971 = vmatpush2.msra.mxu0 0.0
      %1972 = vmatprep.mubr.f32.mxu0 0.0
      %1973 = vmatmul.mubr.f32.gmra.mxu0 %v1783
      %v1974 = vpop.f32.mrf.mxu0
      %v1975 = vadd.f32 0.0, %v1974
      %v1976 = vpop.f32.mrf.mxu0
      %1977 = vmatprep.mubr.f32.mxu0 0.0
      %1978 = vmatmul.mubr.f32.gmra.mxu0 %v1786
      %v1979 = vpop.f32.mrf.mxu0
      %v1980 = vadd.f32 0.0, %v1979
      %v1981 = vpop.f32.mrf.mxu0
      %1982 = vmatprep.mubr.f32.mxu0 0.0
      %1983 = vmatmul.mubr.f32.gmra.mxu0 %v1789
      %v1984 = vpop.f32.mrf.mxu0
      %v1985 = vadd.f32 0.0, %v1984
      %v1986 = vpop.f32.mrf.mxu0
      %1987 = vmatprep.mubr.f32.mxu0 0.0
      %1988 = vmatmul.mubr.f32.gmra.mxu0 %v1792
      %v1989 = vpop.f32.mrf.mxu0
      %v1990 = vadd.f32 0.0, %v1989
      %v1991 = vpop.f32.mrf.mxu0
      %1992 = vmatprep.mubr.f32.mxu0 0.0
      %1993 = vmatmul.mubr.f32.gmra.mxu0 %v1795
      %v1994 = vpop.f32.mrf.mxu0
      %v1995 = vadd.f32 0.0, %v1994
      %v1996 = vpop.f32.mrf.mxu0
      %1997 = vmatprep.mubr.f32.mxu0 0.0
      %1998 = vmatmul.mubr.f32.gmra.mxu0 %v1798
      %v1999 = vpop.f32.mrf.mxu0
      %v2000 = vadd.f32 0.0, %v1999
      %v2001 = vpop.f32.mrf.mxu0
      %2002 = vmatprep.mubr.f32.mxu0 0.0
      %2003 = vmatmul.mubr.f32.gmra.mxu0 %v1801
      %v2004 = vpop.f32.mrf.mxu0
      %v2005 = vadd.f32 0.0, %v2004
      %v2006 = vpop.f32.mrf.mxu0
      %2007 = vmatprep.mubr.f32.mxu0 0.0
      %2008 = vmatmul.mubr.f32.gmra.mxu0 %v1804
      %v2009 = vpop.f32.mrf.mxu0
      %v2010 = vadd.f32 0.0, %v2009
      %v2011 = vpop.f32.mrf.mxu0
      %2012 = vmatprep.mubr.f32.mxu0 0.0
      %2013 = vmatmul.mubr.f32.gmra.mxu0 %v1807
      %v2014 = vpop.f32.mrf.mxu0
      %v2015 = vadd.f32 0.0, %v2014
      %v2016 = vpop.f32.mrf.mxu0
      %2017 = vmatprep.mubr.f32.mxu0 0.0
      %2018 = vmatmul.mubr.f32.gmra.mxu0 %v1810
      %v2019 = vpop.f32.mrf.mxu0
      %v2020 = vadd.f32 0.0, %v2019
      %v2021 = vpop.f32.mrf.mxu0
      %2022 = vmatprep.mubr.f32.mxu0 0.0
      %2023 = vmatmul.mubr.f32.gmra.mxu0 %v1813
      %v2024 = vpop.f32.mrf.mxu0
      %v2025 = vadd.f32 0.0, %v2024
      %v2026 = vpop.f32.mrf.mxu0
      %2027 = vmatprep.mubr.f32.mxu0 0.0
      %2028 = vmatmul.mubr.f32.gmra.mxu0 %v1816
      %v2029 = vpop.f32.mrf.mxu0
      %v2030 = vadd.f32 0.0, %v2029
      %v2031 = vpop.f32.mrf.mxu0
      %2032 = vmatprep.mubr.f32.mxu0 0.0
      %2033 = vmatmul.mubr.f32.gmra.mxu0 %v1819
      %v2034 = vpop.f32.mrf.mxu0
      %v2035 = vadd.f32 0.0, %v2034
      %v2036 = vpop.f32.mrf.mxu0
      %2037 = vmatprep.mubr.f32.mxu0 0.0
      %2038 = vmatmul.mubr.f32.gmra.mxu0 %v1822
      %v2039 = vpop.f32.mrf.mxu0
      %v2040 = vadd.f32 0.0, %v2039
      %v2041 = vpop.f32.mrf.mxu0
      %2042 = vmatprep.mubr.f32.mxu0 0.0
      %2043 = vmatmul.mubr.f32.gmra.mxu0 %v1825
      %v2044 = vpop.f32.mrf.mxu0
      %v2045 = vadd.f32 0.0, %v2044
      %v2046 = vpop.f32.mrf.mxu0
      %2047 = vmatprep.mubr.f32.mxu0 0.0
      %2048 = vmatmul.mubr.f32.gmra.mxu0 %v1828
      %v2049 = vpop.f32.mrf.mxu0
      %v2050 = vadd.f32 0.0, %v2049
      %v2051 = vpop.f32.mrf.mxu0
      %2052 = vmatprep.mubr.f32.mxu0 0.0
      %2053 = vmatmul.mubr.f32.gmra.mxu0 %v1831
      %v2054 = vpop.f32.mrf.mxu0
      %v2055 = vadd.f32 0.0, %v2054
      %v2056 = vpop.f32.mrf.mxu0
      %2057 = vmatprep.mubr.f32.mxu0 0.0
      %2058 = vmatmul.mubr.f32.gmra.mxu0 %v1834
      %v2059 = vpop.f32.mrf.mxu0
      %v2060 = vadd.f32 0.0, %v2059
      %v2061 = vpop.f32.mrf.mxu0
      %2062 = vmatprep.mubr.f32.mxu0 0.0
      %2063 = vmatmul.mubr.f32.gmra.mxu0 %v1837
      %v2064 = vpop.f32.mrf.mxu0
      %v2065 = vadd.f32 0.0, %v2064
      %v2066 = vpop.f32.mrf.mxu0
      %2067 = vmatprep.mubr.f32.mxu0 0.0
      %2068 = vmatmul.mubr.f32.gmra.mxu0 %v1840
      %v2069 = vpop.f32.mrf.mxu0
      %v2070 = vadd.f32 0.0, %v2069
      %v2071 = vpop.f32.mrf.mxu0
      %2072 = vmatprep.mubr.f32.mxu0 0.0
      %2073 = vmatmul.mubr.f32.gmra.mxu0 %v1843
      %v2074 = vpop.f32.mrf.mxu0
      %v2075 = vadd.f32 0.0, %v2074
      %v2076 = vpop.f32.mrf.mxu0
      %2077 = vmatprep.mubr.f32.mxu0 0.0
      %2078 = vmatmul.mubr.f32.gmra.mxu0 %v1846
      %v2079 = vpop.f32.mrf.mxu0
      %v2080 = vadd.f32 0.0, %v2079
      %v2081 = vpop.f32.mrf.mxu0
      %2082 = vmatprep.mubr.f32.mxu0 0.0
      %2083 = vmatmul.mubr.f32.gmra.mxu0 %v1849
      %v2084 = vpop.f32.mrf.mxu0
      %v2085 = vadd.f32 0.0, %v2084
      %v2086 = vpop.f32.mrf.mxu0
      %2087 = vmatprep.mubr.f32.mxu0 0.0
      %2088 = vmatmul.mubr.f32.gmra.mxu0 %v1852
      %v2089 = vpop.f32.mrf.mxu0
      %v2090 = vadd.f32 0.0, %v2089
      %v2091 = vpop.f32.mrf.mxu0
      %2092 = vmatprep.mubr.f32.mxu0 0.0
      %2093 = vmatmul.mubr.f32.gmra.mxu0 %v1855
      %v2094 = vpop.f32.mrf.mxu0
      %v2095 = vadd.f32 0.0, %v2094
      %v2096 = vpop.f32.mrf.mxu0
      %2097 = vmatprep.mubr.f32.mxu0 0.0
      %2098 = vmatmul.mubr.f32.gmra.mxu0 %v1858
      %v2099 = vpop.f32.mrf.mxu0
      %v2100 = vadd.f32 0.0, %v2099
      %v2101 = vpop.f32.mrf.mxu0
      %2102 = vmatprep.mubr.f32.mxu0 0.0
      %2103 = vmatmul.mubr.f32.gmra.mxu0 %v1861
      %v2104 = vpop.f32.mrf.mxu0
      %v2105 = vadd.f32 0.0, %v2104
      %v2106 = vpop.f32.mrf.mxu0
      %2107 = vmatprep.mubr.f32.mxu0 0.0
      %2108 = vmatmul.mubr.f32.gmra.mxu0 %v1864
      %v2109 = vpop.f32.mrf.mxu0
      %v2110 = vadd.f32 0.0, %v2109
      %v2111 = vpop.f32.mrf.mxu0
      %2112 = vmatprep.mubr.f32.mxu0 0.0
      %2113 = vmatmul.mubr.f32.gmra.mxu0 %v1867
      %v2114 = vpop.f32.mrf.mxu0
      %v2115 = vadd.f32 0.0, %v2114
      %v2116 = vpop.f32.mrf.mxu0
      %2117 = vmatprep.mubr.f32.mxu0 0.0
      %2118 = vmatmul.mubr.f32.gmra.mxu0 %v1870
      %v2119 = vpop.f32.mrf.mxu0
      %v2120 = vadd.f32 0.0, %v2119
      %v2121 = vpop.f32.mrf.mxu0
      %2122 = vmatprep.mubr.f32.mxu0 0.0
      %2123 = vmatmul.mubr.f32.gmra.mxu0 %v1873
      %v2124 = vpop.f32.mrf.mxu0
      %v2125 = vadd.f32 0.0, %v2124
      %v2126 = vpop.f32.mrf.mxu0
      %2127 = vmatprep.mubr.f32.mxu0 0.0
      %2128 = vmatmul.mubr.f32.gmra.mxu0 %v1876
      %v2129 = vpop.f32.mrf.mxu0
      %v2130 = vadd.f32 0.0, %v2129
      %v2131 = vpop.f32.mrf.mxu0
      %2132 = vmatprep.mubr.f32.mxu0 0.0
      %2133 = vmatmul.mubr.f32.gmra.mxu0 %v1879
      %v2134 = vpop.f32.mrf.mxu0
      %v2135 = vadd.f32 0.0, %v2134
      %v2136 = vpop.f32.mrf.mxu0
      %2137 = vmatprep.mubr.f32.mxu0 0.0
      %2138 = vmatmul.mubr.f32.gmra.mxu0 %v1882
      %v2139 = vpop.f32.mrf.mxu0
      %v2140 = vadd.f32 0.0, %v2139
      %v2141 = vpop.f32.mrf.mxu0
      %2142 = vmatprep.mubr.f32.mxu0 0.0
      %2143 = vmatmul.mubr.f32.gmra.mxu0 %v1885
      %v2144 = vpop.f32.mrf.mxu0
      %v2145 = vadd.f32 0.0, %v2144
      %v2146 = vpop.f32.mrf.mxu0
      %2147 = vmatprep.mubr.f32.mxu0 0.0
      %2148 = vmatmul.mubr.f32.gmra.mxu0 %v1888
      %v2149 = vpop.f32.mrf.mxu0
      %v2150 = vadd.f32 0.0, %v2149
      %v2151 = vpop.f32.mrf.mxu0
      %2152 = vmatprep.mubr.f32.mxu0 0.0
      %2153 = vmatmul.mubr.f32.gmra.mxu0 %v1891
      %v2154 = vpop.f32.mrf.mxu0
      %v2155 = vadd.f32 0.0, %v2154
      %v2156 = vpop.f32.mrf.mxu0
      %2157 = vmatprep.mubr.f32.mxu0 0.0
      %2158 = vmatmul.mubr.f32.gmra.mxu0 %v1894
      %v2159 = vpop.f32.mrf.mxu0
      %v2160 = vadd.f32 0.0, %v2159
      %v2161 = vpop.f32.mrf.mxu0
      %2162 = vmatprep.mubr.f32.mxu0 0.0
      %2163 = vmatmul.mubr.f32.gmra.mxu0 %v1897
      %v2164 = vpop.f32.mrf.mxu0
      %v2165 = vadd.f32 0.0, %v2164
      %v2166 = vpop.f32.mrf.mxu0
      %2167 = vmatprep.mubr.f32.mxu0 0.0
      %2168 = vmatmul.mubr.f32.gmra.mxu0 %v1900
      %v2169 = vpop.f32.mrf.mxu0
      %v2170 = vadd.f32 0.0, %v2169
      %v2171 = vpop.f32.mrf.mxu0
      %2172 = vmatprep.mubr.f32.mxu0 0.0
      %2173 = vmatmul.mubr.f32.gmra.mxu0 %v1903
      %v2174 = vpop.f32.mrf.mxu0
      %v2175 = vadd.f32 0.0, %v2174
      %v2176 = vpop.f32.mrf.mxu0
      %2177 = vdwg.mxu0
      %v2178 = vadd.f32 %v1536, %v1975
      %v2179 = vadd.f32 %v1541, %v1980
      %v2180 = vadd.f32 %v1546, %v1985
      %v2181 = vadd.f32 %v1551, %v1990
      %v2182 = vadd.f32 %v1556, %v1995
      %v2183 = vadd.f32 %v1561, %v2000
      %v2184 = vadd.f32 %v1566, %v2005
      %v2185 = vadd.f32 %v1571, %v2010
      %v2186 = vadd.f32 %v1576, %v2015
      %v2187 = vadd.f32 %v1581, %v2020
      %v2188 = vadd.f32 %v1586, %v2025
      %v2189 = vadd.f32 %v1591, %v2030
      %v2190 = vadd.f32 %v1596, %v2035
      %v2191 = vadd.f32 %v1601, %v2040
      %v2192 = vadd.f32 %v1606, %v2045
      %v2193 = vadd.f32 %v1611, %v2050
      %v2194 = vadd.f32 %v1616, %v2055
      %v2195 = vadd.f32 %v1621, %v2060
      %v2196 = vadd.f32 %v1626, %v2065
      %v2197 = vadd.f32 %v1631, %v2070
      %v2198 = vadd.f32 %v1636, %v2075
      %v2199 = vadd.f32 %v1641, %v2080
      %v2200 = vadd.f32 %v1646, %v2085
      %v2201 = vadd.f32 %v1651, %v2090
      %v2202 = vadd.f32 %v1656, %v2095
      %v2203 = vadd.f32 %v1661, %v2100
      %v2204 = vadd.f32 %v1666, %v2105
      %v2205 = vadd.f32 %v1671, %v2110
      %v2206 = vadd.f32 %v1676, %v2115
      %v2207 = vadd.f32 %v1681, %v2120
      %v2208 = vadd.f32 %v1686, %v2125
      %v2209 = vadd.f32 %v1691, %v2130
      %v2210 = vadd.f32 %v1696, %v2135
      %v2211 = vadd.f32 %v1701, %v2140
      %v2212 = vadd.f32 %v1706, %v2145
      %v2213 = vadd.f32 %v1711, %v2150
      %v2214 = vadd.f32 %v1716, %v2155
      %v2215 = vadd.f32 %v1721, %v2160
      %v2216 = vadd.f32 %v1726, %v2165
      %v2217 = vadd.f32 %v1731, %v2170
      %v2218 = vadd.f32 %v1736, %v2175
      %v2219 = vld [vmem:[#allocation2 + $0x17] sm:$0xff]
      %v2220 = vld [vmem:[#allocation2 + $0x1f] sm:$0xff]
      %v2221 = vld [vmem:[#allocation2 + $0x27] sm:$0xff]
      %v2222 = vld [vmem:[#allocation2 + $0x2f] sm:$0xff]
      %v2223 = vld [vmem:[#allocation2 + $0x37] sm:$0xff]
      %v2224 = vld [vmem:[#allocation2 + $0x3f] sm:$0xff]
      %v2225 = vld [vmem:[#allocation2 + $0x47] sm:$0xff]
      %v2226 = vld [vmem:[#allocation2 + $0x4f] sm:$0xff]
      %v2227 = vld [vmem:[#allocation2 + $0x57] sm:$0xff]
      %v2228 = vld [vmem:[#allocation2 + $0x5f] sm:$0xff]
      %v2229 = vld [vmem:[#allocation2 + $0x67] sm:$0xff]
      %v2230 = vld [vmem:[#allocation2 + $0x6f] sm:$0xff]
      %v2231 = vld [vmem:[#allocation2 + $0x77] sm:$0xff]
      %v2232 = vld [vmem:[#allocation2 + $0x7f] sm:$0xff]
      %v2233 = vld [vmem:[#allocation2 + $0x87] sm:$0xff]
      %v2234 = vld [vmem:[#allocation2 + $0x8f] sm:$0xff]
      %v2235 = vld [vmem:[#allocation2 + $0x97] sm:$0xff]
      %v2236 = vld [vmem:[#allocation2 + $0x9f] sm:$0xff]
      %v2237 = vld [vmem:[#allocation2 + $0xa7] sm:$0xff]
      %v2238 = vld [vmem:[#allocation2 + $0xaf] sm:$0xff]
      %v2239 = vld [vmem:[#allocation2 + $0xb7] sm:$0xff]
      %v2240 = vld [vmem:[#allocation2 + $0xbf] sm:$0xff]
      %v2241 = vld [vmem:[#allocation2 + $0xc7] sm:$0xff]
      %v2242 = vld [vmem:[#allocation2 + $0xcf] sm:$0xff]
      %v2243 = vld [vmem:[#allocation2 + $0xd7] sm:$0xff]
      %v2244 = vld [vmem:[#allocation2 + $0xdf] sm:$0xff]
      %v2245 = vld [vmem:[#allocation2 + $0xe7] sm:$0xff]
      %v2246 = vld [vmem:[#allocation2 + $0xef] sm:$0xff]
      %v2247 = vld [vmem:[#allocation2 + $0xf7] sm:$0xff]
      %v2248 = vld [vmem:[#allocation2 + $0xff] sm:$0xff]
      %v2249 = vld [vmem:[#allocation2 + $0x107] sm:$0xff]
      %v2250 = vld [vmem:[#allocation2 + $0x10f] sm:$0xff]
      %v2251 = vld [vmem:[#allocation2 + $0x117] sm:$0xff]
      %v2252 = vld [vmem:[#allocation2 + $0x11f] sm:$0xff]
      %v2253 = vld [vmem:[#allocation2 + $0x127] sm:$0xff]
      %v2254 = vld [vmem:[#allocation2 + $0x12f] sm:$0xff]
      %v2255 = vld [vmem:[#allocation2 + $0x137] sm:$0xff]
      %v2256 = vld [vmem:[#allocation2 + $0x13f] sm:$0xff]
      %v2257 = vld [vmem:[#allocation2 + $0x147] sm:$0xff]
      %v2258 = vld [vmem:[#allocation2 + $0x14f] sm:$0xff]
      %v2259 = vld [vmem:[#allocation2 + $0x157] sm:$0xf]
      %s2260 = scalar_lea.vmem %s4, 12
      %v2261 = vld [vmem:[%s2260] sm:$0xf]
      %v2263 = vsel %vm771, %v2219, 0
      %v2266 = vsel %vm771, %v2220, 0
      %v2269 = vsel %vm771, %v2221, 0
      %v2272 = vsel %vm771, %v2222, 0
      %v2275 = vsel %vm771, %v2223, 0
      %v2278 = vsel %vm771, %v2224, 0
      %v2281 = vsel %vm771, %v2225, 0
      %v2284 = vsel %vm771, %v2226, 0
      %v2287 = vsel %vm771, %v2227, 0
      %v2290 = vsel %vm771, %v2228, 0
      %v2293 = vsel %vm771, %v2229, 0
      %v2296 = vsel %vm771, %v2230, 0
      %v2299 = vsel %vm771, %v2231, 0
      %v2302 = vsel %vm771, %v2232, 0
      %v2305 = vsel %vm771, %v2233, 0
      %v2308 = vsel %vm771, %v2234, 0
      %v2311 = vsel %vm771, %v2235, 0
      %v2314 = vsel %vm771, %v2236, 0
      %v2317 = vsel %vm771, %v2237, 0
      %v2320 = vsel %vm771, %v2238, 0
      %v2323 = vsel %vm771, %v2239, 0
      %v2326 = vsel %vm771, %v2240, 0
      %v2329 = vsel %vm771, %v2241, 0
      %v2332 = vsel %vm771, %v2242, 0
      %v2335 = vsel %vm771, %v2243, 0
      %v2338 = vsel %vm771, %v2244, 0
      %v2341 = vsel %vm771, %v2245, 0
      %v2344 = vsel %vm771, %v2246, 0
      %v2347 = vsel %vm771, %v2247, 0
      %v2350 = vsel %vm771, %v2248, 0
      %v2353 = vsel %vm771, %v2249, 0
      %v2356 = vsel %vm771, %v2250, 0
      %v2359 = vsel %vm771, %v2251, 0
      %v2362 = vsel %vm771, %v2252, 0
      %v2365 = vsel %vm771, %v2253, 0
      %v2368 = vsel %vm771, %v2254, 0
      %v2371 = vsel %vm771, %v2255, 0
      %v2374 = vsel %vm771, %v2256, 0
      %v2377 = vsel %vm771, %v2257, 0
      %v2380 = vsel %vm771, %v2258, 0
      %v2383 = vsel %vm771, %v2259, 0
      %v2386 = vsel %vm1069, %v2261, 0
      %2388 = vmatprep.subr.mxu0 0.0
      %2389 = vmatpush1.msra.mxu0 0.0
      %2390 = vmatprep.subr.mxu0 0.0
      %2391 = vmatpush1.msra.mxu0 0.0
      %2392 = vmatprep.subr.mxu0 0.0
      %2393 = vmatpush1.msra.mxu0 0.0
      %2394 = vmatprep.subr.mxu0 0.0
      %2395 = vmatpush1.msra.mxu0 0.0
      %2396 = vmatprep.subr.mxu0 0.0
      %2397 = vmatpush1.msra.mxu0 0.0
      %2398 = vmatprep.subr.mxu0 0.0
      %2399 = vmatpush1.msra.mxu0 0.0
      %2400 = vmatprep.subr.mxu0 0.0
      %2401 = vmatpush1.msra.mxu0 0.0
      %2402 = vmatprep.subr.mxu0 0.0
      %2403 = vmatpush1.msra.mxu0 0.0
      %2404 = vmatprep.subr.mxu0 0.0
      %2405 = vmatpush1.msra.mxu0 0.0
      %2406 = vmatprep.subr.mxu0 0.0
      %2407 = vmatpush1.msra.mxu0 0.0
      %2408 = vmatprep.subr.mxu0 0.0
      %2409 = vmatpush1.msra.mxu0 0.0
      %2410 = vmatprep.subr.mxu0 0.0
      %2411 = vmatpush1.msra.mxu0 0.0
      %2412 = vmatprep.subr.mxu0 0.0
      %2413 = vmatpush1.msra.mxu0 0.0
      %2414 = vmatprep.subr.mxu0 0.0
      %2415 = vmatpush1.msra.mxu0 0.0
      %2416 = vmatprep.subr.mxu0 0.0
      %2417 = vmatpush1.msra.mxu0 0.0
      %2418 = vmatprep.subr.mxu0 0.0
      %2419 = vmatpush1.msra.mxu0 %v2386
      %2420 = vmatprep.subr.mxu0 0.0
      %2421 = vmatpush2.msra.mxu0 0.0
      %2422 = vmatprep.subr.mxu0 0.0
      %2423 = vmatpush2.msra.mxu0 0.0
      %2424 = vmatprep.subr.mxu0 0.0
      %2425 = vmatpush2.msra.mxu0 0.0
      %2426 = vmatprep.subr.mxu0 0.0
      %2427 = vmatpush2.msra.mxu0 0.0
      %2428 = vmatprep.subr.mxu0 0.0
      %2429 = vmatpush2.msra.mxu0 0.0
      %2430 = vmatprep.subr.mxu0 0.0
      %2431 = vmatpush2.msra.mxu0 0.0
      %2432 = vmatprep.subr.mxu0 0.0
      %2433 = vmatpush2.msra.mxu0 0.0
      %2434 = vmatprep.subr.mxu0 0.0
      %2435 = vmatpush2.msra.mxu0 0.0
      %2436 = vmatprep.subr.mxu0 0.0
      %2437 = vmatpush2.msra.mxu0 0.0
      %2438 = vmatprep.subr.mxu0 0.0
      %2439 = vmatpush2.msra.mxu0 0.0
      %2440 = vmatprep.subr.mxu0 0.0
      %2441 = vmatpush2.msra.mxu0 0.0
      %2442 = vmatprep.subr.mxu0 0.0
      %2443 = vmatpush2.msra.mxu0 0.0
      %2444 = vmatprep.subr.mxu0 0.0
      %2445 = vmatpush2.msra.mxu0 0.0
      %2446 = vmatprep.subr.mxu0 0.0
      %2447 = vmatpush2.msra.mxu0 0.0
      %2448 = vmatprep.subr.mxu0 0.0
      %2449 = vmatpush2.msra.mxu0 0.0
      %2450 = vmatprep.subr.mxu0 0.0
      %2451 = vmatpush2.msra.mxu0 0.0
      %2452 = vmatprep.mubr.f32.mxu0 0.0
      %2453 = vmatmul.mubr.f32.gmra.mxu0 %v2263
      %v2454 = vpop.f32.mrf.mxu0
      %v2455 = vadd.f32 0.0, %v2454
      %v2456 = vpop.f32.mrf.mxu0
      %2457 = vmatprep.mubr.f32.mxu0 0.0
      %2458 = vmatmul.mubr.f32.gmra.mxu0 %v2266
      %v2459 = vpop.f32.mrf.mxu0
      %v2460 = vadd.f32 0.0, %v2459
      %v2461 = vpop.f32.mrf.mxu0
      %2462 = vmatprep.mubr.f32.mxu0 0.0
      %2463 = vmatmul.mubr.f32.gmra.mxu0 %v2269
      %v2464 = vpop.f32.mrf.mxu0
      %v2465 = vadd.f32 0.0, %v2464
      %v2466 = vpop.f32.mrf.mxu0
      %2467 = vmatprep.mubr.f32.mxu0 0.0
      %2468 = vmatmul.mubr.f32.gmra.mxu0 %v2272
      %v2469 = vpop.f32.mrf.mxu0
      %v2470 = vadd.f32 0.0, %v2469
      %v2471 = vpop.f32.mrf.mxu0
      %2472 = vmatprep.mubr.f32.mxu0 0.0
      %2473 = vmatmul.mubr.f32.gmra.mxu0 %v2275
      %v2474 = vpop.f32.mrf.mxu0
      %v2475 = vadd.f32 0.0, %v2474
      %v2476 = vpop.f32.mrf.mxu0
      %2477 = vmatprep.mubr.f32.mxu0 0.0
      %2478 = vmatmul.mubr.f32.gmra.mxu0 %v2278
      %v2479 = vpop.f32.mrf.mxu0
      %v2480 = vadd.f32 0.0, %v2479
      %v2481 = vpop.f32.mrf.mxu0
      %2482 = vmatprep.mubr.f32.mxu0 0.0
      %2483 = vmatmul.mubr.f32.gmra.mxu0 %v2281
      %v2484 = vpop.f32.mrf.mxu0
      %v2485 = vadd.f32 0.0, %v2484
      %v2486 = vpop.f32.mrf.mxu0
      %2487 = vmatprep.mubr.f32.mxu0 0.0
      %2488 = vmatmul.mubr.f32.gmra.mxu0 %v2284
      %v2489 = vpop.f32.mrf.mxu0
      %v2490 = vadd.f32 0.0, %v2489
      %v2491 = vpop.f32.mrf.mxu0
      %2492 = vmatprep.mubr.f32.mxu0 0.0
      %2493 = vmatmul.mubr.f32.gmra.mxu0 %v2287
      %v2494 = vpop.f32.mrf.mxu0
      %v2495 = vadd.f32 0.0, %v2494
      %v2496 = vpop.f32.mrf.mxu0
      %2497 = vmatprep.mubr.f32.mxu0 0.0
      %2498 = vmatmul.mubr.f32.gmra.mxu0 %v2290
      %v2499 = vpop.f32.mrf.mxu0
      %v2500 = vadd.f32 0.0, %v2499
      %v2501 = vpop.f32.mrf.mxu0
      %2502 = vmatprep.mubr.f32.mxu0 0.0
      %2503 = vmatmul.mubr.f32.gmra.mxu0 %v2293
      %v2504 = vpop.f32.mrf.mxu0
      %v2505 = vadd.f32 0.0, %v2504
      %v2506 = vpop.f32.mrf.mxu0
      %2507 = vmatprep.mubr.f32.mxu0 0.0
      %2508 = vmatmul.mubr.f32.gmra.mxu0 %v2296
      %v2509 = vpop.f32.mrf.mxu0
      %v2510 = vadd.f32 0.0, %v2509
      %v2511 = vpop.f32.mrf.mxu0
      %2512 = vmatprep.mubr.f32.mxu0 0.0
      %2513 = vmatmul.mubr.f32.gmra.mxu0 %v2299
      %v2514 = vpop.f32.mrf.mxu0
      %v2515 = vadd.f32 0.0, %v2514
      %v2516 = vpop.f32.mrf.mxu0
      %2517 = vmatprep.mubr.f32.mxu0 0.0
      %2518 = vmatmul.mubr.f32.gmra.mxu0 %v2302
      %v2519 = vpop.f32.mrf.mxu0
      %v2520 = vadd.f32 0.0, %v2519
      %v2521 = vpop.f32.mrf.mxu0
      %2522 = vmatprep.mubr.f32.mxu0 0.0
      %2523 = vmatmul.mubr.f32.gmra.mxu0 %v2305
      %v2524 = vpop.f32.mrf.mxu0
      %v2525 = vadd.f32 0.0, %v2524
      %v2526 = vpop.f32.mrf.mxu0
      %2527 = vmatprep.mubr.f32.mxu0 0.0
      %2528 = vmatmul.mubr.f32.gmra.mxu0 %v2308
      %v2529 = vpop.f32.mrf.mxu0
      %v2530 = vadd.f32 0.0, %v2529
      %v2531 = vpop.f32.mrf.mxu0
      %2532 = vmatprep.mubr.f32.mxu0 0.0
      %2533 = vmatmul.mubr.f32.gmra.mxu0 %v2311
      %v2534 = vpop.f32.mrf.mxu0
      %v2535 = vadd.f32 0.0, %v2534
      %v2536 = vpop.f32.mrf.mxu0
      %2537 = vmatprep.mubr.f32.mxu0 0.0
      %2538 = vmatmul.mubr.f32.gmra.mxu0 %v2314
      %v2539 = vpop.f32.mrf.mxu0
      %v2540 = vadd.f32 0.0, %v2539
      %v2541 = vpop.f32.mrf.mxu0
      %2542 = vmatprep.mubr.f32.mxu0 0.0
      %2543 = vmatmul.mubr.f32.gmra.mxu0 %v2317
      %v2544 = vpop.f32.mrf.mxu0
      %v2545 = vadd.f32 0.0, %v2544
      %v2546 = vpop.f32.mrf.mxu0
      %2547 = vmatprep.mubr.f32.mxu0 0.0
      %2548 = vmatmul.mubr.f32.gmra.mxu0 %v2320
      %v2549 = vpop.f32.mrf.mxu0
      %v2550 = vadd.f32 0.0, %v2549
      %v2551 = vpop.f32.mrf.mxu0
      %2552 = vmatprep.mubr.f32.mxu0 0.0
      %2553 = vmatmul.mubr.f32.gmra.mxu0 %v2323
      %v2554 = vpop.f32.mrf.mxu0
      %v2555 = vadd.f32 0.0, %v2554
      %v2556 = vpop.f32.mrf.mxu0
      %2557 = vmatprep.mubr.f32.mxu0 0.0
      %2558 = vmatmul.mubr.f32.gmra.mxu0 %v2326
      %v2559 = vpop.f32.mrf.mxu0
      %v2560 = vadd.f32 0.0, %v2559
      %v2561 = vpop.f32.mrf.mxu0
      %2562 = vmatprep.mubr.f32.mxu0 0.0
      %2563 = vmatmul.mubr.f32.gmra.mxu0 %v2329
      %v2564 = vpop.f32.mrf.mxu0
      %v2565 = vadd.f32 0.0, %v2564
      %v2566 = vpop.f32.mrf.mxu0
      %2567 = vmatprep.mubr.f32.mxu0 0.0
      %2568 = vmatmul.mubr.f32.gmra.mxu0 %v2332
      %v2569 = vpop.f32.mrf.mxu0
      %v2570 = vadd.f32 0.0, %v2569
      %v2571 = vpop.f32.mrf.mxu0
      %2572 = vmatprep.mubr.f32.mxu0 0.0
      %2573 = vmatmul.mubr.f32.gmra.mxu0 %v2335
      %v2574 = vpop.f32.mrf.mxu0
      %v2575 = vadd.f32 0.0, %v2574
      %v2576 = vpop.f32.mrf.mxu0
      %2577 = vmatprep.mubr.f32.mxu0 0.0
      %2578 = vmatmul.mubr.f32.gmra.mxu0 %v2338
      %v2579 = vpop.f32.mrf.mxu0
      %v2580 = vadd.f32 0.0, %v2579
      %v2581 = vpop.f32.mrf.mxu0
      %2582 = vmatprep.mubr.f32.mxu0 0.0
      %2583 = vmatmul.mubr.f32.gmra.mxu0 %v2341
      %v2584 = vpop.f32.mrf.mxu0
      %v2585 = vadd.f32 0.0, %v2584
      %v2586 = vpop.f32.mrf.mxu0
      %2587 = vmatprep.mubr.f32.mxu0 0.0
      %2588 = vmatmul.mubr.f32.gmra.mxu0 %v2344
      %v2589 = vpop.f32.mrf.mxu0
      %v2590 = vadd.f32 0.0, %v2589
      %v2591 = vpop.f32.mrf.mxu0
      %2592 = vmatprep.mubr.f32.mxu0 0.0
      %2593 = vmatmul.mubr.f32.gmra.mxu0 %v2347
      %v2594 = vpop.f32.mrf.mxu0
      %v2595 = vadd.f32 0.0, %v2594
      %v2596 = vpop.f32.mrf.mxu0
      %2597 = vmatprep.mubr.f32.mxu0 0.0
      %2598 = vmatmul.mubr.f32.gmra.mxu0 %v2350
      %v2599 = vpop.f32.mrf.mxu0
      %v2600 = vadd.f32 0.0, %v2599
      %v2601 = vpop.f32.mrf.mxu0
      %2602 = vmatprep.mubr.f32.mxu0 0.0
      %2603 = vmatmul.mubr.f32.gmra.mxu0 %v2353
      %v2604 = vpop.f32.mrf.mxu0
      %v2605 = vadd.f32 0.0, %v2604
      %v2606 = vpop.f32.mrf.mxu0
      %2607 = vmatprep.mubr.f32.mxu0 0.0
      %2608 = vmatmul.mubr.f32.gmra.mxu0 %v2356
      %v2609 = vpop.f32.mrf.mxu0
      %v2610 = vadd.f32 0.0, %v2609
      %v2611 = vpop.f32.mrf.mxu0
      %2612 = vmatprep.mubr.f32.mxu0 0.0
      %2613 = vmatmul.mubr.f32.gmra.mxu0 %v2359
      %v2614 = vpop.f32.mrf.mxu0
      %v2615 = vadd.f32 0.0, %v2614
      %v2616 = vpop.f32.mrf.mxu0
      %2617 = vmatprep.mubr.f32.mxu0 0.0
      %2618 = vmatmul.mubr.f32.gmra.mxu0 %v2362
      %v2619 = vpop.f32.mrf.mxu0
      %v2620 = vadd.f32 0.0, %v2619
      %v2621 = vpop.f32.mrf.mxu0
      %2622 = vmatprep.mubr.f32.mxu0 0.0
      %2623 = vmatmul.mubr.f32.gmra.mxu0 %v2365
      %v2624 = vpop.f32.mrf.mxu0
      %v2625 = vadd.f32 0.0, %v2624
      %v2626 = vpop.f32.mrf.mxu0
      %2627 = vmatprep.mubr.f32.mxu0 0.0
      %2628 = vmatmul.mubr.f32.gmra.mxu0 %v2368
      %v2629 = vpop.f32.mrf.mxu0
      %v2630 = vadd.f32 0.0, %v2629
      %v2631 = vpop.f32.mrf.mxu0
      %2632 = vmatprep.mubr.f32.mxu0 0.0
      %2633 = vmatmul.mubr.f32.gmra.mxu0 %v2371
      %v2634 = vpop.f32.mrf.mxu0
      %v2635 = vadd.f32 0.0, %v2634
      %v2636 = vpop.f32.mrf.mxu0
      %2637 = vmatprep.mubr.f32.mxu0 0.0
      %2638 = vmatmul.mubr.f32.gmra.mxu0 %v2374
      %v2639 = vpop.f32.mrf.mxu0
      %v2640 = vadd.f32 0.0, %v2639
      %v2641 = vpop.f32.mrf.mxu0
      %2642 = vmatprep.mubr.f32.mxu0 0.0
      %2643 = vmatmul.mubr.f32.gmra.mxu0 %v2377
      %v2644 = vpop.f32.mrf.mxu0
      %v2645 = vadd.f32 0.0, %v2644
      %v2646 = vpop.f32.mrf.mxu0
      %2647 = vmatprep.mubr.f32.mxu0 0.0
      %2648 = vmatmul.mubr.f32.gmra.mxu0 %v2380
      %v2649 = vpop.f32.mrf.mxu0
      %v2650 = vadd.f32 0.0, %v2649
      %v2651 = vpop.f32.mrf.mxu0
      %2652 = vmatprep.mubr.f32.mxu0 0.0
      %2653 = vmatmul.mubr.f32.gmra.mxu0 %v2383
      %v2654 = vpop.f32.mrf.mxu0
      %v2655 = vadd.f32 0.0, %v2654
      %v2656 = vpop.f32.mrf.mxu0
      %2657 = vdwg.mxu0
      %v2658 = vadd.f32 %v2178, %v2455
      %v2659 = vadd.f32 %v2179, %v2460
      %v2660 = vadd.f32 %v2180, %v2465
      %v2661 = vadd.f32 %v2181, %v2470
      %v2662 = vadd.f32 %v2182, %v2475
      %v2663 = vadd.f32 %v2183, %v2480
      %v2664 = vadd.f32 %v2184, %v2485
      %v2665 = vadd.f32 %v2185, %v2490
      %v2666 = vadd.f32 %v2186, %v2495
      %v2667 = vadd.f32 %v2187, %v2500
      %v2668 = vadd.f32 %v2188, %v2505
      %v2669 = vadd.f32 %v2189, %v2510
      %v2670 = vadd.f32 %v2190, %v2515
      %v2671 = vadd.f32 %v2191, %v2520
      %v2672 = vadd.f32 %v2192, %v2525
      %v2673 = vadd.f32 %v2193, %v2530
      %v2674 = vadd.f32 %v2194, %v2535
      %v2675 = vadd.f32 %v2195, %v2540
      %v2676 = vadd.f32 %v2196, %v2545
      %v2677 = vadd.f32 %v2197, %v2550
      %v2678 = vadd.f32 %v2198, %v2555
      %v2679 = vadd.f32 %v2199, %v2560
      %v2680 = vadd.f32 %v2200, %v2565
      %v2681 = vadd.f32 %v2201, %v2570
      %v2682 = vadd.f32 %v2202, %v2575
      %v2683 = vadd.f32 %v2203, %v2580
      %v2684 = vadd.f32 %v2204, %v2585
      %v2685 = vadd.f32 %v2205, %v2590
      %v2686 = vadd.f32 %v2206, %v2595
      %v2687 = vadd.f32 %v2207, %v2600
      %v2688 = vadd.f32 %v2208, %v2605
      %v2689 = vadd.f32 %v2209, %v2610
      %v2690 = vadd.f32 %v2210, %v2615
      %v2691 = vadd.f32 %v2211, %v2620
      %v2692 = vadd.f32 %v2212, %v2625
      %v2693 = vadd.f32 %v2213, %v2630
      %v2694 = vadd.f32 %v2214, %v2635
      %v2695 = vadd.f32 %v2215, %v2640
      %v2696 = vadd.f32 %v2216, %v2645
      %v2697 = vadd.f32 %v2217, %v2650
      %v2698 = vadd.f32 %v2218, %v2655
      %v2699 = vld [vmem:[#allocation2 + $0x18] sm:$0xff]
      %v2700 = vld [vmem:[#allocation2 + $0x20] sm:$0xff]
      %v2701 = vld [vmem:[#allocation2 + $0x28] sm:$0xff]
      %v2702 = vld [vmem:[#allocation2 + $0x30] sm:$0xff]
      %v2703 = vld [vmem:[#allocation2 + $0x38] sm:$0xff]
      %v2704 = vld [vmem:[#allocation2 + $0x40] sm:$0xff]
      %v2705 = vld [vmem:[#allocation2 + $0x48] sm:$0xff]
      %v2706 = vld [vmem:[#allocation2 + $0x50] sm:$0xff]
      %v2707 = vld [vmem:[#allocation2 + $0x58] sm:$0xff]
      %v2708 = vld [vmem:[#allocation2 + $0x60] sm:$0xff]
      %v2709 = vld [vmem:[#allocation2 + $0x68] sm:$0xff]
      %v2710 = vld [vmem:[#allocation2 + $0x70] sm:$0xff]
      %v2711 = vld [vmem:[#allocation2 + $0x78] sm:$0xff]
      %v2712 = vld [vmem:[#allocation2 + $0x80] sm:$0xff]
      %v2713 = vld [vmem:[#allocation2 + $0x88] sm:$0xff]
      %v2714 = vld [vmem:[#allocation2 + $0x90] sm:$0xff]
      %v2715 = vld [vmem:[#allocation2 + $0x98] sm:$0xff]
      %v2716 = vld [vmem:[#allocation2 + $0xa0] sm:$0xff]
      %v2717 = vld [vmem:[#allocation2 + $0xa8] sm:$0xff]
      %v2718 = vld [vmem:[#allocation2 + $0xb0] sm:$0xff]
      %v2719 = vld [vmem:[#allocation2 + $0xb8] sm:$0xff]
      %v2720 = vld [vmem:[#allocation2 + $0xc0] sm:$0xff]
      %v2721 = vld [vmem:[#allocation2 + $0xc8] sm:$0xff]
      %v2722 = vld [vmem:[#allocation2 + $0xd0] sm:$0xff]
      %v2723 = vld [vmem:[#allocation2 + $0xd8] sm:$0xff]
      %v2724 = vld [vmem:[#allocation2 + $0xe0] sm:$0xff]
      %v2725 = vld [vmem:[#allocation2 + $0xe8] sm:$0xff]
      %v2726 = vld [vmem:[#allocation2 + $0xf0] sm:$0xff]
      %v2727 = vld [vmem:[#allocation2 + $0xf8] sm:$0xff]
      %v2728 = vld [vmem:[#allocation2 + $0x100] sm:$0xff]
      %v2729 = vld [vmem:[#allocation2 + $0x108] sm:$0xff]
      %v2730 = vld [vmem:[#allocation2 + $0x110] sm:$0xff]
      %v2731 = vld [vmem:[#allocation2 + $0x118] sm:$0xff]
      %v2732 = vld [vmem:[#allocation2 + $0x120] sm:$0xff]
      %v2733 = vld [vmem:[#allocation2 + $0x128] sm:$0xff]
      %v2734 = vld [vmem:[#allocation2 + $0x130] sm:$0xff]
      %v2735 = vld [vmem:[#allocation2 + $0x138] sm:$0xff]
      %v2736 = vld [vmem:[#allocation2 + $0x140] sm:$0xff]
      %v2737 = vld [vmem:[#allocation2 + $0x148] sm:$0xff]
      %v2738 = vld [vmem:[#allocation2 + $0x150] sm:$0xff]
      %v2739 = vld [vmem:[#allocation2 + $0x158] sm:$0xf]
      %s2740 = scalar_lea.vmem %s4, 16
      %v2741 = vld [vmem:[%s2740] sm:$0xf]
      %v2743 = vsel %vm771, %v2699, 0
      %v2746 = vsel %vm771, %v2700, 0
      %v2749 = vsel %vm771, %v2701, 0
      %v2752 = vsel %vm771, %v2702, 0
      %v2755 = vsel %vm771, %v2703, 0
      %v2758 = vsel %vm771, %v2704, 0
      %v2761 = vsel %vm771, %v2705, 0
      %v2764 = vsel %vm771, %v2706, 0
      %v2767 = vsel %vm771, %v2707, 0
      %v2770 = vsel %vm771, %v2708, 0
      %v2773 = vsel %vm771, %v2709, 0
      %v2776 = vsel %vm771, %v2710, 0
      %v2779 = vsel %vm771, %v2711, 0
      %v2782 = vsel %vm771, %v2712, 0
      %v2785 = vsel %vm771, %v2713, 0
      %v2788 = vsel %vm771, %v2714, 0
      %v2791 = vsel %vm771, %v2715, 0
      %v2794 = vsel %vm771, %v2716, 0
      %v2797 = vsel %vm771, %v2717, 0
      %v2800 = vsel %vm771, %v2718, 0
      %v2803 = vsel %vm771, %v2719, 0
      %v2806 = vsel %vm771, %v2720, 0
      %v2809 = vsel %vm771, %v2721, 0
      %v2812 = vsel %vm771, %v2722, 0
      %v2815 = vsel %vm771, %v2723, 0
      %v2818 = vsel %vm771, %v2724, 0
      %v2821 = vsel %vm771, %v2725, 0
      %v2824 = vsel %vm771, %v2726, 0
      %v2827 = vsel %vm771, %v2727, 0
      %v2830 = vsel %vm771, %v2728, 0
      %v2833 = vsel %vm771, %v2729, 0
      %v2836 = vsel %vm771, %v2730, 0
      %v2839 = vsel %vm771, %v2731, 0
      %v2842 = vsel %vm771, %v2732, 0
      %v2845 = vsel %vm771, %v2733, 0
      %v2848 = vsel %vm771, %v2734, 0
      %v2851 = vsel %vm771, %v2735, 0
      %v2854 = vsel %vm771, %v2736, 0
      %v2857 = vsel %vm771, %v2737, 0
      %v2860 = vsel %vm771, %v2738, 0
      %v2863 = vsel %vm771, %v2739, 0
      %v2866 = vsel %vm1069, %v2741, 0
      %2868 = vmatprep.subr.mxu0 0.0
      %2869 = vmatpush1.msra.mxu0 0.0
      %2870 = vmatprep.subr.mxu0 0.0
      %2871 = vmatpush1.msra.mxu0 0.0
      %2872 = vmatprep.subr.mxu0 0.0
      %2873 = vmatpush1.msra.mxu0 0.0
      %2874 = vmatprep.subr.mxu0 0.0
      %2875 = vmatpush1.msra.mxu0 0.0
      %2876 = vmatprep.subr.mxu0 0.0
      %2877 = vmatpush1.msra.mxu0 0.0
      %2878 = vmatprep.subr.mxu0 0.0
      %2879 = vmatpush1.msra.mxu0 0.0
      %2880 = vmatprep.subr.mxu0 0.0
      %2881 = vmatpush1.msra.mxu0 0.0
      %2882 = vmatprep.subr.mxu0 0.0
      %2883 = vmatpush1.msra.mxu0 0.0
      %2884 = vmatprep.subr.mxu0 0.0
      %2885 = vmatpush1.msra.mxu0 0.0
      %2886 = vmatprep.subr.mxu0 0.0
      %2887 = vmatpush1.msra.mxu0 0.0
      %2888 = vmatprep.subr.mxu0 0.0
      %2889 = vmatpush1.msra.mxu0 0.0
      %2890 = vmatprep.subr.mxu0 0.0
      %2891 = vmatpush1.msra.mxu0 0.0
      %2892 = vmatprep.subr.mxu0 0.0
      %2893 = vmatpush1.msra.mxu0 0.0
      %2894 = vmatprep.subr.mxu0 0.0
      %2895 = vmatpush1.msra.mxu0 0.0
      %2896 = vmatprep.subr.mxu0 0.0
      %2897 = vmatpush1.msra.mxu0 0.0
      %2898 = vmatprep.subr.mxu0 0.0
      %2899 = vmatpush1.msra.mxu0 %v2866
      %2900 = vmatprep.subr.mxu0 0.0
      %2901 = vmatpush2.msra.mxu0 0.0
      %2902 = vmatprep.subr.mxu0 0.0
      %2903 = vmatpush2.msra.mxu0 0.0
      %2904 = vmatprep.subr.mxu0 0.0
      %2905 = vmatpush2.msra.mxu0 0.0
      %2906 = vmatprep.subr.mxu0 0.0
      %2907 = vmatpush2.msra.mxu0 0.0
      %2908 = vmatprep.subr.mxu0 0.0
      %2909 = vmatpush2.msra.mxu0 0.0
      %2910 = vmatprep.subr.mxu0 0.0
      %2911 = vmatpush2.msra.mxu0 0.0
      %2912 = vmatprep.subr.mxu0 0.0
      %2913 = vmatpush2.msra.mxu0 0.0
      %2914 = vmatprep.subr.mxu0 0.0
      %2915 = vmatpush2.msra.mxu0 0.0
      %2916 = vmatprep.subr.mxu0 0.0
      %2917 = vmatpush2.msra.mxu0 0.0
      %2918 = vmatprep.subr.mxu0 0.0
      %2919 = vmatpush2.msra.mxu0 0.0
      %2920 = vmatprep.subr.mxu0 0.0
      %2921 = vmatpush2.msra.mxu0 0.0
      %2922 = vmatprep.subr.mxu0 0.0
      %2923 = vmatpush2.msra.mxu0 0.0
      %2924 = vmatprep.subr.mxu0 0.0
      %2925 = vmatpush2.msra.mxu0 0.0
      %2926 = vmatprep.subr.mxu0 0.0
      %2927 = vmatpush2.msra.mxu0 0.0
      %2928 = vmatprep.subr.mxu0 0.0
      %2929 = vmatpush2.msra.mxu0 0.0
      %2930 = vmatprep.subr.mxu0 0.0
      %2931 = vmatpush2.msra.mxu0 0.0
      %2932 = vmatprep.mubr.f32.mxu0 0.0
      %2933 = vmatmul.mubr.f32.gmra.mxu0 %v2743
      %v2934 = vpop.f32.mrf.mxu0
      %v2935 = vadd.f32 0.0, %v2934
      %v2936 = vpop.f32.mrf.mxu0
      %2937 = vmatprep.mubr.f32.mxu0 0.0
      %2938 = vmatmul.mubr.f32.gmra.mxu0 %v2746
      %v2939 = vpop.f32.mrf.mxu0
      %v2940 = vadd.f32 0.0, %v2939
      %v2941 = vpop.f32.mrf.mxu0
      %2942 = vmatprep.mubr.f32.mxu0 0.0
      %2943 = vmatmul.mubr.f32.gmra.mxu0 %v2749
      %v2944 = vpop.f32.mrf.mxu0
      %v2945 = vadd.f32 0.0, %v2944
      %v2946 = vpop.f32.mrf.mxu0
      %2947 = vmatprep.mubr.f32.mxu0 0.0
      %2948 = vmatmul.mubr.f32.gmra.mxu0 %v2752
      %v2949 = vpop.f32.mrf.mxu0
      %v2950 = vadd.f32 0.0, %v2949
      %v2951 = vpop.f32.mrf.mxu0
      %2952 = vmatprep.mubr.f32.mxu0 0.0
      %2953 = vmatmul.mubr.f32.gmra.mxu0 %v2755
      %v2954 = vpop.f32.mrf.mxu0
      %v2955 = vadd.f32 0.0, %v2954
      %v2956 = vpop.f32.mrf.mxu0
      %2957 = vmatprep.mubr.f32.mxu0 0.0
      %2958 = vmatmul.mubr.f32.gmra.mxu0 %v2758
      %v2959 = vpop.f32.mrf.mxu0
      %v2960 = vadd.f32 0.0, %v2959
      %v2961 = vpop.f32.mrf.mxu0
      %2962 = vmatprep.mubr.f32.mxu0 0.0
      %2963 = vmatmul.mubr.f32.gmra.mxu0 %v2761
      %v2964 = vpop.f32.mrf.mxu0
      %v2965 = vadd.f32 0.0, %v2964
      %v2966 = vpop.f32.mrf.mxu0
      %2967 = vmatprep.mubr.f32.mxu0 0.0
      %2968 = vmatmul.mubr.f32.gmra.mxu0 %v2764
      %v2969 = vpop.f32.mrf.mxu0
      %v2970 = vadd.f32 0.0, %v2969
      %v2971 = vpop.f32.mrf.mxu0
      %2972 = vmatprep.mubr.f32.mxu0 0.0
      %2973 = vmatmul.mubr.f32.gmra.mxu0 %v2767
      %v2974 = vpop.f32.mrf.mxu0
      %v2975 = vadd.f32 0.0, %v2974
      %v2976 = vpop.f32.mrf.mxu0
      %2977 = vmatprep.mubr.f32.mxu0 0.0
      %2978 = vmatmul.mubr.f32.gmra.mxu0 %v2770
      %v2979 = vpop.f32.mrf.mxu0
      %v2980 = vadd.f32 0.0, %v2979
      %v2981 = vpop.f32.mrf.mxu0
      %2982 = vmatprep.mubr.f32.mxu0 0.0
      %2983 = vmatmul.mubr.f32.gmra.mxu0 %v2773
      %v2984 = vpop.f32.mrf.mxu0
      %v2985 = vadd.f32 0.0, %v2984
      %v2986 = vpop.f32.mrf.mxu0
      %2987 = vmatprep.mubr.f32.mxu0 0.0
      %2988 = vmatmul.mubr.f32.gmra.mxu0 %v2776
      %v2989 = vpop.f32.mrf.mxu0
      %v2990 = vadd.f32 0.0, %v2989
      %v2991 = vpop.f32.mrf.mxu0
      %2992 = vmatprep.mubr.f32.mxu0 0.0
      %2993 = vmatmul.mubr.f32.gmra.mxu0 %v2779
      %v2994 = vpop.f32.mrf.mxu0
      %v2995 = vadd.f32 0.0, %v2994
      %v2996 = vpop.f32.mrf.mxu0
      %2997 = vmatprep.mubr.f32.mxu0 0.0
      %2998 = vmatmul.mubr.f32.gmra.mxu0 %v2782
      %v2999 = vpop.f32.mrf.mxu0
      %v3000 = vadd.f32 0.0, %v2999
      %v3001 = vpop.f32.mrf.mxu0
      %3002 = vmatprep.mubr.f32.mxu0 0.0
      %3003 = vmatmul.mubr.f32.gmra.mxu0 %v2785
      %v3004 = vpop.f32.mrf.mxu0
      %v3005 = vadd.f32 0.0, %v3004
      %v3006 = vpop.f32.mrf.mxu0
      %3007 = vmatprep.mubr.f32.mxu0 0.0
      %3008 = vmatmul.mubr.f32.gmra.mxu0 %v2788
      %v3009 = vpop.f32.mrf.mxu0
      %v3010 = vadd.f32 0.0, %v3009
      %v3011 = vpop.f32.mrf.mxu0
      %3012 = vmatprep.mubr.f32.mxu0 0.0
      %3013 = vmatmul.mubr.f32.gmra.mxu0 %v2791
      %v3014 = vpop.f32.mrf.mxu0
      %v3015 = vadd.f32 0.0, %v3014
      %v3016 = vpop.f32.mrf.mxu0
      %3017 = vmatprep.mubr.f32.mxu0 0.0
      %3018 = vmatmul.mubr.f32.gmra.mxu0 %v2794
      %v3019 = vpop.f32.mrf.mxu0
      %v3020 = vadd.f32 0.0, %v3019
      %v3021 = vpop.f32.mrf.mxu0
      %3022 = vmatprep.mubr.f32.mxu0 0.0
      %3023 = vmatmul.mubr.f32.gmra.mxu0 %v2797
      %v3024 = vpop.f32.mrf.mxu0
      %v3025 = vadd.f32 0.0, %v3024
      %v3026 = vpop.f32.mrf.mxu0
      %3027 = vmatprep.mubr.f32.mxu0 0.0
      %3028 = vmatmul.mubr.f32.gmra.mxu0 %v2800
      %v3029 = vpop.f32.mrf.mxu0
      %v3030 = vadd.f32 0.0, %v3029
      %v3031 = vpop.f32.mrf.mxu0
      %3032 = vmatprep.mubr.f32.mxu0 0.0
      %3033 = vmatmul.mubr.f32.gmra.mxu0 %v2803
      %v3034 = vpop.f32.mrf.mxu0
      %v3035 = vadd.f32 0.0, %v3034
      %v3036 = vpop.f32.mrf.mxu0
      %3037 = vmatprep.mubr.f32.mxu0 0.0
      %3038 = vmatmul.mubr.f32.gmra.mxu0 %v2806
      %v3039 = vpop.f32.mrf.mxu0
      %v3040 = vadd.f32 0.0, %v3039
      %v3041 = vpop.f32.mrf.mxu0
      %3042 = vmatprep.mubr.f32.mxu0 0.0
      %3043 = vmatmul.mubr.f32.gmra.mxu0 %v2809
      %v3044 = vpop.f32.mrf.mxu0
      %v3045 = vadd.f32 0.0, %v3044
      %v3046 = vpop.f32.mrf.mxu0
      %3047 = vmatprep.mubr.f32.mxu0 0.0
      %3048 = vmatmul.mubr.f32.gmra.mxu0 %v2812
      %v3049 = vpop.f32.mrf.mxu0
      %v3050 = vadd.f32 0.0, %v3049
      %v3051 = vpop.f32.mrf.mxu0
      %3052 = vmatprep.mubr.f32.mxu0 0.0
      %3053 = vmatmul.mubr.f32.gmra.mxu0 %v2815
      %v3054 = vpop.f32.mrf.mxu0
      %v3055 = vadd.f32 0.0, %v3054
      %v3056 = vpop.f32.mrf.mxu0
      %3057 = vmatprep.mubr.f32.mxu0 0.0
      %3058 = vmatmul.mubr.f32.gmra.mxu0 %v2818
      %v3059 = vpop.f32.mrf.mxu0
      %v3060 = vadd.f32 0.0, %v3059
      %v3061 = vpop.f32.mrf.mxu0
      %3062 = vmatprep.mubr.f32.mxu0 0.0
      %3063 = vmatmul.mubr.f32.gmra.mxu0 %v2821
      %v3064 = vpop.f32.mrf.mxu0
      %v3065 = vadd.f32 0.0, %v3064
      %v3066 = vpop.f32.mrf.mxu0
      %3067 = vmatprep.mubr.f32.mxu0 0.0
      %3068 = vmatmul.mubr.f32.gmra.mxu0 %v2824
      %v3069 = vpop.f32.mrf.mxu0
      %v3070 = vadd.f32 0.0, %v3069
      %v3071 = vpop.f32.mrf.mxu0
      %3072 = vmatprep.mubr.f32.mxu0 0.0
      %3073 = vmatmul.mubr.f32.gmra.mxu0 %v2827
      %v3074 = vpop.f32.mrf.mxu0
      %v3075 = vadd.f32 0.0, %v3074
      %v3076 = vpop.f32.mrf.mxu0
      %3077 = vmatprep.mubr.f32.mxu0 0.0
      %3078 = vmatmul.mubr.f32.gmra.mxu0 %v2830
      %v3079 = vpop.f32.mrf.mxu0
      %v3080 = vadd.f32 0.0, %v3079
      %v3081 = vpop.f32.mrf.mxu0
      %3082 = vmatprep.mubr.f32.mxu0 0.0
      %3083 = vmatmul.mubr.f32.gmra.mxu0 %v2833
      %v3084 = vpop.f32.mrf.mxu0
      %v3085 = vadd.f32 0.0, %v3084
      %v3086 = vpop.f32.mrf.mxu0
      %3087 = vmatprep.mubr.f32.mxu0 0.0
      %3088 = vmatmul.mubr.f32.gmra.mxu0 %v2836
      %v3089 = vpop.f32.mrf.mxu0
      %v3090 = vadd.f32 0.0, %v3089
      %v3091 = vpop.f32.mrf.mxu0
      %3092 = vmatprep.mubr.f32.mxu0 0.0
      %3093 = vmatmul.mubr.f32.gmra.mxu0 %v2839
      %v3094 = vpop.f32.mrf.mxu0
      %v3095 = vadd.f32 0.0, %v3094
      %v3096 = vpop.f32.mrf.mxu0
      %3097 = vmatprep.mubr.f32.mxu0 0.0
      %3098 = vmatmul.mubr.f32.gmra.mxu0 %v2842
      %v3099 = vpop.f32.mrf.mxu0
      %v3100 = vadd.f32 0.0, %v3099
      %v3101 = vpop.f32.mrf.mxu0
      %3102 = vmatprep.mubr.f32.mxu0 0.0
      %3103 = vmatmul.mubr.f32.gmra.mxu0 %v2845
      %v3104 = vpop.f32.mrf.mxu0
      %v3105 = vadd.f32 0.0, %v3104
      %v3106 = vpop.f32.mrf.mxu0
      %3107 = vmatprep.mubr.f32.mxu0 0.0
      %3108 = vmatmul.mubr.f32.gmra.mxu0 %v2848
      %v3109 = vpop.f32.mrf.mxu0
      %v3110 = vadd.f32 0.0, %v3109
      %v3111 = vpop.f32.mrf.mxu0
      %3112 = vmatprep.mubr.f32.mxu0 0.0
      %3113 = vmatmul.mubr.f32.gmra.mxu0 %v2851
      %v3114 = vpop.f32.mrf.mxu0
      %v3115 = vadd.f32 0.0, %v3114
      %v3116 = vpop.f32.mrf.mxu0
      %3117 = vmatprep.mubr.f32.mxu0 0.0
      %3118 = vmatmul.mubr.f32.gmra.mxu0 %v2854
      %v3119 = vpop.f32.mrf.mxu0
      %v3120 = vadd.f32 0.0, %v3119
      %v3121 = vpop.f32.mrf.mxu0
      %3122 = vmatprep.mubr.f32.mxu0 0.0
      %3123 = vmatmul.mubr.f32.gmra.mxu0 %v2857
      %v3124 = vpop.f32.mrf.mxu0
      %v3125 = vadd.f32 0.0, %v3124
      %v3126 = vpop.f32.mrf.mxu0
      %3127 = vmatprep.mubr.f32.mxu0 0.0
      %3128 = vmatmul.mubr.f32.gmra.mxu0 %v2860
      %v3129 = vpop.f32.mrf.mxu0
      %v3130 = vadd.f32 0.0, %v3129
      %v3131 = vpop.f32.mrf.mxu0
      %3132 = vmatprep.mubr.f32.mxu0 0.0
      %3133 = vmatmul.mubr.f32.gmra.mxu0 %v2863
      %v3134 = vpop.f32.mrf.mxu0
      %v3135 = vadd.f32 0.0, %v3134
      %v3136 = vpop.f32.mrf.mxu0
      %3137 = vdwg.mxu0
      %v3138 = vadd.f32 %v2658, %v2935
      %v3139 = vadd.f32 %v2659, %v2940
      %v3140 = vadd.f32 %v2660, %v2945
      %v3141 = vadd.f32 %v2661, %v2950
      %v3142 = vadd.f32 %v2662, %v2955
      %v3143 = vadd.f32 %v2663, %v2960
      %v3144 = vadd.f32 %v2664, %v2965
      %v3145 = vadd.f32 %v2665, %v2970
      %v3146 = vadd.f32 %v2666, %v2975
      %v3147 = vadd.f32 %v2667, %v2980
      %v3148 = vadd.f32 %v2668, %v2985
      %v3149 = vadd.f32 %v2669, %v2990
      %v3150 = vadd.f32 %v2670, %v2995
      %v3151 = vadd.f32 %v2671, %v3000
      %v3152 = vadd.f32 %v2672, %v3005
      %v3153 = vadd.f32 %v2673, %v3010
      %v3154 = vadd.f32 %v2674, %v3015
      %v3155 = vadd.f32 %v2675, %v3020
      %v3156 = vadd.f32 %v2676, %v3025
      %v3157 = vadd.f32 %v2677, %v3030
      %v3158 = vadd.f32 %v2678, %v3035
      %v3159 = vadd.f32 %v2679, %v3040
      %v3160 = vadd.f32 %v2680, %v3045
      %v3161 = vadd.f32 %v2681, %v3050
      %v3162 = vadd.f32 %v2682, %v3055
      %v3163 = vadd.f32 %v2683, %v3060
      %v3164 = vadd.f32 %v2684, %v3065
      %v3165 = vadd.f32 %v2685, %v3070
      %v3166 = vadd.f32 %v2686, %v3075
      %v3167 = vadd.f32 %v2687, %v3080
      %v3168 = vadd.f32 %v2688, %v3085
      %v3169 = vadd.f32 %v2689, %v3090
      %v3170 = vadd.f32 %v2690, %v3095
      %v3171 = vadd.f32 %v2691, %v3100
      %v3172 = vadd.f32 %v2692, %v3105
      %v3173 = vadd.f32 %v2693, %v3110
      %v3174 = vadd.f32 %v2694, %v3115
      %v3175 = vadd.f32 %v2695, %v3120
      %v3176 = vadd.f32 %v2696, %v3125
      %v3177 = vadd.f32 %v2697, %v3130
      %v3178 = vadd.f32 %v2698, %v3135
      %v3179 = vld [vmem:[#allocation2 + $0x19] sm:$0xff]
      %v3180 = vld [vmem:[#allocation2 + $0x21] sm:$0xff]
      %v3181 = vld [vmem:[#allocation2 + $0x29] sm:$0xff]
      %v3182 = vld [vmem:[#allocation2 + $0x31] sm:$0xff]
      %v3183 = vld [vmem:[#allocation2 + $0x39] sm:$0xff]
      %v3184 = vld [vmem:[#allocation2 + $0x41] sm:$0xff]
      %v3185 = vld [vmem:[#allocation2 + $0x49] sm:$0xff]
      %v3186 = vld [vmem:[#allocation2 + $0x51] sm:$0xff]
      %v3187 = vld [vmem:[#allocation2 + $0x59] sm:$0xff]
      %v3188 = vld [vmem:[#allocation2 + $0x61] sm:$0xff]
      %v3189 = vld [vmem:[#allocation2 + $0x69] sm:$0xff]
      %v3190 = vld [vmem:[#allocation2 + $0x71] sm:$0xff]
      %v3191 = vld [vmem:[#allocation2 + $0x79] sm:$0xff]
      %v3192 = vld [vmem:[#allocation2 + $0x81] sm:$0xff]
      %v3193 = vld [vmem:[#allocation2 + $0x89] sm:$0xff]
      %v3194 = vld [vmem:[#allocation2 + $0x91] sm:$0xff]
      %v3195 = vld [vmem:[#allocation2 + $0x99] sm:$0xff]
      %v3196 = vld [vmem:[#allocation2 + $0xa1] sm:$0xff]
      %v3197 = vld [vmem:[#allocation2 + $0xa9] sm:$0xff]
      %v3198 = vld [vmem:[#allocation2 + $0xb1] sm:$0xff]
      %v3199 = vld [vmem:[#allocation2 + $0xb9] sm:$0xff]
      %v3200 = vld [vmem:[#allocation2 + $0xc1] sm:$0xff]
      %v3201 = vld [vmem:[#allocation2 + $0xc9] sm:$0xff]
      %v3202 = vld [vmem:[#allocation2 + $0xd1] sm:$0xff]
      %v3203 = vld [vmem:[#allocation2 + $0xd9] sm:$0xff]
      %v3204 = vld [vmem:[#allocation2 + $0xe1] sm:$0xff]
      %v3205 = vld [vmem:[#allocation2 + $0xe9] sm:$0xff]
      %v3206 = vld [vmem:[#allocation2 + $0xf1] sm:$0xff]
      %v3207 = vld [vmem:[#allocation2 + $0xf9] sm:$0xff]
      %v3208 = vld [vmem:[#allocation2 + $0x101] sm:$0xff]
      %v3209 = vld [vmem:[#allocation2 + $0x109] sm:$0xff]
      %v3210 = vld [vmem:[#allocation2 + $0x111] sm:$0xff]
      %v3211 = vld [vmem:[#allocation2 + $0x119] sm:$0xff]
      %v3212 = vld [vmem:[#allocation2 + $0x121] sm:$0xff]
      %v3213 = vld [vmem:[#allocation2 + $0x129] sm:$0xff]
      %v3214 = vld [vmem:[#allocation2 + $0x131] sm:$0xff]
      %v3215 = vld [vmem:[#allocation2 + $0x139] sm:$0xff]
      %v3216 = vld [vmem:[#allocation2 + $0x141] sm:$0xff]
      %v3217 = vld [vmem:[#allocation2 + $0x149] sm:$0xff]
      %v3218 = vld [vmem:[#allocation2 + $0x151] sm:$0xff]
      %v3219 = vld [vmem:[#allocation2 + $0x159] sm:$0xf]
      %s3220 = scalar_lea.vmem %s4, 20
      %v3221 = vld [vmem:[%s3220] sm:$0xf]
      %v3223 = vsel %vm771, %v3179, 0
      %v3226 = vsel %vm771, %v3180, 0
      %v3229 = vsel %vm771, %v3181, 0
      %v3232 = vsel %vm771, %v3182, 0
      %v3235 = vsel %vm771, %v3183, 0
      %v3238 = vsel %vm771, %v3184, 0
      %v3241 = vsel %vm771, %v3185, 0
      %v3244 = vsel %vm771, %v3186, 0
      %v3247 = vsel %vm771, %v3187, 0
      %v3250 = vsel %vm771, %v3188, 0
      %v3253 = vsel %vm771, %v3189, 0
      %v3256 = vsel %vm771, %v3190, 0
      %v3259 = vsel %vm771, %v3191, 0
      %v3262 = vsel %vm771, %v3192, 0
      %v3265 = vsel %vm771, %v3193, 0
      %v3268 = vsel %vm771, %v3194, 0
      %v3271 = vsel %vm771, %v3195, 0
      %v3274 = vsel %vm771, %v3196, 0
      %v3277 = vsel %vm771, %v3197, 0
      %v3280 = vsel %vm771, %v3198, 0
      %v3283 = vsel %vm771, %v3199, 0
      %v3286 = vsel %vm771, %v3200, 0
      %v3289 = vsel %vm771, %v3201, 0
      %v3292 = vsel %vm771, %v3202, 0
      %v3295 = vsel %vm771, %v3203, 0
      %v3298 = vsel %vm771, %v3204, 0
      %v3301 = vsel %vm771, %v3205, 0
      %v3304 = vsel %vm771, %v3206, 0
      %v3307 = vsel %vm771, %v3207, 0
      %v3310 = vsel %vm771, %v3208, 0
      %v3313 = vsel %vm771, %v3209, 0
      %v3316 = vsel %vm771, %v3210, 0
      %v3319 = vsel %vm771, %v3211, 0
      %v3322 = vsel %vm771, %v3212, 0
      %v3325 = vsel %vm771, %v3213, 0
      %v3328 = vsel %vm771, %v3214, 0
      %v3331 = vsel %vm771, %v3215, 0
      %v3334 = vsel %vm771, %v3216, 0
      %v3337 = vsel %vm771, %v3217, 0
      %v3340 = vsel %vm771, %v3218, 0
      %v3343 = vsel %vm771, %v3219, 0
      %v3346 = vsel %vm1069, %v3221, 0
      %3348 = vmatprep.subr.mxu0 0.0
      %3349 = vmatpush1.msra.mxu0 0.0
      %3350 = vmatprep.subr.mxu0 0.0
      %3351 = vmatpush1.msra.mxu0 0.0
      %3352 = vmatprep.subr.mxu0 0.0
      %3353 = vmatpush1.msra.mxu0 0.0
      %3354 = vmatprep.subr.mxu0 0.0
      %3355 = vmatpush1.msra.mxu0 0.0
      %3356 = vmatprep.subr.mxu0 0.0
      %3357 = vmatpush1.msra.mxu0 0.0
      %3358 = vmatprep.subr.mxu0 0.0
      %3359 = vmatpush1.msra.mxu0 0.0
      %3360 = vmatprep.subr.mxu0 0.0
      %3361 = vmatpush1.msra.mxu0 0.0
      %3362 = vmatprep.subr.mxu0 0.0
      %3363 = vmatpush1.msra.mxu0 0.0
      %3364 = vmatprep.subr.mxu0 0.0
      %3365 = vmatpush1.msra.mxu0 0.0
      %3366 = vmatprep.subr.mxu0 0.0
      %3367 = vmatpush1.msra.mxu0 0.0
      %3368 = vmatprep.subr.mxu0 0.0
      %3369 = vmatpush1.msra.mxu0 0.0
      %3370 = vmatprep.subr.mxu0 0.0
      %3371 = vmatpush1.msra.mxu0 0.0
      %3372 = vmatprep.subr.mxu0 0.0
      %3373 = vmatpush1.msra.mxu0 0.0
      %3374 = vmatprep.subr.mxu0 0.0
      %3375 = vmatpush1.msra.mxu0 0.0
      %3376 = vmatprep.subr.mxu0 0.0
      %3377 = vmatpush1.msra.mxu0 0.0
      %3378 = vmatprep.subr.mxu0 0.0
      %3379 = vmatpush1.msra.mxu0 %v3346
      %3380 = vmatprep.subr.mxu0 0.0
      %3381 = vmatpush2.msra.mxu0 0.0
      %3382 = vmatprep.subr.mxu0 0.0
      %3383 = vmatpush2.msra.mxu0 0.0
      %3384 = vmatprep.subr.mxu0 0.0
      %3385 = vmatpush2.msra.mxu0 0.0
      %3386 = vmatprep.subr.mxu0 0.0
      %3387 = vmatpush2.msra.mxu0 0.0
      %3388 = vmatprep.subr.mxu0 0.0
      %3389 = vmatpush2.msra.mxu0 0.0
      %3390 = vmatprep.subr.mxu0 0.0
      %3391 = vmatpush2.msra.mxu0 0.0
      %3392 = vmatprep.subr.mxu0 0.0
      %3393 = vmatpush2.msra.mxu0 0.0
      %3394 = vmatprep.subr.mxu0 0.0
      %3395 = vmatpush2.msra.mxu0 0.0
      %3396 = vmatprep.subr.mxu0 0.0
      %3397 = vmatpush2.msra.mxu0 0.0
      %3398 = vmatprep.subr.mxu0 0.0
      %3399 = vmatpush2.msra.mxu0 0.0
      %3400 = vmatprep.subr.mxu0 0.0
      %3401 = vmatpush2.msra.mxu0 0.0
      %3402 = vmatprep.subr.mxu0 0.0
      %3403 = vmatpush2.msra.mxu0 0.0
      %3404 = vmatprep.subr.mxu0 0.0
      %3405 = vmatpush2.msra.mxu0 0.0
      %3406 = vmatprep.subr.mxu0 0.0
      %3407 = vmatpush2.msra.mxu0 0.0
      %3408 = vmatprep.subr.mxu0 0.0
      %3409 = vmatpush2.msra.mxu0 0.0
      %3410 = vmatprep.subr.mxu0 0.0
      %3411 = vmatpush2.msra.mxu0 0.0
      %3412 = vmatprep.mubr.f32.mxu0 0.0
      %3413 = vmatmul.mubr.f32.gmra.mxu0 %v3223
      %v3414 = vpop.f32.mrf.mxu0
      %v3415 = vadd.f32 0.0, %v3414
      %v3416 = vpop.f32.mrf.mxu0
      %3417 = vmatprep.mubr.f32.mxu0 0.0
      %3418 = vmatmul.mubr.f32.gmra.mxu0 %v3226
      %v3419 = vpop.f32.mrf.mxu0
      %v3420 = vadd.f32 0.0, %v3419
      %v3421 = vpop.f32.mrf.mxu0
      %3422 = vmatprep.mubr.f32.mxu0 0.0
      %3423 = vmatmul.mubr.f32.gmra.mxu0 %v3229
      %v3424 = vpop.f32.mrf.mxu0
      %v3425 = vadd.f32 0.0, %v3424
      %v3426 = vpop.f32.mrf.mxu0
      %3427 = vmatprep.mubr.f32.mxu0 0.0
      %3428 = vmatmul.mubr.f32.gmra.mxu0 %v3232
      %v3429 = vpop.f32.mrf.mxu0
      %v3430 = vadd.f32 0.0, %v3429
      %v3431 = vpop.f32.mrf.mxu0
      %3432 = vmatprep.mubr.f32.mxu0 0.0
      %3433 = vmatmul.mubr.f32.gmra.mxu0 %v3235
      %v3434 = vpop.f32.mrf.mxu0
      %v3435 = vadd.f32 0.0, %v3434
      %v3436 = vpop.f32.mrf.mxu0
      %3437 = vmatprep.mubr.f32.mxu0 0.0
      %3438 = vmatmul.mubr.f32.gmra.mxu0 %v3238
      %v3439 = vpop.f32.mrf.mxu0
      %v3440 = vadd.f32 0.0, %v3439
      %v3441 = vpop.f32.mrf.mxu0
      %3442 = vmatprep.mubr.f32.mxu0 0.0
      %3443 = vmatmul.mubr.f32.gmra.mxu0 %v3241
      %v3444 = vpop.f32.mrf.mxu0
      %v3445 = vadd.f32 0.0, %v3444
      %v3446 = vpop.f32.mrf.mxu0
      %3447 = vmatprep.mubr.f32.mxu0 0.0
      %3448 = vmatmul.mubr.f32.gmra.mxu0 %v3244
      %v3449 = vpop.f32.mrf.mxu0
      %v3450 = vadd.f32 0.0, %v3449
      %v3451 = vpop.f32.mrf.mxu0
      %3452 = vmatprep.mubr.f32.mxu0 0.0
      %3453 = vmatmul.mubr.f32.gmra.mxu0 %v3247
      %v3454 = vpop.f32.mrf.mxu0
      %v3455 = vadd.f32 0.0, %v3454
      %v3456 = vpop.f32.mrf.mxu0
      %3457 = vmatprep.mubr.f32.mxu0 0.0
      %3458 = vmatmul.mubr.f32.gmra.mxu0 %v3250
      %v3459 = vpop.f32.mrf.mxu0
      %v3460 = vadd.f32 0.0, %v3459
      %v3461 = vpop.f32.mrf.mxu0
      %3462 = vmatprep.mubr.f32.mxu0 0.0
      %3463 = vmatmul.mubr.f32.gmra.mxu0 %v3253
      %v3464 = vpop.f32.mrf.mxu0
      %v3465 = vadd.f32 0.0, %v3464
      %v3466 = vpop.f32.mrf.mxu0
      %3467 = vmatprep.mubr.f32.mxu0 0.0
      %3468 = vmatmul.mubr.f32.gmra.mxu0 %v3256
      %v3469 = vpop.f32.mrf.mxu0
      %v3470 = vadd.f32 0.0, %v3469
      %v3471 = vpop.f32.mrf.mxu0
      %3472 = vmatprep.mubr.f32.mxu0 0.0
      %3473 = vmatmul.mubr.f32.gmra.mxu0 %v3259
      %v3474 = vpop.f32.mrf.mxu0
      %v3475 = vadd.f32 0.0, %v3474
      %v3476 = vpop.f32.mrf.mxu0
      %3477 = vmatprep.mubr.f32.mxu0 0.0
      %3478 = vmatmul.mubr.f32.gmra.mxu0 %v3262
      %v3479 = vpop.f32.mrf.mxu0
      %v3480 = vadd.f32 0.0, %v3479
      %v3481 = vpop.f32.mrf.mxu0
      %3482 = vmatprep.mubr.f32.mxu0 0.0
      %3483 = vmatmul.mubr.f32.gmra.mxu0 %v3265
      %v3484 = vpop.f32.mrf.mxu0
      %v3485 = vadd.f32 0.0, %v3484
      %v3486 = vpop.f32.mrf.mxu0
      %3487 = vmatprep.mubr.f32.mxu0 0.0
      %3488 = vmatmul.mubr.f32.gmra.mxu0 %v3268
      %v3489 = vpop.f32.mrf.mxu0
      %v3490 = vadd.f32 0.0, %v3489
      %v3491 = vpop.f32.mrf.mxu0
      %3492 = vmatprep.mubr.f32.mxu0 0.0
      %3493 = vmatmul.mubr.f32.gmra.mxu0 %v3271
      %v3494 = vpop.f32.mrf.mxu0
      %v3495 = vadd.f32 0.0, %v3494
      %v3496 = vpop.f32.mrf.mxu0
      %3497 = vmatprep.mubr.f32.mxu0 0.0
      %3498 = vmatmul.mubr.f32.gmra.mxu0 %v3274
      %v3499 = vpop.f32.mrf.mxu0
      %v3500 = vadd.f32 0.0, %v3499
      %v3501 = vpop.f32.mrf.mxu0
      %3502 = vmatprep.mubr.f32.mxu0 0.0
      %3503 = vmatmul.mubr.f32.gmra.mxu0 %v3277
      %v3504 = vpop.f32.mrf.mxu0
      %v3505 = vadd.f32 0.0, %v3504
      %v3506 = vpop.f32.mrf.mxu0
      %3507 = vmatprep.mubr.f32.mxu0 0.0
      %3508 = vmatmul.mubr.f32.gmra.mxu0 %v3280
      %v3509 = vpop.f32.mrf.mxu0
      %v3510 = vadd.f32 0.0, %v3509
      %v3511 = vpop.f32.mrf.mxu0
      %3512 = vmatprep.mubr.f32.mxu0 0.0
      %3513 = vmatmul.mubr.f32.gmra.mxu0 %v3283
      %v3514 = vpop.f32.mrf.mxu0
      %v3515 = vadd.f32 0.0, %v3514
      %v3516 = vpop.f32.mrf.mxu0
      %3517 = vmatprep.mubr.f32.mxu0 0.0
      %3518 = vmatmul.mubr.f32.gmra.mxu0 %v3286
      %v3519 = vpop.f32.mrf.mxu0
      %v3520 = vadd.f32 0.0, %v3519
      %v3521 = vpop.f32.mrf.mxu0
      %3522 = vmatprep.mubr.f32.mxu0 0.0
      %3523 = vmatmul.mubr.f32.gmra.mxu0 %v3289
      %v3524 = vpop.f32.mrf.mxu0
      %v3525 = vadd.f32 0.0, %v3524
      %v3526 = vpop.f32.mrf.mxu0
      %3527 = vmatprep.mubr.f32.mxu0 0.0
      %3528 = vmatmul.mubr.f32.gmra.mxu0 %v3292
      %v3529 = vpop.f32.mrf.mxu0
      %v3530 = vadd.f32 0.0, %v3529
      %v3531 = vpop.f32.mrf.mxu0
      %3532 = vmatprep.mubr.f32.mxu0 0.0
      %3533 = vmatmul.mubr.f32.gmra.mxu0 %v3295
      %v3534 = vpop.f32.mrf.mxu0
      %v3535 = vadd.f32 0.0, %v3534
      %v3536 = vpop.f32.mrf.mxu0
      %3537 = vmatprep.mubr.f32.mxu0 0.0
      %3538 = vmatmul.mubr.f32.gmra.mxu0 %v3298
      %v3539 = vpop.f32.mrf.mxu0
      %v3540 = vadd.f32 0.0, %v3539
      %v3541 = vpop.f32.mrf.mxu0
      %3542 = vmatprep.mubr.f32.mxu0 0.0
      %3543 = vmatmul.mubr.f32.gmra.mxu0 %v3301
      %v3544 = vpop.f32.mrf.mxu0
      %v3545 = vadd.f32 0.0, %v3544
      %v3546 = vpop.f32.mrf.mxu0
      %3547 = vmatprep.mubr.f32.mxu0 0.0
      %3548 = vmatmul.mubr.f32.gmra.mxu0 %v3304
      %v3549 = vpop.f32.mrf.mxu0
      %v3550 = vadd.f32 0.0, %v3549
      %v3551 = vpop.f32.mrf.mxu0
      %3552 = vmatprep.mubr.f32.mxu0 0.0
      %3553 = vmatmul.mubr.f32.gmra.mxu0 %v3307
      %v3554 = vpop.f32.mrf.mxu0
      %v3555 = vadd.f32 0.0, %v3554
      %v3556 = vpop.f32.mrf.mxu0
      %3557 = vmatprep.mubr.f32.mxu0 0.0
      %3558 = vmatmul.mubr.f32.gmra.mxu0 %v3310
      %v3559 = vpop.f32.mrf.mxu0
      %v3560 = vadd.f32 0.0, %v3559
      %v3561 = vpop.f32.mrf.mxu0
      %3562 = vmatprep.mubr.f32.mxu0 0.0
      %3563 = vmatmul.mubr.f32.gmra.mxu0 %v3313
      %v3564 = vpop.f32.mrf.mxu0
      %v3565 = vadd.f32 0.0, %v3564
      %v3566 = vpop.f32.mrf.mxu0
      %3567 = vmatprep.mubr.f32.mxu0 0.0
      %3568 = vmatmul.mubr.f32.gmra.mxu0 %v3316
      %v3569 = vpop.f32.mrf.mxu0
      %v3570 = vadd.f32 0.0, %v3569
      %v3571 = vpop.f32.mrf.mxu0
      %3572 = vmatprep.mubr.f32.mxu0 0.0
      %3573 = vmatmul.mubr.f32.gmra.mxu0 %v3319
      %v3574 = vpop.f32.mrf.mxu0
      %v3575 = vadd.f32 0.0, %v3574
      %v3576 = vpop.f32.mrf.mxu0
      %3577 = vmatprep.mubr.f32.mxu0 0.0
      %3578 = vmatmul.mubr.f32.gmra.mxu0 %v3322
      %v3579 = vpop.f32.mrf.mxu0
      %v3580 = vadd.f32 0.0, %v3579
      %v3581 = vpop.f32.mrf.mxu0
      %3582 = vmatprep.mubr.f32.mxu0 0.0
      %3583 = vmatmul.mubr.f32.gmra.mxu0 %v3325
      %v3584 = vpop.f32.mrf.mxu0
      %v3585 = vadd.f32 0.0, %v3584
      %v3586 = vpop.f32.mrf.mxu0
      %3587 = vmatprep.mubr.f32.mxu0 0.0
      %3588 = vmatmul.mubr.f32.gmra.mxu0 %v3328
      %v3589 = vpop.f32.mrf.mxu0
      %v3590 = vadd.f32 0.0, %v3589
      %v3591 = vpop.f32.mrf.mxu0
      %3592 = vmatprep.mubr.f32.mxu0 0.0
      %3593 = vmatmul.mubr.f32.gmra.mxu0 %v3331
      %v3594 = vpop.f32.mrf.mxu0
      %v3595 = vadd.f32 0.0, %v3594
      %v3596 = vpop.f32.mrf.mxu0
      %3597 = vmatprep.mubr.f32.mxu0 0.0
      %3598 = vmatmul.mubr.f32.gmra.mxu0 %v3334
      %v3599 = vpop.f32.mrf.mxu0
      %v3600 = vadd.f32 0.0, %v3599
      %v3601 = vpop.f32.mrf.mxu0
      %3602 = vmatprep.mubr.f32.mxu0 0.0
      %3603 = vmatmul.mubr.f32.gmra.mxu0 %v3337
      %v3604 = vpop.f32.mrf.mxu0
      %v3605 = vadd.f32 0.0, %v3604
      %v3606 = vpop.f32.mrf.mxu0
      %3607 = vmatprep.mubr.f32.mxu0 0.0
      %3608 = vmatmul.mubr.f32.gmra.mxu0 %v3340
      %v3609 = vpop.f32.mrf.mxu0
      %v3610 = vadd.f32 0.0, %v3609
      %v3611 = vpop.f32.mrf.mxu0
      %3612 = vmatprep.mubr.f32.mxu0 0.0
      %3613 = vmatmul.mubr.f32.gmra.mxu0 %v3343
      %v3614 = vpop.f32.mrf.mxu0
      %v3615 = vadd.f32 0.0, %v3614
      %v3616 = vpop.f32.mrf.mxu0
      %3617 = vdwg.mxu0
      %v3618 = vadd.f32 %v3138, %v3415
      %v3619 = vadd.f32 %v3139, %v3420
      %v3620 = vadd.f32 %v3140, %v3425
      %v3621 = vadd.f32 %v3141, %v3430
      %v3622 = vadd.f32 %v3142, %v3435
      %v3623 = vadd.f32 %v3143, %v3440
      %v3624 = vadd.f32 %v3144, %v3445
      %v3625 = vadd.f32 %v3145, %v3450
      %v3626 = vadd.f32 %v3146, %v3455
      %v3627 = vadd.f32 %v3147, %v3460
      %v3628 = vadd.f32 %v3148, %v3465
      %v3629 = vadd.f32 %v3149, %v3470
      %v3630 = vadd.f32 %v3150, %v3475
      %v3631 = vadd.f32 %v3151, %v3480
      %v3632 = vadd.f32 %v3152, %v3485
      %v3633 = vadd.f32 %v3153, %v3490
      %v3634 = vadd.f32 %v3154, %v3495
      %v3635 = vadd.f32 %v3155, %v3500
      %v3636 = vadd.f32 %v3156, %v3505
      %v3637 = vadd.f32 %v3157, %v3510
      %v3638 = vadd.f32 %v3158, %v3515
      %v3639 = vadd.f32 %v3159, %v3520
      %v3640 = vadd.f32 %v3160, %v3525
      %v3641 = vadd.f32 %v3161, %v3530
      %v3642 = vadd.f32 %v3162, %v3535
      %v3643 = vadd.f32 %v3163, %v3540
      %v3644 = vadd.f32 %v3164, %v3545
      %v3645 = vadd.f32 %v3165, %v3550
      %v3646 = vadd.f32 %v3166, %v3555
      %v3647 = vadd.f32 %v3167, %v3560
      %v3648 = vadd.f32 %v3168, %v3565
      %v3649 = vadd.f32 %v3169, %v3570
      %v3650 = vadd.f32 %v3170, %v3575
      %v3651 = vadd.f32 %v3171, %v3580
      %v3652 = vadd.f32 %v3172, %v3585
      %v3653 = vadd.f32 %v3173, %v3590
      %v3654 = vadd.f32 %v3174, %v3595
      %v3655 = vadd.f32 %v3175, %v3600
      %v3656 = vadd.f32 %v3176, %v3605
      %v3657 = vadd.f32 %v3177, %v3610
      %v3658 = vadd.f32 %v3178, %v3615
      %v3659 = vld [vmem:[#allocation2 + $0x29] sm:$0xff]
      %v3660 = vld [vmem:[#allocation2 + $0x31] sm:$0xff]
      %v3661 = vld [vmem:[#allocation2 + $0x39] sm:$0xff]
      %v3662 = vld [vmem:[#allocation2 + $0x41] sm:$0xff]
      %v3663 = vld [vmem:[#allocation2 + $0x49] sm:$0xff]
      %v3664 = vld [vmem:[#allocation2 + $0x51] sm:$0xff]
      %v3665 = vld [vmem:[#allocation2 + $0x59] sm:$0xff]
      %v3666 = vld [vmem:[#allocation2 + $0x61] sm:$0xff]
      %v3667 = vld [vmem:[#allocation2 + $0x69] sm:$0xff]
      %v3668 = vld [vmem:[#allocation2 + $0x71] sm:$0xff]
      %v3669 = vld [vmem:[#allocation2 + $0x79] sm:$0xff]
      %v3670 = vld [vmem:[#allocation2 + $0x81] sm:$0xff]
      %v3671 = vld [vmem:[#allocation2 + $0x89] sm:$0xff]
      %v3672 = vld [vmem:[#allocation2 + $0x91] sm:$0xff]
      %v3673 = vld [vmem:[#allocation2 + $0x99] sm:$0xff]
      %v3674 = vld [vmem:[#allocation2 + $0xa1] sm:$0xff]
      %v3675 = vld [vmem:[#allocation2 + $0xa9] sm:$0xff]
      %v3676 = vld [vmem:[#allocation2 + $0xb1] sm:$0xff]
      %v3677 = vld [vmem:[#allocation2 + $0xb9] sm:$0xff]
      %v3678 = vld [vmem:[#allocation2 + $0xc1] sm:$0xff]
      %v3679 = vld [vmem:[#allocation2 + $0xc9] sm:$0xff]
      %v3680 = vld [vmem:[#allocation2 + $0xd1] sm:$0xff]
      %v3681 = vld [vmem:[#allocation2 + $0xd9] sm:$0xff]
      %v3682 = vld [vmem:[#allocation2 + $0xe1] sm:$0xff]
      %v3683 = vld [vmem:[#allocation2 + $0xe9] sm:$0xff]
      %v3684 = vld [vmem:[#allocation2 + $0xf1] sm:$0xff]
      %v3685 = vld [vmem:[#allocation2 + $0xf9] sm:$0xff]
      %v3686 = vld [vmem:[#allocation2 + $0x101] sm:$0xff]
      %v3687 = vld [vmem:[#allocation2 + $0x109] sm:$0xff]
      %v3688 = vld [vmem:[#allocation2 + $0x111] sm:$0xff]
      %v3689 = vld [vmem:[#allocation2 + $0x119] sm:$0xff]
      %v3690 = vld [vmem:[#allocation2 + $0x121] sm:$0xff]
      %v3691 = vld [vmem:[#allocation2 + $0x129] sm:$0xff]
      %v3692 = vld [vmem:[#allocation2 + $0x131] sm:$0xff]
      %v3693 = vld [vmem:[#allocation2 + $0x139] sm:$0xff]
      %v3694 = vld [vmem:[#allocation2 + $0x141] sm:$0xff]
      %v3695 = vld [vmem:[#allocation2 + $0x149] sm:$0xff]
      %v3696 = vld [vmem:[#allocation2 + $0x151] sm:$0xff]
      %v3697 = vld [vmem:[#allocation2 + $0x159] sm:$0xff]
      %v3698 = vld [vmem:[#allocation2 + $0x161] sm:$0xff]
      %v3699 = vld [vmem:[#allocation2 + $0x169] sm:$0xf]
      %s3700 = scalar_lea.vmem %s4, 24
      %v3701 = vld [vmem:[%s3700] sm:$0xf]
      %v3703 = vsel %vm771, %v3659, 0
      %v3706 = vsel %vm771, %v3660, 0
      %v3709 = vsel %vm771, %v3661, 0
      %v3712 = vsel %vm771, %v3662, 0
      %v3715 = vsel %vm771, %v3663, 0
      %v3718 = vsel %vm771, %v3664, 0
      %v3721 = vsel %vm771, %v3665, 0
      %v3724 = vsel %vm771, %v3666, 0
      %v3727 = vsel %vm771, %v3667, 0
      %v3730 = vsel %vm771, %v3668, 0
      %v3733 = vsel %vm771, %v3669, 0
      %v3736 = vsel %vm771, %v3670, 0
      %v3739 = vsel %vm771, %v3671, 0
      %v3742 = vsel %vm771, %v3672, 0
      %v3745 = vsel %vm771, %v3673, 0
      %v3748 = vsel %vm771, %v3674, 0
      %v3751 = vsel %vm771, %v3675, 0
      %v3754 = vsel %vm771, %v3676, 0
      %v3757 = vsel %vm771, %v3677, 0
      %v3760 = vsel %vm771, %v3678, 0
      %v3763 = vsel %vm771, %v3679, 0
      %v3766 = vsel %vm771, %v3680, 0
      %v3769 = vsel %vm771, %v3681, 0
      %v3772 = vsel %vm771, %v3682, 0
      %v3775 = vsel %vm771, %v3683, 0
      %v3778 = vsel %vm771, %v3684, 0
      %v3781 = vsel %vm771, %v3685, 0
      %v3784 = vsel %vm771, %v3686, 0
      %v3787 = vsel %vm771, %v3687, 0
      %v3790 = vsel %vm771, %v3688, 0
      %v3793 = vsel %vm771, %v3689, 0
      %v3796 = vsel %vm771, %v3690, 0
      %v3799 = vsel %vm771, %v3691, 0
      %v3802 = vsel %vm771, %v3692, 0
      %v3805 = vsel %vm771, %v3693, 0
      %v3808 = vsel %vm771, %v3694, 0
      %v3811 = vsel %vm771, %v3695, 0
      %v3814 = vsel %vm771, %v3696, 0
      %v3817 = vsel %vm771, %v3697, 0
      %v3820 = vsel %vm771, %v3698, 0
      %v3823 = vsel %vm771, %v3699, 0
      %v3826 = vsel %vm1069, %v3701, 0
      %3828 = vmatprep.subr.mxu0 0.0
      %3829 = vmatpush1.msra.mxu0 0.0
      %3830 = vmatprep.subr.mxu0 0.0
      %3831 = vmatpush1.msra.mxu0 0.0
      %3832 = vmatprep.subr.mxu0 0.0
      %3833 = vmatpush1.msra.mxu0 0.0
      %3834 = vmatprep.subr.mxu0 0.0
      %3835 = vmatpush1.msra.mxu0 0.0
      %3836 = vmatprep.subr.mxu0 0.0
      %3837 = vmatpush1.msra.mxu0 0.0
      %3838 = vmatprep.subr.mxu0 0.0
      %3839 = vmatpush1.msra.mxu0 0.0
      %3840 = vmatprep.subr.mxu0 0.0
      %3841 = vmatpush1.msra.mxu0 0.0
      %3842 = vmatprep.subr.mxu0 0.0
      %3843 = vmatpush1.msra.mxu0 0.0
      %3844 = vmatprep.subr.mxu0 0.0
      %3845 = vmatpush1.msra.mxu0 0.0
      %3846 = vmatprep.subr.mxu0 0.0
      %3847 = vmatpush1.msra.mxu0 0.0
      %3848 = vmatprep.subr.mxu0 0.0
      %3849 = vmatpush1.msra.mxu0 0.0
      %3850 = vmatprep.subr.mxu0 0.0
      %3851 = vmatpush1.msra.mxu0 0.0
      %3852 = vmatprep.subr.mxu0 0.0
      %3853 = vmatpush1.msra.mxu0 0.0
      %3854 = vmatprep.subr.mxu0 0.0
      %3855 = vmatpush1.msra.mxu0 0.0
      %3856 = vmatprep.subr.mxu0 0.0
      %3857 = vmatpush1.msra.mxu0 0.0
      %3858 = vmatprep.subr.mxu0 0.0
      %3859 = vmatpush1.msra.mxu0 %v3826
      %3860 = vmatprep.subr.mxu0 0.0
      %3861 = vmatpush2.msra.mxu0 0.0
      %3862 = vmatprep.subr.mxu0 0.0
      %3863 = vmatpush2.msra.mxu0 0.0
      %3864 = vmatprep.subr.mxu0 0.0
      %3865 = vmatpush2.msra.mxu0 0.0
      %3866 = vmatprep.subr.mxu0 0.0
      %3867 = vmatpush2.msra.mxu0 0.0
      %3868 = vmatprep.subr.mxu0 0.0
      %3869 = vmatpush2.msra.mxu0 0.0
      %3870 = vmatprep.subr.mxu0 0.0
      %3871 = vmatpush2.msra.mxu0 0.0
      %3872 = vmatprep.subr.mxu0 0.0
      %3873 = vmatpush2.msra.mxu0 0.0
      %3874 = vmatprep.subr.mxu0 0.0
      %3875 = vmatpush2.msra.mxu0 0.0
      %3876 = vmatprep.subr.mxu0 0.0
      %3877 = vmatpush2.msra.mxu0 0.0
      %3878 = vmatprep.subr.mxu0 0.0
      %3879 = vmatpush2.msra.mxu0 0.0
      %3880 = vmatprep.subr.mxu0 0.0
      %3881 = vmatpush2.msra.mxu0 0.0
      %3882 = vmatprep.subr.mxu0 0.0
      %3883 = vmatpush2.msra.mxu0 0.0
      %3884 = vmatprep.subr.mxu0 0.0
      %3885 = vmatpush2.msra.mxu0 0.0
      %3886 = vmatprep.subr.mxu0 0.0
      %3887 = vmatpush2.msra.mxu0 0.0
      %3888 = vmatprep.subr.mxu0 0.0
      %3889 = vmatpush2.msra.mxu0 0.0
      %3890 = vmatprep.subr.mxu0 0.0
      %3891 = vmatpush2.msra.mxu0 0.0
      %3892 = vmatprep.mubr.f32.mxu0 0.0
      %3893 = vmatmul.mubr.f32.gmra.mxu0 %v3703
      %v3894 = vpop.f32.mrf.mxu0
      %v3895 = vadd.f32 0.0, %v3894
      %v3896 = vpop.f32.mrf.mxu0
      %3897 = vmatprep.mubr.f32.mxu0 0.0
      %3898 = vmatmul.mubr.f32.gmra.mxu0 %v3706
      %v3899 = vpop.f32.mrf.mxu0
      %v3900 = vadd.f32 0.0, %v3899
      %v3901 = vpop.f32.mrf.mxu0
      %3902 = vmatprep.mubr.f32.mxu0 0.0
      %3903 = vmatmul.mubr.f32.gmra.mxu0 %v3709
      %v3904 = vpop.f32.mrf.mxu0
      %v3905 = vadd.f32 0.0, %v3904
      %v3906 = vpop.f32.mrf.mxu0
      %3907 = vmatprep.mubr.f32.mxu0 0.0
      %3908 = vmatmul.mubr.f32.gmra.mxu0 %v3712
      %v3909 = vpop.f32.mrf.mxu0
      %v3910 = vadd.f32 0.0, %v3909
      %v3911 = vpop.f32.mrf.mxu0
      %3912 = vmatprep.mubr.f32.mxu0 0.0
      %3913 = vmatmul.mubr.f32.gmra.mxu0 %v3715
      %v3914 = vpop.f32.mrf.mxu0
      %v3915 = vadd.f32 0.0, %v3914
      %v3916 = vpop.f32.mrf.mxu0
      %3917 = vmatprep.mubr.f32.mxu0 0.0
      %3918 = vmatmul.mubr.f32.gmra.mxu0 %v3718
      %v3919 = vpop.f32.mrf.mxu0
      %v3920 = vadd.f32 0.0, %v3919
      %v3921 = vpop.f32.mrf.mxu0
      %3922 = vmatprep.mubr.f32.mxu0 0.0
      %3923 = vmatmul.mubr.f32.gmra.mxu0 %v3721
      %v3924 = vpop.f32.mrf.mxu0
      %v3925 = vadd.f32 0.0, %v3924
      %v3926 = vpop.f32.mrf.mxu0
      %3927 = vmatprep.mubr.f32.mxu0 0.0
      %3928 = vmatmul.mubr.f32.gmra.mxu0 %v3724
      %v3929 = vpop.f32.mrf.mxu0
      %v3930 = vadd.f32 0.0, %v3929
      %v3931 = vpop.f32.mrf.mxu0
      %3932 = vmatprep.mubr.f32.mxu0 0.0
      %3933 = vmatmul.mubr.f32.gmra.mxu0 %v3727
      %v3934 = vpop.f32.mrf.mxu0
      %v3935 = vadd.f32 0.0, %v3934
      %v3936 = vpop.f32.mrf.mxu0
      %3937 = vmatprep.mubr.f32.mxu0 0.0
      %3938 = vmatmul.mubr.f32.gmra.mxu0 %v3730
      %v3939 = vpop.f32.mrf.mxu0
      %v3940 = vadd.f32 0.0, %v3939
      %v3941 = vpop.f32.mrf.mxu0
      %3942 = vmatprep.mubr.f32.mxu0 0.0
      %3943 = vmatmul.mubr.f32.gmra.mxu0 %v3733
      %v3944 = vpop.f32.mrf.mxu0
      %v3945 = vadd.f32 0.0, %v3944
      %v3946 = vpop.f32.mrf.mxu0
      %3947 = vmatprep.mubr.f32.mxu0 0.0
      %3948 = vmatmul.mubr.f32.gmra.mxu0 %v3736
      %v3949 = vpop.f32.mrf.mxu0
      %v3950 = vadd.f32 0.0, %v3949
      %v3951 = vpop.f32.mrf.mxu0
      %3952 = vmatprep.mubr.f32.mxu0 0.0
      %3953 = vmatmul.mubr.f32.gmra.mxu0 %v3739
      %v3954 = vpop.f32.mrf.mxu0
      %v3955 = vadd.f32 0.0, %v3954
      %v3956 = vpop.f32.mrf.mxu0
      %3957 = vmatprep.mubr.f32.mxu0 0.0
      %3958 = vmatmul.mubr.f32.gmra.mxu0 %v3742
      %v3959 = vpop.f32.mrf.mxu0
      %v3960 = vadd.f32 0.0, %v3959
      %v3961 = vpop.f32.mrf.mxu0
      %3962 = vmatprep.mubr.f32.mxu0 0.0
      %3963 = vmatmul.mubr.f32.gmra.mxu0 %v3745
      %v3964 = vpop.f32.mrf.mxu0
      %v3965 = vadd.f32 0.0, %v3964
      %v3966 = vpop.f32.mrf.mxu0
      %3967 = vmatprep.mubr.f32.mxu0 0.0
      %3968 = vmatmul.mubr.f32.gmra.mxu0 %v3748
      %v3969 = vpop.f32.mrf.mxu0
      %v3970 = vadd.f32 0.0, %v3969
      %v3971 = vpop.f32.mrf.mxu0
      %3972 = vmatprep.mubr.f32.mxu0 0.0
      %3973 = vmatmul.mubr.f32.gmra.mxu0 %v3751
      %v3974 = vpop.f32.mrf.mxu0
      %v3975 = vadd.f32 0.0, %v3974
      %v3976 = vpop.f32.mrf.mxu0
      %3977 = vmatprep.mubr.f32.mxu0 0.0
      %3978 = vmatmul.mubr.f32.gmra.mxu0 %v3754
      %v3979 = vpop.f32.mrf.mxu0
      %v3980 = vadd.f32 0.0, %v3979
      %v3981 = vpop.f32.mrf.mxu0
      %3982 = vmatprep.mubr.f32.mxu0 0.0
      %3983 = vmatmul.mubr.f32.gmra.mxu0 %v3757
      %v3984 = vpop.f32.mrf.mxu0
      %v3985 = vadd.f32 0.0, %v3984
      %v3986 = vpop.f32.mrf.mxu0
      %3987 = vmatprep.mubr.f32.mxu0 0.0
      %3988 = vmatmul.mubr.f32.gmra.mxu0 %v3760
      %v3989 = vpop.f32.mrf.mxu0
      %v3990 = vadd.f32 0.0, %v3989
      %v3991 = vpop.f32.mrf.mxu0
      %3992 = vmatprep.mubr.f32.mxu0 0.0
      %3993 = vmatmul.mubr.f32.gmra.mxu0 %v3763
      %v3994 = vpop.f32.mrf.mxu0
      %v3995 = vadd.f32 0.0, %v3994
      %v3996 = vpop.f32.mrf.mxu0
      %3997 = vmatprep.mubr.f32.mxu0 0.0
      %3998 = vmatmul.mubr.f32.gmra.mxu0 %v3766
      %v3999 = vpop.f32.mrf.mxu0
      %v4000 = vadd.f32 0.0, %v3999
      %v4001 = vpop.f32.mrf.mxu0
      %4002 = vmatprep.mubr.f32.mxu0 0.0
      %4003 = vmatmul.mubr.f32.gmra.mxu0 %v3769
      %v4004 = vpop.f32.mrf.mxu0
      %v4005 = vadd.f32 0.0, %v4004
      %v4006 = vpop.f32.mrf.mxu0
      %4007 = vmatprep.mubr.f32.mxu0 0.0
      %4008 = vmatmul.mubr.f32.gmra.mxu0 %v3772
      %v4009 = vpop.f32.mrf.mxu0
      %v4010 = vadd.f32 0.0, %v4009
      %v4011 = vpop.f32.mrf.mxu0
      %4012 = vmatprep.mubr.f32.mxu0 0.0
      %4013 = vmatmul.mubr.f32.gmra.mxu0 %v3775
      %v4014 = vpop.f32.mrf.mxu0
      %v4015 = vadd.f32 0.0, %v4014
      %v4016 = vpop.f32.mrf.mxu0
      %4017 = vmatprep.mubr.f32.mxu0 0.0
      %4018 = vmatmul.mubr.f32.gmra.mxu0 %v3778
      %v4019 = vpop.f32.mrf.mxu0
      %v4020 = vadd.f32 0.0, %v4019
      %v4021 = vpop.f32.mrf.mxu0
      %4022 = vmatprep.mubr.f32.mxu0 0.0
      %4023 = vmatmul.mubr.f32.gmra.mxu0 %v3781
      %v4024 = vpop.f32.mrf.mxu0
      %v4025 = vadd.f32 0.0, %v4024
      %v4026 = vpop.f32.mrf.mxu0
      %4027 = vmatprep.mubr.f32.mxu0 0.0
      %4028 = vmatmul.mubr.f32.gmra.mxu0 %v3784
      %v4029 = vpop.f32.mrf.mxu0
      %v4030 = vadd.f32 0.0, %v4029
      %v4031 = vpop.f32.mrf.mxu0
      %4032 = vmatprep.mubr.f32.mxu0 0.0
      %4033 = vmatmul.mubr.f32.gmra.mxu0 %v3787
      %v4034 = vpop.f32.mrf.mxu0
      %v4035 = vadd.f32 0.0, %v4034
      %v4036 = vpop.f32.mrf.mxu0
      %4037 = vmatprep.mubr.f32.mxu0 0.0
      %4038 = vmatmul.mubr.f32.gmra.mxu0 %v3790
      %v4039 = vpop.f32.mrf.mxu0
      %v4040 = vadd.f32 0.0, %v4039
      %v4041 = vpop.f32.mrf.mxu0
      %4042 = vmatprep.mubr.f32.mxu0 0.0
      %4043 = vmatmul.mubr.f32.gmra.mxu0 %v3793
      %v4044 = vpop.f32.mrf.mxu0
      %v4045 = vadd.f32 0.0, %v4044
      %v4046 = vpop.f32.mrf.mxu0
      %4047 = vmatprep.mubr.f32.mxu0 0.0
      %4048 = vmatmul.mubr.f32.gmra.mxu0 %v3796
      %v4049 = vpop.f32.mrf.mxu0
      %v4050 = vadd.f32 0.0, %v4049
      %v4051 = vpop.f32.mrf.mxu0
      %4052 = vmatprep.mubr.f32.mxu0 0.0
      %4053 = vmatmul.mubr.f32.gmra.mxu0 %v3799
      %v4054 = vpop.f32.mrf.mxu0
      %v4055 = vadd.f32 0.0, %v4054
      %v4056 = vpop.f32.mrf.mxu0
      %4057 = vmatprep.mubr.f32.mxu0 0.0
      %4058 = vmatmul.mubr.f32.gmra.mxu0 %v3802
      %v4059 = vpop.f32.mrf.mxu0
      %v4060 = vadd.f32 0.0, %v4059
      %v4061 = vpop.f32.mrf.mxu0
      %4062 = vmatprep.mubr.f32.mxu0 0.0
      %4063 = vmatmul.mubr.f32.gmra.mxu0 %v3805
      %v4064 = vpop.f32.mrf.mxu0
      %v4065 = vadd.f32 0.0, %v4064
      %v4066 = vpop.f32.mrf.mxu0
      %4067 = vmatprep.mubr.f32.mxu0 0.0
      %4068 = vmatmul.mubr.f32.gmra.mxu0 %v3808
      %v4069 = vpop.f32.mrf.mxu0
      %v4070 = vadd.f32 0.0, %v4069
      %v4071 = vpop.f32.mrf.mxu0
      %4072 = vmatprep.mubr.f32.mxu0 0.0
      %4073 = vmatmul.mubr.f32.gmra.mxu0 %v3811
      %v4074 = vpop.f32.mrf.mxu0
      %v4075 = vadd.f32 0.0, %v4074
      %v4076 = vpop.f32.mrf.mxu0
      %4077 = vmatprep.mubr.f32.mxu0 0.0
      %4078 = vmatmul.mubr.f32.gmra.mxu0 %v3814
      %v4079 = vpop.f32.mrf.mxu0
      %v4080 = vadd.f32 0.0, %v4079
      %v4081 = vpop.f32.mrf.mxu0
      %4082 = vmatprep.mubr.f32.mxu0 0.0
      %4083 = vmatmul.mubr.f32.gmra.mxu0 %v3817
      %v4084 = vpop.f32.mrf.mxu0
      %v4085 = vadd.f32 0.0, %v4084
      %v4086 = vpop.f32.mrf.mxu0
      %4087 = vmatprep.mubr.f32.mxu0 0.0
      %4088 = vmatmul.mubr.f32.gmra.mxu0 %v3820
      %v4089 = vpop.f32.mrf.mxu0
      %v4090 = vadd.f32 0.0, %v4089
      %v4091 = vpop.f32.mrf.mxu0
      %4092 = vmatprep.mubr.f32.mxu0 0.0
      %4093 = vmatmul.mubr.f32.gmra.mxu0 %v3823
      %v4094 = vpop.f32.mrf.mxu0
      %v4095 = vadd.f32 0.0, %v4094
      %v4096 = vpop.f32.mrf.mxu0
      %4097 = vdwg.mxu0
      %v4098 = vadd.f32 %v3618, %v3895
      %v4099 = vadd.f32 %v3619, %v3900
      %v4100 = vadd.f32 %v3620, %v3905
      %v4101 = vadd.f32 %v3621, %v3910
      %v4102 = vadd.f32 %v3622, %v3915
      %v4103 = vadd.f32 %v3623, %v3920
      %v4104 = vadd.f32 %v3624, %v3925
      %v4105 = vadd.f32 %v3625, %v3930
      %v4106 = vadd.f32 %v3626, %v3935
      %v4107 = vadd.f32 %v3627, %v3940
      %v4108 = vadd.f32 %v3628, %v3945
      %v4109 = vadd.f32 %v3629, %v3950
      %v4110 = vadd.f32 %v3630, %v3955
      %v4111 = vadd.f32 %v3631, %v3960
      %v4112 = vadd.f32 %v3632, %v3965
      %v4113 = vadd.f32 %v3633, %v3970
      %v4114 = vadd.f32 %v3634, %v3975
      %v4115 = vadd.f32 %v3635, %v3980
      %v4116 = vadd.f32 %v3636, %v3985
      %v4117 = vadd.f32 %v3637, %v3990
      %v4118 = vadd.f32 %v3638, %v3995
      %v4119 = vadd.f32 %v3639, %v4000
      %v4120 = vadd.f32 %v3640, %v4005
      %v4121 = vadd.f32 %v3641, %v4010
      %v4122 = vadd.f32 %v3642, %v4015
      %v4123 = vadd.f32 %v3643, %v4020
      %v4124 = vadd.f32 %v3644, %v4025
      %v4125 = vadd.f32 %v3645, %v4030
      %v4126 = vadd.f32 %v3646, %v4035
      %v4127 = vadd.f32 %v3647, %v4040
      %v4128 = vadd.f32 %v3648, %v4045
      %v4129 = vadd.f32 %v3649, %v4050
      %v4130 = vadd.f32 %v3650, %v4055
      %v4131 = vadd.f32 %v3651, %v4060
      %v4132 = vadd.f32 %v3652, %v4065
      %v4133 = vadd.f32 %v3653, %v4070
      %v4134 = vadd.f32 %v3654, %v4075
      %v4135 = vadd.f32 %v3655, %v4080
      %v4136 = vadd.f32 %v3656, %v4085
      %v4137 = vadd.f32 %v3657, %v4090
      %v4138 = vadd.f32 %v3658, %v4095
      %v4139 = vld [vmem:[#allocation2 + $0x2a] sm:$0xff]
      %v4140 = vld [vmem:[#allocation2 + $0x32] sm:$0xff]
      %v4141 = vld [vmem:[#allocation2 + $0x3a] sm:$0xff]
      %v4142 = vld [vmem:[#allocation2 + $0x42] sm:$0xff]
      %v4143 = vld [vmem:[#allocation2 + $0x4a] sm:$0xff]
      %v4144 = vld [vmem:[#allocation2 + $0x52] sm:$0xff]
      %v4145 = vld [vmem:[#allocation2 + $0x5a] sm:$0xff]
      %v4146 = vld [vmem:[#allocation2 + $0x62] sm:$0xff]
      %v4147 = vld [vmem:[#allocation2 + $0x6a] sm:$0xff]
      %v4148 = vld [vmem:[#allocation2 + $0x72] sm:$0xff]
      %v4149 = vld [vmem:[#allocation2 + $0x7a] sm:$0xff]
      %v4150 = vld [vmem:[#allocation2 + $0x82] sm:$0xff]
      %v4151 = vld [vmem:[#allocation2 + $0x8a] sm:$0xff]
      %v4152 = vld [vmem:[#allocation2 + $0x92] sm:$0xff]
      %v4153 = vld [vmem:[#allocation2 + $0x9a] sm:$0xff]
      %v4154 = vld [vmem:[#allocation2 + $0xa2] sm:$0xff]
      %v4155 = vld [vmem:[#allocation2 + $0xaa] sm:$0xff]
      %v4156 = vld [vmem:[#allocation2 + $0xb2] sm:$0xff]
      %v4157 = vld [vmem:[#allocation2 + $0xba] sm:$0xff]
      %v4158 = vld [vmem:[#allocation2 + $0xc2] sm:$0xff]
      %v4159 = vld [vmem:[#allocation2 + $0xca] sm:$0xff]
      %v4160 = vld [vmem:[#allocation2 + $0xd2] sm:$0xff]
      %v4161 = vld [vmem:[#allocation2 + $0xda] sm:$0xff]
      %v4162 = vld [vmem:[#allocation2 + $0xe2] sm:$0xff]
      %v4163 = vld [vmem:[#allocation2 + $0xea] sm:$0xff]
      %v4164 = vld [vmem:[#allocation2 + $0xf2] sm:$0xff]
      %v4165 = vld [vmem:[#allocation2 + $0xfa] sm:$0xff]
      %v4166 = vld [vmem:[#allocation2 + $0x102] sm:$0xff]
      %v4167 = vld [vmem:[#allocation2 + $0x10a] sm:$0xff]
      %v4168 = vld [vmem:[#allocation2 + $0x112] sm:$0xff]
      %v4169 = vld [vmem:[#allocation2 + $0x11a] sm:$0xff]
      %v4170 = vld [vmem:[#allocation2 + $0x122] sm:$0xff]
      %v4171 = vld [vmem:[#allocation2 + $0x12a] sm:$0xff]
      %v4172 = vld [vmem:[#allocation2 + $0x132] sm:$0xff]
      %v4173 = vld [vmem:[#allocation2 + $0x13a] sm:$0xff]
      %v4174 = vld [vmem:[#allocation2 + $0x142] sm:$0xff]
      %v4175 = vld [vmem:[#allocation2 + $0x14a] sm:$0xff]
      %v4176 = vld [vmem:[#allocation2 + $0x152] sm:$0xff]
      %v4177 = vld [vmem:[#allocation2 + $0x15a] sm:$0xff]
      %v4178 = vld [vmem:[#allocation2 + $0x162] sm:$0xff]
      %v4179 = vld [vmem:[#allocation2 + $0x16a] sm:$0xf]
      %s4180 = scalar_lea.vmem %s4, 28
      %v4181 = vld [vmem:[%s4180] sm:$0xf]
      %v4183 = vsel %vm771, %v4139, 0
      %v4186 = vsel %vm771, %v4140, 0
      %v4189 = vsel %vm771, %v4141, 0
      %v4192 = vsel %vm771, %v4142, 0
      %v4195 = vsel %vm771, %v4143, 0
      %v4198 = vsel %vm771, %v4144, 0
      %v4201 = vsel %vm771, %v4145, 0
      %v4204 = vsel %vm771, %v4146, 0
      %v4207 = vsel %vm771, %v4147, 0
      %v4210 = vsel %vm771, %v4148, 0
      %v4213 = vsel %vm771, %v4149, 0
      %v4216 = vsel %vm771, %v4150, 0
      %v4219 = vsel %vm771, %v4151, 0
      %v4222 = vsel %vm771, %v4152, 0
      %v4225 = vsel %vm771, %v4153, 0
      %v4228 = vsel %vm771, %v4154, 0
      %v4231 = vsel %vm771, %v4155, 0
      %v4234 = vsel %vm771, %v4156, 0
      %v4237 = vsel %vm771, %v4157, 0
      %v4240 = vsel %vm771, %v4158, 0
      %v4243 = vsel %vm771, %v4159, 0
      %v4246 = vsel %vm771, %v4160, 0
      %v4249 = vsel %vm771, %v4161, 0
      %v4252 = vsel %vm771, %v4162, 0
      %v4255 = vsel %vm771, %v4163, 0
      %v4258 = vsel %vm771, %v4164, 0
      %v4261 = vsel %vm771, %v4165, 0
      %v4264 = vsel %vm771, %v4166, 0
      %v4267 = vsel %vm771, %v4167, 0
      %v4270 = vsel %vm771, %v4168, 0
      %v4273 = vsel %vm771, %v4169, 0
      %v4276 = vsel %vm771, %v4170, 0
      %v4279 = vsel %vm771, %v4171, 0
      %v4282 = vsel %vm771, %v4172, 0
      %v4285 = vsel %vm771, %v4173, 0
      %v4288 = vsel %vm771, %v4174, 0
      %v4291 = vsel %vm771, %v4175, 0
      %v4294 = vsel %vm771, %v4176, 0
      %v4297 = vsel %vm771, %v4177, 0
      %v4300 = vsel %vm771, %v4178, 0
      %v4303 = vsel %vm771, %v4179, 0
      %v4306 = vsel %vm1069, %v4181, 0
      %4308 = vmatprep.subr.mxu0 0.0
      %4309 = vmatpush1.msra.mxu0 0.0
      %4310 = vmatprep.subr.mxu0 0.0
      %4311 = vmatpush1.msra.mxu0 0.0
      %4312 = vmatprep.subr.mxu0 0.0
      %4313 = vmatpush1.msra.mxu0 0.0
      %4314 = vmatprep.subr.mxu0 0.0
      %4315 = vmatpush1.msra.mxu0 0.0
      %4316 = vmatprep.subr.mxu0 0.0
      %4317 = vmatpush1.msra.mxu0 0.0
      %4318 = vmatprep.subr.mxu0 0.0
      %4319 = vmatpush1.msra.mxu0 0.0
      %4320 = vmatprep.subr.mxu0 0.0
      %4321 = vmatpush1.msra.mxu0 0.0
      %4322 = vmatprep.subr.mxu0 0.0
      %4323 = vmatpush1.msra.mxu0 0.0
      %4324 = vmatprep.subr.mxu0 0.0
      %4325 = vmatpush1.msra.mxu0 0.0
      %4326 = vmatprep.subr.mxu0 0.0
      %4327 = vmatpush1.msra.mxu0 0.0
      %4328 = vmatprep.subr.mxu0 0.0
      %4329 = vmatpush1.msra.mxu0 0.0
      %4330 = vmatprep.subr.mxu0 0.0
      %4331 = vmatpush1.msra.mxu0 0.0
      %4332 = vmatprep.subr.mxu0 0.0
      %4333 = vmatpush1.msra.mxu0 0.0
      %4334 = vmatprep.subr.mxu0 0.0
      %4335 = vmatpush1.msra.mxu0 0.0
      %4336 = vmatprep.subr.mxu0 0.0
      %4337 = vmatpush1.msra.mxu0 0.0
      %4338 = vmatprep.subr.mxu0 0.0
      %4339 = vmatpush1.msra.mxu0 %v4306
      %4340 = vmatprep.subr.mxu0 0.0
      %4341 = vmatpush2.msra.mxu0 0.0
      %4342 = vmatprep.subr.mxu0 0.0
      %4343 = vmatpush2.msra.mxu0 0.0
      %4344 = vmatprep.subr.mxu0 0.0
      %4345 = vmatpush2.msra.mxu0 0.0
      %4346 = vmatprep.subr.mxu0 0.0
      %4347 = vmatpush2.msra.mxu0 0.0
      %4348 = vmatprep.subr.mxu0 0.0
      %4349 = vmatpush2.msra.mxu0 0.0
      %4350 = vmatprep.subr.mxu0 0.0
      %4351 = vmatpush2.msra.mxu0 0.0
      %4352 = vmatprep.subr.mxu0 0.0
      %4353 = vmatpush2.msra.mxu0 0.0
      %4354 = vmatprep.subr.mxu0 0.0
      %4355 = vmatpush2.msra.mxu0 0.0
      %4356 = vmatprep.subr.mxu0 0.0
      %4357 = vmatpush2.msra.mxu0 0.0
      %4358 = vmatprep.subr.mxu0 0.0
      %4359 = vmatpush2.msra.mxu0 0.0
      %4360 = vmatprep.subr.mxu0 0.0
      %4361 = vmatpush2.msra.mxu0 0.0
      %4362 = vmatprep.subr.mxu0 0.0
      %4363 = vmatpush2.msra.mxu0 0.0
      %4364 = vmatprep.subr.mxu0 0.0
      %4365 = vmatpush2.msra.mxu0 0.0
      %4366 = vmatprep.subr.mxu0 0.0
      %4367 = vmatpush2.msra.mxu0 0.0
      %4368 = vmatprep.subr.mxu0 0.0
      %4369 = vmatpush2.msra.mxu0 0.0
      %4370 = vmatprep.subr.mxu0 0.0
      %4371 = vmatpush2.msra.mxu0 0.0
      %4372 = vmatprep.mubr.f32.mxu0 0.0
      %4373 = vmatmul.mubr.f32.gmra.mxu0 %v4183
      %v4374 = vpop.f32.mrf.mxu0
      %v4375 = vadd.f32 0.0, %v4374
      %v4376 = vpop.f32.mrf.mxu0
      %4377 = vmatprep.mubr.f32.mxu0 0.0
      %4378 = vmatmul.mubr.f32.gmra.mxu0 %v4186
      %v4379 = vpop.f32.mrf.mxu0
      %v4380 = vadd.f32 0.0, %v4379
      %v4381 = vpop.f32.mrf.mxu0
      %4382 = vmatprep.mubr.f32.mxu0 0.0
      %4383 = vmatmul.mubr.f32.gmra.mxu0 %v4189
      %v4384 = vpop.f32.mrf.mxu0
      %v4385 = vadd.f32 0.0, %v4384
      %v4386 = vpop.f32.mrf.mxu0
      %4387 = vmatprep.mubr.f32.mxu0 0.0
      %4388 = vmatmul.mubr.f32.gmra.mxu0 %v4192
      %v4389 = vpop.f32.mrf.mxu0
      %v4390 = vadd.f32 0.0, %v4389
      %v4391 = vpop.f32.mrf.mxu0
      %4392 = vmatprep.mubr.f32.mxu0 0.0
      %4393 = vmatmul.mubr.f32.gmra.mxu0 %v4195
      %v4394 = vpop.f32.mrf.mxu0
      %v4395 = vadd.f32 0.0, %v4394
      %v4396 = vpop.f32.mrf.mxu0
      %4397 = vmatprep.mubr.f32.mxu0 0.0
      %4398 = vmatmul.mubr.f32.gmra.mxu0 %v4198
      %v4399 = vpop.f32.mrf.mxu0
      %v4400 = vadd.f32 0.0, %v4399
      %v4401 = vpop.f32.mrf.mxu0
      %4402 = vmatprep.mubr.f32.mxu0 0.0
      %4403 = vmatmul.mubr.f32.gmra.mxu0 %v4201
      %v4404 = vpop.f32.mrf.mxu0
      %v4405 = vadd.f32 0.0, %v4404
      %v4406 = vpop.f32.mrf.mxu0
      %4407 = vmatprep.mubr.f32.mxu0 0.0
      %4408 = vmatmul.mubr.f32.gmra.mxu0 %v4204
      %v4409 = vpop.f32.mrf.mxu0
      %v4410 = vadd.f32 0.0, %v4409
      %v4411 = vpop.f32.mrf.mxu0
      %4412 = vmatprep.mubr.f32.mxu0 0.0
      %4413 = vmatmul.mubr.f32.gmra.mxu0 %v4207
      %v4414 = vpop.f32.mrf.mxu0
      %v4415 = vadd.f32 0.0, %v4414
      %v4416 = vpop.f32.mrf.mxu0
      %4417 = vmatprep.mubr.f32.mxu0 0.0
      %4418 = vmatmul.mubr.f32.gmra.mxu0 %v4210
      %v4419 = vpop.f32.mrf.mxu0
      %v4420 = vadd.f32 0.0, %v4419
      %v4421 = vpop.f32.mrf.mxu0
      %4422 = vmatprep.mubr.f32.mxu0 0.0
      %4423 = vmatmul.mubr.f32.gmra.mxu0 %v4213
      %v4424 = vpop.f32.mrf.mxu0
      %v4425 = vadd.f32 0.0, %v4424
      %v4426 = vpop.f32.mrf.mxu0
      %4427 = vmatprep.mubr.f32.mxu0 0.0
      %4428 = vmatmul.mubr.f32.gmra.mxu0 %v4216
      %v4429 = vpop.f32.mrf.mxu0
      %v4430 = vadd.f32 0.0, %v4429
      %v4431 = vpop.f32.mrf.mxu0
      %4432 = vmatprep.mubr.f32.mxu0 0.0
      %4433 = vmatmul.mubr.f32.gmra.mxu0 %v4219
      %v4434 = vpop.f32.mrf.mxu0
      %v4435 = vadd.f32 0.0, %v4434
      %v4436 = vpop.f32.mrf.mxu0
      %4437 = vmatprep.mubr.f32.mxu0 0.0
      %4438 = vmatmul.mubr.f32.gmra.mxu0 %v4222
      %v4439 = vpop.f32.mrf.mxu0
      %v4440 = vadd.f32 0.0, %v4439
      %v4441 = vpop.f32.mrf.mxu0
      %4442 = vmatprep.mubr.f32.mxu0 0.0
      %4443 = vmatmul.mubr.f32.gmra.mxu0 %v4225
      %v4444 = vpop.f32.mrf.mxu0
      %v4445 = vadd.f32 0.0, %v4444
      %v4446 = vpop.f32.mrf.mxu0
      %4447 = vmatprep.mubr.f32.mxu0 0.0
      %4448 = vmatmul.mubr.f32.gmra.mxu0 %v4228
      %v4449 = vpop.f32.mrf.mxu0
      %v4450 = vadd.f32 0.0, %v4449
      %v4451 = vpop.f32.mrf.mxu0
      %4452 = vmatprep.mubr.f32.mxu0 0.0
      %4453 = vmatmul.mubr.f32.gmra.mxu0 %v4231
      %v4454 = vpop.f32.mrf.mxu0
      %v4455 = vadd.f32 0.0, %v4454
      %v4456 = vpop.f32.mrf.mxu0
      %4457 = vmatprep.mubr.f32.mxu0 0.0
      %4458 = vmatmul.mubr.f32.gmra.mxu0 %v4234
      %v4459 = vpop.f32.mrf.mxu0
      %v4460 = vadd.f32 0.0, %v4459
      %v4461 = vpop.f32.mrf.mxu0
      %4462 = vmatprep.mubr.f32.mxu0 0.0
      %4463 = vmatmul.mubr.f32.gmra.mxu0 %v4237
      %v4464 = vpop.f32.mrf.mxu0
      %v4465 = vadd.f32 0.0, %v4464
      %v4466 = vpop.f32.mrf.mxu0
      %4467 = vmatprep.mubr.f32.mxu0 0.0
      %4468 = vmatmul.mubr.f32.gmra.mxu0 %v4240
      %v4469 = vpop.f32.mrf.mxu0
      %v4470 = vadd.f32 0.0, %v4469
      %v4471 = vpop.f32.mrf.mxu0
      %4472 = vmatprep.mubr.f32.mxu0 0.0
      %4473 = vmatmul.mubr.f32.gmra.mxu0 %v4243
      %v4474 = vpop.f32.mrf.mxu0
      %v4475 = vadd.f32 0.0, %v4474
      %v4476 = vpop.f32.mrf.mxu0
      %4477 = vmatprep.mubr.f32.mxu0 0.0
      %4478 = vmatmul.mubr.f32.gmra.mxu0 %v4246
      %v4479 = vpop.f32.mrf.mxu0
      %v4480 = vadd.f32 0.0, %v4479
      %v4481 = vpop.f32.mrf.mxu0
      %4482 = vmatprep.mubr.f32.mxu0 0.0
      %4483 = vmatmul.mubr.f32.gmra.mxu0 %v4249
      %v4484 = vpop.f32.mrf.mxu0
      %v4485 = vadd.f32 0.0, %v4484
      %v4486 = vpop.f32.mrf.mxu0
      %4487 = vmatprep.mubr.f32.mxu0 0.0
      %4488 = vmatmul.mubr.f32.gmra.mxu0 %v4252
      %v4489 = vpop.f32.mrf.mxu0
      %v4490 = vadd.f32 0.0, %v4489
      %v4491 = vpop.f32.mrf.mxu0
      %4492 = vmatprep.mubr.f32.mxu0 0.0
      %4493 = vmatmul.mubr.f32.gmra.mxu0 %v4255
      %v4494 = vpop.f32.mrf.mxu0
      %v4495 = vadd.f32 0.0, %v4494
      %v4496 = vpop.f32.mrf.mxu0
      %4497 = vmatprep.mubr.f32.mxu0 0.0
      %4498 = vmatmul.mubr.f32.gmra.mxu0 %v4258
      %v4499 = vpop.f32.mrf.mxu0
      %v4500 = vadd.f32 0.0, %v4499
      %v4501 = vpop.f32.mrf.mxu0
      %4502 = vmatprep.mubr.f32.mxu0 0.0
      %4503 = vmatmul.mubr.f32.gmra.mxu0 %v4261
      %v4504 = vpop.f32.mrf.mxu0
      %v4505 = vadd.f32 0.0, %v4504
      %v4506 = vpop.f32.mrf.mxu0
      %4507 = vmatprep.mubr.f32.mxu0 0.0
      %4508 = vmatmul.mubr.f32.gmra.mxu0 %v4264
      %v4509 = vpop.f32.mrf.mxu0
      %v4510 = vadd.f32 0.0, %v4509
      %v4511 = vpop.f32.mrf.mxu0
      %4512 = vmatprep.mubr.f32.mxu0 0.0
      %4513 = vmatmul.mubr.f32.gmra.mxu0 %v4267
      %v4514 = vpop.f32.mrf.mxu0
      %v4515 = vadd.f32 0.0, %v4514
      %v4516 = vpop.f32.mrf.mxu0
      %4517 = vmatprep.mubr.f32.mxu0 0.0
      %4518 = vmatmul.mubr.f32.gmra.mxu0 %v4270
      %v4519 = vpop.f32.mrf.mxu0
      %v4520 = vadd.f32 0.0, %v4519
      %v4521 = vpop.f32.mrf.mxu0
      %4522 = vmatprep.mubr.f32.mxu0 0.0
      %4523 = vmatmul.mubr.f32.gmra.mxu0 %v4273
      %v4524 = vpop.f32.mrf.mxu0
      %v4525 = vadd.f32 0.0, %v4524
      %v4526 = vpop.f32.mrf.mxu0
      %4527 = vmatprep.mubr.f32.mxu0 0.0
      %4528 = vmatmul.mubr.f32.gmra.mxu0 %v4276
      %v4529 = vpop.f32.mrf.mxu0
      %v4530 = vadd.f32 0.0, %v4529
      %v4531 = vpop.f32.mrf.mxu0
      %4532 = vmatprep.mubr.f32.mxu0 0.0
      %4533 = vmatmul.mubr.f32.gmra.mxu0 %v4279
      %v4534 = vpop.f32.mrf.mxu0
      %v4535 = vadd.f32 0.0, %v4534
      %v4536 = vpop.f32.mrf.mxu0
      %4537 = vmatprep.mubr.f32.mxu0 0.0
      %4538 = vmatmul.mubr.f32.gmra.mxu0 %v4282
      %v4539 = vpop.f32.mrf.mxu0
      %v4540 = vadd.f32 0.0, %v4539
      %v4541 = vpop.f32.mrf.mxu0
      %4542 = vmatprep.mubr.f32.mxu0 0.0
      %4543 = vmatmul.mubr.f32.gmra.mxu0 %v4285
      %v4544 = vpop.f32.mrf.mxu0
      %v4545 = vadd.f32 0.0, %v4544
      %v4546 = vpop.f32.mrf.mxu0
      %4547 = vmatprep.mubr.f32.mxu0 0.0
      %4548 = vmatmul.mubr.f32.gmra.mxu0 %v4288
      %v4549 = vpop.f32.mrf.mxu0
      %v4550 = vadd.f32 0.0, %v4549
      %v4551 = vpop.f32.mrf.mxu0
      %4552 = vmatprep.mubr.f32.mxu0 0.0
      %4553 = vmatmul.mubr.f32.gmra.mxu0 %v4291
      %v4554 = vpop.f32.mrf.mxu0
      %v4555 = vadd.f32 0.0, %v4554
      %v4556 = vpop.f32.mrf.mxu0
      %4557 = vmatprep.mubr.f32.mxu0 0.0
      %4558 = vmatmul.mubr.f32.gmra.mxu0 %v4294
      %v4559 = vpop.f32.mrf.mxu0
      %v4560 = vadd.f32 0.0, %v4559
      %v4561 = vpop.f32.mrf.mxu0
      %4562 = vmatprep.mubr.f32.mxu0 0.0
      %4563 = vmatmul.mubr.f32.gmra.mxu0 %v4297
      %v4564 = vpop.f32.mrf.mxu0
      %v4565 = vadd.f32 0.0, %v4564
      %v4566 = vpop.f32.mrf.mxu0
      %4567 = vmatprep.mubr.f32.mxu0 0.0
      %4568 = vmatmul.mubr.f32.gmra.mxu0 %v4300
      %v4569 = vpop.f32.mrf.mxu0
      %v4570 = vadd.f32 0.0, %v4569
      %v4571 = vpop.f32.mrf.mxu0
      %4572 = vmatprep.mubr.f32.mxu0 0.0
      %4573 = vmatmul.mubr.f32.gmra.mxu0 %v4303
      %v4574 = vpop.f32.mrf.mxu0
      %v4575 = vadd.f32 0.0, %v4574
      %v4576 = vpop.f32.mrf.mxu0
      %4577 = vdwg.mxu0
      %v4578 = vadd.f32 %v4098, %v4375
      %v4579 = vadd.f32 %v4099, %v4380
      %v4580 = vadd.f32 %v4100, %v4385
      %v4581 = vadd.f32 %v4101, %v4390
      %v4582 = vadd.f32 %v4102, %v4395
      %v4583 = vadd.f32 %v4103, %v4400
      %v4584 = vadd.f32 %v4104, %v4405
      %v4585 = vadd.f32 %v4105, %v4410
      %v4586 = vadd.f32 %v4106, %v4415
      %v4587 = vadd.f32 %v4107, %v4420
      %v4588 = vadd.f32 %v4108, %v4425
      %v4589 = vadd.f32 %v4109, %v4430
      %v4590 = vadd.f32 %v4110, %v4435
      %v4591 = vadd.f32 %v4111, %v4440
      %v4592 = vadd.f32 %v4112, %v4445
      %v4593 = vadd.f32 %v4113, %v4450
      %v4594 = vadd.f32 %v4114, %v4455
      %v4595 = vadd.f32 %v4115, %v4460
      %v4596 = vadd.f32 %v4116, %v4465
      %v4597 = vadd.f32 %v4117, %v4470
      %v4598 = vadd.f32 %v4118, %v4475
      %v4599 = vadd.f32 %v4119, %v4480
      %v4600 = vadd.f32 %v4120, %v4485
      %v4601 = vadd.f32 %v4121, %v4490
      %v4602 = vadd.f32 %v4122, %v4495
      %v4603 = vadd.f32 %v4123, %v4500
      %v4604 = vadd.f32 %v4124, %v4505
      %v4605 = vadd.f32 %v4125, %v4510
      %v4606 = vadd.f32 %v4126, %v4515
      %v4607 = vadd.f32 %v4127, %v4520
      %v4608 = vadd.f32 %v4128, %v4525
      %v4609 = vadd.f32 %v4129, %v4530
      %v4610 = vadd.f32 %v4130, %v4535
      %v4611 = vadd.f32 %v4131, %v4540
      %v4612 = vadd.f32 %v4132, %v4545
      %v4613 = vadd.f32 %v4133, %v4550
      %v4614 = vadd.f32 %v4134, %v4555
      %v4615 = vadd.f32 %v4135, %v4560
      %v4616 = vadd.f32 %v4136, %v4565
      %v4617 = vadd.f32 %v4137, %v4570
      %v4618 = vadd.f32 %v4138, %v4575
      %v4619 = vld [vmem:[#allocation2 + $0x2b] sm:$0xff]
      %v4620 = vld [vmem:[#allocation2 + $0x33] sm:$0xff]
      %v4621 = vld [vmem:[#allocation2 + $0x3b] sm:$0xff]
      %v4622 = vld [vmem:[#allocation2 + $0x43] sm:$0xff]
      %v4623 = vld [vmem:[#allocation2 + $0x4b] sm:$0xff]
      %v4624 = vld [vmem:[#allocation2 + $0x53] sm:$0xff]
      %v4625 = vld [vmem:[#allocation2 + $0x5b] sm:$0xff]
      %v4626 = vld [vmem:[#allocation2 + $0x63] sm:$0xff]
      %v4627 = vld [vmem:[#allocation2 + $0x6b] sm:$0xff]
      %v4628 = vld [vmem:[#allocation2 + $0x73] sm:$0xff]
      %v4629 = vld [vmem:[#allocation2 + $0x7b] sm:$0xff]
      %v4630 = vld [vmem:[#allocation2 + $0x83] sm:$0xff]
      %v4631 = vld [vmem:[#allocation2 + $0x8b] sm:$0xff]
      %v4632 = vld [vmem:[#allocation2 + $0x93] sm:$0xff]
      %v4633 = vld [vmem:[#allocation2 + $0x9b] sm:$0xff]
      %v4634 = vld [vmem:[#allocation2 + $0xa3] sm:$0xff]
      %v4635 = vld [vmem:[#allocation2 + $0xab] sm:$0xff]
      %v4636 = vld [vmem:[#allocation2 + $0xb3] sm:$0xff]
      %v4637 = vld [vmem:[#allocation2 + $0xbb] sm:$0xff]
      %v4638 = vld [vmem:[#allocation2 + $0xc3] sm:$0xff]
      %v4639 = vld [vmem:[#allocation2 + $0xcb] sm:$0xff]
      %v4640 = vld [vmem:[#allocation2 + $0xd3] sm:$0xff]
      %v4641 = vld [vmem:[#allocation2 + $0xdb] sm:$0xff]
      %v4642 = vld [vmem:[#allocation2 + $0xe3] sm:$0xff]
      %v4643 = vld [vmem:[#allocation2 + $0xeb] sm:$0xff]
      %v4644 = vld [vmem:[#allocation2 + $0xf3] sm:$0xff]
      %v4645 = vld [vmem:[#allocation2 + $0xfb] sm:$0xff]
      %v4646 = vld [vmem:[#allocation2 + $0x103] sm:$0xff]
      %v4647 = vld [vmem:[#allocation2 + $0x10b] sm:$0xff]
      %v4648 = vld [vmem:[#allocation2 + $0x113] sm:$0xff]
      %v4649 = vld [vmem:[#allocation2 + $0x11b] sm:$0xff]
      %v4650 = vld [vmem:[#allocation2 + $0x123] sm:$0xff]
      %v4651 = vld [vmem:[#allocation2 + $0x12b] sm:$0xff]
      %v4652 = vld [vmem:[#allocation2 + $0x133] sm:$0xff]
      %v4653 = vld [vmem:[#allocation2 + $0x13b] sm:$0xff]
      %v4654 = vld [vmem:[#allocation2 + $0x143] sm:$0xff]
      %v4655 = vld [vmem:[#allocation2 + $0x14b] sm:$0xff]
      %v4656 = vld [vmem:[#allocation2 + $0x153] sm:$0xff]
      %v4657 = vld [vmem:[#allocation2 + $0x15b] sm:$0xff]
      %v4658 = vld [vmem:[#allocation2 + $0x163] sm:$0xff]
      %v4659 = vld [vmem:[#allocation2 + $0x16b] sm:$0xf]
      %s4660 = scalar_lea.vmem %s4, 32
      %v4661 = vld [vmem:[%s4660] sm:$0xf]
      %v4663 = vsel %vm771, %v4619, 0
      %v4666 = vsel %vm771, %v4620, 0
      %v4669 = vsel %vm771, %v4621, 0
      %v4672 = vsel %vm771, %v4622, 0
      %v4675 = vsel %vm771, %v4623, 0
      %v4678 = vsel %vm771, %v4624, 0
      %v4681 = vsel %vm771, %v4625, 0
      %v4684 = vsel %vm771, %v4626, 0
      %v4687 = vsel %vm771, %v4627, 0
      %v4690 = vsel %vm771, %v4628, 0
      %v4693 = vsel %vm771, %v4629, 0
      %v4696 = vsel %vm771, %v4630, 0
      %v4699 = vsel %vm771, %v4631, 0
      %v4702 = vsel %vm771, %v4632, 0
      %v4705 = vsel %vm771, %v4633, 0
      %v4708 = vsel %vm771, %v4634, 0
      %v4711 = vsel %vm771, %v4635, 0
      %v4714 = vsel %vm771, %v4636, 0
      %v4717 = vsel %vm771, %v4637, 0
      %v4720 = vsel %vm771, %v4638, 0
      %v4723 = vsel %vm771, %v4639, 0
      %v4726 = vsel %vm771, %v4640, 0
      %v4729 = vsel %vm771, %v4641, 0
      %v4732 = vsel %vm771, %v4642, 0
      %v4735 = vsel %vm771, %v4643, 0
      %v4738 = vsel %vm771, %v4644, 0
      %v4741 = vsel %vm771, %v4645, 0
      %v4744 = vsel %vm771, %v4646, 0
      %v4747 = vsel %vm771, %v4647, 0
      %v4750 = vsel %vm771, %v4648, 0
      %v4753 = vsel %vm771, %v4649, 0
      %v4756 = vsel %vm771, %v4650, 0
      %v4759 = vsel %vm771, %v4651, 0
      %v4762 = vsel %vm771, %v4652, 0
      %v4765 = vsel %vm771, %v4653, 0
      %v4768 = vsel %vm771, %v4654, 0
      %v4771 = vsel %vm771, %v4655, 0
      %v4774 = vsel %vm771, %v4656, 0
      %v4777 = vsel %vm771, %v4657, 0
      %v4780 = vsel %vm771, %v4658, 0
      %v4783 = vsel %vm771, %v4659, 0
      %v4786 = vsel %vm1069, %v4661, 0
      %4788 = vmatprep.subr.mxu0 0.0
      %4789 = vmatpush1.msra.mxu0 0.0
      %4790 = vmatprep.subr.mxu0 0.0
      %4791 = vmatpush1.msra.mxu0 0.0
      %4792 = vmatprep.subr.mxu0 0.0
      %4793 = vmatpush1.msra.mxu0 0.0
      %4794 = vmatprep.subr.mxu0 0.0
      %4795 = vmatpush1.msra.mxu0 0.0
      %4796 = vmatprep.subr.mxu0 0.0
      %4797 = vmatpush1.msra.mxu0 0.0
      %4798 = vmatprep.subr.mxu0 0.0
      %4799 = vmatpush1.msra.mxu0 0.0
      %4800 = vmatprep.subr.mxu0 0.0
      %4801 = vmatpush1.msra.mxu0 0.0
      %4802 = vmatprep.subr.mxu0 0.0
      %4803 = vmatpush1.msra.mxu0 0.0
      %4804 = vmatprep.subr.mxu0 0.0
      %4805 = vmatpush1.msra.mxu0 0.0
      %4806 = vmatprep.subr.mxu0 0.0
      %4807 = vmatpush1.msra.mxu0 0.0
      %4808 = vmatprep.subr.mxu0 0.0
      %4809 = vmatpush1.msra.mxu0 0.0
      %4810 = vmatprep.subr.mxu0 0.0
      %4811 = vmatpush1.msra.mxu0 0.0
      %4812 = vmatprep.subr.mxu0 0.0
      %4813 = vmatpush1.msra.mxu0 0.0
      %4814 = vmatprep.subr.mxu0 0.0
      %4815 = vmatpush1.msra.mxu0 0.0
      %4816 = vmatprep.subr.mxu0 0.0
      %4817 = vmatpush1.msra.mxu0 0.0
      %4818 = vmatprep.subr.mxu0 0.0
      %4819 = vmatpush1.msra.mxu0 %v4786
      %4820 = vmatprep.subr.mxu0 0.0
      %4821 = vmatpush2.msra.mxu0 0.0
      %4822 = vmatprep.subr.mxu0 0.0
      %4823 = vmatpush2.msra.mxu0 0.0
      %4824 = vmatprep.subr.mxu0 0.0
      %4825 = vmatpush2.msra.mxu0 0.0
      %4826 = vmatprep.subr.mxu0 0.0
      %4827 = vmatpush2.msra.mxu0 0.0
      %4828 = vmatprep.subr.mxu0 0.0
      %4829 = vmatpush2.msra.mxu0 0.0
      %4830 = vmatprep.subr.mxu0 0.0
      %4831 = vmatpush2.msra.mxu0 0.0
      %4832 = vmatprep.subr.mxu0 0.0
      %4833 = vmatpush2.msra.mxu0 0.0
      %4834 = vmatprep.subr.mxu0 0.0
      %4835 = vmatpush2.msra.mxu0 0.0
      %4836 = vmatprep.subr.mxu0 0.0
      %4837 = vmatpush2.msra.mxu0 0.0
      %4838 = vmatprep.subr.mxu0 0.0
      %4839 = vmatpush2.msra.mxu0 0.0
      %4840 = vmatprep.subr.mxu0 0.0
      %4841 = vmatpush2.msra.mxu0 0.0
      %4842 = vmatprep.subr.mxu0 0.0
      %4843 = vmatpush2.msra.mxu0 0.0
      %4844 = vmatprep.subr.mxu0 0.0
      %4845 = vmatpush2.msra.mxu0 0.0
      %4846 = vmatprep.subr.mxu0 0.0
      %4847 = vmatpush2.msra.mxu0 0.0
      %4848 = vmatprep.subr.mxu0 0.0
      %4849 = vmatpush2.msra.mxu0 0.0
      %4850 = vmatprep.subr.mxu0 0.0
      %4851 = vmatpush2.msra.mxu0 0.0
      %4852 = vmatprep.mubr.f32.mxu0 0.0
      %4853 = vmatmul.mubr.f32.gmra.mxu0 %v4663
      %v4854 = vpop.f32.mrf.mxu0
      %v4855 = vadd.f32 0.0, %v4854
      %v4856 = vpop.f32.mrf.mxu0
      %4857 = vmatprep.mubr.f32.mxu0 0.0
      %4858 = vmatmul.mubr.f32.gmra.mxu0 %v4666
      %v4859 = vpop.f32.mrf.mxu0
      %v4860 = vadd.f32 0.0, %v4859
      %v4861 = vpop.f32.mrf.mxu0
      %4862 = vmatprep.mubr.f32.mxu0 0.0
      %4863 = vmatmul.mubr.f32.gmra.mxu0 %v4669
      %v4864 = vpop.f32.mrf.mxu0
      %v4865 = vadd.f32 0.0, %v4864
      %v4866 = vpop.f32.mrf.mxu0
      %4867 = vmatprep.mubr.f32.mxu0 0.0
      %4868 = vmatmul.mubr.f32.gmra.mxu0 %v4672
      %v4869 = vpop.f32.mrf.mxu0
      %v4870 = vadd.f32 0.0, %v4869
      %v4871 = vpop.f32.mrf.mxu0
      %4872 = vmatprep.mubr.f32.mxu0 0.0
      %4873 = vmatmul.mubr.f32.gmra.mxu0 %v4675
      %v4874 = vpop.f32.mrf.mxu0
      %v4875 = vadd.f32 0.0, %v4874
      %v4876 = vpop.f32.mrf.mxu0
      %4877 = vmatprep.mubr.f32.mxu0 0.0
      %4878 = vmatmul.mubr.f32.gmra.mxu0 %v4678
      %v4879 = vpop.f32.mrf.mxu0
      %v4880 = vadd.f32 0.0, %v4879
      %v4881 = vpop.f32.mrf.mxu0
      %4882 = vmatprep.mubr.f32.mxu0 0.0
      %4883 = vmatmul.mubr.f32.gmra.mxu0 %v4681
      %v4884 = vpop.f32.mrf.mxu0
      %v4885 = vadd.f32 0.0, %v4884
      %v4886 = vpop.f32.mrf.mxu0
      %4887 = vmatprep.mubr.f32.mxu0 0.0
      %4888 = vmatmul.mubr.f32.gmra.mxu0 %v4684
      %v4889 = vpop.f32.mrf.mxu0
      %v4890 = vadd.f32 0.0, %v4889
      %v4891 = vpop.f32.mrf.mxu0
      %4892 = vmatprep.mubr.f32.mxu0 0.0
      %4893 = vmatmul.mubr.f32.gmra.mxu0 %v4687
      %v4894 = vpop.f32.mrf.mxu0
      %v4895 = vadd.f32 0.0, %v4894
      %v4896 = vpop.f32.mrf.mxu0
      %4897 = vmatprep.mubr.f32.mxu0 0.0
      %4898 = vmatmul.mubr.f32.gmra.mxu0 %v4690
      %v4899 = vpop.f32.mrf.mxu0
      %v4900 = vadd.f32 0.0, %v4899
      %v4901 = vpop.f32.mrf.mxu0
      %4902 = vmatprep.mubr.f32.mxu0 0.0
      %4903 = vmatmul.mubr.f32.gmra.mxu0 %v4693
      %v4904 = vpop.f32.mrf.mxu0
      %v4905 = vadd.f32 0.0, %v4904
      %v4906 = vpop.f32.mrf.mxu0
      %4907 = vmatprep.mubr.f32.mxu0 0.0
      %4908 = vmatmul.mubr.f32.gmra.mxu0 %v4696
      %v4909 = vpop.f32.mrf.mxu0
      %v4910 = vadd.f32 0.0, %v4909
      %v4911 = vpop.f32.mrf.mxu0
      %4912 = vmatprep.mubr.f32.mxu0 0.0
      %4913 = vmatmul.mubr.f32.gmra.mxu0 %v4699
      %v4914 = vpop.f32.mrf.mxu0
      %v4915 = vadd.f32 0.0, %v4914
      %v4916 = vpop.f32.mrf.mxu0
      %4917 = vmatprep.mubr.f32.mxu0 0.0
      %4918 = vmatmul.mubr.f32.gmra.mxu0 %v4702
      %v4919 = vpop.f32.mrf.mxu0
      %v4920 = vadd.f32 0.0, %v4919
      %v4921 = vpop.f32.mrf.mxu0
      %4922 = vmatprep.mubr.f32.mxu0 0.0
      %4923 = vmatmul.mubr.f32.gmra.mxu0 %v4705
      %v4924 = vpop.f32.mrf.mxu0
      %v4925 = vadd.f32 0.0, %v4924
      %v4926 = vpop.f32.mrf.mxu0
      %4927 = vmatprep.mubr.f32.mxu0 0.0
      %4928 = vmatmul.mubr.f32.gmra.mxu0 %v4708
      %v4929 = vpop.f32.mrf.mxu0
      %v4930 = vadd.f32 0.0, %v4929
      %v4931 = vpop.f32.mrf.mxu0
      %4932 = vmatprep.mubr.f32.mxu0 0.0
      %4933 = vmatmul.mubr.f32.gmra.mxu0 %v4711
      %v4934 = vpop.f32.mrf.mxu0
      %v4935 = vadd.f32 0.0, %v4934
      %v4936 = vpop.f32.mrf.mxu0
      %4937 = vmatprep.mubr.f32.mxu0 0.0
      %4938 = vmatmul.mubr.f32.gmra.mxu0 %v4714
      %v4939 = vpop.f32.mrf.mxu0
      %v4940 = vadd.f32 0.0, %v4939
      %v4941 = vpop.f32.mrf.mxu0
      %4942 = vmatprep.mubr.f32.mxu0 0.0
      %4943 = vmatmul.mubr.f32.gmra.mxu0 %v4717
      %v4944 = vpop.f32.mrf.mxu0
      %v4945 = vadd.f32 0.0, %v4944
      %v4946 = vpop.f32.mrf.mxu0
      %4947 = vmatprep.mubr.f32.mxu0 0.0
      %4948 = vmatmul.mubr.f32.gmra.mxu0 %v4720
      %v4949 = vpop.f32.mrf.mxu0
      %v4950 = vadd.f32 0.0, %v4949
      %v4951 = vpop.f32.mrf.mxu0
      %4952 = vmatprep.mubr.f32.mxu0 0.0
      %4953 = vmatmul.mubr.f32.gmra.mxu0 %v4723
      %v4954 = vpop.f32.mrf.mxu0
      %v4955 = vadd.f32 0.0, %v4954
      %v4956 = vpop.f32.mrf.mxu0
      %4957 = vmatprep.mubr.f32.mxu0 0.0
      %4958 = vmatmul.mubr.f32.gmra.mxu0 %v4726
      %v4959 = vpop.f32.mrf.mxu0
      %v4960 = vadd.f32 0.0, %v4959
      %v4961 = vpop.f32.mrf.mxu0
      %4962 = vmatprep.mubr.f32.mxu0 0.0
      %4963 = vmatmul.mubr.f32.gmra.mxu0 %v4729
      %v4964 = vpop.f32.mrf.mxu0
      %v4965 = vadd.f32 0.0, %v4964
      %v4966 = vpop.f32.mrf.mxu0
      %4967 = vmatprep.mubr.f32.mxu0 0.0
      %4968 = vmatmul.mubr.f32.gmra.mxu0 %v4732
      %v4969 = vpop.f32.mrf.mxu0
      %v4970 = vadd.f32 0.0, %v4969
      %v4971 = vpop.f32.mrf.mxu0
      %4972 = vmatprep.mubr.f32.mxu0 0.0
      %4973 = vmatmul.mubr.f32.gmra.mxu0 %v4735
      %v4974 = vpop.f32.mrf.mxu0
      %v4975 = vadd.f32 0.0, %v4974
      %v4976 = vpop.f32.mrf.mxu0
      %4977 = vmatprep.mubr.f32.mxu0 0.0
      %4978 = vmatmul.mubr.f32.gmra.mxu0 %v4738
      %v4979 = vpop.f32.mrf.mxu0
      %v4980 = vadd.f32 0.0, %v4979
      %v4981 = vpop.f32.mrf.mxu0
      %4982 = vmatprep.mubr.f32.mxu0 0.0
      %4983 = vmatmul.mubr.f32.gmra.mxu0 %v4741
      %v4984 = vpop.f32.mrf.mxu0
      %v4985 = vadd.f32 0.0, %v4984
      %v4986 = vpop.f32.mrf.mxu0
      %4987 = vmatprep.mubr.f32.mxu0 0.0
      %4988 = vmatmul.mubr.f32.gmra.mxu0 %v4744
      %v4989 = vpop.f32.mrf.mxu0
      %v4990 = vadd.f32 0.0, %v4989
      %v4991 = vpop.f32.mrf.mxu0
      %4992 = vmatprep.mubr.f32.mxu0 0.0
      %4993 = vmatmul.mubr.f32.gmra.mxu0 %v4747
      %v4994 = vpop.f32.mrf.mxu0
      %v4995 = vadd.f32 0.0, %v4994
      %v4996 = vpop.f32.mrf.mxu0
      %4997 = vmatprep.mubr.f32.mxu0 0.0
      %4998 = vmatmul.mubr.f32.gmra.mxu0 %v4750
      %v4999 = vpop.f32.mrf.mxu0
      %v5000 = vadd.f32 0.0, %v4999
      %v5001 = vpop.f32.mrf.mxu0
      %5002 = vmatprep.mubr.f32.mxu0 0.0
      %5003 = vmatmul.mubr.f32.gmra.mxu0 %v4753
      %v5004 = vpop.f32.mrf.mxu0
      %v5005 = vadd.f32 0.0, %v5004
      %v5006 = vpop.f32.mrf.mxu0
      %5007 = vmatprep.mubr.f32.mxu0 0.0
      %5008 = vmatmul.mubr.f32.gmra.mxu0 %v4756
      %v5009 = vpop.f32.mrf.mxu0
      %v5010 = vadd.f32 0.0, %v5009
      %v5011 = vpop.f32.mrf.mxu0
      %5012 = vmatprep.mubr.f32.mxu0 0.0
      %5013 = vmatmul.mubr.f32.gmra.mxu0 %v4759
      %v5014 = vpop.f32.mrf.mxu0
      %v5015 = vadd.f32 0.0, %v5014
      %v5016 = vpop.f32.mrf.mxu0
      %5017 = vmatprep.mubr.f32.mxu0 0.0
      %5018 = vmatmul.mubr.f32.gmra.mxu0 %v4762
      %v5019 = vpop.f32.mrf.mxu0
      %v5020 = vadd.f32 0.0, %v5019
      %v5021 = vpop.f32.mrf.mxu0
      %5022 = vmatprep.mubr.f32.mxu0 0.0
      %5023 = vmatmul.mubr.f32.gmra.mxu0 %v4765
      %v5024 = vpop.f32.mrf.mxu0
      %v5025 = vadd.f32 0.0, %v5024
      %v5026 = vpop.f32.mrf.mxu0
      %5027 = vmatprep.mubr.f32.mxu0 0.0
      %5028 = vmatmul.mubr.f32.gmra.mxu0 %v4768
      %v5029 = vpop.f32.mrf.mxu0
      %v5030 = vadd.f32 0.0, %v5029
      %v5031 = vpop.f32.mrf.mxu0
      %5032 = vmatprep.mubr.f32.mxu0 0.0
      %5033 = vmatmul.mubr.f32.gmra.mxu0 %v4771
      %v5034 = vpop.f32.mrf.mxu0
      %v5035 = vadd.f32 0.0, %v5034
      %v5036 = vpop.f32.mrf.mxu0
      %5037 = vmatprep.mubr.f32.mxu0 0.0
      %5038 = vmatmul.mubr.f32.gmra.mxu0 %v4774
      %v5039 = vpop.f32.mrf.mxu0
      %v5040 = vadd.f32 0.0, %v5039
      %v5041 = vpop.f32.mrf.mxu0
      %5042 = vmatprep.mubr.f32.mxu0 0.0
      %5043 = vmatmul.mubr.f32.gmra.mxu0 %v4777
      %v5044 = vpop.f32.mrf.mxu0
      %v5045 = vadd.f32 0.0, %v5044
      %v5046 = vpop.f32.mrf.mxu0
      %5047 = vmatprep.mubr.f32.mxu0 0.0
      %5048 = vmatmul.mubr.f32.gmra.mxu0 %v4780
      %v5049 = vpop.f32.mrf.mxu0
      %v5050 = vadd.f32 0.0, %v5049
      %v5051 = vpop.f32.mrf.mxu0
      %5052 = vmatprep.mubr.f32.mxu0 0.0
      %5053 = vmatmul.mubr.f32.gmra.mxu0 %v4783
      %v5054 = vpop.f32.mrf.mxu0
      %v5055 = vadd.f32 0.0, %v5054
      %v5056 = vpop.f32.mrf.mxu0
      %5057 = vdwg.mxu0
      %v5058 = vadd.f32 %v4578, %v4855
      %v5059 = vadd.f32 %v4579, %v4860
      %v5060 = vadd.f32 %v4580, %v4865
      %v5061 = vadd.f32 %v4581, %v4870
      %v5062 = vadd.f32 %v4582, %v4875
      %v5063 = vadd.f32 %v4583, %v4880
      %v5064 = vadd.f32 %v4584, %v4885
      %v5065 = vadd.f32 %v4585, %v4890
      %v5066 = vadd.f32 %v4586, %v4895
      %v5067 = vadd.f32 %v4587, %v4900
      %v5068 = vadd.f32 %v4588, %v4905
      %v5069 = vadd.f32 %v4589, %v4910
      %v5070 = vadd.f32 %v4590, %v4915
      %v5071 = vadd.f32 %v4591, %v4920
      %v5072 = vadd.f32 %v4592, %v4925
      %v5073 = vadd.f32 %v4593, %v4930
      %v5074 = vadd.f32 %v4594, %v4935
      %v5075 = vadd.f32 %v4595, %v4940
      %v5076 = vadd.f32 %v4596, %v4945
      %v5077 = vadd.f32 %v4597, %v4950
      %v5078 = vadd.f32 %v4598, %v4955
      %v5079 = vadd.f32 %v4599, %v4960
      %v5080 = vadd.f32 %v4600, %v4965
      %v5081 = vadd.f32 %v4601, %v4970
      %v5082 = vadd.f32 %v4602, %v4975
      %v5083 = vadd.f32 %v4603, %v4980
      %v5084 = vadd.f32 %v4604, %v4985
      %v5085 = vadd.f32 %v4605, %v4990
      %v5086 = vadd.f32 %v4606, %v4995
      %v5087 = vadd.f32 %v4607, %v5000
      %v5088 = vadd.f32 %v4608, %v5005
      %v5089 = vadd.f32 %v4609, %v5010
      %v5090 = vadd.f32 %v4610, %v5015
      %v5091 = vadd.f32 %v4611, %v5020
      %v5092 = vadd.f32 %v4612, %v5025
      %v5093 = vadd.f32 %v4613, %v5030
      %v5094 = vadd.f32 %v4614, %v5035
      %v5095 = vadd.f32 %v4615, %v5040
      %v5096 = vadd.f32 %v4616, %v5045
      %v5097 = vadd.f32 %v4617, %v5050
      %v5098 = vadd.f32 %v4618, %v5055
      %v5099 = vld [vmem:[%s5] sm:$0x1]
      %v5101 = vlaneseq
      %v5102 = vshrl.u32 %v5101, 7
      %v5103 = vsub.s32 0, %v5102
      %v5104 = vrot.slane %v5099, %v5103
      %v5106 = vmul.f32 %v5058, %v5104
      %v5107 = vmul.f32 %v5059, %v5104
      %v5108 = vmul.f32 %v5060, %v5104
      %v5109 = vmul.f32 %v5061, %v5104
      %v5110 = vmul.f32 %v5062, %v5104
      %v5111 = vmul.f32 %v5063, %v5104
      %v5112 = vmul.f32 %v5064, %v5104
      %v5113 = vmul.f32 %v5065, %v5104
      %v5114 = vmul.f32 %v5066, %v5104
      %v5115 = vmul.f32 %v5067, %v5104
      %v5116 = vmul.f32 %v5068, %v5104
      %v5117 = vmul.f32 %v5069, %v5104
      %v5118 = vmul.f32 %v5070, %v5104
      %v5119 = vmul.f32 %v5071, %v5104
      %v5120 = vmul.f32 %v5072, %v5104
      %v5121 = vmul.f32 %v5073, %v5104
      %v5122 = vmul.f32 %v5074, %v5104
      %v5123 = vmul.f32 %v5075, %v5104
      %v5124 = vmul.f32 %v5076, %v5104
      %v5125 = vmul.f32 %v5077, %v5104
      %v5126 = vmul.f32 %v5078, %v5104
      %v5127 = vmul.f32 %v5079, %v5104
      %v5128 = vmul.f32 %v5080, %v5104
      %v5129 = vmul.f32 %v5081, %v5104
      %v5130 = vmul.f32 %v5082, %v5104
      %v5131 = vmul.f32 %v5083, %v5104
      %v5132 = vmul.f32 %v5084, %v5104
      %v5133 = vmul.f32 %v5085, %v5104
      %v5134 = vmul.f32 %v5086, %v5104
      %v5135 = vmul.f32 %v5087, %v5104
      %v5136 = vmul.f32 %v5088, %v5104
      %v5137 = vmul.f32 %v5089, %v5104
      %v5138 = vmul.f32 %v5090, %v5104
      %v5139 = vmul.f32 %v5091, %v5104
      %v5140 = vmul.f32 %v5092, %v5104
      %v5141 = vmul.f32 %v5093, %v5104
      %v5142 = vmul.f32 %v5094, %v5104
      %v5143 = vmul.f32 %v5095, %v5104
      %v5144 = vmul.f32 %v5096, %v5104
      %v5145 = vmul.f32 %v5097, %v5104
      %v5146 = vmul.f32 %v5098, %v5104
      %v5147 = vld [vmem:[%s6] sm:$0x1]
      %v5149 = vlaneseq
      %v5150 = vshrl.u32 %v5149, 7
      %v5151 = vsub.s32 0, %v5150
      %v5152 = vrot.slane %v5147, %v5151
      %v5154 = vadd.f32 %v5106, %v5152
      %v5155 = vadd.f32 %v5107, %v5152
      %v5156 = vadd.f32 %v5108, %v5152
      %v5157 = vadd.f32 %v5109, %v5152
      %v5158 = vadd.f32 %v5110, %v5152
      %v5159 = vadd.f32 %v5111, %v5152
      %v5160 = vadd.f32 %v5112, %v5152
      %v5161 = vadd.f32 %v5113, %v5152
      %v5162 = vadd.f32 %v5114, %v5152
      %v5163 = vadd.f32 %v5115, %v5152
      %v5164 = vadd.f32 %v5116, %v5152
      %v5165 = vadd.f32 %v5117, %v5152
      %v5166 = vadd.f32 %v5118, %v5152
      %v5167 = vadd.f32 %v5119, %v5152
      %v5168 = vadd.f32 %v5120, %v5152
      %v5169 = vadd.f32 %v5121, %v5152
      %v5170 = vadd.f32 %v5122, %v5152
      %v5171 = vadd.f32 %v5123, %v5152
      %v5172 = vadd.f32 %v5124, %v5152
      %v5173 = vadd.f32 %v5125, %v5152
      %v5174 = vadd.f32 %v5126, %v5152
      %v5175 = vadd.f32 %v5127, %v5152
      %v5176 = vadd.f32 %v5128, %v5152
      %v5177 = vadd.f32 %v5129, %v5152
      %v5178 = vadd.f32 %v5130, %v5152
      %v5179 = vadd.f32 %v5131, %v5152
      %v5180 = vadd.f32 %v5132, %v5152
      %v5181 = vadd.f32 %v5133, %v5152
      %v5182 = vadd.f32 %v5134, %v5152
      %v5183 = vadd.f32 %v5135, %v5152
      %v5184 = vadd.f32 %v5136, %v5152
      %v5185 = vadd.f32 %v5137, %v5152
      %v5186 = vadd.f32 %v5138, %v5152
      %v5187 = vadd.f32 %v5139, %v5152
      %v5188 = vadd.f32 %v5140, %v5152
      %v5189 = vadd.f32 %v5141, %v5152
      %v5190 = vadd.f32 %v5142, %v5152
      %v5191 = vadd.f32 %v5143, %v5152
      %v5192 = vadd.f32 %v5144, %v5152
      %v5193 = vadd.f32 %v5145, %v5152
      %v5194 = vadd.f32 %v5146, %v5152
      %v5195 = vmax.f32 %v5154, 0.0
      %v5196 = vmax.f32 %v5155, 0.0
      %v5197 = vmax.f32 %v5156, 0.0
      %v5198 = vmax.f32 %v5157, 0.0
      %v5199 = vmax.f32 %v5158, 0.0
      %v5200 = vmax.f32 %v5159, 0.0
      %v5201 = vmax.f32 %v5160, 0.0
      %v5202 = vmax.f32 %v5161, 0.0
      %v5203 = vmax.f32 %v5162, 0.0
      %v5204 = vmax.f32 %v5163, 0.0
      %v5205 = vmax.f32 %v5164, 0.0
      %v5206 = vmax.f32 %v5165, 0.0
      %v5207 = vmax.f32 %v5166, 0.0
      %v5208 = vmax.f32 %v5167, 0.0
      %v5209 = vmax.f32 %v5168, 0.0
      %v5210 = vmax.f32 %v5169, 0.0
      %v5211 = vmax.f32 %v5170, 0.0
      %v5212 = vmax.f32 %v5171, 0.0
      %v5213 = vmax.f32 %v5172, 0.0
      %v5214 = vmax.f32 %v5173, 0.0
      %v5215 = vmax.f32 %v5174, 0.0
      %v5216 = vmax.f32 %v5175, 0.0
      %v5217 = vmax.f32 %v5176, 0.0
      %v5218 = vmax.f32 %v5177, 0.0
      %v5219 = vmax.f32 %v5178, 0.0
      %v5220 = vmax.f32 %v5179, 0.0
      %v5221 = vmax.f32 %v5180, 0.0
      %v5222 = vmax.f32 %v5181, 0.0
      %v5223 = vmax.f32 %v5182, 0.0
      %v5224 = vmax.f32 %v5183, 0.0
      %v5225 = vmax.f32 %v5184, 0.0
      %v5226 = vmax.f32 %v5185, 0.0
      %v5227 = vmax.f32 %v5186, 0.0
      %v5228 = vmax.f32 %v5187, 0.0
      %v5229 = vmax.f32 %v5188, 0.0
      %v5230 = vmax.f32 %v5189, 0.0
      %v5231 = vmax.f32 %v5190, 0.0
      %v5232 = vmax.f32 %v5191, 0.0
      %v5233 = vmax.f32 %v5192, 0.0
      %v5234 = vmax.f32 %v5193, 0.0
      %v5235 = vmax.f32 %v5194, 0.0
      %v5236 = vmul.f32 %v5195, %v528
      %v5237 = vmul.f32 %v5196, %v533
      %v5238 = vmul.f32 %v5197, %v538
      %v5239 = vmul.f32 %v5198, %v543
      %v5240 = vmul.f32 %v5199, %v548
      %v5241 = vmul.f32 %v5200, %v553
      %v5242 = vmul.f32 %v5201, %v558
      %v5243 = vmul.f32 %v5202, %v563
      %v5244 = vmul.f32 %v5203, %v568
      %v5245 = vmul.f32 %v5204, %v573
      %v5246 = vmul.f32 %v5205, %v578
      %v5247 = vmul.f32 %v5206, %v583
      %v5248 = vmul.f32 %v5207, %v588
      %v5249 = vmul.f32 %v5208, %v593
      %v5250 = vmul.f32 %v5209, %v598
      %v5251 = vmul.f32 %v5210, %v603
      %v5252 = vmul.f32 %v5211, %v608
      %v5253 = vmul.f32 %v5212, %v613
      %v5254 = vmul.f32 %v5213, %v618
      %v5255 = vmul.f32 %v5214, %v623
      %v5256 = vmul.f32 %v5215, %v628
      %v5257 = vmul.f32 %v5216, %v633
      %v5258 = vmul.f32 %v5217, %v638
      %v5259 = vmul.f32 %v5218, %v643
      %v5260 = vmul.f32 %v5219, %v648
      %v5261 = vmul.f32 %v5220, %v653
      %v5262 = vmul.f32 %v5221, %v658
      %v5263 = vmul.f32 %v5222, %v663
      %v5264 = vmul.f32 %v5223, %v668
      %v5265 = vmul.f32 %v5224, %v673
      %v5266 = vmul.f32 %v5225, %v678
      %v5267 = vmul.f32 %v5226, %v683
      %v5268 = vmul.f32 %v5227, %v688
      %v5269 = vmul.f32 %v5228, %v693
      %v5270 = vmul.f32 %v5229, %v698
      %v5271 = vmul.f32 %v5230, %v703
      %v5272 = vmul.f32 %v5231, %v708
      %v5273 = vmul.f32 %v5232, %v713
      %v5274 = vmul.f32 %v5233, %v718
      %v5275 = vmul.f32 %v5234, %v723
      %v5276 = vmul.f32 %v5235, %v728
      %5277 = vst.msk [vmem:[#allocation3] sm:$0xff] %vm771, 0.0
      %5278 = vst.msk [vmem:[#allocation3 + $0x8] sm:$0xff] %vm771, 0.0
      %5279 = vst.msk [vmem:[#allocation3 + $0x10] sm:$0xff] %vm771, 0.0
      %5280 = vst.msk [vmem:[#allocation3 + $0x18] sm:$0xff] %vm771, 0.0
      %5281 = vst.msk [vmem:[#allocation3 + $0x20] sm:$0xff] %vm771, 0.0
      %5282 = vst.msk [vmem:[#allocation3 + $0x28] sm:$0xff] %vm771, 0.0
      %5283 = vst.msk [vmem:[#allocation3 + $0x30] sm:$0xff] %vm771, 0.0
      %5284 = vst.msk [vmem:[#allocation3 + $0x38] sm:$0xff] %vm771, 0.0
      %5285 = vst.msk [vmem:[#allocation3 + $0x40] sm:$0xff] %vm771, 0.0
      %5286 = vst.msk [vmem:[#allocation3 + $0x48] sm:$0xff] %vm771, 0.0
      %5287 = vst.msk [vmem:[#allocation3 + $0x50] sm:$0xff] %vm771, 0.0
      %5288 = vst.msk [vmem:[#allocation3 + $0x58] sm:$0xff] %vm771, 0.0
      %5289 = vst.msk [vmem:[#allocation3 + $0x60] sm:$0xff] %vm771, 0.0
      %5290 = vst.msk [vmem:[#allocation3 + $0x68] sm:$0xff] %vm771, 0.0
      %5291 = vst.msk [vmem:[#allocation3 + $0x70] sm:$0xff] %vm771, 0.0
      %5292 = vst.msk [vmem:[#allocation3 + $0x78] sm:$0xff] %vm771, 0.0
      %5293 = vst.msk [vmem:[#allocation3 + $0x80] sm:$0xff] %vm771, 0.0
      %5294 = vst.msk [vmem:[#allocation3 + $0x88] sm:$0xff] %vm771, 0.0
      %5295 = vst.msk [vmem:[#allocation3 + $0x90] sm:$0xff] %vm771, 0.0
      %5296 = vst.msk [vmem:[#allocation3 + $0x98] sm:$0xff] %vm771, 0.0
      %5297 = vst.msk [vmem:[#allocation3 + $0xa0] sm:$0xff] %vm771, 0.0
      %5298 = vst.msk [vmem:[#allocation3 + $0xa8] sm:$0xff] %vm771, 0.0
      %5299 = vst.msk [vmem:[#allocation3 + $0xb0] sm:$0xff] %vm771, 0.0
      %5300 = vst.msk [vmem:[#allocation3 + $0xb8] sm:$0xff] %vm771, 0.0
      %5301 = vst.msk [vmem:[#allocation3 + $0xc0] sm:$0xff] %vm771, 0.0
      %5302 = vst.msk [vmem:[#allocation3 + $0xc8] sm:$0xff] %vm771, 0.0
      %5303 = vst.msk [vmem:[#allocation3 + $0xd0] sm:$0xff] %vm771, 0.0
      %5304 = vst.msk [vmem:[#allocation3 + $0xd8] sm:$0xff] %vm771, 0.0
      %5305 = vst.msk [vmem:[#allocation3 + $0xe0] sm:$0xff] %vm771, 0.0
      %5306 = vst.msk [vmem:[#allocation3 + $0xe8] sm:$0xff] %vm771, 0.0
      %5307 = vst.msk [vmem:[#allocation3 + $0xf0] sm:$0xff] %vm771, 0.0
      %5308 = vst.msk [vmem:[#allocation3 + $0xf8] sm:$0xff] %vm771, 0.0
      %5309 = vst.msk [vmem:[#allocation3 + $0x100] sm:$0xff] %vm771, 0.0
      %5310 = vst.msk [vmem:[#allocation3 + $0x108] sm:$0xff] %vm771, 0.0
      %5311 = vst.msk [vmem:[#allocation3 + $0x110] sm:$0xff] %vm771, 0.0
      %5312 = vst.msk [vmem:[#allocation3 + $0x118] sm:$0xff] %vm771, 0.0
      %5313 = vst.msk [vmem:[#allocation3 + $0x120] sm:$0xff] %vm771, 0.0
      %5314 = vst.msk [vmem:[#allocation3 + $0x128] sm:$0xff] %vm771, 0.0
      %5315 = vst.msk [vmem:[#allocation3 + $0x130] sm:$0xff] %vm771, 0.0
      %5316 = vst.msk [vmem:[#allocation3 + $0x138] sm:$0xff] %vm771, 0.0
      %5317 = vst.msk [vmem:[#allocation3 + $0x140] sm:$0xff] %vm771, 0.0
      %5318 = vst.msk [vmem:[#allocation3 + $0x148] sm:$0xff] %vm771, 0.0
      %5319 = vst.msk [vmem:[#allocation3 + $0x150] sm:$0xff] %vm771, 0.0
      %5320 = vst.msk [vmem:[#allocation3 + $0x158] sm:$0xff] %vm771, 0.0
      %5321 = vst.msk [vmem:[#allocation3 + $0x160] sm:$0xff] %vm771, 0.0
      %5322 = vst.msk [vmem:[#allocation3 + $0x168] sm:$0xff] %vm771, 0.0
      %5323 = vst.msk [vmem:[#allocation3 + $0x170] sm:$0xf] %vm818, 0.0
      %5324 = vst.msk [vmem:[#allocation3 + $0x18] sm:$0xff] %vm771, %v5236
      %5325 = vst.msk [vmem:[#allocation3 + $0x20] sm:$0xff] %vm771, %v5237
      %5326 = vst.msk [vmem:[#allocation3 + $0x28] sm:$0xff] %vm771, %v5238
      %5327 = vst.msk [vmem:[#allocation3 + $0x30] sm:$0xff] %vm771, %v5239
      %5328 = vst.msk [vmem:[#allocation3 + $0x38] sm:$0xff] %vm771, %v5240
      %5329 = vst.msk [vmem:[#allocation3 + $0x40] sm:$0xff] %vm771, %v5241
      %5330 = vst.msk [vmem:[#allocation3 + $0x48] sm:$0xff] %vm771, %v5242
      %5331 = vst.msk [vmem:[#allocation3 + $0x50] sm:$0xff] %vm771, %v5243
      %5332 = vst.msk [vmem:[#allocation3 + $0x58] sm:$0xff] %vm771, %v5244
      %5333 = vst.msk [vmem:[#allocation3 + $0x60] sm:$0xff] %vm771, %v5245
      %5334 = vst.msk [vmem:[#allocation3 + $0x68] sm:$0xff] %vm771, %v5246
      %5335 = vst.msk [vmem:[#allocation3 + $0x70] sm:$0xff] %vm771, %v5247
      %5336 = vst.msk [vmem:[#allocation3 + $0x78] sm:$0xff] %vm771, %v5248
      %5337 = vst.msk [vmem:[#allocation3 + $0x80] sm:$0xff] %vm771, %v5249
      %5338 = vst.msk [vmem:[#allocation3 + $0x88] sm:$0xff] %vm771, %v5250
      %5339 = vst.msk [vmem:[#allocation3 + $0x90] sm:$0xff] %vm771, %v5251
      %5340 = vst.msk [vmem:[#allocation3 + $0x98] sm:$0xff] %vm771, %v5252
      %5341 = vst.msk [vmem:[#allocation3 + $0xa0] sm:$0xff] %vm771, %v5253
      %5342 = vst.msk [vmem:[#allocation3 + $0xa8] sm:$0xff] %vm771, %v5254
      %5343 = vst.msk [vmem:[#allocation3 + $0xb0] sm:$0xff] %vm771, %v5255
      %5344 = vst.msk [vmem:[#allocation3 + $0xb8] sm:$0xff] %vm771, %v5256
      %5345 = vst.msk [vmem:[#allocation3 + $0xc0] sm:$0xff] %vm771, %v5257
      %5346 = vst.msk [vmem:[#allocation3 + $0xc8] sm:$0xff] %vm771, %v5258
      %5347 = vst.msk [vmem:[#allocation3 + $0xd0] sm:$0xff] %vm771, %v5259
      %5348 = vst.msk [vmem:[#allocation3 + $0xd8] sm:$0xff] %vm771, %v5260
      %5349 = vst.msk [vmem:[#allocation3 + $0xe0] sm:$0xff] %vm771, %v5261
      %5350 = vst.msk [vmem:[#allocation3 + $0xe8] sm:$0xff] %vm771, %v5262
      %5351 = vst.msk [vmem:[#allocation3 + $0xf0] sm:$0xff] %vm771, %v5263
      %5352 = vst.msk [vmem:[#allocation3 + $0xf8] sm:$0xff] %vm771, %v5264
      %5353 = vst.msk [vmem:[#allocation3 + $0x100] sm:$0xff] %vm771, %v5265
      %5354 = vst.msk [vmem:[#allocation3 + $0x108] sm:$0xff] %vm771, %v5266
      %5355 = vst.msk [vmem:[#allocation3 + $0x110] sm:$0xff] %vm771, %v5267
      %5356 = vst.msk [vmem:[#allocation3 + $0x118] sm:$0xff] %vm771, %v5268
      %5357 = vst.msk [vmem:[#allocation3 + $0x120] sm:$0xff] %vm771, %v5269
      %5358 = vst.msk [vmem:[#allocation3 + $0x128] sm:$0xff] %vm771, %v5270
      %5359 = vst.msk [vmem:[#allocation3 + $0x130] sm:$0xff] %vm771, %v5271
      %5360 = vst.msk [vmem:[#allocation3 + $0x138] sm:$0xff] %vm771, %v5272
      %5361 = vst.msk [vmem:[#allocation3 + $0x140] sm:$0xff] %vm771, %v5273
      %5362 = vst.msk [vmem:[#allocation3 + $0x148] sm:$0xff] %vm771, %v5274
      %5363 = vst.msk [vmem:[#allocation3 + $0x150] sm:$0xff] %vm771, %v5275
      %5364 = vst.msk [vmem:[#allocation3 + $0x158] sm:$0xf] %vm818, %v5276
      %v5365 = vld [vmem:[#allocation3 + $0x5] sm:$0xff]
      %v5366 = vld [vmem:[#allocation3 + $0xd] sm:$0xff]
      %v5367 = vld [vmem:[#allocation3 + $0x15] sm:$0xff]
      %v5368 = vld [vmem:[#allocation3 + $0x1d] sm:$0xff]
      %v5369 = vld [vmem:[#allocation3 + $0x25] sm:$0xff]
      %v5370 = vld [vmem:[#allocation3 + $0x2d] sm:$0xff]
      %v5371 = vld [vmem:[#allocation3 + $0x35] sm:$0xff]
      %v5372 = vld [vmem:[#allocation3 + $0x3d] sm:$0xff]
      %v5373 = vld [vmem:[#allocation3 + $0x45] sm:$0xff]
      %v5374 = vld [vmem:[#allocation3 + $0x4d] sm:$0xff]
      %v5375 = vld [vmem:[#allocation3 + $0x55] sm:$0xff]
      %v5376 = vld [vmem:[#allocation3 + $0x5d] sm:$0xff]
      %v5377 = vld [vmem:[#allocation3 + $0x65] sm:$0xff]
      %v5378 = vld [vmem:[#allocation3 + $0x6d] sm:$0xff]
      %v5379 = vld [vmem:[#allocation3 + $0x75] sm:$0xff]
      %v5380 = vld [vmem:[#allocation3 + $0x7d] sm:$0xff]
      %v5381 = vld [vmem:[#allocation3 + $0x85] sm:$0xff]
      %v5382 = vld [vmem:[#allocation3 + $0x8d] sm:$0xff]
      %v5383 = vld [vmem:[#allocation3 + $0x95] sm:$0xff]
      %v5384 = vld [vmem:[#allocation3 + $0x9d] sm:$0xff]
      %v5385 = vld [vmem:[#allocation3 + $0xa5] sm:$0xff]
      %v5386 = vld [vmem:[#allocation3 + $0xad] sm:$0xff]
      %v5387 = vld [vmem:[#allocation3 + $0xb5] sm:$0xff]
      %v5388 = vld [vmem:[#allocation3 + $0xbd] sm:$0xff]
      %v5389 = vld [vmem:[#allocation3 + $0xc5] sm:$0xff]
      %v5390 = vld [vmem:[#allocation3 + $0xcd] sm:$0xff]
      %v5391 = vld [vmem:[#allocation3 + $0xd5] sm:$0xff]
      %v5392 = vld [vmem:[#allocation3 + $0xdd] sm:$0xff]
      %v5393 = vld [vmem:[#allocation3 + $0xe5] sm:$0xff]
      %v5394 = vld [vmem:[#allocation3 + $0xed] sm:$0xff]
      %v5395 = vld [vmem:[#allocation3 + $0xf5] sm:$0xff]
      %v5396 = vld [vmem:[#allocation3 + $0xfd] sm:$0xff]
      %v5397 = vld [vmem:[#allocation3 + $0x105] sm:$0xff]
      %v5398 = vld [vmem:[#allocation3 + $0x10d] sm:$0xff]
      %v5399 = vld [vmem:[#allocation3 + $0x115] sm:$0xff]
      %v5400 = vld [vmem:[#allocation3 + $0x11d] sm:$0xff]
      %v5401 = vld [vmem:[#allocation3 + $0x125] sm:$0xff]
      %v5402 = vld [vmem:[#allocation3 + $0x12d] sm:$0xff]
      %v5403 = vld [vmem:[#allocation3 + $0x135] sm:$0xff]
      %v5404 = vld [vmem:[#allocation3 + $0x13d] sm:$0xff]
      %v5405 = vld [vmem:[#allocation3 + $0x145] sm:$0xf]
      %v5406 = vld [vmem:[%s7] sm:$0xf]
      %v5407 = vld [vmem:[#allocation3 + $0x6] sm:$0xff]
      %v5408 = vld [vmem:[#allocation3 + $0xe] sm:$0xff]
      %v5409 = vld [vmem:[#allocation3 + $0x16] sm:$0xff]
      %v5410 = vld [vmem:[#allocation3 + $0x1e] sm:$0xff]
      %v5411 = vld [vmem:[#allocation3 + $0x26] sm:$0xff]
      %v5412 = vld [vmem:[#allocation3 + $0x2e] sm:$0xff]
      %v5413 = vld [vmem:[#allocation3 + $0x36] sm:$0xff]
      %v5414 = vld [vmem:[#allocation3 + $0x3e] sm:$0xff]
      %v5415 = vld [vmem:[#allocation3 + $0x46] sm:$0xff]
      %v5416 = vld [vmem:[#allocation3 + $0x4e] sm:$0xff]
      %v5417 = vld [vmem:[#allocation3 + $0x56] sm:$0xff]
      %v5418 = vld [vmem:[#allocation3 + $0x5e] sm:$0xff]
      %v5419 = vld [vmem:[#allocation3 + $0x66] sm:$0xff]
      %v5420 = vld [vmem:[#allocation3 + $0x6e] sm:$0xff]
      %v5421 = vld [vmem:[#allocation3 + $0x76] sm:$0xff]
      %v5422 = vld [vmem:[#allocation3 + $0x7e] sm:$0xff]
      %v5423 = vld [vmem:[#allocation3 + $0x86] sm:$0xff]
      %v5424 = vld [vmem:[#allocation3 + $0x8e] sm:$0xff]
      %v5425 = vld [vmem:[#allocation3 + $0x96] sm:$0xff]
      %v5426 = vld [vmem:[#allocation3 + $0x9e] sm:$0xff]
      %v5427 = vld [vmem:[#allocation3 + $0xa6] sm:$0xff]
      %v5428 = vld [vmem:[#allocation3 + $0xae] sm:$0xff]
      %v5429 = vld [vmem:[#allocation3 + $0xb6] sm:$0xff]
      %v5430 = vld [vmem:[#allocation3 + $0xbe] sm:$0xff]
      %v5431 = vld [vmem:[#allocation3 + $0xc6] sm:$0xff]
      %v5432 = vld [vmem:[#allocation3 + $0xce] sm:$0xff]
      %v5433 = vld [vmem:[#allocation3 + $0xd6] sm:$0xff]
      %v5434 = vld [vmem:[#allocation3 + $0xde] sm:$0xff]
      %v5435 = vld [vmem:[#allocation3 + $0xe6] sm:$0xff]
      %v5436 = vld [vmem:[#allocation3 + $0xee] sm:$0xff]
      %v5437 = vld [vmem:[#allocation3 + $0xf6] sm:$0xff]
      %v5438 = vld [vmem:[#allocation3 + $0xfe] sm:$0xff]
      %v5439 = vld [vmem:[#allocation3 + $0x106] sm:$0xff]
      %v5440 = vld [vmem:[#allocation3 + $0x10e] sm:$0xff]
      %v5441 = vld [vmem:[#allocation3 + $0x116] sm:$0xff]
      %v5442 = vld [vmem:[#allocation3 + $0x11e] sm:$0xff]
      %v5443 = vld [vmem:[#allocation3 + $0x126] sm:$0xff]
      %v5444 = vld [vmem:[#allocation3 + $0x12e] sm:$0xff]
      %v5445 = vld [vmem:[#allocation3 + $0x136] sm:$0xff]
      %v5446 = vld [vmem:[#allocation3 + $0x13e] sm:$0xff]
      %v5447 = vld [vmem:[#allocation3 + $0x146] sm:$0xf]
      %s5448 = scalar_lea.vmem %s7, 4
      %v5449 = vld [vmem:[%s5448] sm:$0xf]
      %v5451 = vsel %vm771, %v5407, 0
      %v5454 = vsel %vm771, %v5408, 0
      %v5457 = vsel %vm771, %v5409, 0
      %v5460 = vsel %vm771, %v5410, 0
      %v5463 = vsel %vm771, %v5411, 0
      %v5466 = vsel %vm771, %v5412, 0
      %v5469 = vsel %vm771, %v5413, 0
      %v5472 = vsel %vm771, %v5414, 0
      %v5475 = vsel %vm771, %v5415, 0
      %v5478 = vsel %vm771, %v5416, 0
      %v5481 = vsel %vm771, %v5417, 0
      %v5484 = vsel %vm771, %v5418, 0
      %v5487 = vsel %vm771, %v5419, 0
      %v5490 = vsel %vm771, %v5420, 0
      %v5493 = vsel %vm771, %v5421, 0
      %v5496 = vsel %vm771, %v5422, 0
      %v5499 = vsel %vm771, %v5423, 0
      %v5502 = vsel %vm771, %v5424, 0
      %v5505 = vsel %vm771, %v5425, 0
      %v5508 = vsel %vm771, %v5426, 0
      %v5511 = vsel %vm771, %v5427, 0
      %v5514 = vsel %vm771, %v5428, 0
      %v5517 = vsel %vm771, %v5429, 0
      %v5520 = vsel %vm771, %v5430, 0
      %v5523 = vsel %vm771, %v5431, 0
      %v5526 = vsel %vm771, %v5432, 0
      %v5529 = vsel %vm771, %v5433, 0
      %v5532 = vsel %vm771, %v5434, 0
      %v5535 = vsel %vm771, %v5435, 0
      %v5538 = vsel %vm771, %v5436, 0
      %v5541 = vsel %vm771, %v5437, 0
      %v5544 = vsel %vm771, %v5438, 0
      %v5547 = vsel %vm771, %v5439, 0
      %v5550 = vsel %vm771, %v5440, 0
      %v5553 = vsel %vm771, %v5441, 0
      %v5556 = vsel %vm771, %v5442, 0
      %v5559 = vsel %vm771, %v5443, 0
      %v5562 = vsel %vm771, %v5444, 0
      %v5565 = vsel %vm771, %v5445, 0
      %v5568 = vsel %vm771, %v5446, 0
      %v5571 = vsel %vm771, %v5447, 0
      %v5574 = vsel %vm1069, %v5449, 0
      %5576 = vmatprep.subr.mxu0 0.0
      %5577 = vmatpush1.msra.mxu0 0.0
      %5578 = vmatprep.subr.mxu0 0.0
      %5579 = vmatpush1.msra.mxu0 0.0
      %5580 = vmatprep.subr.mxu0 0.0
      %5581 = vmatpush1.msra.mxu0 0.0
      %5582 = vmatprep.subr.mxu0 0.0
      %5583 = vmatpush1.msra.mxu0 0.0
      %5584 = vmatprep.subr.mxu0 0.0
      %5585 = vmatpush1.msra.mxu0 0.0
      %5586 = vmatprep.subr.mxu0 0.0
      %5587 = vmatpush1.msra.mxu0 0.0
      %5588 = vmatprep.subr.mxu0 0.0
      %5589 = vmatpush1.msra.mxu0 0.0
      %5590 = vmatprep.subr.mxu0 0.0
      %5591 = vmatpush1.msra.mxu0 0.0
      %5592 = vmatprep.subr.mxu0 0.0
      %5593 = vmatpush1.msra.mxu0 0.0
      %5594 = vmatprep.subr.mxu0 0.0
      %5595 = vmatpush1.msra.mxu0 0.0
      %5596 = vmatprep.subr.mxu0 0.0
      %5597 = vmatpush1.msra.mxu0 0.0
      %5598 = vmatprep.subr.mxu0 0.0
      %5599 = vmatpush1.msra.mxu0 0.0
      %5600 = vmatprep.subr.mxu0 0.0
      %5601 = vmatpush1.msra.mxu0 0.0
      %5602 = vmatprep.subr.mxu0 0.0
      %5603 = vmatpush1.msra.mxu0 0.0
      %5604 = vmatprep.subr.mxu0 0.0
      %5605 = vmatpush1.msra.mxu0 0.0
      %5606 = vmatprep.subr.mxu0 0.0
      %5607 = vmatpush1.msra.mxu0 %v5574
      %5608 = vmatprep.subr.mxu0 0.0
      %5609 = vmatpush2.msra.mxu0 0.0
      %5610 = vmatprep.subr.mxu0 0.0
      %5611 = vmatpush2.msra.mxu0 0.0
      %5612 = vmatprep.subr.mxu0 0.0
      %5613 = vmatpush2.msra.mxu0 0.0
      %5614 = vmatprep.subr.mxu0 0.0
      %5615 = vmatpush2.msra.mxu0 0.0
      %5616 = vmatprep.subr.mxu0 0.0
      %5617 = vmatpush2.msra.mxu0 0.0
      %5618 = vmatprep.subr.mxu0 0.0
      %5619 = vmatpush2.msra.mxu0 0.0
      %5620 = vmatprep.subr.mxu0 0.0
      %5621 = vmatpush2.msra.mxu0 0.0
      %5622 = vmatprep.subr.mxu0 0.0
      %5623 = vmatpush2.msra.mxu0 0.0
      %5624 = vmatprep.subr.mxu0 0.0
      %5625 = vmatpush2.msra.mxu0 0.0
      %5626 = vmatprep.subr.mxu0 0.0
      %5627 = vmatpush2.msra.mxu0 0.0
      %5628 = vmatprep.subr.mxu0 0.0
      %5629 = vmatpush2.msra.mxu0 0.0
      %5630 = vmatprep.subr.mxu0 0.0
      %5631 = vmatpush2.msra.mxu0 0.0
      %5632 = vmatprep.subr.mxu0 0.0
      %5633 = vmatpush2.msra.mxu0 0.0
      %5634 = vmatprep.subr.mxu0 0.0
      %5635 = vmatpush2.msra.mxu0 0.0
      %5636 = vmatprep.subr.mxu0 0.0
      %5637 = vmatpush2.msra.mxu0 0.0
      %5638 = vmatprep.subr.mxu0 0.0
      %5639 = vmatpush2.msra.mxu0 0.0
      %5640 = vmatprep.mubr.f32.mxu0 0.0
      %5641 = vmatmul.mubr.f32.gmra.mxu0 %v5451
      %v5642 = vpop.f32.mrf.mxu0
      %v5643 = vadd.f32 0.0, %v5642
      %v5644 = vpop.f32.mrf.mxu0
      %5645 = vmatprep.mubr.f32.mxu0 0.0
      %5646 = vmatmul.mubr.f32.gmra.mxu0 %v5454
      %v5647 = vpop.f32.mrf.mxu0
      %v5648 = vadd.f32 0.0, %v5647
      %v5649 = vpop.f32.mrf.mxu0
      %5650 = vmatprep.mubr.f32.mxu0 0.0
      %5651 = vmatmul.mubr.f32.gmra.mxu0 %v5457
      %v5652 = vpop.f32.mrf.mxu0
      %v5653 = vadd.f32 0.0, %v5652
      %v5654 = vpop.f32.mrf.mxu0
      %5655 = vmatprep.mubr.f32.mxu0 0.0
      %5656 = vmatmul.mubr.f32.gmra.mxu0 %v5460
      %v5657 = vpop.f32.mrf.mxu0
      %v5658 = vadd.f32 0.0, %v5657
      %v5659 = vpop.f32.mrf.mxu0
      %5660 = vmatprep.mubr.f32.mxu0 0.0
      %5661 = vmatmul.mubr.f32.gmra.mxu0 %v5463
      %v5662 = vpop.f32.mrf.mxu0
      %v5663 = vadd.f32 0.0, %v5662
      %v5664 = vpop.f32.mrf.mxu0
      %5665 = vmatprep.mubr.f32.mxu0 0.0
      %5666 = vmatmul.mubr.f32.gmra.mxu0 %v5466
      %v5667 = vpop.f32.mrf.mxu0
      %v5668 = vadd.f32 0.0, %v5667
      %v5669 = vpop.f32.mrf.mxu0
      %5670 = vmatprep.mubr.f32.mxu0 0.0
      %5671 = vmatmul.mubr.f32.gmra.mxu0 %v5469
      %v5672 = vpop.f32.mrf.mxu0
      %v5673 = vadd.f32 0.0, %v5672
      %v5674 = vpop.f32.mrf.mxu0
      %5675 = vmatprep.mubr.f32.mxu0 0.0
      %5676 = vmatmul.mubr.f32.gmra.mxu0 %v5472
      %v5677 = vpop.f32.mrf.mxu0
      %v5678 = vadd.f32 0.0, %v5677
      %v5679 = vpop.f32.mrf.mxu0
      %5680 = vmatprep.mubr.f32.mxu0 0.0
      %5681 = vmatmul.mubr.f32.gmra.mxu0 %v5475
      %v5682 = vpop.f32.mrf.mxu0
      %v5683 = vadd.f32 0.0, %v5682
      %v5684 = vpop.f32.mrf.mxu0
      %5685 = vmatprep.mubr.f32.mxu0 0.0
      %5686 = vmatmul.mubr.f32.gmra.mxu0 %v5478
      %v5687 = vpop.f32.mrf.mxu0
      %v5688 = vadd.f32 0.0, %v5687
      %v5689 = vpop.f32.mrf.mxu0
      %5690 = vmatprep.mubr.f32.mxu0 0.0
      %5691 = vmatmul.mubr.f32.gmra.mxu0 %v5481
      %v5692 = vpop.f32.mrf.mxu0
      %v5693 = vadd.f32 0.0, %v5692
      %v5694 = vpop.f32.mrf.mxu0
      %5695 = vmatprep.mubr.f32.mxu0 0.0
      %5696 = vmatmul.mubr.f32.gmra.mxu0 %v5484
      %v5697 = vpop.f32.mrf.mxu0
      %v5698 = vadd.f32 0.0, %v5697
      %v5699 = vpop.f32.mrf.mxu0
      %5700 = vmatprep.mubr.f32.mxu0 0.0
      %5701 = vmatmul.mubr.f32.gmra.mxu0 %v5487
      %v5702 = vpop.f32.mrf.mxu0
      %v5703 = vadd.f32 0.0, %v5702
      %v5704 = vpop.f32.mrf.mxu0
      %5705 = vmatprep.mubr.f32.mxu0 0.0
      %5706 = vmatmul.mubr.f32.gmra.mxu0 %v5490
      %v5707 = vpop.f32.mrf.mxu0
      %v5708 = vadd.f32 0.0, %v5707
      %v5709 = vpop.f32.mrf.mxu0
      %5710 = vmatprep.mubr.f32.mxu0 0.0
      %5711 = vmatmul.mubr.f32.gmra.mxu0 %v5493
      %v5712 = vpop.f32.mrf.mxu0
      %v5713 = vadd.f32 0.0, %v5712
      %v5714 = vpop.f32.mrf.mxu0
      %5715 = vmatprep.mubr.f32.mxu0 0.0
      %5716 = vmatmul.mubr.f32.gmra.mxu0 %v5496
      %v5717 = vpop.f32.mrf.mxu0
      %v5718 = vadd.f32 0.0, %v5717
      %v5719 = vpop.f32.mrf.mxu0
      %5720 = vmatprep.mubr.f32.mxu0 0.0
      %5721 = vmatmul.mubr.f32.gmra.mxu0 %v5499
      %v5722 = vpop.f32.mrf.mxu0
      %v5723 = vadd.f32 0.0, %v5722
      %v5724 = vpop.f32.mrf.mxu0
      %5725 = vmatprep.mubr.f32.mxu0 0.0
      %5726 = vmatmul.mubr.f32.gmra.mxu0 %v5502
      %v5727 = vpop.f32.mrf.mxu0
      %v5728 = vadd.f32 0.0, %v5727
      %v5729 = vpop.f32.mrf.mxu0
      %5730 = vmatprep.mubr.f32.mxu0 0.0
      %5731 = vmatmul.mubr.f32.gmra.mxu0 %v5505
      %v5732 = vpop.f32.mrf.mxu0
      %v5733 = vadd.f32 0.0, %v5732
      %v5734 = vpop.f32.mrf.mxu0
      %5735 = vmatprep.mubr.f32.mxu0 0.0
      %5736 = vmatmul.mubr.f32.gmra.mxu0 %v5508
      %v5737 = vpop.f32.mrf.mxu0
      %v5738 = vadd.f32 0.0, %v5737
      %v5739 = vpop.f32.mrf.mxu0
      %5740 = vmatprep.mubr.f32.mxu0 0.0
      %5741 = vmatmul.mubr.f32.gmra.mxu0 %v5511
      %v5742 = vpop.f32.mrf.mxu0
      %v5743 = vadd.f32 0.0, %v5742
      %v5744 = vpop.f32.mrf.mxu0
      %5745 = vmatprep.mubr.f32.mxu0 0.0
      %5746 = vmatmul.mubr.f32.gmra.mxu0 %v5514
      %v5747 = vpop.f32.mrf.mxu0
      %v5748 = vadd.f32 0.0, %v5747
      %v5749 = vpop.f32.mrf.mxu0
      %5750 = vmatprep.mubr.f32.mxu0 0.0
      %5751 = vmatmul.mubr.f32.gmra.mxu0 %v5517
      %v5752 = vpop.f32.mrf.mxu0
      %v5753 = vadd.f32 0.0, %v5752
      %v5754 = vpop.f32.mrf.mxu0
      %5755 = vmatprep.mubr.f32.mxu0 0.0
      %5756 = vmatmul.mubr.f32.gmra.mxu0 %v5520
      %v5757 = vpop.f32.mrf.mxu0
      %v5758 = vadd.f32 0.0, %v5757
      %v5759 = vpop.f32.mrf.mxu0
      %5760 = vmatprep.mubr.f32.mxu0 0.0
      %5761 = vmatmul.mubr.f32.gmra.mxu0 %v5523
      %v5762 = vpop.f32.mrf.mxu0
      %v5763 = vadd.f32 0.0, %v5762
      %v5764 = vpop.f32.mrf.mxu0
      %5765 = vmatprep.mubr.f32.mxu0 0.0
      %5766 = vmatmul.mubr.f32.gmra.mxu0 %v5526
      %v5767 = vpop.f32.mrf.mxu0
      %v5768 = vadd.f32 0.0, %v5767
      %v5769 = vpop.f32.mrf.mxu0
      %5770 = vmatprep.mubr.f32.mxu0 0.0
      %5771 = vmatmul.mubr.f32.gmra.mxu0 %v5529
      %v5772 = vpop.f32.mrf.mxu0
      %v5773 = vadd.f32 0.0, %v5772
      %v5774 = vpop.f32.mrf.mxu0
      %5775 = vmatprep.mubr.f32.mxu0 0.0
      %5776 = vmatmul.mubr.f32.gmra.mxu0 %v5532
      %v5777 = vpop.f32.mrf.mxu0
      %v5778 = vadd.f32 0.0, %v5777
      %v5779 = vpop.f32.mrf.mxu0
      %5780 = vmatprep.mubr.f32.mxu0 0.0
      %5781 = vmatmul.mubr.f32.gmra.mxu0 %v5535
      %v5782 = vpop.f32.mrf.mxu0
      %v5783 = vadd.f32 0.0, %v5782
      %v5784 = vpop.f32.mrf.mxu0
      %5785 = vmatprep.mubr.f32.mxu0 0.0
      %5786 = vmatmul.mubr.f32.gmra.mxu0 %v5538
      %v5787 = vpop.f32.mrf.mxu0
      %v5788 = vadd.f32 0.0, %v5787
      %v5789 = vpop.f32.mrf.mxu0
      %5790 = vmatprep.mubr.f32.mxu0 0.0
      %5791 = vmatmul.mubr.f32.gmra.mxu0 %v5541
      %v5792 = vpop.f32.mrf.mxu0
      %v5793 = vadd.f32 0.0, %v5792
      %v5794 = vpop.f32.mrf.mxu0
      %5795 = vmatprep.mubr.f32.mxu0 0.0
      %5796 = vmatmul.mubr.f32.gmra.mxu0 %v5544
      %v5797 = vpop.f32.mrf.mxu0
      %v5798 = vadd.f32 0.0, %v5797
      %v5799 = vpop.f32.mrf.mxu0
      %5800 = vmatprep.mubr.f32.mxu0 0.0
      %5801 = vmatmul.mubr.f32.gmra.mxu0 %v5547
      %v5802 = vpop.f32.mrf.mxu0
      %v5803 = vadd.f32 0.0, %v5802
      %v5804 = vpop.f32.mrf.mxu0
      %5805 = vmatprep.mubr.f32.mxu0 0.0
      %5806 = vmatmul.mubr.f32.gmra.mxu0 %v5550
      %v5807 = vpop.f32.mrf.mxu0
      %v5808 = vadd.f32 0.0, %v5807
      %v5809 = vpop.f32.mrf.mxu0
      %5810 = vmatprep.mubr.f32.mxu0 0.0
      %5811 = vmatmul.mubr.f32.gmra.mxu0 %v5553
      %v5812 = vpop.f32.mrf.mxu0
      %v5813 = vadd.f32 0.0, %v5812
      %v5814 = vpop.f32.mrf.mxu0
      %5815 = vmatprep.mubr.f32.mxu0 0.0
      %5816 = vmatmul.mubr.f32.gmra.mxu0 %v5556
      %v5817 = vpop.f32.mrf.mxu0
      %v5818 = vadd.f32 0.0, %v5817
      %v5819 = vpop.f32.mrf.mxu0
      %5820 = vmatprep.mubr.f32.mxu0 0.0
      %5821 = vmatmul.mubr.f32.gmra.mxu0 %v5559
      %v5822 = vpop.f32.mrf.mxu0
      %v5823 = vadd.f32 0.0, %v5822
      %v5824 = vpop.f32.mrf.mxu0
      %5825 = vmatprep.mubr.f32.mxu0 0.0
      %5826 = vmatmul.mubr.f32.gmra.mxu0 %v5562
      %v5827 = vpop.f32.mrf.mxu0
      %v5828 = vadd.f32 0.0, %v5827
      %v5829 = vpop.f32.mrf.mxu0
      %5830 = vmatprep.mubr.f32.mxu0 0.0
      %5831 = vmatmul.mubr.f32.gmra.mxu0 %v5565
      %v5832 = vpop.f32.mrf.mxu0
      %v5833 = vadd.f32 0.0, %v5832
      %v5834 = vpop.f32.mrf.mxu0
      %5835 = vmatprep.mubr.f32.mxu0 0.0
      %5836 = vmatmul.mubr.f32.gmra.mxu0 %v5568
      %v5837 = vpop.f32.mrf.mxu0
      %v5838 = vadd.f32 0.0, %v5837
      %v5839 = vpop.f32.mrf.mxu0
      %5840 = vmatprep.mubr.f32.mxu0 0.0
      %5841 = vmatmul.mubr.f32.gmra.mxu0 %v5571
      %v5842 = vpop.f32.mrf.mxu0
      %v5843 = vadd.f32 0.0, %v5842
      %v5844 = vpop.f32.mrf.mxu0
      %5845 = vdwg.mxu0
      %v5847 = vsel %vm771, %v5365, 0
      %v5850 = vsel %vm771, %v5366, 0
      %v5853 = vsel %vm771, %v5367, 0
      %v5856 = vsel %vm771, %v5368, 0
      %v5859 = vsel %vm771, %v5369, 0
      %v5862 = vsel %vm771, %v5370, 0
      %v5865 = vsel %vm771, %v5371, 0
      %v5868 = vsel %vm771, %v5372, 0
      %v5871 = vsel %vm771, %v5373, 0
      %v5874 = vsel %vm771, %v5374, 0
      %v5877 = vsel %vm771, %v5375, 0
      %v5880 = vsel %vm771, %v5376, 0
      %v5883 = vsel %vm771, %v5377, 0
      %v5886 = vsel %vm771, %v5378, 0
      %v5889 = vsel %vm771, %v5379, 0
      %v5892 = vsel %vm771, %v5380, 0
      %v5895 = vsel %vm771, %v5381, 0
      %v5898 = vsel %vm771, %v5382, 0
      %v5901 = vsel %vm771, %v5383, 0
      %v5904 = vsel %vm771, %v5384, 0
      %v5907 = vsel %vm771, %v5385, 0
      %v5910 = vsel %vm771, %v5386, 0
      %v5913 = vsel %vm771, %v5387, 0
      %v5916 = vsel %vm771, %v5388, 0
      %v5919 = vsel %vm771, %v5389, 0
      %v5922 = vsel %vm771, %v5390, 0
      %v5925 = vsel %vm771, %v5391, 0
      %v5928 = vsel %vm771, %v5392, 0
      %v5931 = vsel %vm771, %v5393, 0
      %v5934 = vsel %vm771, %v5394, 0
      %v5937 = vsel %vm771, %v5395, 0
      %v5940 = vsel %vm771, %v5396, 0
      %v5943 = vsel %vm771, %v5397, 0
      %v5946 = vsel %vm771, %v5398, 0
      %v5949 = vsel %vm771, %v5399, 0
      %v5952 = vsel %vm771, %v5400, 0
      %v5955 = vsel %vm771, %v5401, 0
      %v5958 = vsel %vm771, %v5402, 0
      %v5961 = vsel %vm771, %v5403, 0
      %v5964 = vsel %vm771, %v5404, 0
      %v5967 = vsel %vm771, %v5405, 0
      %v5970 = vsel %vm1069, %v5406, 0
      %5972 = vmatprep.subr.mxu0 0.0
      %5973 = vmatpush1.msra.mxu0 0.0
      %5974 = vmatprep.subr.mxu0 0.0
      %5975 = vmatpush1.msra.mxu0 0.0
      %5976 = vmatprep.subr.mxu0 0.0
      %5977 = vmatpush1.msra.mxu0 0.0
      %5978 = vmatprep.subr.mxu0 0.0
      %5979 = vmatpush1.msra.mxu0 0.0
      %5980 = vmatprep.subr.mxu0 0.0
      %5981 = vmatpush1.msra.mxu0 0.0
      %5982 = vmatprep.subr.mxu0 0.0
      %5983 = vmatpush1.msra.mxu0 0.0
      %5984 = vmatprep.subr.mxu0 0.0
      %5985 = vmatpush1.msra.mxu0 0.0
      %5986 = vmatprep.subr.mxu0 0.0
      %5987 = vmatpush1.msra.mxu0 0.0
      %5988 = vmatprep.subr.mxu0 0.0
      %5989 = vmatpush1.msra.mxu0 0.0
      %5990 = vmatprep.subr.mxu0 0.0
      %5991 = vmatpush1.msra.mxu0 0.0
      %5992 = vmatprep.subr.mxu0 0.0
      %5993 = vmatpush1.msra.mxu0 0.0
      %5994 = vmatprep.subr.mxu0 0.0
      %5995 = vmatpush1.msra.mxu0 0.0
      %5996 = vmatprep.subr.mxu0 0.0
      %5997 = vmatpush1.msra.mxu0 0.0
      %5998 = vmatprep.subr.mxu0 0.0
      %5999 = vmatpush1.msra.mxu0 0.0
      %6000 = vmatprep.subr.mxu0 0.0
      %6001 = vmatpush1.msra.mxu0 0.0
      %6002 = vmatprep.subr.mxu0 0.0
      %6003 = vmatpush1.msra.mxu0 %v5970
      %6004 = vmatprep.subr.mxu0 0.0
      %6005 = vmatpush2.msra.mxu0 0.0
      %6006 = vmatprep.subr.mxu0 0.0
      %6007 = vmatpush2.msra.mxu0 0.0
      %6008 = vmatprep.subr.mxu0 0.0
      %6009 = vmatpush2.msra.mxu0 0.0
      %6010 = vmatprep.subr.mxu0 0.0
      %6011 = vmatpush2.msra.mxu0 0.0
      %6012 = vmatprep.subr.mxu0 0.0
      %6013 = vmatpush2.msra.mxu0 0.0
      %6014 = vmatprep.subr.mxu0 0.0
      %6015 = vmatpush2.msra.mxu0 0.0
      %6016 = vmatprep.subr.mxu0 0.0
      %6017 = vmatpush2.msra.mxu0 0.0
      %6018 = vmatprep.subr.mxu0 0.0
      %6019 = vmatpush2.msra.mxu0 0.0
      %6020 = vmatprep.subr.mxu0 0.0
      %6021 = vmatpush2.msra.mxu0 0.0
      %6022 = vmatprep.subr.mxu0 0.0
      %6023 = vmatpush2.msra.mxu0 0.0
      %6024 = vmatprep.subr.mxu0 0.0
      %6025 = vmatpush2.msra.mxu0 0.0
      %6026 = vmatprep.subr.mxu0 0.0
      %6027 = vmatpush2.msra.mxu0 0.0
      %6028 = vmatprep.subr.mxu0 0.0
      %6029 = vmatpush2.msra.mxu0 0.0
      %6030 = vmatprep.subr.mxu0 0.0
      %6031 = vmatpush2.msra.mxu0 0.0
      %6032 = vmatprep.subr.mxu0 0.0
      %6033 = vmatpush2.msra.mxu0 0.0
      %6034 = vmatprep.subr.mxu0 0.0
      %6035 = vmatpush2.msra.mxu0 0.0
      %6036 = vmatprep.mubr.f32.mxu0 0.0
      %6037 = vmatmul.mubr.f32.gmra.mxu0 %v5847
      %v6038 = vpop.f32.mrf.mxu0
      %v6039 = vadd.f32 %v5643, %v6038
      %v6040 = vpop.f32.mrf.mxu0
      %6041 = vmatprep.mubr.f32.mxu0 0.0
      %6042 = vmatmul.mubr.f32.gmra.mxu0 %v5850
      %v6043 = vpop.f32.mrf.mxu0
      %v6044 = vadd.f32 %v5648, %v6043
      %v6045 = vpop.f32.mrf.mxu0
      %6046 = vmatprep.mubr.f32.mxu0 0.0
      %6047 = vmatmul.mubr.f32.gmra.mxu0 %v5853
      %v6048 = vpop.f32.mrf.mxu0
      %v6049 = vadd.f32 %v5653, %v6048
      %v6050 = vpop.f32.mrf.mxu0
      %6051 = vmatprep.mubr.f32.mxu0 0.0
      %6052 = vmatmul.mubr.f32.gmra.mxu0 %v5856
      %v6053 = vpop.f32.mrf.mxu0
      %v6054 = vadd.f32 %v5658, %v6053
      %v6055 = vpop.f32.mrf.mxu0
      %6056 = vmatprep.mubr.f32.mxu0 0.0
      %6057 = vmatmul.mubr.f32.gmra.mxu0 %v5859
      %v6058 = vpop.f32.mrf.mxu0
      %v6059 = vadd.f32 %v5663, %v6058
      %v6060 = vpop.f32.mrf.mxu0
      %6061 = vmatprep.mubr.f32.mxu0 0.0
      %6062 = vmatmul.mubr.f32.gmra.mxu0 %v5862
      %v6063 = vpop.f32.mrf.mxu0
      %v6064 = vadd.f32 %v5668, %v6063
      %v6065 = vpop.f32.mrf.mxu0
      %6066 = vmatprep.mubr.f32.mxu0 0.0
      %6067 = vmatmul.mubr.f32.gmra.mxu0 %v5865
      %v6068 = vpop.f32.mrf.mxu0
      %v6069 = vadd.f32 %v5673, %v6068
      %v6070 = vpop.f32.mrf.mxu0
      %6071 = vmatprep.mubr.f32.mxu0 0.0
      %6072 = vmatmul.mubr.f32.gmra.mxu0 %v5868
      %v6073 = vpop.f32.mrf.mxu0
      %v6074 = vadd.f32 %v5678, %v6073
      %v6075 = vpop.f32.mrf.mxu0
      %6076 = vmatprep.mubr.f32.mxu0 0.0
      %6077 = vmatmul.mubr.f32.gmra.mxu0 %v5871
      %v6078 = vpop.f32.mrf.mxu0
      %v6079 = vadd.f32 %v5683, %v6078
      %v6080 = vpop.f32.mrf.mxu0
      %6081 = vmatprep.mubr.f32.mxu0 0.0
      %6082 = vmatmul.mubr.f32.gmra.mxu0 %v5874
      %v6083 = vpop.f32.mrf.mxu0
      %v6084 = vadd.f32 %v5688, %v6083
      %v6085 = vpop.f32.mrf.mxu0
      %6086 = vmatprep.mubr.f32.mxu0 0.0
      %6087 = vmatmul.mubr.f32.gmra.mxu0 %v5877
      %v6088 = vpop.f32.mrf.mxu0
      %v6089 = vadd.f32 %v5693, %v6088
      %v6090 = vpop.f32.mrf.mxu0
      %6091 = vmatprep.mubr.f32.mxu0 0.0
      %6092 = vmatmul.mubr.f32.gmra.mxu0 %v5880
      %v6093 = vpop.f32.mrf.mxu0
      %v6094 = vadd.f32 %v5698, %v6093
      %v6095 = vpop.f32.mrf.mxu0
      %6096 = vmatprep.mubr.f32.mxu0 0.0
      %6097 = vmatmul.mubr.f32.gmra.mxu0 %v5883
      %v6098 = vpop.f32.mrf.mxu0
      %v6099 = vadd.f32 %v5703, %v6098
      %v6100 = vpop.f32.mrf.mxu0
      %6101 = vmatprep.mubr.f32.mxu0 0.0
      %6102 = vmatmul.mubr.f32.gmra.mxu0 %v5886
      %v6103 = vpop.f32.mrf.mxu0
      %v6104 = vadd.f32 %v5708, %v6103
      %v6105 = vpop.f32.mrf.mxu0
      %6106 = vmatprep.mubr.f32.mxu0 0.0
      %6107 = vmatmul.mubr.f32.gmra.mxu0 %v5889
      %v6108 = vpop.f32.mrf.mxu0
      %v6109 = vadd.f32 %v5713, %v6108
      %v6110 = vpop.f32.mrf.mxu0
      %6111 = vmatprep.mubr.f32.mxu0 0.0
      %6112 = vmatmul.mubr.f32.gmra.mxu0 %v5892
      %v6113 = vpop.f32.mrf.mxu0
      %v6114 = vadd.f32 %v5718, %v6113
      %v6115 = vpop.f32.mrf.mxu0
      %6116 = vmatprep.mubr.f32.mxu0 0.0
      %6117 = vmatmul.mubr.f32.gmra.mxu0 %v5895
      %v6118 = vpop.f32.mrf.mxu0
      %v6119 = vadd.f32 %v5723, %v6118
      %v6120 = vpop.f32.mrf.mxu0
      %6121 = vmatprep.mubr.f32.mxu0 0.0
      %6122 = vmatmul.mubr.f32.gmra.mxu0 %v5898
      %v6123 = vpop.f32.mrf.mxu0
      %v6124 = vadd.f32 %v5728, %v6123
      %v6125 = vpop.f32.mrf.mxu0
      %6126 = vmatprep.mubr.f32.mxu0 0.0
      %6127 = vmatmul.mubr.f32.gmra.mxu0 %v5901
      %v6128 = vpop.f32.mrf.mxu0
      %v6129 = vadd.f32 %v5733, %v6128
      %v6130 = vpop.f32.mrf.mxu0
      %6131 = vmatprep.mubr.f32.mxu0 0.0
      %6132 = vmatmul.mubr.f32.gmra.mxu0 %v5904
      %v6133 = vpop.f32.mrf.mxu0
      %v6134 = vadd.f32 %v5738, %v6133
      %v6135 = vpop.f32.mrf.mxu0
      %6136 = vmatprep.mubr.f32.mxu0 0.0
      %6137 = vmatmul.mubr.f32.gmra.mxu0 %v5907
      %v6138 = vpop.f32.mrf.mxu0
      %v6139 = vadd.f32 %v5743, %v6138
      %v6140 = vpop.f32.mrf.mxu0
      %6141 = vmatprep.mubr.f32.mxu0 0.0
      %6142 = vmatmul.mubr.f32.gmra.mxu0 %v5910
      %v6143 = vpop.f32.mrf.mxu0
      %v6144 = vadd.f32 %v5748, %v6143
      %v6145 = vpop.f32.mrf.mxu0
      %6146 = vmatprep.mubr.f32.mxu0 0.0
      %6147 = vmatmul.mubr.f32.gmra.mxu0 %v5913
      %v6148 = vpop.f32.mrf.mxu0
      %v6149 = vadd.f32 %v5753, %v6148
      %v6150 = vpop.f32.mrf.mxu0
      %6151 = vmatprep.mubr.f32.mxu0 0.0
      %6152 = vmatmul.mubr.f32.gmra.mxu0 %v5916
      %v6153 = vpop.f32.mrf.mxu0
      %v6154 = vadd.f32 %v5758, %v6153
      %v6155 = vpop.f32.mrf.mxu0
      %6156 = vmatprep.mubr.f32.mxu0 0.0
      %6157 = vmatmul.mubr.f32.gmra.mxu0 %v5919
      %v6158 = vpop.f32.mrf.mxu0
      %v6159 = vadd.f32 %v5763, %v6158
      %v6160 = vpop.f32.mrf.mxu0
      %6161 = vmatprep.mubr.f32.mxu0 0.0
      %6162 = vmatmul.mubr.f32.gmra.mxu0 %v5922
      %v6163 = vpop.f32.mrf.mxu0
      %v6164 = vadd.f32 %v5768, %v6163
      %v6165 = vpop.f32.mrf.mxu0
      %6166 = vmatprep.mubr.f32.mxu0 0.0
      %6167 = vmatmul.mubr.f32.gmra.mxu0 %v5925
      %v6168 = vpop.f32.mrf.mxu0
      %v6169 = vadd.f32 %v5773, %v6168
      %v6170 = vpop.f32.mrf.mxu0
      %6171 = vmatprep.mubr.f32.mxu0 0.0
      %6172 = vmatmul.mubr.f32.gmra.mxu0 %v5928
      %v6173 = vpop.f32.mrf.mxu0
      %v6174 = vadd.f32 %v5778, %v6173
      %v6175 = vpop.f32.mrf.mxu0
      %6176 = vmatprep.mubr.f32.mxu0 0.0
      %6177 = vmatmul.mubr.f32.gmra.mxu0 %v5931
      %v6178 = vpop.f32.mrf.mxu0
      %v6179 = vadd.f32 %v5783, %v6178
      %v6180 = vpop.f32.mrf.mxu0
      %6181 = vmatprep.mubr.f32.mxu0 0.0
      %6182 = vmatmul.mubr.f32.gmra.mxu0 %v5934
      %v6183 = vpop.f32.mrf.mxu0
      %v6184 = vadd.f32 %v5788, %v6183
      %v6185 = vpop.f32.mrf.mxu0
      %6186 = vmatprep.mubr.f32.mxu0 0.0
      %6187 = vmatmul.mubr.f32.gmra.mxu0 %v5937
      %v6188 = vpop.f32.mrf.mxu0
      %v6189 = vadd.f32 %v5793, %v6188
      %v6190 = vpop.f32.mrf.mxu0
      %6191 = vmatprep.mubr.f32.mxu0 0.0
      %6192 = vmatmul.mubr.f32.gmra.mxu0 %v5940
      %v6193 = vpop.f32.mrf.mxu0
      %v6194 = vadd.f32 %v5798, %v6193
      %v6195 = vpop.f32.mrf.mxu0
      %6196 = vmatprep.mubr.f32.mxu0 0.0
      %6197 = vmatmul.mubr.f32.gmra.mxu0 %v5943
      %v6198 = vpop.f32.mrf.mxu0
      %v6199 = vadd.f32 %v5803, %v6198
      %v6200 = vpop.f32.mrf.mxu0
      %6201 = vmatprep.mubr.f32.mxu0 0.0
      %6202 = vmatmul.mubr.f32.gmra.mxu0 %v5946
      %v6203 = vpop.f32.mrf.mxu0
      %v6204 = vadd.f32 %v5808, %v6203
      %v6205 = vpop.f32.mrf.mxu0
      %6206 = vmatprep.mubr.f32.mxu0 0.0
      %6207 = vmatmul.mubr.f32.gmra.mxu0 %v5949
      %v6208 = vpop.f32.mrf.mxu0
      %v6209 = vadd.f32 %v5813, %v6208
      %v6210 = vpop.f32.mrf.mxu0
      %6211 = vmatprep.mubr.f32.mxu0 0.0
      %6212 = vmatmul.mubr.f32.gmra.mxu0 %v5952
      %v6213 = vpop.f32.mrf.mxu0
      %v6214 = vadd.f32 %v5818, %v6213
      %v6215 = vpop.f32.mrf.mxu0
      %6216 = vmatprep.mubr.f32.mxu0 0.0
      %6217 = vmatmul.mubr.f32.gmra.mxu0 %v5955
      %v6218 = vpop.f32.mrf.mxu0
      %v6219 = vadd.f32 %v5823, %v6218
      %v6220 = vpop.f32.mrf.mxu0
      %6221 = vmatprep.mubr.f32.mxu0 0.0
      %6222 = vmatmul.mubr.f32.gmra.mxu0 %v5958
      %v6223 = vpop.f32.mrf.mxu0
      %v6224 = vadd.f32 %v5828, %v6223
      %v6225 = vpop.f32.mrf.mxu0
      %6226 = vmatprep.mubr.f32.mxu0 0.0
      %6227 = vmatmul.mubr.f32.gmra.mxu0 %v5961
      %v6228 = vpop.f32.mrf.mxu0
      %v6229 = vadd.f32 %v5833, %v6228
      %v6230 = vpop.f32.mrf.mxu0
      %6231 = vmatprep.mubr.f32.mxu0 0.0
      %6232 = vmatmul.mubr.f32.gmra.mxu0 %v5964
      %v6233 = vpop.f32.mrf.mxu0
      %v6234 = vadd.f32 %v5838, %v6233
      %v6235 = vpop.f32.mrf.mxu0
      %6236 = vmatprep.mubr.f32.mxu0 0.0
      %6237 = vmatmul.mubr.f32.gmra.mxu0 %v5967
      %v6238 = vpop.f32.mrf.mxu0
      %v6239 = vadd.f32 %v5843, %v6238
      %v6240 = vpop.f32.mrf.mxu0
      %6241 = vdwg.mxu0
      %v6242 = vld [vmem:[#allocation3 + $0x7] sm:$0xff]
      %v6243 = vld [vmem:[#allocation3 + $0xf] sm:$0xff]
      %v6244 = vld [vmem:[#allocation3 + $0x17] sm:$0xff]
      %v6245 = vld [vmem:[#allocation3 + $0x1f] sm:$0xff]
      %v6246 = vld [vmem:[#allocation3 + $0x27] sm:$0xff]
      %v6247 = vld [vmem:[#allocation3 + $0x2f] sm:$0xff]
      %v6248 = vld [vmem:[#allocation3 + $0x37] sm:$0xff]
      %v6249 = vld [vmem:[#allocation3 + $0x3f] sm:$0xff]
      %v6250 = vld [vmem:[#allocation3 + $0x47] sm:$0xff]
      %v6251 = vld [vmem:[#allocation3 + $0x4f] sm:$0xff]
      %v6252 = vld [vmem:[#allocation3 + $0x57] sm:$0xff]
      %v6253 = vld [vmem:[#allocation3 + $0x5f] sm:$0xff]
      %v6254 = vld [vmem:[#allocation3 + $0x67] sm:$0xff]
      %v6255 = vld [vmem:[#allocation3 + $0x6f] sm:$0xff]
      %v6256 = vld [vmem:[#allocation3 + $0x77] sm:$0xff]
      %v6257 = vld [vmem:[#allocation3 + $0x7f] sm:$0xff]
      %v6258 = vld [vmem:[#allocation3 + $0x87] sm:$0xff]
      %v6259 = vld [vmem:[#allocation3 + $0x8f] sm:$0xff]
      %v6260 = vld [vmem:[#allocation3 + $0x97] sm:$0xff]
      %v6261 = vld [vmem:[#allocation3 + $0x9f] sm:$0xff]
      %v6262 = vld [vmem:[#allocation3 + $0xa7] sm:$0xff]
      %v6263 = vld [vmem:[#allocation3 + $0xaf] sm:$0xff]
      %v6264 = vld [vmem:[#allocation3 + $0xb7] sm:$0xff]
      %v6265 = vld [vmem:[#allocation3 + $0xbf] sm:$0xff]
      %v6266 = vld [vmem:[#allocation3 + $0xc7] sm:$0xff]
      %v6267 = vld [vmem:[#allocation3 + $0xcf] sm:$0xff]
      %v6268 = vld [vmem:[#allocation3 + $0xd7] sm:$0xff]
      %v6269 = vld [vmem:[#allocation3 + $0xdf] sm:$0xff]
      %v6270 = vld [vmem:[#allocation3 + $0xe7] sm:$0xff]
      %v6271 = vld [vmem:[#allocation3 + $0xef] sm:$0xff]
      %v6272 = vld [vmem:[#allocation3 + $0xf7] sm:$0xff]
      %v6273 = vld [vmem:[#allocation3 + $0xff] sm:$0xff]
      %v6274 = vld [vmem:[#allocation3 + $0x107] sm:$0xff]
      %v6275 = vld [vmem:[#allocation3 + $0x10f] sm:$0xff]
      %v6276 = vld [vmem:[#allocation3 + $0x117] sm:$0xff]
      %v6277 = vld [vmem:[#allocation3 + $0x11f] sm:$0xff]
      %v6278 = vld [vmem:[#allocation3 + $0x127] sm:$0xff]
      %v6279 = vld [vmem:[#allocation3 + $0x12f] sm:$0xff]
      %v6280 = vld [vmem:[#allocation3 + $0x137] sm:$0xff]
      %v6281 = vld [vmem:[#allocation3 + $0x13f] sm:$0xff]
      %v6282 = vld [vmem:[#allocation3 + $0x147] sm:$0xf]
      %s6283 = scalar_lea.vmem %s7, 8
      %v6284 = vld [vmem:[%s6283] sm:$0xf]
      %v6286 = vsel %vm771, %v6242, 0
      %v6289 = vsel %vm771, %v6243, 0
      %v6292 = vsel %vm771, %v6244, 0
      %v6295 = vsel %vm771, %v6245, 0
      %v6298 = vsel %vm771, %v6246, 0
      %v6301 = vsel %vm771, %v6247, 0
      %v6304 = vsel %vm771, %v6248, 0
      %v6307 = vsel %vm771, %v6249, 0
      %v6310 = vsel %vm771, %v6250, 0
      %v6313 = vsel %vm771, %v6251, 0
      %v6316 = vsel %vm771, %v6252, 0
      %v6319 = vsel %vm771, %v6253, 0
      %v6322 = vsel %vm771, %v6254, 0
      %v6325 = vsel %vm771, %v6255, 0
      %v6328 = vsel %vm771, %v6256, 0
      %v6331 = vsel %vm771, %v6257, 0
      %v6334 = vsel %vm771, %v6258, 0
      %v6337 = vsel %vm771, %v6259, 0
      %v6340 = vsel %vm771, %v6260, 0
      %v6343 = vsel %vm771, %v6261, 0
      %v6346 = vsel %vm771, %v6262, 0
      %v6349 = vsel %vm771, %v6263, 0
      %v6352 = vsel %vm771, %v6264, 0
      %v6355 = vsel %vm771, %v6265, 0
      %v6358 = vsel %vm771, %v6266, 0
      %v6361 = vsel %vm771, %v6267, 0
      %v6364 = vsel %vm771, %v6268, 0
      %v6367 = vsel %vm771, %v6269, 0
      %v6370 = vsel %vm771, %v6270, 0
      %v6373 = vsel %vm771, %v6271, 0
      %v6376 = vsel %vm771, %v6272, 0
      %v6379 = vsel %vm771, %v6273, 0
      %v6382 = vsel %vm771, %v6274, 0
      %v6385 = vsel %vm771, %v6275, 0
      %v6388 = vsel %vm771, %v6276, 0
      %v6391 = vsel %vm771, %v6277, 0
      %v6394 = vsel %vm771, %v6278, 0
      %v6397 = vsel %vm771, %v6279, 0
      %v6400 = vsel %vm771, %v6280, 0
      %v6403 = vsel %vm771, %v6281, 0
      %v6406 = vsel %vm771, %v6282, 0
      %v6409 = vsel %vm1069, %v6284, 0
      %6411 = vmatprep.subr.mxu0 0.0
      %6412 = vmatpush1.msra.mxu0 0.0
      %6413 = vmatprep.subr.mxu0 0.0
      %6414 = vmatpush1.msra.mxu0 0.0
      %6415 = vmatprep.subr.mxu0 0.0
      %6416 = vmatpush1.msra.mxu0 0.0
      %6417 = vmatprep.subr.mxu0 0.0
      %6418 = vmatpush1.msra.mxu0 0.0
      %6419 = vmatprep.subr.mxu0 0.0
      %6420 = vmatpush1.msra.mxu0 0.0
      %6421 = vmatprep.subr.mxu0 0.0
      %6422 = vmatpush1.msra.mxu0 0.0
      %6423 = vmatprep.subr.mxu0 0.0
      %6424 = vmatpush1.msra.mxu0 0.0
      %6425 = vmatprep.subr.mxu0 0.0
      %6426 = vmatpush1.msra.mxu0 0.0
      %6427 = vmatprep.subr.mxu0 0.0
      %6428 = vmatpush1.msra.mxu0 0.0
      %6429 = vmatprep.subr.mxu0 0.0
      %6430 = vmatpush1.msra.mxu0 0.0
      %6431 = vmatprep.subr.mxu0 0.0
      %6432 = vmatpush1.msra.mxu0 0.0
      %6433 = vmatprep.subr.mxu0 0.0
      %6434 = vmatpush1.msra.mxu0 0.0
      %6435 = vmatprep.subr.mxu0 0.0
      %6436 = vmatpush1.msra.mxu0 0.0
      %6437 = vmatprep.subr.mxu0 0.0
      %6438 = vmatpush1.msra.mxu0 0.0
      %6439 = vmatprep.subr.mxu0 0.0
      %6440 = vmatpush1.msra.mxu0 0.0
      %6441 = vmatprep.subr.mxu0 0.0
      %6442 = vmatpush1.msra.mxu0 %v6409
      %6443 = vmatprep.subr.mxu0 0.0
      %6444 = vmatpush2.msra.mxu0 0.0
      %6445 = vmatprep.subr.mxu0 0.0
      %6446 = vmatpush2.msra.mxu0 0.0
      %6447 = vmatprep.subr.mxu0 0.0
      %6448 = vmatpush2.msra.mxu0 0.0
      %6449 = vmatprep.subr.mxu0 0.0
      %6450 = vmatpush2.msra.mxu0 0.0
      %6451 = vmatprep.subr.mxu0 0.0
      %6452 = vmatpush2.msra.mxu0 0.0
      %6453 = vmatprep.subr.mxu0 0.0
      %6454 = vmatpush2.msra.mxu0 0.0
      %6455 = vmatprep.subr.mxu0 0.0
      %6456 = vmatpush2.msra.mxu0 0.0
      %6457 = vmatprep.subr.mxu0 0.0
      %6458 = vmatpush2.msra.mxu0 0.0
      %6459 = vmatprep.subr.mxu0 0.0
      %6460 = vmatpush2.msra.mxu0 0.0
      %6461 = vmatprep.subr.mxu0 0.0
      %6462 = vmatpush2.msra.mxu0 0.0
      %6463 = vmatprep.subr.mxu0 0.0
      %6464 = vmatpush2.msra.mxu0 0.0
      %6465 = vmatprep.subr.mxu0 0.0
      %6466 = vmatpush2.msra.mxu0 0.0
      %6467 = vmatprep.subr.mxu0 0.0
      %6468 = vmatpush2.msra.mxu0 0.0
      %6469 = vmatprep.subr.mxu0 0.0
      %6470 = vmatpush2.msra.mxu0 0.0
      %6471 = vmatprep.subr.mxu0 0.0
      %6472 = vmatpush2.msra.mxu0 0.0
      %6473 = vmatprep.subr.mxu0 0.0
      %6474 = vmatpush2.msra.mxu0 0.0
      %6475 = vmatprep.mubr.f32.mxu0 0.0
      %6476 = vmatmul.mubr.f32.gmra.mxu0 %v6286
      %v6477 = vpop.f32.mrf.mxu0
      %v6478 = vadd.f32 0.0, %v6477
      %v6479 = vpop.f32.mrf.mxu0
      %6480 = vmatprep.mubr.f32.mxu0 0.0
      %6481 = vmatmul.mubr.f32.gmra.mxu0 %v6289
      %v6482 = vpop.f32.mrf.mxu0
      %v6483 = vadd.f32 0.0, %v6482
      %v6484 = vpop.f32.mrf.mxu0
      %6485 = vmatprep.mubr.f32.mxu0 0.0
      %6486 = vmatmul.mubr.f32.gmra.mxu0 %v6292
      %v6487 = vpop.f32.mrf.mxu0
      %v6488 = vadd.f32 0.0, %v6487
      %v6489 = vpop.f32.mrf.mxu0
      %6490 = vmatprep.mubr.f32.mxu0 0.0
      %6491 = vmatmul.mubr.f32.gmra.mxu0 %v6295
      %v6492 = vpop.f32.mrf.mxu0
      %v6493 = vadd.f32 0.0, %v6492
      %v6494 = vpop.f32.mrf.mxu0
      %6495 = vmatprep.mubr.f32.mxu0 0.0
      %6496 = vmatmul.mubr.f32.gmra.mxu0 %v6298
      %v6497 = vpop.f32.mrf.mxu0
      %v6498 = vadd.f32 0.0, %v6497
      %v6499 = vpop.f32.mrf.mxu0
      %6500 = vmatprep.mubr.f32.mxu0 0.0
      %6501 = vmatmul.mubr.f32.gmra.mxu0 %v6301
      %v6502 = vpop.f32.mrf.mxu0
      %v6503 = vadd.f32 0.0, %v6502
      %v6504 = vpop.f32.mrf.mxu0
      %6505 = vmatprep.mubr.f32.mxu0 0.0
      %6506 = vmatmul.mubr.f32.gmra.mxu0 %v6304
      %v6507 = vpop.f32.mrf.mxu0
      %v6508 = vadd.f32 0.0, %v6507
      %v6509 = vpop.f32.mrf.mxu0
      %6510 = vmatprep.mubr.f32.mxu0 0.0
      %6511 = vmatmul.mubr.f32.gmra.mxu0 %v6307
      %v6512 = vpop.f32.mrf.mxu0
      %v6513 = vadd.f32 0.0, %v6512
      %v6514 = vpop.f32.mrf.mxu0
      %6515 = vmatprep.mubr.f32.mxu0 0.0
      %6516 = vmatmul.mubr.f32.gmra.mxu0 %v6310
      %v6517 = vpop.f32.mrf.mxu0
      %v6518 = vadd.f32 0.0, %v6517
      %v6519 = vpop.f32.mrf.mxu0
      %6520 = vmatprep.mubr.f32.mxu0 0.0
      %6521 = vmatmul.mubr.f32.gmra.mxu0 %v6313
      %v6522 = vpop.f32.mrf.mxu0
      %v6523 = vadd.f32 0.0, %v6522
      %v6524 = vpop.f32.mrf.mxu0
      %6525 = vmatprep.mubr.f32.mxu0 0.0
      %6526 = vmatmul.mubr.f32.gmra.mxu0 %v6316
      %v6527 = vpop.f32.mrf.mxu0
      %v6528 = vadd.f32 0.0, %v6527
      %v6529 = vpop.f32.mrf.mxu0
      %6530 = vmatprep.mubr.f32.mxu0 0.0
      %6531 = vmatmul.mubr.f32.gmra.mxu0 %v6319
      %v6532 = vpop.f32.mrf.mxu0
      %v6533 = vadd.f32 0.0, %v6532
      %v6534 = vpop.f32.mrf.mxu0
      %6535 = vmatprep.mubr.f32.mxu0 0.0
      %6536 = vmatmul.mubr.f32.gmra.mxu0 %v6322
      %v6537 = vpop.f32.mrf.mxu0
      %v6538 = vadd.f32 0.0, %v6537
      %v6539 = vpop.f32.mrf.mxu0
      %6540 = vmatprep.mubr.f32.mxu0 0.0
      %6541 = vmatmul.mubr.f32.gmra.mxu0 %v6325
      %v6542 = vpop.f32.mrf.mxu0
      %v6543 = vadd.f32 0.0, %v6542
      %v6544 = vpop.f32.mrf.mxu0
      %6545 = vmatprep.mubr.f32.mxu0 0.0
      %6546 = vmatmul.mubr.f32.gmra.mxu0 %v6328
      %v6547 = vpop.f32.mrf.mxu0
      %v6548 = vadd.f32 0.0, %v6547
      %v6549 = vpop.f32.mrf.mxu0
      %6550 = vmatprep.mubr.f32.mxu0 0.0
      %6551 = vmatmul.mubr.f32.gmra.mxu0 %v6331
      %v6552 = vpop.f32.mrf.mxu0
      %v6553 = vadd.f32 0.0, %v6552
      %v6554 = vpop.f32.mrf.mxu0
      %6555 = vmatprep.mubr.f32.mxu0 0.0
      %6556 = vmatmul.mubr.f32.gmra.mxu0 %v6334
      %v6557 = vpop.f32.mrf.mxu0
      %v6558 = vadd.f32 0.0, %v6557
      %v6559 = vpop.f32.mrf.mxu0
      %6560 = vmatprep.mubr.f32.mxu0 0.0
      %6561 = vmatmul.mubr.f32.gmra.mxu0 %v6337
      %v6562 = vpop.f32.mrf.mxu0
      %v6563 = vadd.f32 0.0, %v6562
      %v6564 = vpop.f32.mrf.mxu0
      %6565 = vmatprep.mubr.f32.mxu0 0.0
      %6566 = vmatmul.mubr.f32.gmra.mxu0 %v6340
      %v6567 = vpop.f32.mrf.mxu0
      %v6568 = vadd.f32 0.0, %v6567
      %v6569 = vpop.f32.mrf.mxu0
      %6570 = vmatprep.mubr.f32.mxu0 0.0
      %6571 = vmatmul.mubr.f32.gmra.mxu0 %v6343
      %v6572 = vpop.f32.mrf.mxu0
      %v6573 = vadd.f32 0.0, %v6572
      %v6574 = vpop.f32.mrf.mxu0
      %6575 = vmatprep.mubr.f32.mxu0 0.0
      %6576 = vmatmul.mubr.f32.gmra.mxu0 %v6346
      %v6577 = vpop.f32.mrf.mxu0
      %v6578 = vadd.f32 0.0, %v6577
      %v6579 = vpop.f32.mrf.mxu0
      %6580 = vmatprep.mubr.f32.mxu0 0.0
      %6581 = vmatmul.mubr.f32.gmra.mxu0 %v6349
      %v6582 = vpop.f32.mrf.mxu0
      %v6583 = vadd.f32 0.0, %v6582
      %v6584 = vpop.f32.mrf.mxu0
      %6585 = vmatprep.mubr.f32.mxu0 0.0
      %6586 = vmatmul.mubr.f32.gmra.mxu0 %v6352
      %v6587 = vpop.f32.mrf.mxu0
      %v6588 = vadd.f32 0.0, %v6587
      %v6589 = vpop.f32.mrf.mxu0
      %6590 = vmatprep.mubr.f32.mxu0 0.0
      %6591 = vmatmul.mubr.f32.gmra.mxu0 %v6355
      %v6592 = vpop.f32.mrf.mxu0
      %v6593 = vadd.f32 0.0, %v6592
      %v6594 = vpop.f32.mrf.mxu0
      %6595 = vmatprep.mubr.f32.mxu0 0.0
      %6596 = vmatmul.mubr.f32.gmra.mxu0 %v6358
      %v6597 = vpop.f32.mrf.mxu0
      %v6598 = vadd.f32 0.0, %v6597
      %v6599 = vpop.f32.mrf.mxu0
      %6600 = vmatprep.mubr.f32.mxu0 0.0
      %6601 = vmatmul.mubr.f32.gmra.mxu0 %v6361
      %v6602 = vpop.f32.mrf.mxu0
      %v6603 = vadd.f32 0.0, %v6602
      %v6604 = vpop.f32.mrf.mxu0
      %6605 = vmatprep.mubr.f32.mxu0 0.0
      %6606 = vmatmul.mubr.f32.gmra.mxu0 %v6364
      %v6607 = vpop.f32.mrf.mxu0
      %v6608 = vadd.f32 0.0, %v6607
      %v6609 = vpop.f32.mrf.mxu0
      %6610 = vmatprep.mubr.f32.mxu0 0.0
      %6611 = vmatmul.mubr.f32.gmra.mxu0 %v6367
      %v6612 = vpop.f32.mrf.mxu0
      %v6613 = vadd.f32 0.0, %v6612
      %v6614 = vpop.f32.mrf.mxu0
      %6615 = vmatprep.mubr.f32.mxu0 0.0
      %6616 = vmatmul.mubr.f32.gmra.mxu0 %v6370
      %v6617 = vpop.f32.mrf.mxu0
      %v6618 = vadd.f32 0.0, %v6617
      %v6619 = vpop.f32.mrf.mxu0
      %6620 = vmatprep.mubr.f32.mxu0 0.0
      %6621 = vmatmul.mubr.f32.gmra.mxu0 %v6373
      %v6622 = vpop.f32.mrf.mxu0
      %v6623 = vadd.f32 0.0, %v6622
      %v6624 = vpop.f32.mrf.mxu0
      %6625 = vmatprep.mubr.f32.mxu0 0.0
      %6626 = vmatmul.mubr.f32.gmra.mxu0 %v6376
      %v6627 = vpop.f32.mrf.mxu0
      %v6628 = vadd.f32 0.0, %v6627
      %v6629 = vpop.f32.mrf.mxu0
      %6630 = vmatprep.mubr.f32.mxu0 0.0
      %6631 = vmatmul.mubr.f32.gmra.mxu0 %v6379
      %v6632 = vpop.f32.mrf.mxu0
      %v6633 = vadd.f32 0.0, %v6632
      %v6634 = vpop.f32.mrf.mxu0
      %6635 = vmatprep.mubr.f32.mxu0 0.0
      %6636 = vmatmul.mubr.f32.gmra.mxu0 %v6382
      %v6637 = vpop.f32.mrf.mxu0
      %v6638 = vadd.f32 0.0, %v6637
      %v6639 = vpop.f32.mrf.mxu0
      %6640 = vmatprep.mubr.f32.mxu0 0.0
      %6641 = vmatmul.mubr.f32.gmra.mxu0 %v6385
      %v6642 = vpop.f32.mrf.mxu0
      %v6643 = vadd.f32 0.0, %v6642
      %v6644 = vpop.f32.mrf.mxu0
      %6645 = vmatprep.mubr.f32.mxu0 0.0
      %6646 = vmatmul.mubr.f32.gmra.mxu0 %v6388
      %v6647 = vpop.f32.mrf.mxu0
      %v6648 = vadd.f32 0.0, %v6647
      %v6649 = vpop.f32.mrf.mxu0
      %6650 = vmatprep.mubr.f32.mxu0 0.0
      %6651 = vmatmul.mubr.f32.gmra.mxu0 %v6391
      %v6652 = vpop.f32.mrf.mxu0
      %v6653 = vadd.f32 0.0, %v6652
      %v6654 = vpop.f32.mrf.mxu0
      %6655 = vmatprep.mubr.f32.mxu0 0.0
      %6656 = vmatmul.mubr.f32.gmra.mxu0 %v6394
      %v6657 = vpop.f32.mrf.mxu0
      %v6658 = vadd.f32 0.0, %v6657
      %v6659 = vpop.f32.mrf.mxu0
      %6660 = vmatprep.mubr.f32.mxu0 0.0
      %6661 = vmatmul.mubr.f32.gmra.mxu0 %v6397
      %v6662 = vpop.f32.mrf.mxu0
      %v6663 = vadd.f32 0.0, %v6662
      %v6664 = vpop.f32.mrf.mxu0
      %6665 = vmatprep.mubr.f32.mxu0 0.0
      %6666 = vmatmul.mubr.f32.gmra.mxu0 %v6400
      %v6667 = vpop.f32.mrf.mxu0
      %v6668 = vadd.f32 0.0, %v6667
      %v6669 = vpop.f32.mrf.mxu0
      %6670 = vmatprep.mubr.f32.mxu0 0.0
      %6671 = vmatmul.mubr.f32.gmra.mxu0 %v6403
      %v6672 = vpop.f32.mrf.mxu0
      %v6673 = vadd.f32 0.0, %v6672
      %v6674 = vpop.f32.mrf.mxu0
      %6675 = vmatprep.mubr.f32.mxu0 0.0
      %6676 = vmatmul.mubr.f32.gmra.mxu0 %v6406
      %v6677 = vpop.f32.mrf.mxu0
      %v6678 = vadd.f32 0.0, %v6677
      %v6679 = vpop.f32.mrf.mxu0
      %6680 = vdwg.mxu0
      %v6681 = vadd.f32 %v6039, %v6478
      %v6682 = vadd.f32 %v6044, %v6483
      %v6683 = vadd.f32 %v6049, %v6488
      %v6684 = vadd.f32 %v6054, %v6493
      %v6685 = vadd.f32 %v6059, %v6498
      %v6686 = vadd.f32 %v6064, %v6503
      %v6687 = vadd.f32 %v6069, %v6508
      %v6688 = vadd.f32 %v6074, %v6513
      %v6689 = vadd.f32 %v6079, %v6518
      %v6690 = vadd.f32 %v6084, %v6523
      %v6691 = vadd.f32 %v6089, %v6528
      %v6692 = vadd.f32 %v6094, %v6533
      %v6693 = vadd.f32 %v6099, %v6538
      %v6694 = vadd.f32 %v6104, %v6543
      %v6695 = vadd.f32 %v6109, %v6548
      %v6696 = vadd.f32 %v6114, %v6553
      %v6697 = vadd.f32 %v6119, %v6558
      %v6698 = vadd.f32 %v6124, %v6563
      %v6699 = vadd.f32 %v6129, %v6568
      %v6700 = vadd.f32 %v6134, %v6573
      %v6701 = vadd.f32 %v6139, %v6578
      %v6702 = vadd.f32 %v6144, %v6583
      %v6703 = vadd.f32 %v6149, %v6588
      %v6704 = vadd.f32 %v6154, %v6593
      %v6705 = vadd.f32 %v6159, %v6598
      %v6706 = vadd.f32 %v6164, %v6603
      %v6707 = vadd.f32 %v6169, %v6608
      %v6708 = vadd.f32 %v6174, %v6613
      %v6709 = vadd.f32 %v6179, %v6618
      %v6710 = vadd.f32 %v6184, %v6623
      %v6711 = vadd.f32 %v6189, %v6628
      %v6712 = vadd.f32 %v6194, %v6633
      %v6713 = vadd.f32 %v6199, %v6638
      %v6714 = vadd.f32 %v6204, %v6643
      %v6715 = vadd.f32 %v6209, %v6648
      %v6716 = vadd.f32 %v6214, %v6653
      %v6717 = vadd.f32 %v6219, %v6658
      %v6718 = vadd.f32 %v6224, %v6663
      %v6719 = vadd.f32 %v6229, %v6668
      %v6720 = vadd.f32 %v6234, %v6673
      %v6721 = vadd.f32 %v6239, %v6678
      %v6722 = vld [vmem:[#allocation3 + $0x17] sm:$0xff]
      %v6723 = vld [vmem:[#allocation3 + $0x1f] sm:$0xff]
      %v6724 = vld [vmem:[#allocation3 + $0x27] sm:$0xff]
      %v6725 = vld [vmem:[#allocation3 + $0x2f] sm:$0xff]
      %v6726 = vld [vmem:[#allocation3 + $0x37] sm:$0xff]
      %v6727 = vld [vmem:[#allocation3 + $0x3f] sm:$0xff]
      %v6728 = vld [vmem:[#allocation3 + $0x47] sm:$0xff]
      %v6729 = vld [vmem:[#allocation3 + $0x4f] sm:$0xff]
      %v6730 = vld [vmem:[#allocation3 + $0x57] sm:$0xff]
      %v6731 = vld [vmem:[#allocation3 + $0x5f] sm:$0xff]
      %v6732 = vld [vmem:[#allocation3 + $0x67] sm:$0xff]
      %v6733 = vld [vmem:[#allocation3 + $0x6f] sm:$0xff]
      %v6734 = vld [vmem:[#allocation3 + $0x77] sm:$0xff]
      %v6735 = vld [vmem:[#allocation3 + $0x7f] sm:$0xff]
      %v6736 = vld [vmem:[#allocation3 + $0x87] sm:$0xff]
      %v6737 = vld [vmem:[#allocation3 + $0x8f] sm:$0xff]
      %v6738 = vld [vmem:[#allocation3 + $0x97] sm:$0xff]
      %v6739 = vld [vmem:[#allocation3 + $0x9f] sm:$0xff]
      %v6740 = vld [vmem:[#allocation3 + $0xa7] sm:$0xff]
      %v6741 = vld [vmem:[#allocation3 + $0xaf] sm:$0xff]
      %v6742 = vld [vmem:[#allocation3 + $0xb7] sm:$0xff]
      %v6743 = vld [vmem:[#allocation3 + $0xbf] sm:$0xff]
      %v6744 = vld [vmem:[#allocation3 + $0xc7] sm:$0xff]
      %v6745 = vld [vmem:[#allocation3 + $0xcf] sm:$0xff]
      %v6746 = vld [vmem:[#allocation3 + $0xd7] sm:$0xff]
      %v6747 = vld [vmem:[#allocation3 + $0xdf] sm:$0xff]
      %v6748 = vld [vmem:[#allocation3 + $0xe7] sm:$0xff]
      %v6749 = vld [vmem:[#allocation3 + $0xef] sm:$0xff]
      %v6750 = vld [vmem:[#allocation3 + $0xf7] sm:$0xff]
      %v6751 = vld [vmem:[#allocation3 + $0xff] sm:$0xff]
      %v6752 = vld [vmem:[#allocation3 + $0x107] sm:$0xff]
      %v6753 = vld [vmem:[#allocation3 + $0x10f] sm:$0xff]
      %v6754 = vld [vmem:[#allocation3 + $0x117] sm:$0xff]
      %v6755 = vld [vmem:[#allocation3 + $0x11f] sm:$0xff]
      %v6756 = vld [vmem:[#allocation3 + $0x127] sm:$0xff]
      %v6757 = vld [vmem:[#allocation3 + $0x12f] sm:$0xff]
      %v6758 = vld [vmem:[#allocation3 + $0x137] sm:$0xff]
      %v6759 = vld [vmem:[#allocation3 + $0x13f] sm:$0xff]
      %v6760 = vld [vmem:[#allocation3 + $0x147] sm:$0xff]
      %v6761 = vld [vmem:[#allocation3 + $0x14f] sm:$0xff]
      %v6762 = vld [vmem:[#allocation3 + $0x157] sm:$0xf]
      %s6763 = scalar_lea.vmem %s7, 12
      %v6764 = vld [vmem:[%s6763] sm:$0xf]
      %v6766 = vsel %vm771, %v6722, 0
      %v6769 = vsel %vm771, %v6723, 0
      %v6772 = vsel %vm771, %v6724, 0
      %v6775 = vsel %vm771, %v6725, 0
      %v6778 = vsel %vm771, %v6726, 0
      %v6781 = vsel %vm771, %v6727, 0
      %v6784 = vsel %vm771, %v6728, 0
      %v6787 = vsel %vm771, %v6729, 0
      %v6790 = vsel %vm771, %v6730, 0
      %v6793 = vsel %vm771, %v6731, 0
      %v6796 = vsel %vm771, %v6732, 0
      %v6799 = vsel %vm771, %v6733, 0
      %v6802 = vsel %vm771, %v6734, 0
      %v6805 = vsel %vm771, %v6735, 0
      %v6808 = vsel %vm771, %v6736, 0
      %v6811 = vsel %vm771, %v6737, 0
      %v6814 = vsel %vm771, %v6738, 0
      %v6817 = vsel %vm771, %v6739, 0
      %v6820 = vsel %vm771, %v6740, 0
      %v6823 = vsel %vm771, %v6741, 0
      %v6826 = vsel %vm771, %v6742, 0
      %v6829 = vsel %vm771, %v6743, 0
      %v6832 = vsel %vm771, %v6744, 0
      %v6835 = vsel %vm771, %v6745, 0
      %v6838 = vsel %vm771, %v6746, 0
      %v6841 = vsel %vm771, %v6747, 0
      %v6844 = vsel %vm771, %v6748, 0
      %v6847 = vsel %vm771, %v6749, 0
      %v6850 = vsel %vm771, %v6750, 0
      %v6853 = vsel %vm771, %v6751, 0
      %v6856 = vsel %vm771, %v6752, 0
      %v6859 = vsel %vm771, %v6753, 0
      %v6862 = vsel %vm771, %v6754, 0
      %v6865 = vsel %vm771, %v6755, 0
      %v6868 = vsel %vm771, %v6756, 0
      %v6871 = vsel %vm771, %v6757, 0
      %v6874 = vsel %vm771, %v6758, 0
      %v6877 = vsel %vm771, %v6759, 0
      %v6880 = vsel %vm771, %v6760, 0
      %v6883 = vsel %vm771, %v6761, 0
      %v6886 = vsel %vm771, %v6762, 0
      %v6889 = vsel %vm1069, %v6764, 0
      %6891 = vmatprep.subr.mxu0 0.0
      %6892 = vmatpush1.msra.mxu0 0.0
      %6893 = vmatprep.subr.mxu0 0.0
      %6894 = vmatpush1.msra.mxu0 0.0
      %6895 = vmatprep.subr.mxu0 0.0
      %6896 = vmatpush1.msra.mxu0 0.0
      %6897 = vmatprep.subr.mxu0 0.0
      %6898 = vmatpush1.msra.mxu0 0.0
      %6899 = vmatprep.subr.mxu0 0.0
      %6900 = vmatpush1.msra.mxu0 0.0
      %6901 = vmatprep.subr.mxu0 0.0
      %6902 = vmatpush1.msra.mxu0 0.0
      %6903 = vmatprep.subr.mxu0 0.0
      %6904 = vmatpush1.msra.mxu0 0.0
      %6905 = vmatprep.subr.mxu0 0.0
      %6906 = vmatpush1.msra.mxu0 0.0
      %6907 = vmatprep.subr.mxu0 0.0
      %6908 = vmatpush1.msra.mxu0 0.0
      %6909 = vmatprep.subr.mxu0 0.0
      %6910 = vmatpush1.msra.mxu0 0.0
      %6911 = vmatprep.subr.mxu0 0.0
      %6912 = vmatpush1.msra.mxu0 0.0
      %6913 = vmatprep.subr.mxu0 0.0
      %6914 = vmatpush1.msra.mxu0 0.0
      %6915 = vmatprep.subr.mxu0 0.0
      %6916 = vmatpush1.msra.mxu0 0.0
      %6917 = vmatprep.subr.mxu0 0.0
      %6918 = vmatpush1.msra.mxu0 0.0
      %6919 = vmatprep.subr.mxu0 0.0
      %6920 = vmatpush1.msra.mxu0 0.0
      %6921 = vmatprep.subr.mxu0 0.0
      %6922 = vmatpush1.msra.mxu0 %v6889
      %6923 = vmatprep.subr.mxu0 0.0
      %6924 = vmatpush2.msra.mxu0 0.0
      %6925 = vmatprep.subr.mxu0 0.0
      %6926 = vmatpush2.msra.mxu0 0.0
      %6927 = vmatprep.subr.mxu0 0.0
      %6928 = vmatpush2.msra.mxu0 0.0
      %6929 = vmatprep.subr.mxu0 0.0
      %6930 = vmatpush2.msra.mxu0 0.0
      %6931 = vmatprep.subr.mxu0 0.0
      %6932 = vmatpush2.msra.mxu0 0.0
      %6933 = vmatprep.subr.mxu0 0.0
      %6934 = vmatpush2.msra.mxu0 0.0
      %6935 = vmatprep.subr.mxu0 0.0
      %6936 = vmatpush2.msra.mxu0 0.0
      %6937 = vmatprep.subr.mxu0 0.0
      %6938 = vmatpush2.msra.mxu0 0.0
      %6939 = vmatprep.subr.mxu0 0.0
      %6940 = vmatpush2.msra.mxu0 0.0
      %6941 = vmatprep.subr.mxu0 0.0
      %6942 = vmatpush2.msra.mxu0 0.0
      %6943 = vmatprep.subr.mxu0 0.0
      %6944 = vmatpush2.msra.mxu0 0.0
      %6945 = vmatprep.subr.mxu0 0.0
      %6946 = vmatpush2.msra.mxu0 0.0
      %6947 = vmatprep.subr.mxu0 0.0
      %6948 = vmatpush2.msra.mxu0 0.0
      %6949 = vmatprep.subr.mxu0 0.0
      %6950 = vmatpush2.msra.mxu0 0.0
      %6951 = vmatprep.subr.mxu0 0.0
      %6952 = vmatpush2.msra.mxu0 0.0
      %6953 = vmatprep.subr.mxu0 0.0
      %6954 = vmatpush2.msra.mxu0 0.0
      %6955 = vmatprep.mubr.f32.mxu0 0.0
      %6956 = vmatmul.mubr.f32.gmra.mxu0 %v6766
      %v6957 = vpop.f32.mrf.mxu0
      %v6958 = vadd.f32 0.0, %v6957
      %v6959 = vpop.f32.mrf.mxu0
      %6960 = vmatprep.mubr.f32.mxu0 0.0
      %6961 = vmatmul.mubr.f32.gmra.mxu0 %v6769
      %v6962 = vpop.f32.mrf.mxu0
      %v6963 = vadd.f32 0.0, %v6962
      %v6964 = vpop.f32.mrf.mxu0
      %6965 = vmatprep.mubr.f32.mxu0 0.0
      %6966 = vmatmul.mubr.f32.gmra.mxu0 %v6772
      %v6967 = vpop.f32.mrf.mxu0
      %v6968 = vadd.f32 0.0, %v6967
      %v6969 = vpop.f32.mrf.mxu0
      %6970 = vmatprep.mubr.f32.mxu0 0.0
      %6971 = vmatmul.mubr.f32.gmra.mxu0 %v6775
      %v6972 = vpop.f32.mrf.mxu0
      %v6973 = vadd.f32 0.0, %v6972
      %v6974 = vpop.f32.mrf.mxu0
      %6975 = vmatprep.mubr.f32.mxu0 0.0
      %6976 = vmatmul.mubr.f32.gmra.mxu0 %v6778
      %v6977 = vpop.f32.mrf.mxu0
      %v6978 = vadd.f32 0.0, %v6977
      %v6979 = vpop.f32.mrf.mxu0
      %6980 = vmatprep.mubr.f32.mxu0 0.0
      %6981 = vmatmul.mubr.f32.gmra.mxu0 %v6781
      %v6982 = vpop.f32.mrf.mxu0
      %v6983 = vadd.f32 0.0, %v6982
      %v6984 = vpop.f32.mrf.mxu0
      %6985 = vmatprep.mubr.f32.mxu0 0.0
      %6986 = vmatmul.mubr.f32.gmra.mxu0 %v6784
      %v6987 = vpop.f32.mrf.mxu0
      %v6988 = vadd.f32 0.0, %v6987
      %v6989 = vpop.f32.mrf.mxu0
      %6990 = vmatprep.mubr.f32.mxu0 0.0
      %6991 = vmatmul.mubr.f32.gmra.mxu0 %v6787
      %v6992 = vpop.f32.mrf.mxu0
      %v6993 = vadd.f32 0.0, %v6992
      %v6994 = vpop.f32.mrf.mxu0
      %6995 = vmatprep.mubr.f32.mxu0 0.0
      %6996 = vmatmul.mubr.f32.gmra.mxu0 %v6790
      %v6997 = vpop.f32.mrf.mxu0
      %v6998 = vadd.f32 0.0, %v6997
      %v6999 = vpop.f32.mrf.mxu0
      %7000 = vmatprep.mubr.f32.mxu0 0.0
      %7001 = vmatmul.mubr.f32.gmra.mxu0 %v6793
      %v7002 = vpop.f32.mrf.mxu0
      %v7003 = vadd.f32 0.0, %v7002
      %v7004 = vpop.f32.mrf.mxu0
      %7005 = vmatprep.mubr.f32.mxu0 0.0
      %7006 = vmatmul.mubr.f32.gmra.mxu0 %v6796
      %v7007 = vpop.f32.mrf.mxu0
      %v7008 = vadd.f32 0.0, %v7007
      %v7009 = vpop.f32.mrf.mxu0
      %7010 = vmatprep.mubr.f32.mxu0 0.0
      %7011 = vmatmul.mubr.f32.gmra.mxu0 %v6799
      %v7012 = vpop.f32.mrf.mxu0
      %v7013 = vadd.f32 0.0, %v7012
      %v7014 = vpop.f32.mrf.mxu0
      %7015 = vmatprep.mubr.f32.mxu0 0.0
      %7016 = vmatmul.mubr.f32.gmra.mxu0 %v6802
      %v7017 = vpop.f32.mrf.mxu0
      %v7018 = vadd.f32 0.0, %v7017
      %v7019 = vpop.f32.mrf.mxu0
      %7020 = vmatprep.mubr.f32.mxu0 0.0
      %7021 = vmatmul.mubr.f32.gmra.mxu0 %v6805
      %v7022 = vpop.f32.mrf.mxu0
      %v7023 = vadd.f32 0.0, %v7022
      %v7024 = vpop.f32.mrf.mxu0
      %7025 = vmatprep.mubr.f32.mxu0 0.0
      %7026 = vmatmul.mubr.f32.gmra.mxu0 %v6808
      %v7027 = vpop.f32.mrf.mxu0
      %v7028 = vadd.f32 0.0, %v7027
      %v7029 = vpop.f32.mrf.mxu0
      %7030 = vmatprep.mubr.f32.mxu0 0.0
      %7031 = vmatmul.mubr.f32.gmra.mxu0 %v6811
      %v7032 = vpop.f32.mrf.mxu0
      %v7033 = vadd.f32 0.0, %v7032
      %v7034 = vpop.f32.mrf.mxu0
      %7035 = vmatprep.mubr.f32.mxu0 0.0
      %7036 = vmatmul.mubr.f32.gmra.mxu0 %v6814
      %v7037 = vpop.f32.mrf.mxu0
      %v7038 = vadd.f32 0.0, %v7037
      %v7039 = vpop.f32.mrf.mxu0
      %7040 = vmatprep.mubr.f32.mxu0 0.0
      %7041 = vmatmul.mubr.f32.gmra.mxu0 %v6817
      %v7042 = vpop.f32.mrf.mxu0
      %v7043 = vadd.f32 0.0, %v7042
      %v7044 = vpop.f32.mrf.mxu0
      %7045 = vmatprep.mubr.f32.mxu0 0.0
      %7046 = vmatmul.mubr.f32.gmra.mxu0 %v6820
      %v7047 = vpop.f32.mrf.mxu0
      %v7048 = vadd.f32 0.0, %v7047
      %v7049 = vpop.f32.mrf.mxu0
      %7050 = vmatprep.mubr.f32.mxu0 0.0
      %7051 = vmatmul.mubr.f32.gmra.mxu0 %v6823
      %v7052 = vpop.f32.mrf.mxu0
      %v7053 = vadd.f32 0.0, %v7052
      %v7054 = vpop.f32.mrf.mxu0
      %7055 = vmatprep.mubr.f32.mxu0 0.0
      %7056 = vmatmul.mubr.f32.gmra.mxu0 %v6826
      %v7057 = vpop.f32.mrf.mxu0
      %v7058 = vadd.f32 0.0, %v7057
      %v7059 = vpop.f32.mrf.mxu0
      %7060 = vmatprep.mubr.f32.mxu0 0.0
      %7061 = vmatmul.mubr.f32.gmra.mxu0 %v6829
      %v7062 = vpop.f32.mrf.mxu0
      %v7063 = vadd.f32 0.0, %v7062
      %v7064 = vpop.f32.mrf.mxu0
      %7065 = vmatprep.mubr.f32.mxu0 0.0
      %7066 = vmatmul.mubr.f32.gmra.mxu0 %v6832
      %v7067 = vpop.f32.mrf.mxu0
      %v7068 = vadd.f32 0.0, %v7067
      %v7069 = vpop.f32.mrf.mxu0
      %7070 = vmatprep.mubr.f32.mxu0 0.0
      %7071 = vmatmul.mubr.f32.gmra.mxu0 %v6835
      %v7072 = vpop.f32.mrf.mxu0
      %v7073 = vadd.f32 0.0, %v7072
      %v7074 = vpop.f32.mrf.mxu0
      %7075 = vmatprep.mubr.f32.mxu0 0.0
      %7076 = vmatmul.mubr.f32.gmra.mxu0 %v6838
      %v7077 = vpop.f32.mrf.mxu0
      %v7078 = vadd.f32 0.0, %v7077
      %v7079 = vpop.f32.mrf.mxu0
      %7080 = vmatprep.mubr.f32.mxu0 0.0
      %7081 = vmatmul.mubr.f32.gmra.mxu0 %v6841
      %v7082 = vpop.f32.mrf.mxu0
      %v7083 = vadd.f32 0.0, %v7082
      %v7084 = vpop.f32.mrf.mxu0
      %7085 = vmatprep.mubr.f32.mxu0 0.0
      %7086 = vmatmul.mubr.f32.gmra.mxu0 %v6844
      %v7087 = vpop.f32.mrf.mxu0
      %v7088 = vadd.f32 0.0, %v7087
      %v7089 = vpop.f32.mrf.mxu0
      %7090 = vmatprep.mubr.f32.mxu0 0.0
      %7091 = vmatmul.mubr.f32.gmra.mxu0 %v6847
      %v7092 = vpop.f32.mrf.mxu0
      %v7093 = vadd.f32 0.0, %v7092
      %v7094 = vpop.f32.mrf.mxu0
      %7095 = vmatprep.mubr.f32.mxu0 0.0
      %7096 = vmatmul.mubr.f32.gmra.mxu0 %v6850
      %v7097 = vpop.f32.mrf.mxu0
      %v7098 = vadd.f32 0.0, %v7097
      %v7099 = vpop.f32.mrf.mxu0
      %7100 = vmatprep.mubr.f32.mxu0 0.0
      %7101 = vmatmul.mubr.f32.gmra.mxu0 %v6853
      %v7102 = vpop.f32.mrf.mxu0
      %v7103 = vadd.f32 0.0, %v7102
      %v7104 = vpop.f32.mrf.mxu0
      %7105 = vmatprep.mubr.f32.mxu0 0.0
      %7106 = vmatmul.mubr.f32.gmra.mxu0 %v6856
      %v7107 = vpop.f32.mrf.mxu0
      %v7108 = vadd.f32 0.0, %v7107
      %v7109 = vpop.f32.mrf.mxu0
      %7110 = vmatprep.mubr.f32.mxu0 0.0
      %7111 = vmatmul.mubr.f32.gmra.mxu0 %v6859
      %v7112 = vpop.f32.mrf.mxu0
      %v7113 = vadd.f32 0.0, %v7112
      %v7114 = vpop.f32.mrf.mxu0
      %7115 = vmatprep.mubr.f32.mxu0 0.0
      %7116 = vmatmul.mubr.f32.gmra.mxu0 %v6862
      %v7117 = vpop.f32.mrf.mxu0
      %v7118 = vadd.f32 0.0, %v7117
      %v7119 = vpop.f32.mrf.mxu0
      %7120 = vmatprep.mubr.f32.mxu0 0.0
      %7121 = vmatmul.mubr.f32.gmra.mxu0 %v6865
      %v7122 = vpop.f32.mrf.mxu0
      %v7123 = vadd.f32 0.0, %v7122
      %v7124 = vpop.f32.mrf.mxu0
      %7125 = vmatprep.mubr.f32.mxu0 0.0
      %7126 = vmatmul.mubr.f32.gmra.mxu0 %v6868
      %v7127 = vpop.f32.mrf.mxu0
      %v7128 = vadd.f32 0.0, %v7127
      %v7129 = vpop.f32.mrf.mxu0
      %7130 = vmatprep.mubr.f32.mxu0 0.0
      %7131 = vmatmul.mubr.f32.gmra.mxu0 %v6871
      %v7132 = vpop.f32.mrf.mxu0
      %v7133 = vadd.f32 0.0, %v7132
      %v7134 = vpop.f32.mrf.mxu0
      %7135 = vmatprep.mubr.f32.mxu0 0.0
      %7136 = vmatmul.mubr.f32.gmra.mxu0 %v6874
      %v7137 = vpop.f32.mrf.mxu0
      %v7138 = vadd.f32 0.0, %v7137
      %v7139 = vpop.f32.mrf.mxu0
      %7140 = vmatprep.mubr.f32.mxu0 0.0
      %7141 = vmatmul.mubr.f32.gmra.mxu0 %v6877
      %v7142 = vpop.f32.mrf.mxu0
      %v7143 = vadd.f32 0.0, %v7142
      %v7144 = vpop.f32.mrf.mxu0
      %7145 = vmatprep.mubr.f32.mxu0 0.0
      %7146 = vmatmul.mubr.f32.gmra.mxu0 %v6880
      %v7147 = vpop.f32.mrf.mxu0
      %v7148 = vadd.f32 0.0, %v7147
      %v7149 = vpop.f32.mrf.mxu0
      %7150 = vmatprep.mubr.f32.mxu0 0.0
      %7151 = vmatmul.mubr.f32.gmra.mxu0 %v6883
      %v7152 = vpop.f32.mrf.mxu0
      %v7153 = vadd.f32 0.0, %v7152
      %v7154 = vpop.f32.mrf.mxu0
      %7155 = vmatprep.mubr.f32.mxu0 0.0
      %7156 = vmatmul.mubr.f32.gmra.mxu0 %v6886
      %v7157 = vpop.f32.mrf.mxu0
      %v7158 = vadd.f32 0.0, %v7157
      %v7159 = vpop.f32.mrf.mxu0
      %7160 = vdwg.mxu0
      %v7161 = vadd.f32 %v6681, %v6958
      %v7162 = vadd.f32 %v6682, %v6963
      %v7163 = vadd.f32 %v6683, %v6968
      %v7164 = vadd.f32 %v6684, %v6973
      %v7165 = vadd.f32 %v6685, %v6978
      %v7166 = vadd.f32 %v6686, %v6983
      %v7167 = vadd.f32 %v6687, %v6988
      %v7168 = vadd.f32 %v6688, %v6993
      %v7169 = vadd.f32 %v6689, %v6998
      %v7170 = vadd.f32 %v6690, %v7003
      %v7171 = vadd.f32 %v6691, %v7008
      %v7172 = vadd.f32 %v6692, %v7013
      %v7173 = vadd.f32 %v6693, %v7018
      %v7174 = vadd.f32 %v6694, %v7023
      %v7175 = vadd.f32 %v6695, %v7028
      %v7176 = vadd.f32 %v6696, %v7033
      %v7177 = vadd.f32 %v6697, %v7038
      %v7178 = vadd.f32 %v6698, %v7043
      %v7179 = vadd.f32 %v6699, %v7048
      %v7180 = vadd.f32 %v6700, %v7053
      %v7181 = vadd.f32 %v6701, %v7058
      %v7182 = vadd.f32 %v6702, %v7063
      %v7183 = vadd.f32 %v6703, %v7068
      %v7184 = vadd.f32 %v6704, %v7073
      %v7185 = vadd.f32 %v6705, %v7078
      %v7186 = vadd.f32 %v6706, %v7083
      %v7187 = vadd.f32 %v6707, %v7088
      %v7188 = vadd.f32 %v6708, %v7093
      %v7189 = vadd.f32 %v6709, %v7098
      %v7190 = vadd.f32 %v6710, %v7103
      %v7191 = vadd.f32 %v6711, %v7108
      %v7192 = vadd.f32 %v6712, %v7113
      %v7193 = vadd.f32 %v6713, %v7118
      %v7194 = vadd.f32 %v6714, %v7123
      %v7195 = vadd.f32 %v6715, %v7128
      %v7196 = vadd.f32 %v6716, %v7133
      %v7197 = vadd.f32 %v6717, %v7138
      %v7198 = vadd.f32 %v6718, %v7143
      %v7199 = vadd.f32 %v6719, %v7148
      %v7200 = vadd.f32 %v6720, %v7153
      %v7201 = vadd.f32 %v6721, %v7158
      %v7202 = vld [vmem:[#allocation3 + $0x18] sm:$0xff]
      %v7203 = vld [vmem:[#allocation3 + $0x20] sm:$0xff]
      %v7204 = vld [vmem:[#allocation3 + $0x28] sm:$0xff]
      %v7205 = vld [vmem:[#allocation3 + $0x30] sm:$0xff]
      %v7206 = vld [vmem:[#allocation3 + $0x38] sm:$0xff]
      %v7207 = vld [vmem:[#allocation3 + $0x40] sm:$0xff]
      %v7208 = vld [vmem:[#allocation3 + $0x48] sm:$0xff]
      %v7209 = vld [vmem:[#allocation3 + $0x50] sm:$0xff]
      %v7210 = vld [vmem:[#allocation3 + $0x58] sm:$0xff]
      %v7211 = vld [vmem:[#allocation3 + $0x60] sm:$0xff]
      %v7212 = vld [vmem:[#allocation3 + $0x68] sm:$0xff]
      %v7213 = vld [vmem:[#allocation3 + $0x70] sm:$0xff]
      %v7214 = vld [vmem:[#allocation3 + $0x78] sm:$0xff]
      %v7215 = vld [vmem:[#allocation3 + $0x80] sm:$0xff]
      %v7216 = vld [vmem:[#allocation3 + $0x88] sm:$0xff]
      %v7217 = vld [vmem:[#allocation3 + $0x90] sm:$0xff]
      %v7218 = vld [vmem:[#allocation3 + $0x98] sm:$0xff]
      %v7219 = vld [vmem:[#allocation3 + $0xa0] sm:$0xff]
      %v7220 = vld [vmem:[#allocation3 + $0xa8] sm:$0xff]
      %v7221 = vld [vmem:[#allocation3 + $0xb0] sm:$0xff]
      %v7222 = vld [vmem:[#allocation3 + $0xb8] sm:$0xff]
      %v7223 = vld [vmem:[#allocation3 + $0xc0] sm:$0xff]
      %v7224 = vld [vmem:[#allocation3 + $0xc8] sm:$0xff]
      %v7225 = vld [vmem:[#allocation3 + $0xd0] sm:$0xff]
      %v7226 = vld [vmem:[#allocation3 + $0xd8] sm:$0xff]
      %v7227 = vld [vmem:[#allocation3 + $0xe0] sm:$0xff]
      %v7228 = vld [vmem:[#allocation3 + $0xe8] sm:$0xff]
      %v7229 = vld [vmem:[#allocation3 + $0xf0] sm:$0xff]
      %v7230 = vld [vmem:[#allocation3 + $0xf8] sm:$0xff]
      %v7231 = vld [vmem:[#allocation3 + $0x100] sm:$0xff]
      %v7232 = vld [vmem:[#allocation3 + $0x108] sm:$0xff]
      %v7233 = vld [vmem:[#allocation3 + $0x110] sm:$0xff]
      %v7234 = vld [vmem:[#allocation3 + $0x118] sm:$0xff]
      %v7235 = vld [vmem:[#allocation3 + $0x120] sm:$0xff]
      %v7236 = vld [vmem:[#allocation3 + $0x128] sm:$0xff]
      %v7237 = vld [vmem:[#allocation3 + $0x130] sm:$0xff]
      %v7238 = vld [vmem:[#allocation3 + $0x138] sm:$0xff]
      %v7239 = vld [vmem:[#allocation3 + $0x140] sm:$0xff]
      %v7240 = vld [vmem:[#allocation3 + $0x148] sm:$0xff]
      %v7241 = vld [vmem:[#allocation3 + $0x150] sm:$0xff]
      %v7242 = vld [vmem:[#allocation3 + $0x158] sm:$0xf]
      %s7243 = scalar_lea.vmem %s7, 16
      %v7244 = vld [vmem:[%s7243] sm:$0xf]
      %v7246 = vsel %vm771, %v7202, 0
      %v7249 = vsel %vm771, %v7203, 0
      %v7252 = vsel %vm771, %v7204, 0
      %v7255 = vsel %vm771, %v7205, 0
      %v7258 = vsel %vm771, %v7206, 0
      %v7261 = vsel %vm771, %v7207, 0
      %v7264 = vsel %vm771, %v7208, 0
      %v7267 = vsel %vm771, %v7209, 0
      %v7270 = vsel %vm771, %v7210, 0
      %v7273 = vsel %vm771, %v7211, 0
      %v7276 = vsel %vm771, %v7212, 0
      %v7279 = vsel %vm771, %v7213, 0
      %v7282 = vsel %vm771, %v7214, 0
      %v7285 = vsel %vm771, %v7215, 0
      %v7288 = vsel %vm771, %v7216, 0
      %v7291 = vsel %vm771, %v7217, 0
      %v7294 = vsel %vm771, %v7218, 0
      %v7297 = vsel %vm771, %v7219, 0
      %v7300 = vsel %vm771, %v7220, 0
      %v7303 = vsel %vm771, %v7221, 0
      %v7306 = vsel %vm771, %v7222, 0
      %v7309 = vsel %vm771, %v7223, 0
      %v7312 = vsel %vm771, %v7224, 0
      %v7315 = vsel %vm771, %v7225, 0
      %v7318 = vsel %vm771, %v7226, 0
      %v7321 = vsel %vm771, %v7227, 0
      %v7324 = vsel %vm771, %v7228, 0
      %v7327 = vsel %vm771, %v7229, 0
      %v7330 = vsel %vm771, %v7230, 0
      %v7333 = vsel %vm771, %v7231, 0
      %v7336 = vsel %vm771, %v7232, 0
      %v7339 = vsel %vm771, %v7233, 0
      %v7342 = vsel %vm771, %v7234, 0
      %v7345 = vsel %vm771, %v7235, 0
      %v7348 = vsel %vm771, %v7236, 0
      %v7351 = vsel %vm771, %v7237, 0
      %v7354 = vsel %vm771, %v7238, 0
      %v7357 = vsel %vm771, %v7239, 0
      %v7360 = vsel %vm771, %v7240, 0
      %v7363 = vsel %vm771, %v7241, 0
      %v7366 = vsel %vm771, %v7242, 0
      %v7369 = vsel %vm1069, %v7244, 0
      %7371 = vmatprep.subr.mxu0 0.0
      %7372 = vmatpush1.msra.mxu0 0.0
      %7373 = vmatprep.subr.mxu0 0.0
      %7374 = vmatpush1.msra.mxu0 0.0
      %7375 = vmatprep.subr.mxu0 0.0
      %7376 = vmatpush1.msra.mxu0 0.0
      %7377 = vmatprep.subr.mxu0 0.0
      %7378 = vmatpush1.msra.mxu0 0.0
      %7379 = vmatprep.subr.mxu0 0.0
      %7380 = vmatpush1.msra.mxu0 0.0
      %7381 = vmatprep.subr.mxu0 0.0
      %7382 = vmatpush1.msra.mxu0 0.0
      %7383 = vmatprep.subr.mxu0 0.0
      %7384 = vmatpush1.msra.mxu0 0.0
      %7385 = vmatprep.subr.mxu0 0.0
      %7386 = vmatpush1.msra.mxu0 0.0
      %7387 = vmatprep.subr.mxu0 0.0
      %7388 = vmatpush1.msra.mxu0 0.0
      %7389 = vmatprep.subr.mxu0 0.0
      %7390 = vmatpush1.msra.mxu0 0.0
      %7391 = vmatprep.subr.mxu0 0.0
      %7392 = vmatpush1.msra.mxu0 0.0
      %7393 = vmatprep.subr.mxu0 0.0
      %7394 = vmatpush1.msra.mxu0 0.0
      %7395 = vmatprep.subr.mxu0 0.0
      %7396 = vmatpush1.msra.mxu0 0.0
      %7397 = vmatprep.subr.mxu0 0.0
      %7398 = vmatpush1.msra.mxu0 0.0
      %7399 = vmatprep.subr.mxu0 0.0
      %7400 = vmatpush1.msra.mxu0 0.0
      %7401 = vmatprep.subr.mxu0 0.0
      %7402 = vmatpush1.msra.mxu0 %v7369
      %7403 = vmatprep.subr.mxu0 0.0
      %7404 = vmatpush2.msra.mxu0 0.0
      %7405 = vmatprep.subr.mxu0 0.0
      %7406 = vmatpush2.msra.mxu0 0.0
      %7407 = vmatprep.subr.mxu0 0.0
      %7408 = vmatpush2.msra.mxu0 0.0
      %7409 = vmatprep.subr.mxu0 0.0
      %7410 = vmatpush2.msra.mxu0 0.0
      %7411 = vmatprep.subr.mxu0 0.0
      %7412 = vmatpush2.msra.mxu0 0.0
      %7413 = vmatprep.subr.mxu0 0.0
      %7414 = vmatpush2.msra.mxu0 0.0
      %7415 = vmatprep.subr.mxu0 0.0
      %7416 = vmatpush2.msra.mxu0 0.0
      %7417 = vmatprep.subr.mxu0 0.0
      %7418 = vmatpush2.msra.mxu0 0.0
      %7419 = vmatprep.subr.mxu0 0.0
      %7420 = vmatpush2.msra.mxu0 0.0
      %7421 = vmatprep.subr.mxu0 0.0
      %7422 = vmatpush2.msra.mxu0 0.0
      %7423 = vmatprep.subr.mxu0 0.0
      %7424 = vmatpush2.msra.mxu0 0.0
      %7425 = vmatprep.subr.mxu0 0.0
      %7426 = vmatpush2.msra.mxu0 0.0
      %7427 = vmatprep.subr.mxu0 0.0
      %7428 = vmatpush2.msra.mxu0 0.0
      %7429 = vmatprep.subr.mxu0 0.0
      %7430 = vmatpush2.msra.mxu0 0.0
      %7431 = vmatprep.subr.mxu0 0.0
      %7432 = vmatpush2.msra.mxu0 0.0
      %7433 = vmatprep.subr.mxu0 0.0
      %7434 = vmatpush2.msra.mxu0 0.0
      %7435 = vmatprep.mubr.f32.mxu0 0.0
      %7436 = vmatmul.mubr.f32.gmra.mxu0 %v7246
      %v7437 = vpop.f32.mrf.mxu0
      %v7438 = vadd.f32 0.0, %v7437
      %v7439 = vpop.f32.mrf.mxu0
      %7440 = vmatprep.mubr.f32.mxu0 0.0
      %7441 = vmatmul.mubr.f32.gmra.mxu0 %v7249
      %v7442 = vpop.f32.mrf.mxu0
      %v7443 = vadd.f32 0.0, %v7442
      %v7444 = vpop.f32.mrf.mxu0
      %7445 = vmatprep.mubr.f32.mxu0 0.0
      %7446 = vmatmul.mubr.f32.gmra.mxu0 %v7252
      %v7447 = vpop.f32.mrf.mxu0
      %v7448 = vadd.f32 0.0, %v7447
      %v7449 = vpop.f32.mrf.mxu0
      %7450 = vmatprep.mubr.f32.mxu0 0.0
      %7451 = vmatmul.mubr.f32.gmra.mxu0 %v7255
      %v7452 = vpop.f32.mrf.mxu0
      %v7453 = vadd.f32 0.0, %v7452
      %v7454 = vpop.f32.mrf.mxu0
      %7455 = vmatprep.mubr.f32.mxu0 0.0
      %7456 = vmatmul.mubr.f32.gmra.mxu0 %v7258
      %v7457 = vpop.f32.mrf.mxu0
      %v7458 = vadd.f32 0.0, %v7457
      %v7459 = vpop.f32.mrf.mxu0
      %7460 = vmatprep.mubr.f32.mxu0 0.0
      %7461 = vmatmul.mubr.f32.gmra.mxu0 %v7261
      %v7462 = vpop.f32.mrf.mxu0
      %v7463 = vadd.f32 0.0, %v7462
      %v7464 = vpop.f32.mrf.mxu0
      %7465 = vmatprep.mubr.f32.mxu0 0.0
      %7466 = vmatmul.mubr.f32.gmra.mxu0 %v7264
      %v7467 = vpop.f32.mrf.mxu0
      %v7468 = vadd.f32 0.0, %v7467
      %v7469 = vpop.f32.mrf.mxu0
      %7470 = vmatprep.mubr.f32.mxu0 0.0
      %7471 = vmatmul.mubr.f32.gmra.mxu0 %v7267
      %v7472 = vpop.f32.mrf.mxu0
      %v7473 = vadd.f32 0.0, %v7472
      %v7474 = vpop.f32.mrf.mxu0
      %7475 = vmatprep.mubr.f32.mxu0 0.0
      %7476 = vmatmul.mubr.f32.gmra.mxu0 %v7270
      %v7477 = vpop.f32.mrf.mxu0
      %v7478 = vadd.f32 0.0, %v7477
      %v7479 = vpop.f32.mrf.mxu0
      %7480 = vmatprep.mubr.f32.mxu0 0.0
      %7481 = vmatmul.mubr.f32.gmra.mxu0 %v7273
      %v7482 = vpop.f32.mrf.mxu0
      %v7483 = vadd.f32 0.0, %v7482
      %v7484 = vpop.f32.mrf.mxu0
      %7485 = vmatprep.mubr.f32.mxu0 0.0
      %7486 = vmatmul.mubr.f32.gmra.mxu0 %v7276
      %v7487 = vpop.f32.mrf.mxu0
      %v7488 = vadd.f32 0.0, %v7487
      %v7489 = vpop.f32.mrf.mxu0
      %7490 = vmatprep.mubr.f32.mxu0 0.0
      %7491 = vmatmul.mubr.f32.gmra.mxu0 %v7279
      %v7492 = vpop.f32.mrf.mxu0
      %v7493 = vadd.f32 0.0, %v7492
      %v7494 = vpop.f32.mrf.mxu0
      %7495 = vmatprep.mubr.f32.mxu0 0.0
      %7496 = vmatmul.mubr.f32.gmra.mxu0 %v7282
      %v7497 = vpop.f32.mrf.mxu0
      %v7498 = vadd.f32 0.0, %v7497
      %v7499 = vpop.f32.mrf.mxu0
      %7500 = vmatprep.mubr.f32.mxu0 0.0
      %7501 = vmatmul.mubr.f32.gmra.mxu0 %v7285
      %v7502 = vpop.f32.mrf.mxu0
      %v7503 = vadd.f32 0.0, %v7502
      %v7504 = vpop.f32.mrf.mxu0
      %7505 = vmatprep.mubr.f32.mxu0 0.0
      %7506 = vmatmul.mubr.f32.gmra.mxu0 %v7288
      %v7507 = vpop.f32.mrf.mxu0
      %v7508 = vadd.f32 0.0, %v7507
      %v7509 = vpop.f32.mrf.mxu0
      %7510 = vmatprep.mubr.f32.mxu0 0.0
      %7511 = vmatmul.mubr.f32.gmra.mxu0 %v7291
      %v7512 = vpop.f32.mrf.mxu0
      %v7513 = vadd.f32 0.0, %v7512
      %v7514 = vpop.f32.mrf.mxu0
      %7515 = vmatprep.mubr.f32.mxu0 0.0
      %7516 = vmatmul.mubr.f32.gmra.mxu0 %v7294
      %v7517 = vpop.f32.mrf.mxu0
      %v7518 = vadd.f32 0.0, %v7517
      %v7519 = vpop.f32.mrf.mxu0
      %7520 = vmatprep.mubr.f32.mxu0 0.0
      %7521 = vmatmul.mubr.f32.gmra.mxu0 %v7297
      %v7522 = vpop.f32.mrf.mxu0
      %v7523 = vadd.f32 0.0, %v7522
      %v7524 = vpop.f32.mrf.mxu0
      %7525 = vmatprep.mubr.f32.mxu0 0.0
      %7526 = vmatmul.mubr.f32.gmra.mxu0 %v7300
      %v7527 = vpop.f32.mrf.mxu0
      %v7528 = vadd.f32 0.0, %v7527
      %v7529 = vpop.f32.mrf.mxu0
      %7530 = vmatprep.mubr.f32.mxu0 0.0
      %7531 = vmatmul.mubr.f32.gmra.mxu0 %v7303
      %v7532 = vpop.f32.mrf.mxu0
      %v7533 = vadd.f32 0.0, %v7532
      %v7534 = vpop.f32.mrf.mxu0
      %7535 = vmatprep.mubr.f32.mxu0 0.0
      %7536 = vmatmul.mubr.f32.gmra.mxu0 %v7306
      %v7537 = vpop.f32.mrf.mxu0
      %v7538 = vadd.f32 0.0, %v7537
      %v7539 = vpop.f32.mrf.mxu0
      %7540 = vmatprep.mubr.f32.mxu0 0.0
      %7541 = vmatmul.mubr.f32.gmra.mxu0 %v7309
      %v7542 = vpop.f32.mrf.mxu0
      %v7543 = vadd.f32 0.0, %v7542
      %v7544 = vpop.f32.mrf.mxu0
      %7545 = vmatprep.mubr.f32.mxu0 0.0
      %7546 = vmatmul.mubr.f32.gmra.mxu0 %v7312
      %v7547 = vpop.f32.mrf.mxu0
      %v7548 = vadd.f32 0.0, %v7547
      %v7549 = vpop.f32.mrf.mxu0
      %7550 = vmatprep.mubr.f32.mxu0 0.0
      %7551 = vmatmul.mubr.f32.gmra.mxu0 %v7315
      %v7552 = vpop.f32.mrf.mxu0
      %v7553 = vadd.f32 0.0, %v7552
      %v7554 = vpop.f32.mrf.mxu0
      %7555 = vmatprep.mubr.f32.mxu0 0.0
      %7556 = vmatmul.mubr.f32.gmra.mxu0 %v7318
      %v7557 = vpop.f32.mrf.mxu0
      %v7558 = vadd.f32 0.0, %v7557
      %v7559 = vpop.f32.mrf.mxu0
      %7560 = vmatprep.mubr.f32.mxu0 0.0
      %7561 = vmatmul.mubr.f32.gmra.mxu0 %v7321
      %v7562 = vpop.f32.mrf.mxu0
      %v7563 = vadd.f32 0.0, %v7562
      %v7564 = vpop.f32.mrf.mxu0
      %7565 = vmatprep.mubr.f32.mxu0 0.0
      %7566 = vmatmul.mubr.f32.gmra.mxu0 %v7324
      %v7567 = vpop.f32.mrf.mxu0
      %v7568 = vadd.f32 0.0, %v7567
      %v7569 = vpop.f32.mrf.mxu0
      %7570 = vmatprep.mubr.f32.mxu0 0.0
      %7571 = vmatmul.mubr.f32.gmra.mxu0 %v7327
      %v7572 = vpop.f32.mrf.mxu0
      %v7573 = vadd.f32 0.0, %v7572
      %v7574 = vpop.f32.mrf.mxu0
      %7575 = vmatprep.mubr.f32.mxu0 0.0
      %7576 = vmatmul.mubr.f32.gmra.mxu0 %v7330
      %v7577 = vpop.f32.mrf.mxu0
      %v7578 = vadd.f32 0.0, %v7577
      %v7579 = vpop.f32.mrf.mxu0
      %7580 = vmatprep.mubr.f32.mxu0 0.0
      %7581 = vmatmul.mubr.f32.gmra.mxu0 %v7333
      %v7582 = vpop.f32.mrf.mxu0
      %v7583 = vadd.f32 0.0, %v7582
      %v7584 = vpop.f32.mrf.mxu0
      %7585 = vmatprep.mubr.f32.mxu0 0.0
      %7586 = vmatmul.mubr.f32.gmra.mxu0 %v7336
      %v7587 = vpop.f32.mrf.mxu0
      %v7588 = vadd.f32 0.0, %v7587
      %v7589 = vpop.f32.mrf.mxu0
      %7590 = vmatprep.mubr.f32.mxu0 0.0
      %7591 = vmatmul.mubr.f32.gmra.mxu0 %v7339
      %v7592 = vpop.f32.mrf.mxu0
      %v7593 = vadd.f32 0.0, %v7592
      %v7594 = vpop.f32.mrf.mxu0
      %7595 = vmatprep.mubr.f32.mxu0 0.0
      %7596 = vmatmul.mubr.f32.gmra.mxu0 %v7342
      %v7597 = vpop.f32.mrf.mxu0
      %v7598 = vadd.f32 0.0, %v7597
      %v7599 = vpop.f32.mrf.mxu0
      %7600 = vmatprep.mubr.f32.mxu0 0.0
      %7601 = vmatmul.mubr.f32.gmra.mxu0 %v7345
      %v7602 = vpop.f32.mrf.mxu0
      %v7603 = vadd.f32 0.0, %v7602
      %v7604 = vpop.f32.mrf.mxu0
      %7605 = vmatprep.mubr.f32.mxu0 0.0
      %7606 = vmatmul.mubr.f32.gmra.mxu0 %v7348
      %v7607 = vpop.f32.mrf.mxu0
      %v7608 = vadd.f32 0.0, %v7607
      %v7609 = vpop.f32.mrf.mxu0
      %7610 = vmatprep.mubr.f32.mxu0 0.0
      %7611 = vmatmul.mubr.f32.gmra.mxu0 %v7351
      %v7612 = vpop.f32.mrf.mxu0
      %v7613 = vadd.f32 0.0, %v7612
      %v7614 = vpop.f32.mrf.mxu0
      %7615 = vmatprep.mubr.f32.mxu0 0.0
      %7616 = vmatmul.mubr.f32.gmra.mxu0 %v7354
      %v7617 = vpop.f32.mrf.mxu0
      %v7618 = vadd.f32 0.0, %v7617
      %v7619 = vpop.f32.mrf.mxu0
      %7620 = vmatprep.mubr.f32.mxu0 0.0
      %7621 = vmatmul.mubr.f32.gmra.mxu0 %v7357
      %v7622 = vpop.f32.mrf.mxu0
      %v7623 = vadd.f32 0.0, %v7622
      %v7624 = vpop.f32.mrf.mxu0
      %7625 = vmatprep.mubr.f32.mxu0 0.0
      %7626 = vmatmul.mubr.f32.gmra.mxu0 %v7360
      %v7627 = vpop.f32.mrf.mxu0
      %v7628 = vadd.f32 0.0, %v7627
      %v7629 = vpop.f32.mrf.mxu0
      %7630 = vmatprep.mubr.f32.mxu0 0.0
      %7631 = vmatmul.mubr.f32.gmra.mxu0 %v7363
      %v7632 = vpop.f32.mrf.mxu0
      %v7633 = vadd.f32 0.0, %v7632
      %v7634 = vpop.f32.mrf.mxu0
      %7635 = vmatprep.mubr.f32.mxu0 0.0
      %7636 = vmatmul.mubr.f32.gmra.mxu0 %v7366
      %v7637 = vpop.f32.mrf.mxu0
      %v7638 = vadd.f32 0.0, %v7637
      %v7639 = vpop.f32.mrf.mxu0
      %7640 = vdwg.mxu0
      %v7641 = vadd.f32 %v7161, %v7438
      %v7642 = vadd.f32 %v7162, %v7443
      %v7643 = vadd.f32 %v7163, %v7448
      %v7644 = vadd.f32 %v7164, %v7453
      %v7645 = vadd.f32 %v7165, %v7458
      %v7646 = vadd.f32 %v7166, %v7463
      %v7647 = vadd.f32 %v7167, %v7468
      %v7648 = vadd.f32 %v7168, %v7473
      %v7649 = vadd.f32 %v7169, %v7478
      %v7650 = vadd.f32 %v7170, %v7483
      %v7651 = vadd.f32 %v7171, %v7488
      %v7652 = vadd.f32 %v7172, %v7493
      %v7653 = vadd.f32 %v7173, %v7498
      %v7654 = vadd.f32 %v7174, %v7503
      %v7655 = vadd.f32 %v7175, %v7508
      %v7656 = vadd.f32 %v7176, %v7513
      %v7657 = vadd.f32 %v7177, %v7518
      %v7658 = vadd.f32 %v7178, %v7523
      %v7659 = vadd.f32 %v7179, %v7528
      %v7660 = vadd.f32 %v7180, %v7533
      %v7661 = vadd.f32 %v7181, %v7538
      %v7662 = vadd.f32 %v7182, %v7543
      %v7663 = vadd.f32 %v7183, %v7548
      %v7664 = vadd.f32 %v7184, %v7553
      %v7665 = vadd.f32 %v7185, %v7558
      %v7666 = vadd.f32 %v7186, %v7563
      %v7667 = vadd.f32 %v7187, %v7568
      %v7668 = vadd.f32 %v7188, %v7573
      %v7669 = vadd.f32 %v7189, %v7578
      %v7670 = vadd.f32 %v7190, %v7583
      %v7671 = vadd.f32 %v7191, %v7588
      %v7672 = vadd.f32 %v7192, %v7593
      %v7673 = vadd.f32 %v7193, %v7598
      %v7674 = vadd.f32 %v7194, %v7603
      %v7675 = vadd.f32 %v7195, %v7608
      %v7676 = vadd.f32 %v7196, %v7613
      %v7677 = vadd.f32 %v7197, %v7618
      %v7678 = vadd.f32 %v7198, %v7623
      %v7679 = vadd.f32 %v7199, %v7628
      %v7680 = vadd.f32 %v7200, %v7633
      %v7681 = vadd.f32 %v7201, %v7638
      %v7682 = vld [vmem:[#allocation3 + $0x19] sm:$0xff]
      %v7683 = vld [vmem:[#allocation3 + $0x21] sm:$0xff]
      %v7684 = vld [vmem:[#allocation3 + $0x29] sm:$0xff]
      %v7685 = vld [vmem:[#allocation3 + $0x31] sm:$0xff]
      %v7686 = vld [vmem:[#allocation3 + $0x39] sm:$0xff]
      %v7687 = vld [vmem:[#allocation3 + $0x41] sm:$0xff]
      %v7688 = vld [vmem:[#allocation3 + $0x49] sm:$0xff]
      %v7689 = vld [vmem:[#allocation3 + $0x51] sm:$0xff]
      %v7690 = vld [vmem:[#allocation3 + $0x59] sm:$0xff]
      %v7691 = vld [vmem:[#allocation3 + $0x61] sm:$0xff]
      %v7692 = vld [vmem:[#allocation3 + $0x69] sm:$0xff]
      %v7693 = vld [vmem:[#allocation3 + $0x71] sm:$0xff]
      %v7694 = vld [vmem:[#allocation3 + $0x79] sm:$0xff]
      %v7695 = vld [vmem:[#allocation3 + $0x81] sm:$0xff]
      %v7696 = vld [vmem:[#allocation3 + $0x89] sm:$0xff]
      %v7697 = vld [vmem:[#allocation3 + $0x91] sm:$0xff]
      %v7698 = vld [vmem:[#allocation3 + $0x99] sm:$0xff]
      %v7699 = vld [vmem:[#allocation3 + $0xa1] sm:$0xff]
      %v7700 = vld [vmem:[#allocation3 + $0xa9] sm:$0xff]
      %v7701 = vld [vmem:[#allocation3 + $0xb1] sm:$0xff]
      %v7702 = vld [vmem:[#allocation3 + $0xb9] sm:$0xff]
      %v7703 = vld [vmem:[#allocation3 + $0xc1] sm:$0xff]
      %v7704 = vld [vmem:[#allocation3 + $0xc9] sm:$0xff]
      %v7705 = vld [vmem:[#allocation3 + $0xd1] sm:$0xff]
      %v7706 = vld [vmem:[#allocation3 + $0xd9] sm:$0xff]
      %v7707 = vld [vmem:[#allocation3 + $0xe1] sm:$0xff]
      %v7708 = vld [vmem:[#allocation3 + $0xe9] sm:$0xff]
      %v7709 = vld [vmem:[#allocation3 + $0xf1] sm:$0xff]
      %v7710 = vld [vmem:[#allocation3 + $0xf9] sm:$0xff]
      %v7711 = vld [vmem:[#allocation3 + $0x101] sm:$0xff]
      %v7712 = vld [vmem:[#allocation3 + $0x109] sm:$0xff]
      %v7713 = vld [vmem:[#allocation3 + $0x111] sm:$0xff]
      %v7714 = vld [vmem:[#allocation3 + $0x119] sm:$0xff]
      %v7715 = vld [vmem:[#allocation3 + $0x121] sm:$0xff]
      %v7716 = vld [vmem:[#allocation3 + $0x129] sm:$0xff]
      %v7717 = vld [vmem:[#allocation3 + $0x131] sm:$0xff]
      %v7718 = vld [vmem:[#allocation3 + $0x139] sm:$0xff]
      %v7719 = vld [vmem:[#allocation3 + $0x141] sm:$0xff]
      %v7720 = vld [vmem:[#allocation3 + $0x149] sm:$0xff]
      %v7721 = vld [vmem:[#allocation3 + $0x151] sm:$0xff]
      %v7722 = vld [vmem:[#allocation3 + $0x159] sm:$0xf]
      %s7723 = scalar_lea.vmem %s7, 20
      %v7724 = vld [vmem:[%s7723] sm:$0xf]
      %v7726 = vsel %vm771, %v7682, 0
      %v7729 = vsel %vm771, %v7683, 0
      %v7732 = vsel %vm771, %v7684, 0
      %v7735 = vsel %vm771, %v7685, 0
      %v7738 = vsel %vm771, %v7686, 0
      %v7741 = vsel %vm771, %v7687, 0
      %v7744 = vsel %vm771, %v7688, 0
      %v7747 = vsel %vm771, %v7689, 0
      %v7750 = vsel %vm771, %v7690, 0
      %v7753 = vsel %vm771, %v7691, 0
      %v7756 = vsel %vm771, %v7692, 0
      %v7759 = vsel %vm771, %v7693, 0
      %v7762 = vsel %vm771, %v7694, 0
      %v7765 = vsel %vm771, %v7695, 0
      %v7768 = vsel %vm771, %v7696, 0
      %v7771 = vsel %vm771, %v7697, 0
      %v7774 = vsel %vm771, %v7698, 0
      %v7777 = vsel %vm771, %v7699, 0
      %v7780 = vsel %vm771, %v7700, 0
      %v7783 = vsel %vm771, %v7701, 0
      %v7786 = vsel %vm771, %v7702, 0
      %v7789 = vsel %vm771, %v7703, 0
      %v7792 = vsel %vm771, %v7704, 0
      %v7795 = vsel %vm771, %v7705, 0
      %v7798 = vsel %vm771, %v7706, 0
      %v7801 = vsel %vm771, %v7707, 0
      %v7804 = vsel %vm771, %v7708, 0
      %v7807 = vsel %vm771, %v7709, 0
      %v7810 = vsel %vm771, %v7710, 0
      %v7813 = vsel %vm771, %v7711, 0
      %v7816 = vsel %vm771, %v7712, 0
      %v7819 = vsel %vm771, %v7713, 0
      %v7822 = vsel %vm771, %v7714, 0
      %v7825 = vsel %vm771, %v7715, 0
      %v7828 = vsel %vm771, %v7716, 0
      %v7831 = vsel %vm771, %v7717, 0
      %v7834 = vsel %vm771, %v7718, 0
      %v7837 = vsel %vm771, %v7719, 0
      %v7840 = vsel %vm771, %v7720, 0
      %v7843 = vsel %vm771, %v7721, 0
      %v7846 = vsel %vm771, %v7722, 0
      %v7849 = vsel %vm1069, %v7724, 0
      %7851 = vmatprep.subr.mxu0 0.0
      %7852 = vmatpush1.msra.mxu0 0.0
      %7853 = vmatprep.subr.mxu0 0.0
      %7854 = vmatpush1.msra.mxu0 0.0
      %7855 = vmatprep.subr.mxu0 0.0
      %7856 = vmatpush1.msra.mxu0 0.0
      %7857 = vmatprep.subr.mxu0 0.0
      %7858 = vmatpush1.msra.mxu0 0.0
      %7859 = vmatprep.subr.mxu0 0.0
      %7860 = vmatpush1.msra.mxu0 0.0
      %7861 = vmatprep.subr.mxu0 0.0
      %7862 = vmatpush1.msra.mxu0 0.0
      %7863 = vmatprep.subr.mxu0 0.0
      %7864 = vmatpush1.msra.mxu0 0.0
      %7865 = vmatprep.subr.mxu0 0.0
      %7866 = vmatpush1.msra.mxu0 0.0
      %7867 = vmatprep.subr.mxu0 0.0
      %7868 = vmatpush1.msra.mxu0 0.0
      %7869 = vmatprep.subr.mxu0 0.0
      %7870 = vmatpush1.msra.mxu0 0.0
      %7871 = vmatprep.subr.mxu0 0.0
      %7872 = vmatpush1.msra.mxu0 0.0
      %7873 = vmatprep.subr.mxu0 0.0
      %7874 = vmatpush1.msra.mxu0 0.0
      %7875 = vmatprep.subr.mxu0 0.0
      %7876 = vmatpush1.msra.mxu0 0.0
      %7877 = vmatprep.subr.mxu0 0.0
      %7878 = vmatpush1.msra.mxu0 0.0
      %7879 = vmatprep.subr.mxu0 0.0
      %7880 = vmatpush1.msra.mxu0 0.0
      %7881 = vmatprep.subr.mxu0 0.0
      %7882 = vmatpush1.msra.mxu0 %v7849
      %7883 = vmatprep.subr.mxu0 0.0
      %7884 = vmatpush2.msra.mxu0 0.0
      %7885 = vmatprep.subr.mxu0 0.0
      %7886 = vmatpush2.msra.mxu0 0.0
      %7887 = vmatprep.subr.mxu0 0.0
      %7888 = vmatpush2.msra.mxu0 0.0
      %7889 = vmatprep.subr.mxu0 0.0
      %7890 = vmatpush2.msra.mxu0 0.0
      %7891 = vmatprep.subr.mxu0 0.0
      %7892 = vmatpush2.msra.mxu0 0.0
      %7893 = vmatprep.subr.mxu0 0.0
      %7894 = vmatpush2.msra.mxu0 0.0
      %7895 = vmatprep.subr.mxu0 0.0
      %7896 = vmatpush2.msra.mxu0 0.0
      %7897 = vmatprep.subr.mxu0 0.0
      %7898 = vmatpush2.msra.mxu0 0.0
      %7899 = vmatprep.subr.mxu0 0.0
      %7900 = vmatpush2.msra.mxu0 0.0
      %7901 = vmatprep.subr.mxu0 0.0
      %7902 = vmatpush2.msra.mxu0 0.0
      %7903 = vmatprep.subr.mxu0 0.0
      %7904 = vmatpush2.msra.mxu0 0.0
      %7905 = vmatprep.subr.mxu0 0.0
      %7906 = vmatpush2.msra.mxu0 0.0
      %7907 = vmatprep.subr.mxu0 0.0
      %7908 = vmatpush2.msra.mxu0 0.0
      %7909 = vmatprep.subr.mxu0 0.0
      %7910 = vmatpush2.msra.mxu0 0.0
      %7911 = vmatprep.subr.mxu0 0.0
      %7912 = vmatpush2.msra.mxu0 0.0
      %7913 = vmatprep.subr.mxu0 0.0
      %7914 = vmatpush2.msra.mxu0 0.0
      %7915 = vmatprep.mubr.f32.mxu0 0.0
      %7916 = vmatmul.mubr.f32.gmra.mxu0 %v7726
      %v7917 = vpop.f32.mrf.mxu0
      %v7918 = vadd.f32 0.0, %v7917
      %v7919 = vpop.f32.mrf.mxu0
      %7920 = vmatprep.mubr.f32.mxu0 0.0
      %7921 = vmatmul.mubr.f32.gmra.mxu0 %v7729
      %v7922 = vpop.f32.mrf.mxu0
      %v7923 = vadd.f32 0.0, %v7922
      %v7924 = vpop.f32.mrf.mxu0
      %7925 = vmatprep.mubr.f32.mxu0 0.0
      %7926 = vmatmul.mubr.f32.gmra.mxu0 %v7732
      %v7927 = vpop.f32.mrf.mxu0
      %v7928 = vadd.f32 0.0, %v7927
      %v7929 = vpop.f32.mrf.mxu0
      %7930 = vmatprep.mubr.f32.mxu0 0.0
      %7931 = vmatmul.mubr.f32.gmra.mxu0 %v7735
      %v7932 = vpop.f32.mrf.mxu0
      %v7933 = vadd.f32 0.0, %v7932
      %v7934 = vpop.f32.mrf.mxu0
      %7935 = vmatprep.mubr.f32.mxu0 0.0
      %7936 = vmatmul.mubr.f32.gmra.mxu0 %v7738
      %v7937 = vpop.f32.mrf.mxu0
      %v7938 = vadd.f32 0.0, %v7937
      %v7939 = vpop.f32.mrf.mxu0
      %7940 = vmatprep.mubr.f32.mxu0 0.0
      %7941 = vmatmul.mubr.f32.gmra.mxu0 %v7741
      %v7942 = vpop.f32.mrf.mxu0
      %v7943 = vadd.f32 0.0, %v7942
      %v7944 = vpop.f32.mrf.mxu0
      %7945 = vmatprep.mubr.f32.mxu0 0.0
      %7946 = vmatmul.mubr.f32.gmra.mxu0 %v7744
      %v7947 = vpop.f32.mrf.mxu0
      %v7948 = vadd.f32 0.0, %v7947
      %v7949 = vpop.f32.mrf.mxu0
      %7950 = vmatprep.mubr.f32.mxu0 0.0
      %7951 = vmatmul.mubr.f32.gmra.mxu0 %v7747
      %v7952 = vpop.f32.mrf.mxu0
      %v7953 = vadd.f32 0.0, %v7952
      %v7954 = vpop.f32.mrf.mxu0
      %7955 = vmatprep.mubr.f32.mxu0 0.0
      %7956 = vmatmul.mubr.f32.gmra.mxu0 %v7750
      %v7957 = vpop.f32.mrf.mxu0
      %v7958 = vadd.f32 0.0, %v7957
      %v7959 = vpop.f32.mrf.mxu0
      %7960 = vmatprep.mubr.f32.mxu0 0.0
      %7961 = vmatmul.mubr.f32.gmra.mxu0 %v7753
      %v7962 = vpop.f32.mrf.mxu0
      %v7963 = vadd.f32 0.0, %v7962
      %v7964 = vpop.f32.mrf.mxu0
      %7965 = vmatprep.mubr.f32.mxu0 0.0
      %7966 = vmatmul.mubr.f32.gmra.mxu0 %v7756
      %v7967 = vpop.f32.mrf.mxu0
      %v7968 = vadd.f32 0.0, %v7967
      %v7969 = vpop.f32.mrf.mxu0
      %7970 = vmatprep.mubr.f32.mxu0 0.0
      %7971 = vmatmul.mubr.f32.gmra.mxu0 %v7759
      %v7972 = vpop.f32.mrf.mxu0
      %v7973 = vadd.f32 0.0, %v7972
      %v7974 = vpop.f32.mrf.mxu0
      %7975 = vmatprep.mubr.f32.mxu0 0.0
      %7976 = vmatmul.mubr.f32.gmra.mxu0 %v7762
      %v7977 = vpop.f32.mrf.mxu0
      %v7978 = vadd.f32 0.0, %v7977
      %v7979 = vpop.f32.mrf.mxu0
      %7980 = vmatprep.mubr.f32.mxu0 0.0
      %7981 = vmatmul.mubr.f32.gmra.mxu0 %v7765
      %v7982 = vpop.f32.mrf.mxu0
      %v7983 = vadd.f32 0.0, %v7982
      %v7984 = vpop.f32.mrf.mxu0
      %7985 = vmatprep.mubr.f32.mxu0 0.0
      %7986 = vmatmul.mubr.f32.gmra.mxu0 %v7768
      %v7987 = vpop.f32.mrf.mxu0
      %v7988 = vadd.f32 0.0, %v7987
      %v7989 = vpop.f32.mrf.mxu0
      %7990 = vmatprep.mubr.f32.mxu0 0.0
      %7991 = vmatmul.mubr.f32.gmra.mxu0 %v7771
      %v7992 = vpop.f32.mrf.mxu0
      %v7993 = vadd.f32 0.0, %v7992
      %v7994 = vpop.f32.mrf.mxu0
      %7995 = vmatprep.mubr.f32.mxu0 0.0
      %7996 = vmatmul.mubr.f32.gmra.mxu0 %v7774
      %v7997 = vpop.f32.mrf.mxu0
      %v7998 = vadd.f32 0.0, %v7997
      %v7999 = vpop.f32.mrf.mxu0
      %8000 = vmatprep.mubr.f32.mxu0 0.0
      %8001 = vmatmul.mubr.f32.gmra.mxu0 %v7777
      %v8002 = vpop.f32.mrf.mxu0
      %v8003 = vadd.f32 0.0, %v8002
      %v8004 = vpop.f32.mrf.mxu0
      %8005 = vmatprep.mubr.f32.mxu0 0.0
      %8006 = vmatmul.mubr.f32.gmra.mxu0 %v7780
      %v8007 = vpop.f32.mrf.mxu0
      %v8008 = vadd.f32 0.0, %v8007
      %v8009 = vpop.f32.mrf.mxu0
      %8010 = vmatprep.mubr.f32.mxu0 0.0
      %8011 = vmatmul.mubr.f32.gmra.mxu0 %v7783
      %v8012 = vpop.f32.mrf.mxu0
      %v8013 = vadd.f32 0.0, %v8012
      %v8014 = vpop.f32.mrf.mxu0
      %8015 = vmatprep.mubr.f32.mxu0 0.0
      %8016 = vmatmul.mubr.f32.gmra.mxu0 %v7786
      %v8017 = vpop.f32.mrf.mxu0
      %v8018 = vadd.f32 0.0, %v8017
      %v8019 = vpop.f32.mrf.mxu0
      %8020 = vmatprep.mubr.f32.mxu0 0.0
      %8021 = vmatmul.mubr.f32.gmra.mxu0 %v7789
      %v8022 = vpop.f32.mrf.mxu0
      %v8023 = vadd.f32 0.0, %v8022
      %v8024 = vpop.f32.mrf.mxu0
      %8025 = vmatprep.mubr.f32.mxu0 0.0
      %8026 = vmatmul.mubr.f32.gmra.mxu0 %v7792
      %v8027 = vpop.f32.mrf.mxu0
      %v8028 = vadd.f32 0.0, %v8027
      %v8029 = vpop.f32.mrf.mxu0
      %8030 = vmatprep.mubr.f32.mxu0 0.0
      %8031 = vmatmul.mubr.f32.gmra.mxu0 %v7795
      %v8032 = vpop.f32.mrf.mxu0
      %v8033 = vadd.f32 0.0, %v8032
      %v8034 = vpop.f32.mrf.mxu0
      %8035 = vmatprep.mubr.f32.mxu0 0.0
      %8036 = vmatmul.mubr.f32.gmra.mxu0 %v7798
      %v8037 = vpop.f32.mrf.mxu0
      %v8038 = vadd.f32 0.0, %v8037
      %v8039 = vpop.f32.mrf.mxu0
      %8040 = vmatprep.mubr.f32.mxu0 0.0
      %8041 = vmatmul.mubr.f32.gmra.mxu0 %v7801
      %v8042 = vpop.f32.mrf.mxu0
      %v8043 = vadd.f32 0.0, %v8042
      %v8044 = vpop.f32.mrf.mxu0
      %8045 = vmatprep.mubr.f32.mxu0 0.0
      %8046 = vmatmul.mubr.f32.gmra.mxu0 %v7804
      %v8047 = vpop.f32.mrf.mxu0
      %v8048 = vadd.f32 0.0, %v8047
      %v8049 = vpop.f32.mrf.mxu0
      %8050 = vmatprep.mubr.f32.mxu0 0.0
      %8051 = vmatmul.mubr.f32.gmra.mxu0 %v7807
      %v8052 = vpop.f32.mrf.mxu0
      %v8053 = vadd.f32 0.0, %v8052
      %v8054 = vpop.f32.mrf.mxu0
      %8055 = vmatprep.mubr.f32.mxu0 0.0
      %8056 = vmatmul.mubr.f32.gmra.mxu0 %v7810
      %v8057 = vpop.f32.mrf.mxu0
      %v8058 = vadd.f32 0.0, %v8057
      %v8059 = vpop.f32.mrf.mxu0
      %8060 = vmatprep.mubr.f32.mxu0 0.0
      %8061 = vmatmul.mubr.f32.gmra.mxu0 %v7813
      %v8062 = vpop.f32.mrf.mxu0
      %v8063 = vadd.f32 0.0, %v8062
      %v8064 = vpop.f32.mrf.mxu0
      %8065 = vmatprep.mubr.f32.mxu0 0.0
      %8066 = vmatmul.mubr.f32.gmra.mxu0 %v7816
      %v8067 = vpop.f32.mrf.mxu0
      %v8068 = vadd.f32 0.0, %v8067
      %v8069 = vpop.f32.mrf.mxu0
      %8070 = vmatprep.mubr.f32.mxu0 0.0
      %8071 = vmatmul.mubr.f32.gmra.mxu0 %v7819
      %v8072 = vpop.f32.mrf.mxu0
      %v8073 = vadd.f32 0.0, %v8072
      %v8074 = vpop.f32.mrf.mxu0
      %8075 = vmatprep.mubr.f32.mxu0 0.0
      %8076 = vmatmul.mubr.f32.gmra.mxu0 %v7822
      %v8077 = vpop.f32.mrf.mxu0
      %v8078 = vadd.f32 0.0, %v8077
      %v8079 = vpop.f32.mrf.mxu0
      %8080 = vmatprep.mubr.f32.mxu0 0.0
      %8081 = vmatmul.mubr.f32.gmra.mxu0 %v7825
      %v8082 = vpop.f32.mrf.mxu0
      %v8083 = vadd.f32 0.0, %v8082
      %v8084 = vpop.f32.mrf.mxu0
      %8085 = vmatprep.mubr.f32.mxu0 0.0
      %8086 = vmatmul.mubr.f32.gmra.mxu0 %v7828
      %v8087 = vpop.f32.mrf.mxu0
      %v8088 = vadd.f32 0.0, %v8087
      %v8089 = vpop.f32.mrf.mxu0
      %8090 = vmatprep.mubr.f32.mxu0 0.0
      %8091 = vmatmul.mubr.f32.gmra.mxu0 %v7831
      %v8092 = vpop.f32.mrf.mxu0
      %v8093 = vadd.f32 0.0, %v8092
      %v8094 = vpop.f32.mrf.mxu0
      %8095 = vmatprep.mubr.f32.mxu0 0.0
      %8096 = vmatmul.mubr.f32.gmra.mxu0 %v7834
      %v8097 = vpop.f32.mrf.mxu0
      %v8098 = vadd.f32 0.0, %v8097
      %v8099 = vpop.f32.mrf.mxu0
      %8100 = vmatprep.mubr.f32.mxu0 0.0
      %8101 = vmatmul.mubr.f32.gmra.mxu0 %v7837
      %v8102 = vpop.f32.mrf.mxu0
      %v8103 = vadd.f32 0.0, %v8102
      %v8104 = vpop.f32.mrf.mxu0
      %8105 = vmatprep.mubr.f32.mxu0 0.0
      %8106 = vmatmul.mubr.f32.gmra.mxu0 %v7840
      %v8107 = vpop.f32.mrf.mxu0
      %v8108 = vadd.f32 0.0, %v8107
      %v8109 = vpop.f32.mrf.mxu0
      %8110 = vmatprep.mubr.f32.mxu0 0.0
      %8111 = vmatmul.mubr.f32.gmra.mxu0 %v7843
      %v8112 = vpop.f32.mrf.mxu0
      %v8113 = vadd.f32 0.0, %v8112
      %v8114 = vpop.f32.mrf.mxu0
      %8115 = vmatprep.mubr.f32.mxu0 0.0
      %8116 = vmatmul.mubr.f32.gmra.mxu0 %v7846
      %v8117 = vpop.f32.mrf.mxu0
      %v8118 = vadd.f32 0.0, %v8117
      %v8119 = vpop.f32.mrf.mxu0
      %8120 = vdwg.mxu0
      %v8121 = vadd.f32 %v7641, %v7918
      %v8122 = vadd.f32 %v7642, %v7923
      %v8123 = vadd.f32 %v7643, %v7928
      %v8124 = vadd.f32 %v7644, %v7933
      %v8125 = vadd.f32 %v7645, %v7938
      %v8126 = vadd.f32 %v7646, %v7943
      %v8127 = vadd.f32 %v7647, %v7948
      %v8128 = vadd.f32 %v7648, %v7953
      %v8129 = vadd.f32 %v7649, %v7958
      %v8130 = vadd.f32 %v7650, %v7963
      %v8131 = vadd.f32 %v7651, %v7968
      %v8132 = vadd.f32 %v7652, %v7973
      %v8133 = vadd.f32 %v7653, %v7978
      %v8134 = vadd.f32 %v7654, %v7983
      %v8135 = vadd.f32 %v7655, %v7988
      %v8136 = vadd.f32 %v7656, %v7993
      %v8137 = vadd.f32 %v7657, %v7998
      %v8138 = vadd.f32 %v7658, %v8003
      %v8139 = vadd.f32 %v7659, %v8008
      %v8140 = vadd.f32 %v7660, %v8013
      %v8141 = vadd.f32 %v7661, %v8018
      %v8142 = vadd.f32 %v7662, %v8023
      %v8143 = vadd.f32 %v7663, %v8028
      %v8144 = vadd.f32 %v7664, %v8033
      %v8145 = vadd.f32 %v7665, %v8038
      %v8146 = vadd.f32 %v7666, %v8043
      %v8147 = vadd.f32 %v7667, %v8048
      %v8148 = vadd.f32 %v7668, %v8053
      %v8149 = vadd.f32 %v7669, %v8058
      %v8150 = vadd.f32 %v7670, %v8063
      %v8151 = vadd.f32 %v7671, %v8068
      %v8152 = vadd.f32 %v7672, %v8073
      %v8153 = vadd.f32 %v7673, %v8078
      %v8154 = vadd.f32 %v7674, %v8083
      %v8155 = vadd.f32 %v7675, %v8088
      %v8156 = vadd.f32 %v7676, %v8093
      %v8157 = vadd.f32 %v7677, %v8098
      %v8158 = vadd.f32 %v7678, %v8103
      %v8159 = vadd.f32 %v7679, %v8108
      %v8160 = vadd.f32 %v7680, %v8113
      %v8161 = vadd.f32 %v7681, %v8118
      %v8162 = vld [vmem:[#allocation3 + $0x29] sm:$0xff]
      %v8163 = vld [vmem:[#allocation3 + $0x31] sm:$0xff]
      %v8164 = vld [vmem:[#allocation3 + $0x39] sm:$0xff]
      %v8165 = vld [vmem:[#allocation3 + $0x41] sm:$0xff]
      %v8166 = vld [vmem:[#allocation3 + $0x49] sm:$0xff]
      %v8167 = vld [vmem:[#allocation3 + $0x51] sm:$0xff]
      %v8168 = vld [vmem:[#allocation3 + $0x59] sm:$0xff]
      %v8169 = vld [vmem:[#allocation3 + $0x61] sm:$0xff]
      %v8170 = vld [vmem:[#allocation3 + $0x69] sm:$0xff]
      %v8171 = vld [vmem:[#allocation3 + $0x71] sm:$0xff]
      %v8172 = vld [vmem:[#allocation3 + $0x79] sm:$0xff]
      %v8173 = vld [vmem:[#allocation3 + $0x81] sm:$0xff]
      %v8174 = vld [vmem:[#allocation3 + $0x89] sm:$0xff]
      %v8175 = vld [vmem:[#allocation3 + $0x91] sm:$0xff]
      %v8176 = vld [vmem:[#allocation3 + $0x99] sm:$0xff]
      %v8177 = vld [vmem:[#allocation3 + $0xa1] sm:$0xff]
      %v8178 = vld [vmem:[#allocation3 + $0xa9] sm:$0xff]
      %v8179 = vld [vmem:[#allocation3 + $0xb1] sm:$0xff]
      %v8180 = vld [vmem:[#allocation3 + $0xb9] sm:$0xff]
      %v8181 = vld [vmem:[#allocation3 + $0xc1] sm:$0xff]
      %v8182 = vld [vmem:[#allocation3 + $0xc9] sm:$0xff]
      %v8183 = vld [vmem:[#allocation3 + $0xd1] sm:$0xff]
      %v8184 = vld [vmem:[#allocation3 + $0xd9] sm:$0xff]
      %v8185 = vld [vmem:[#allocation3 + $0xe1] sm:$0xff]
      %v8186 = vld [vmem:[#allocation3 + $0xe9] sm:$0xff]
      %v8187 = vld [vmem:[#allocation3 + $0xf1] sm:$0xff]
      %v8188 = vld [vmem:[#allocation3 + $0xf9] sm:$0xff]
      %v8189 = vld [vmem:[#allocation3 + $0x101] sm:$0xff]
      %v8190 = vld [vmem:[#allocation3 + $0x109] sm:$0xff]
      %v8191 = vld [vmem:[#allocation3 + $0x111] sm:$0xff]
      %v8192 = vld [vmem:[#allocation3 + $0x119] sm:$0xff]
      %v8193 = vld [vmem:[#allocation3 + $0x121] sm:$0xff]
      %v8194 = vld [vmem:[#allocation3 + $0x129] sm:$0xff]
      %v8195 = vld [vmem:[#allocation3 + $0x131] sm:$0xff]
      %v8196 = vld [vmem:[#allocation3 + $0x139] sm:$0xff]
      %v8197 = vld [vmem:[#allocation3 + $0x141] sm:$0xff]
      %v8198 = vld [vmem:[#allocation3 + $0x149] sm:$0xff]
      %v8199 = vld [vmem:[#allocation3 + $0x151] sm:$0xff]
      %v8200 = vld [vmem:[#allocation3 + $0x159] sm:$0xff]
      %v8201 = vld [vmem:[#allocation3 + $0x161] sm:$0xff]
      %v8202 = vld [vmem:[#allocation3 + $0x169] sm:$0xf]
      %s8203 = scalar_lea.vmem %s7, 24
      %v8204 = vld [vmem:[%s8203] sm:$0xf]
      %v8206 = vsel %vm771, %v8162, 0
      %v8209 = vsel %vm771, %v8163, 0
      %v8212 = vsel %vm771, %v8164, 0
      %v8215 = vsel %vm771, %v8165, 0
      %v8218 = vsel %vm771, %v8166, 0
      %v8221 = vsel %vm771, %v8167, 0
      %v8224 = vsel %vm771, %v8168, 0
      %v8227 = vsel %vm771, %v8169, 0
      %v8230 = vsel %vm771, %v8170, 0
      %v8233 = vsel %vm771, %v8171, 0
      %v8236 = vsel %vm771, %v8172, 0
      %v8239 = vsel %vm771, %v8173, 0
      %v8242 = vsel %vm771, %v8174, 0
      %v8245 = vsel %vm771, %v8175, 0
      %v8248 = vsel %vm771, %v8176, 0
      %v8251 = vsel %vm771, %v8177, 0
      %v8254 = vsel %vm771, %v8178, 0
      %v8257 = vsel %vm771, %v8179, 0
      %v8260 = vsel %vm771, %v8180, 0
      %v8263 = vsel %vm771, %v8181, 0
      %v8266 = vsel %vm771, %v8182, 0
      %v8269 = vsel %vm771, %v8183, 0
      %v8272 = vsel %vm771, %v8184, 0
      %v8275 = vsel %vm771, %v8185, 0
      %v8278 = vsel %vm771, %v8186, 0
      %v8281 = vsel %vm771, %v8187, 0
      %v8284 = vsel %vm771, %v8188, 0
      %v8287 = vsel %vm771, %v8189, 0
      %v8290 = vsel %vm771, %v8190, 0
      %v8293 = vsel %vm771, %v8191, 0
      %v8296 = vsel %vm771, %v8192, 0
      %v8299 = vsel %vm771, %v8193, 0
      %v8302 = vsel %vm771, %v8194, 0
      %v8305 = vsel %vm771, %v8195, 0
      %v8308 = vsel %vm771, %v8196, 0
      %v8311 = vsel %vm771, %v8197, 0
      %v8314 = vsel %vm771, %v8198, 0
      %v8317 = vsel %vm771, %v8199, 0
      %v8320 = vsel %vm771, %v8200, 0
      %v8323 = vsel %vm771, %v8201, 0
      %v8326 = vsel %vm771, %v8202, 0
      %v8329 = vsel %vm1069, %v8204, 0
      %8331 = vmatprep.subr.mxu0 0.0
      %8332 = vmatpush1.msra.mxu0 0.0
      %8333 = vmatprep.subr.mxu0 0.0
      %8334 = vmatpush1.msra.mxu0 0.0
      %8335 = vmatprep.subr.mxu0 0.0
      %8336 = vmatpush1.msra.mxu0 0.0
      %8337 = vmatprep.subr.mxu0 0.0
      %8338 = vmatpush1.msra.mxu0 0.0
      %8339 = vmatprep.subr.mxu0 0.0
      %8340 = vmatpush1.msra.mxu0 0.0
      %8341 = vmatprep.subr.mxu0 0.0
      %8342 = vmatpush1.msra.mxu0 0.0
      %8343 = vmatprep.subr.mxu0 0.0
      %8344 = vmatpush1.msra.mxu0 0.0
      %8345 = vmatprep.subr.mxu0 0.0
      %8346 = vmatpush1.msra.mxu0 0.0
      %8347 = vmatprep.subr.mxu0 0.0
      %8348 = vmatpush1.msra.mxu0 0.0
      %8349 = vmatprep.subr.mxu0 0.0
      %8350 = vmatpush1.msra.mxu0 0.0
      %8351 = vmatprep.subr.mxu0 0.0
      %8352 = vmatpush1.msra.mxu0 0.0
      %8353 = vmatprep.subr.mxu0 0.0
      %8354 = vmatpush1.msra.mxu0 0.0
      %8355 = vmatprep.subr.mxu0 0.0
      %8356 = vmatpush1.msra.mxu0 0.0
      %8357 = vmatprep.subr.mxu0 0.0
      %8358 = vmatpush1.msra.mxu0 0.0
      %8359 = vmatprep.subr.mxu0 0.0
      %8360 = vmatpush1.msra.mxu0 0.0
      %8361 = vmatprep.subr.mxu0 0.0
      %8362 = vmatpush1.msra.mxu0 %v8329
      %8363 = vmatprep.subr.mxu0 0.0
      %8364 = vmatpush2.msra.mxu0 0.0
      %8365 = vmatprep.subr.mxu0 0.0
      %8366 = vmatpush2.msra.mxu0 0.0
      %8367 = vmatprep.subr.mxu0 0.0
      %8368 = vmatpush2.msra.mxu0 0.0
      %8369 = vmatprep.subr.mxu0 0.0
      %8370 = vmatpush2.msra.mxu0 0.0
      %8371 = vmatprep.subr.mxu0 0.0
      %8372 = vmatpush2.msra.mxu0 0.0
      %8373 = vmatprep.subr.mxu0 0.0
      %8374 = vmatpush2.msra.mxu0 0.0
      %8375 = vmatprep.subr.mxu0 0.0
      %8376 = vmatpush2.msra.mxu0 0.0
      %8377 = vmatprep.subr.mxu0 0.0
      %8378 = vmatpush2.msra.mxu0 0.0
      %8379 = vmatprep.subr.mxu0 0.0
      %8380 = vmatpush2.msra.mxu0 0.0
      %8381 = vmatprep.subr.mxu0 0.0
      %8382 = vmatpush2.msra.mxu0 0.0
      %8383 = vmatprep.subr.mxu0 0.0
      %8384 = vmatpush2.msra.mxu0 0.0
      %8385 = vmatprep.subr.mxu0 0.0
      %8386 = vmatpush2.msra.mxu0 0.0
      %8387 = vmatprep.subr.mxu0 0.0
      %8388 = vmatpush2.msra.mxu0 0.0
      %8389 = vmatprep.subr.mxu0 0.0
      %8390 = vmatpush2.msra.mxu0 0.0
      %8391 = vmatprep.subr.mxu0 0.0
      %8392 = vmatpush2.msra.mxu0 0.0
      %8393 = vmatprep.subr.mxu0 0.0
      %8394 = vmatpush2.msra.mxu0 0.0
      %8395 = vmatprep.mubr.f32.mxu0 0.0
      %8396 = vmatmul.mubr.f32.gmra.mxu0 %v8206
      %v8397 = vpop.f32.mrf.mxu0
      %v8398 = vadd.f32 0.0, %v8397
      %v8399 = vpop.f32.mrf.mxu0
      %8400 = vmatprep.mubr.f32.mxu0 0.0
      %8401 = vmatmul.mubr.f32.gmra.mxu0 %v8209
      %v8402 = vpop.f32.mrf.mxu0
      %v8403 = vadd.f32 0.0, %v8402
      %v8404 = vpop.f32.mrf.mxu0
      %8405 = vmatprep.mubr.f32.mxu0 0.0
      %8406 = vmatmul.mubr.f32.gmra.mxu0 %v8212
      %v8407 = vpop.f32.mrf.mxu0
      %v8408 = vadd.f32 0.0, %v8407
      %v8409 = vpop.f32.mrf.mxu0
      %8410 = vmatprep.mubr.f32.mxu0 0.0
      %8411 = vmatmul.mubr.f32.gmra.mxu0 %v8215
      %v8412 = vpop.f32.mrf.mxu0
      %v8413 = vadd.f32 0.0, %v8412
      %v8414 = vpop.f32.mrf.mxu0
      %8415 = vmatprep.mubr.f32.mxu0 0.0
      %8416 = vmatmul.mubr.f32.gmra.mxu0 %v8218
      %v8417 = vpop.f32.mrf.mxu0
      %v8418 = vadd.f32 0.0, %v8417
      %v8419 = vpop.f32.mrf.mxu0
      %8420 = vmatprep.mubr.f32.mxu0 0.0
      %8421 = vmatmul.mubr.f32.gmra.mxu0 %v8221
      %v8422 = vpop.f32.mrf.mxu0
      %v8423 = vadd.f32 0.0, %v8422
      %v8424 = vpop.f32.mrf.mxu0
      %8425 = vmatprep.mubr.f32.mxu0 0.0
      %8426 = vmatmul.mubr.f32.gmra.mxu0 %v8224
      %v8427 = vpop.f32.mrf.mxu0
      %v8428 = vadd.f32 0.0, %v8427
      %v8429 = vpop.f32.mrf.mxu0
      %8430 = vmatprep.mubr.f32.mxu0 0.0
      %8431 = vmatmul.mubr.f32.gmra.mxu0 %v8227
      %v8432 = vpop.f32.mrf.mxu0
      %v8433 = vadd.f32 0.0, %v8432
      %v8434 = vpop.f32.mrf.mxu0
      %8435 = vmatprep.mubr.f32.mxu0 0.0
      %8436 = vmatmul.mubr.f32.gmra.mxu0 %v8230
      %v8437 = vpop.f32.mrf.mxu0
      %v8438 = vadd.f32 0.0, %v8437
      %v8439 = vpop.f32.mrf.mxu0
      %8440 = vmatprep.mubr.f32.mxu0 0.0
      %8441 = vmatmul.mubr.f32.gmra.mxu0 %v8233
      %v8442 = vpop.f32.mrf.mxu0
      %v8443 = vadd.f32 0.0, %v8442
      %v8444 = vpop.f32.mrf.mxu0
      %8445 = vmatprep.mubr.f32.mxu0 0.0
      %8446 = vmatmul.mubr.f32.gmra.mxu0 %v8236
      %v8447 = vpop.f32.mrf.mxu0
      %v8448 = vadd.f32 0.0, %v8447
      %v8449 = vpop.f32.mrf.mxu0
      %8450 = vmatprep.mubr.f32.mxu0 0.0
      %8451 = vmatmul.mubr.f32.gmra.mxu0 %v8239
      %v8452 = vpop.f32.mrf.mxu0
      %v8453 = vadd.f32 0.0, %v8452
      %v8454 = vpop.f32.mrf.mxu0
      %8455 = vmatprep.mubr.f32.mxu0 0.0
      %8456 = vmatmul.mubr.f32.gmra.mxu0 %v8242
      %v8457 = vpop.f32.mrf.mxu0
      %v8458 = vadd.f32 0.0, %v8457
      %v8459 = vpop.f32.mrf.mxu0
      %8460 = vmatprep.mubr.f32.mxu0 0.0
      %8461 = vmatmul.mubr.f32.gmra.mxu0 %v8245
      %v8462 = vpop.f32.mrf.mxu0
      %v8463 = vadd.f32 0.0, %v8462
      %v8464 = vpop.f32.mrf.mxu0
      %8465 = vmatprep.mubr.f32.mxu0 0.0
      %8466 = vmatmul.mubr.f32.gmra.mxu0 %v8248
      %v8467 = vpop.f32.mrf.mxu0
      %v8468 = vadd.f32 0.0, %v8467
      %v8469 = vpop.f32.mrf.mxu0
      %8470 = vmatprep.mubr.f32.mxu0 0.0
      %8471 = vmatmul.mubr.f32.gmra.mxu0 %v8251
      %v8472 = vpop.f32.mrf.mxu0
      %v8473 = vadd.f32 0.0, %v8472
      %v8474 = vpop.f32.mrf.mxu0
      %8475 = vmatprep.mubr.f32.mxu0 0.0
      %8476 = vmatmul.mubr.f32.gmra.mxu0 %v8254
      %v8477 = vpop.f32.mrf.mxu0
      %v8478 = vadd.f32 0.0, %v8477
      %v8479 = vpop.f32.mrf.mxu0
      %8480 = vmatprep.mubr.f32.mxu0 0.0
      %8481 = vmatmul.mubr.f32.gmra.mxu0 %v8257
      %v8482 = vpop.f32.mrf.mxu0
      %v8483 = vadd.f32 0.0, %v8482
      %v8484 = vpop.f32.mrf.mxu0
      %8485 = vmatprep.mubr.f32.mxu0 0.0
      %8486 = vmatmul.mubr.f32.gmra.mxu0 %v8260
      %v8487 = vpop.f32.mrf.mxu0
      %v8488 = vadd.f32 0.0, %v8487
      %v8489 = vpop.f32.mrf.mxu0
      %8490 = vmatprep.mubr.f32.mxu0 0.0
      %8491 = vmatmul.mubr.f32.gmra.mxu0 %v8263
      %v8492 = vpop.f32.mrf.mxu0
      %v8493 = vadd.f32 0.0, %v8492
      %v8494 = vpop.f32.mrf.mxu0
      %8495 = vmatprep.mubr.f32.mxu0 0.0
      %8496 = vmatmul.mubr.f32.gmra.mxu0 %v8266
      %v8497 = vpop.f32.mrf.mxu0
      %v8498 = vadd.f32 0.0, %v8497
      %v8499 = vpop.f32.mrf.mxu0
      %8500 = vmatprep.mubr.f32.mxu0 0.0
      %8501 = vmatmul.mubr.f32.gmra.mxu0 %v8269
      %v8502 = vpop.f32.mrf.mxu0
      %v8503 = vadd.f32 0.0, %v8502
      %v8504 = vpop.f32.mrf.mxu0
      %8505 = vmatprep.mubr.f32.mxu0 0.0
      %8506 = vmatmul.mubr.f32.gmra.mxu0 %v8272
      %v8507 = vpop.f32.mrf.mxu0
      %v8508 = vadd.f32 0.0, %v8507
      %v8509 = vpop.f32.mrf.mxu0
      %8510 = vmatprep.mubr.f32.mxu0 0.0
      %8511 = vmatmul.mubr.f32.gmra.mxu0 %v8275
      %v8512 = vpop.f32.mrf.mxu0
      %v8513 = vadd.f32 0.0, %v8512
      %v8514 = vpop.f32.mrf.mxu0
      %8515 = vmatprep.mubr.f32.mxu0 0.0
      %8516 = vmatmul.mubr.f32.gmra.mxu0 %v8278
      %v8517 = vpop.f32.mrf.mxu0
      %v8518 = vadd.f32 0.0, %v8517
      %v8519 = vpop.f32.mrf.mxu0
      %8520 = vmatprep.mubr.f32.mxu0 0.0
      %8521 = vmatmul.mubr.f32.gmra.mxu0 %v8281
      %v8522 = vpop.f32.mrf.mxu0
      %v8523 = vadd.f32 0.0, %v8522
      %v8524 = vpop.f32.mrf.mxu0
      %8525 = vmatprep.mubr.f32.mxu0 0.0
      %8526 = vmatmul.mubr.f32.gmra.mxu0 %v8284
      %v8527 = vpop.f32.mrf.mxu0
      %v8528 = vadd.f32 0.0, %v8527
      %v8529 = vpop.f32.mrf.mxu0
      %8530 = vmatprep.mubr.f32.mxu0 0.0
      %8531 = vmatmul.mubr.f32.gmra.mxu0 %v8287
      %v8532 = vpop.f32.mrf.mxu0
      %v8533 = vadd.f32 0.0, %v8532
      %v8534 = vpop.f32.mrf.mxu0
      %8535 = vmatprep.mubr.f32.mxu0 0.0
      %8536 = vmatmul.mubr.f32.gmra.mxu0 %v8290
      %v8537 = vpop.f32.mrf.mxu0
      %v8538 = vadd.f32 0.0, %v8537
      %v8539 = vpop.f32.mrf.mxu0
      %8540 = vmatprep.mubr.f32.mxu0 0.0
      %8541 = vmatmul.mubr.f32.gmra.mxu0 %v8293
      %v8542 = vpop.f32.mrf.mxu0
      %v8543 = vadd.f32 0.0, %v8542
      %v8544 = vpop.f32.mrf.mxu0
      %8545 = vmatprep.mubr.f32.mxu0 0.0
      %8546 = vmatmul.mubr.f32.gmra.mxu0 %v8296
      %v8547 = vpop.f32.mrf.mxu0
      %v8548 = vadd.f32 0.0, %v8547
      %v8549 = vpop.f32.mrf.mxu0
      %8550 = vmatprep.mubr.f32.mxu0 0.0
      %8551 = vmatmul.mubr.f32.gmra.mxu0 %v8299
      %v8552 = vpop.f32.mrf.mxu0
      %v8553 = vadd.f32 0.0, %v8552
      %v8554 = vpop.f32.mrf.mxu0
      %8555 = vmatprep.mubr.f32.mxu0 0.0
      %8556 = vmatmul.mubr.f32.gmra.mxu0 %v8302
      %v8557 = vpop.f32.mrf.mxu0
      %v8558 = vadd.f32 0.0, %v8557
      %v8559 = vpop.f32.mrf.mxu0
      %8560 = vmatprep.mubr.f32.mxu0 0.0
      %8561 = vmatmul.mubr.f32.gmra.mxu0 %v8305
      %v8562 = vpop.f32.mrf.mxu0
      %v8563 = vadd.f32 0.0, %v8562
      %v8564 = vpop.f32.mrf.mxu0
      %8565 = vmatprep.mubr.f32.mxu0 0.0
      %8566 = vmatmul.mubr.f32.gmra.mxu0 %v8308
      %v8567 = vpop.f32.mrf.mxu0
      %v8568 = vadd.f32 0.0, %v8567
      %v8569 = vpop.f32.mrf.mxu0
      %8570 = vmatprep.mubr.f32.mxu0 0.0
      %8571 = vmatmul.mubr.f32.gmra.mxu0 %v8311
      %v8572 = vpop.f32.mrf.mxu0
      %v8573 = vadd.f32 0.0, %v8572
      %v8574 = vpop.f32.mrf.mxu0
      %8575 = vmatprep.mubr.f32.mxu0 0.0
      %8576 = vmatmul.mubr.f32.gmra.mxu0 %v8314
      %v8577 = vpop.f32.mrf.mxu0
      %v8578 = vadd.f32 0.0, %v8577
      %v8579 = vpop.f32.mrf.mxu0
      %8580 = vmatprep.mubr.f32.mxu0 0.0
      %8581 = vmatmul.mubr.f32.gmra.mxu0 %v8317
      %v8582 = vpop.f32.mrf.mxu0
      %v8583 = vadd.f32 0.0, %v8582
      %v8584 = vpop.f32.mrf.mxu0
      %8585 = vmatprep.mubr.f32.mxu0 0.0
      %8586 = vmatmul.mubr.f32.gmra.mxu0 %v8320
      %v8587 = vpop.f32.mrf.mxu0
      %v8588 = vadd.f32 0.0, %v8587
      %v8589 = vpop.f32.mrf.mxu0
      %8590 = vmatprep.mubr.f32.mxu0 0.0
      %8591 = vmatmul.mubr.f32.gmra.mxu0 %v8323
      %v8592 = vpop.f32.mrf.mxu0
      %v8593 = vadd.f32 0.0, %v8592
      %v8594 = vpop.f32.mrf.mxu0
      %8595 = vmatprep.mubr.f32.mxu0 0.0
      %8596 = vmatmul.mubr.f32.gmra.mxu0 %v8326
      %v8597 = vpop.f32.mrf.mxu0
      %v8598 = vadd.f32 0.0, %v8597
      %v8599 = vpop.f32.mrf.mxu0
      %8600 = vdwg.mxu0
      %v8601 = vadd.f32 %v8121, %v8398
      %v8602 = vadd.f32 %v8122, %v8403
      %v8603 = vadd.f32 %v8123, %v8408
      %v8604 = vadd.f32 %v8124, %v8413
      %v8605 = vadd.f32 %v8125, %v8418
      %v8606 = vadd.f32 %v8126, %v8423
      %v8607 = vadd.f32 %v8127, %v8428
      %v8608 = vadd.f32 %v8128, %v8433
      %v8609 = vadd.f32 %v8129, %v8438
      %v8610 = vadd.f32 %v8130, %v8443
      %v8611 = vadd.f32 %v8131, %v8448
      %v8612 = vadd.f32 %v8132, %v8453
      %v8613 = vadd.f32 %v8133, %v8458
      %v8614 = vadd.f32 %v8134, %v8463
      %v8615 = vadd.f32 %v8135, %v8468
      %v8616 = vadd.f32 %v8136, %v8473
      %v8617 = vadd.f32 %v8137, %v8478
      %v8618 = vadd.f32 %v8138, %v8483
      %v8619 = vadd.f32 %v8139, %v8488
      %v8620 = vadd.f32 %v8140, %v8493
      %v8621 = vadd.f32 %v8141, %v8498
      %v8622 = vadd.f32 %v8142, %v8503
      %v8623 = vadd.f32 %v8143, %v8508
      %v8624 = vadd.f32 %v8144, %v8513
      %v8625 = vadd.f32 %v8145, %v8518
      %v8626 = vadd.f32 %v8146, %v8523
      %v8627 = vadd.f32 %v8147, %v8528
      %v8628 = vadd.f32 %v8148, %v8533
      %v8629 = vadd.f32 %v8149, %v8538
      %v8630 = vadd.f32 %v8150, %v8543
      %v8631 = vadd.f32 %v8151, %v8548
      %v8632 = vadd.f32 %v8152, %v8553
      %v8633 = vadd.f32 %v8153, %v8558
      %v8634 = vadd.f32 %v8154, %v8563
      %v8635 = vadd.f32 %v8155, %v8568
      %v8636 = vadd.f32 %v8156, %v8573
      %v8637 = vadd.f32 %v8157, %v8578
      %v8638 = vadd.f32 %v8158, %v8583
      %v8639 = vadd.f32 %v8159, %v8588
      %v8640 = vadd.f32 %v8160, %v8593
      %v8641 = vadd.f32 %v8161, %v8598
      %v8642 = vld [vmem:[#allocation3 + $0x2a] sm:$0xff]
      %v8643 = vld [vmem:[#allocation3 + $0x32] sm:$0xff]
      %v8644 = vld [vmem:[#allocation3 + $0x3a] sm:$0xff]
      %v8645 = vld [vmem:[#allocation3 + $0x42] sm:$0xff]
      %v8646 = vld [vmem:[#allocation3 + $0x4a] sm:$0xff]
      %v8647 = vld [vmem:[#allocation3 + $0x52] sm:$0xff]
      %v8648 = vld [vmem:[#allocation3 + $0x5a] sm:$0xff]
      %v8649 = vld [vmem:[#allocation3 + $0x62] sm:$0xff]
      %v8650 = vld [vmem:[#allocation3 + $0x6a] sm:$0xff]
      %v8651 = vld [vmem:[#allocation3 + $0x72] sm:$0xff]
      %v8652 = vld [vmem:[#allocation3 + $0x7a] sm:$0xff]
      %v8653 = vld [vmem:[#allocation3 + $0x82] sm:$0xff]
      %v8654 = vld [vmem:[#allocation3 + $0x8a] sm:$0xff]
      %v8655 = vld [vmem:[#allocation3 + $0x92] sm:$0xff]
      %v8656 = vld [vmem:[#allocation3 + $0x9a] sm:$0xff]
      %v8657 = vld [vmem:[#allocation3 + $0xa2] sm:$0xff]
      %v8658 = vld [vmem:[#allocation3 + $0xaa] sm:$0xff]
      %v8659 = vld [vmem:[#allocation3 + $0xb2] sm:$0xff]
      %v8660 = vld [vmem:[#allocation3 + $0xba] sm:$0xff]
      %v8661 = vld [vmem:[#allocation3 + $0xc2] sm:$0xff]
      %v8662 = vld [vmem:[#allocation3 + $0xca] sm:$0xff]
      %v8663 = vld [vmem:[#allocation3 + $0xd2] sm:$0xff]
      %v8664 = vld [vmem:[#allocation3 + $0xda] sm:$0xff]
      %v8665 = vld [vmem:[#allocation3 + $0xe2] sm:$0xff]
      %v8666 = vld [vmem:[#allocation3 + $0xea] sm:$0xff]
      %v8667 = vld [vmem:[#allocation3 + $0xf2] sm:$0xff]
      %v8668 = vld [vmem:[#allocation3 + $0xfa] sm:$0xff]
      %v8669 = vld [vmem:[#allocation3 + $0x102] sm:$0xff]
      %v8670 = vld [vmem:[#allocation3 + $0x10a] sm:$0xff]
      %v8671 = vld [vmem:[#allocation3 + $0x112] sm:$0xff]
      %v8672 = vld [vmem:[#allocation3 + $0x11a] sm:$0xff]
      %v8673 = vld [vmem:[#allocation3 + $0x122] sm:$0xff]
      %v8674 = vld [vmem:[#allocation3 + $0x12a] sm:$0xff]
      %v8675 = vld [vmem:[#allocation3 + $0x132] sm:$0xff]
      %v8676 = vld [vmem:[#allocation3 + $0x13a] sm:$0xff]
      %v8677 = vld [vmem:[#allocation3 + $0x142] sm:$0xff]
      %v8678 = vld [vmem:[#allocation3 + $0x14a] sm:$0xff]
      %v8679 = vld [vmem:[#allocation3 + $0x152] sm:$0xff]
      %v8680 = vld [vmem:[#allocation3 + $0x15a] sm:$0xff]
      %v8681 = vld [vmem:[#allocation3 + $0x162] sm:$0xff]
      %v8682 = vld [vmem:[#allocation3 + $0x16a] sm:$0xf]
      %s8683 = scalar_lea.vmem %s7, 28
      %v8684 = vld [vmem:[%s8683] sm:$0xf]
      %v8686 = vsel %vm771, %v8642, 0
      %v8689 = vsel %vm771, %v8643, 0
      %v8692 = vsel %vm771, %v8644, 0
      %v8695 = vsel %vm771, %v8645, 0
      %v8698 = vsel %vm771, %v8646, 0
      %v8701 = vsel %vm771, %v8647, 0
      %v8704 = vsel %vm771, %v8648, 0
      %v8707 = vsel %vm771, %v8649, 0
      %v8710 = vsel %vm771, %v8650, 0
      %v8713 = vsel %vm771, %v8651, 0
      %v8716 = vsel %vm771, %v8652, 0
      %v8719 = vsel %vm771, %v8653, 0
      %v8722 = vsel %vm771, %v8654, 0
      %v8725 = vsel %vm771, %v8655, 0
      %v8728 = vsel %vm771, %v8656, 0
      %v8731 = vsel %vm771, %v8657, 0
      %v8734 = vsel %vm771, %v8658, 0
      %v8737 = vsel %vm771, %v8659, 0
      %v8740 = vsel %vm771, %v8660, 0
      %v8743 = vsel %vm771, %v8661, 0
      %v8746 = vsel %vm771, %v8662, 0
      %v8749 = vsel %vm771, %v8663, 0
      %v8752 = vsel %vm771, %v8664, 0
      %v8755 = vsel %vm771, %v8665, 0
      %v8758 = vsel %vm771, %v8666, 0
      %v8761 = vsel %vm771, %v8667, 0
      %v8764 = vsel %vm771, %v8668, 0
      %v8767 = vsel %vm771, %v8669, 0
      %v8770 = vsel %vm771, %v8670, 0
      %v8773 = vsel %vm771, %v8671, 0
      %v8776 = vsel %vm771, %v8672, 0
      %v8779 = vsel %vm771, %v8673, 0
      %v8782 = vsel %vm771, %v8674, 0
      %v8785 = vsel %vm771, %v8675, 0
      %v8788 = vsel %vm771, %v8676, 0
      %v8791 = vsel %vm771, %v8677, 0
      %v8794 = vsel %vm771, %v8678, 0
      %v8797 = vsel %vm771, %v8679, 0
      %v8800 = vsel %vm771, %v8680, 0
      %v8803 = vsel %vm771, %v8681, 0
      %v8806 = vsel %vm771, %v8682, 0
      %v8809 = vsel %vm1069, %v8684, 0
      %8811 = vmatprep.subr.mxu0 0.0
      %8812 = vmatpush1.msra.mxu0 0.0
      %8813 = vmatprep.subr.mxu0 0.0
      %8814 = vmatpush1.msra.mxu0 0.0
      %8815 = vmatprep.subr.mxu0 0.0
      %8816 = vmatpush1.msra.mxu0 0.0
      %8817 = vmatprep.subr.mxu0 0.0
      %8818 = vmatpush1.msra.mxu0 0.0
      %8819 = vmatprep.subr.mxu0 0.0
      %8820 = vmatpush1.msra.mxu0 0.0
      %8821 = vmatprep.subr.mxu0 0.0
      %8822 = vmatpush1.msra.mxu0 0.0
      %8823 = vmatprep.subr.mxu0 0.0
      %8824 = vmatpush1.msra.mxu0 0.0
      %8825 = vmatprep.subr.mxu0 0.0
      %8826 = vmatpush1.msra.mxu0 0.0
      %8827 = vmatprep.subr.mxu0 0.0
      %8828 = vmatpush1.msra.mxu0 0.0
      %8829 = vmatprep.subr.mxu0 0.0
      %8830 = vmatpush1.msra.mxu0 0.0
      %8831 = vmatprep.subr.mxu0 0.0
      %8832 = vmatpush1.msra.mxu0 0.0
      %8833 = vmatprep.subr.mxu0 0.0
      %8834 = vmatpush1.msra.mxu0 0.0
      %8835 = vmatprep.subr.mxu0 0.0
      %8836 = vmatpush1.msra.mxu0 0.0
      %8837 = vmatprep.subr.mxu0 0.0
      %8838 = vmatpush1.msra.mxu0 0.0
      %8839 = vmatprep.subr.mxu0 0.0
      %8840 = vmatpush1.msra.mxu0 0.0
      %8841 = vmatprep.subr.mxu0 0.0
      %8842 = vmatpush1.msra.mxu0 %v8809
      %8843 = vmatprep.subr.mxu0 0.0
      %8844 = vmatpush2.msra.mxu0 0.0
      %8845 = vmatprep.subr.mxu0 0.0
      %8846 = vmatpush2.msra.mxu0 0.0
      %8847 = vmatprep.subr.mxu0 0.0
      %8848 = vmatpush2.msra.mxu0 0.0
      %8849 = vmatprep.subr.mxu0 0.0
      %8850 = vmatpush2.msra.mxu0 0.0
      %8851 = vmatprep.subr.mxu0 0.0
      %8852 = vmatpush2.msra.mxu0 0.0
      %8853 = vmatprep.subr.mxu0 0.0
      %8854 = vmatpush2.msra.mxu0 0.0
      %8855 = vmatprep.subr.mxu0 0.0
      %8856 = vmatpush2.msra.mxu0 0.0
      %8857 = vmatprep.subr.mxu0 0.0
      %8858 = vmatpush2.msra.mxu0 0.0
      %8859 = vmatprep.subr.mxu0 0.0
      %8860 = vmatpush2.msra.mxu0 0.0
      %8861 = vmatprep.subr.mxu0 0.0
      %8862 = vmatpush2.msra.mxu0 0.0
      %8863 = vmatprep.subr.mxu0 0.0
      %8864 = vmatpush2.msra.mxu0 0.0
      %8865 = vmatprep.subr.mxu0 0.0
      %8866 = vmatpush2.msra.mxu0 0.0
      %8867 = vmatprep.subr.mxu0 0.0
      %8868 = vmatpush2.msra.mxu0 0.0
      %8869 = vmatprep.subr.mxu0 0.0
      %8870 = vmatpush2.msra.mxu0 0.0
      %8871 = vmatprep.subr.mxu0 0.0
      %8872 = vmatpush2.msra.mxu0 0.0
      %8873 = vmatprep.subr.mxu0 0.0
      %8874 = vmatpush2.msra.mxu0 0.0
      %8875 = vmatprep.mubr.f32.mxu0 0.0
      %8876 = vmatmul.mubr.f32.gmra.mxu0 %v8686
      %v8877 = vpop.f32.mrf.mxu0
      %v8878 = vadd.f32 0.0, %v8877
      %v8879 = vpop.f32.mrf.mxu0
      %8880 = vmatprep.mubr.f32.mxu0 0.0
      %8881 = vmatmul.mubr.f32.gmra.mxu0 %v8689
      %v8882 = vpop.f32.mrf.mxu0
      %v8883 = vadd.f32 0.0, %v8882
      %v8884 = vpop.f32.mrf.mxu0
      %8885 = vmatprep.mubr.f32.mxu0 0.0
      %8886 = vmatmul.mubr.f32.gmra.mxu0 %v8692
      %v8887 = vpop.f32.mrf.mxu0
      %v8888 = vadd.f32 0.0, %v8887
      %v8889 = vpop.f32.mrf.mxu0
      %8890 = vmatprep.mubr.f32.mxu0 0.0
      %8891 = vmatmul.mubr.f32.gmra.mxu0 %v8695
      %v8892 = vpop.f32.mrf.mxu0
      %v8893 = vadd.f32 0.0, %v8892
      %v8894 = vpop.f32.mrf.mxu0
      %8895 = vmatprep.mubr.f32.mxu0 0.0
      %8896 = vmatmul.mubr.f32.gmra.mxu0 %v8698
      %v8897 = vpop.f32.mrf.mxu0
      %v8898 = vadd.f32 0.0, %v8897
      %v8899 = vpop.f32.mrf.mxu0
      %8900 = vmatprep.mubr.f32.mxu0 0.0
      %8901 = vmatmul.mubr.f32.gmra.mxu0 %v8701
      %v8902 = vpop.f32.mrf.mxu0
      %v8903 = vadd.f32 0.0, %v8902
      %v8904 = vpop.f32.mrf.mxu0
      %8905 = vmatprep.mubr.f32.mxu0 0.0
      %8906 = vmatmul.mubr.f32.gmra.mxu0 %v8704
      %v8907 = vpop.f32.mrf.mxu0
      %v8908 = vadd.f32 0.0, %v8907
      %v8909 = vpop.f32.mrf.mxu0
      %8910 = vmatprep.mubr.f32.mxu0 0.0
      %8911 = vmatmul.mubr.f32.gmra.mxu0 %v8707
      %v8912 = vpop.f32.mrf.mxu0
      %v8913 = vadd.f32 0.0, %v8912
      %v8914 = vpop.f32.mrf.mxu0
      %8915 = vmatprep.mubr.f32.mxu0 0.0
      %8916 = vmatmul.mubr.f32.gmra.mxu0 %v8710
      %v8917 = vpop.f32.mrf.mxu0
      %v8918 = vadd.f32 0.0, %v8917
      %v8919 = vpop.f32.mrf.mxu0
      %8920 = vmatprep.mubr.f32.mxu0 0.0
      %8921 = vmatmul.mubr.f32.gmra.mxu0 %v8713
      %v8922 = vpop.f32.mrf.mxu0
      %v8923 = vadd.f32 0.0, %v8922
      %v8924 = vpop.f32.mrf.mxu0
      %8925 = vmatprep.mubr.f32.mxu0 0.0
      %8926 = vmatmul.mubr.f32.gmra.mxu0 %v8716
      %v8927 = vpop.f32.mrf.mxu0
      %v8928 = vadd.f32 0.0, %v8927
      %v8929 = vpop.f32.mrf.mxu0
      %8930 = vmatprep.mubr.f32.mxu0 0.0
      %8931 = vmatmul.mubr.f32.gmra.mxu0 %v8719
      %v8932 = vpop.f32.mrf.mxu0
      %v8933 = vadd.f32 0.0, %v8932
      %v8934 = vpop.f32.mrf.mxu0
      %8935 = vmatprep.mubr.f32.mxu0 0.0
      %8936 = vmatmul.mubr.f32.gmra.mxu0 %v8722
      %v8937 = vpop.f32.mrf.mxu0
      %v8938 = vadd.f32 0.0, %v8937
      %v8939 = vpop.f32.mrf.mxu0
      %8940 = vmatprep.mubr.f32.mxu0 0.0
      %8941 = vmatmul.mubr.f32.gmra.mxu0 %v8725
      %v8942 = vpop.f32.mrf.mxu0
      %v8943 = vadd.f32 0.0, %v8942
      %v8944 = vpop.f32.mrf.mxu0
      %8945 = vmatprep.mubr.f32.mxu0 0.0
      %8946 = vmatmul.mubr.f32.gmra.mxu0 %v8728
      %v8947 = vpop.f32.mrf.mxu0
      %v8948 = vadd.f32 0.0, %v8947
      %v8949 = vpop.f32.mrf.mxu0
      %8950 = vmatprep.mubr.f32.mxu0 0.0
      %8951 = vmatmul.mubr.f32.gmra.mxu0 %v8731
      %v8952 = vpop.f32.mrf.mxu0
      %v8953 = vadd.f32 0.0, %v8952
      %v8954 = vpop.f32.mrf.mxu0
      %8955 = vmatprep.mubr.f32.mxu0 0.0
      %8956 = vmatmul.mubr.f32.gmra.mxu0 %v8734
      %v8957 = vpop.f32.mrf.mxu0
      %v8958 = vadd.f32 0.0, %v8957
      %v8959 = vpop.f32.mrf.mxu0
      %8960 = vmatprep.mubr.f32.mxu0 0.0
      %8961 = vmatmul.mubr.f32.gmra.mxu0 %v8737
      %v8962 = vpop.f32.mrf.mxu0
      %v8963 = vadd.f32 0.0, %v8962
      %v8964 = vpop.f32.mrf.mxu0
      %8965 = vmatprep.mubr.f32.mxu0 0.0
      %8966 = vmatmul.mubr.f32.gmra.mxu0 %v8740
      %v8967 = vpop.f32.mrf.mxu0
      %v8968 = vadd.f32 0.0, %v8967
      %v8969 = vpop.f32.mrf.mxu0
      %8970 = vmatprep.mubr.f32.mxu0 0.0
      %8971 = vmatmul.mubr.f32.gmra.mxu0 %v8743
      %v8972 = vpop.f32.mrf.mxu0
      %v8973 = vadd.f32 0.0, %v8972
      %v8974 = vpop.f32.mrf.mxu0
      %8975 = vmatprep.mubr.f32.mxu0 0.0
      %8976 = vmatmul.mubr.f32.gmra.mxu0 %v8746
      %v8977 = vpop.f32.mrf.mxu0
      %v8978 = vadd.f32 0.0, %v8977
      %v8979 = vpop.f32.mrf.mxu0
      %8980 = vmatprep.mubr.f32.mxu0 0.0
      %8981 = vmatmul.mubr.f32.gmra.mxu0 %v8749
      %v8982 = vpop.f32.mrf.mxu0
      %v8983 = vadd.f32 0.0, %v8982
      %v8984 = vpop.f32.mrf.mxu0
      %8985 = vmatprep.mubr.f32.mxu0 0.0
      %8986 = vmatmul.mubr.f32.gmra.mxu0 %v8752
      %v8987 = vpop.f32.mrf.mxu0
      %v8988 = vadd.f32 0.0, %v8987
      %v8989 = vpop.f32.mrf.mxu0
      %8990 = vmatprep.mubr.f32.mxu0 0.0
      %8991 = vmatmul.mubr.f32.gmra.mxu0 %v8755
      %v8992 = vpop.f32.mrf.mxu0
      %v8993 = vadd.f32 0.0, %v8992
      %v8994 = vpop.f32.mrf.mxu0
      %8995 = vmatprep.mubr.f32.mxu0 0.0
      %8996 = vmatmul.mubr.f32.gmra.mxu0 %v8758
      %v8997 = vpop.f32.mrf.mxu0
      %v8998 = vadd.f32 0.0, %v8997
      %v8999 = vpop.f32.mrf.mxu0
      %9000 = vmatprep.mubr.f32.mxu0 0.0
      %9001 = vmatmul.mubr.f32.gmra.mxu0 %v8761
      %v9002 = vpop.f32.mrf.mxu0
      %v9003 = vadd.f32 0.0, %v9002
      %v9004 = vpop.f32.mrf.mxu0
      %9005 = vmatprep.mubr.f32.mxu0 0.0
      %9006 = vmatmul.mubr.f32.gmra.mxu0 %v8764
      %v9007 = vpop.f32.mrf.mxu0
      %v9008 = vadd.f32 0.0, %v9007
      %v9009 = vpop.f32.mrf.mxu0
      %9010 = vmatprep.mubr.f32.mxu0 0.0
      %9011 = vmatmul.mubr.f32.gmra.mxu0 %v8767
      %v9012 = vpop.f32.mrf.mxu0
      %v9013 = vadd.f32 0.0, %v9012
      %v9014 = vpop.f32.mrf.mxu0
      %9015 = vmatprep.mubr.f32.mxu0 0.0
      %9016 = vmatmul.mubr.f32.gmra.mxu0 %v8770
      %v9017 = vpop.f32.mrf.mxu0
      %v9018 = vadd.f32 0.0, %v9017
      %v9019 = vpop.f32.mrf.mxu0
      %9020 = vmatprep.mubr.f32.mxu0 0.0
      %9021 = vmatmul.mubr.f32.gmra.mxu0 %v8773
      %v9022 = vpop.f32.mrf.mxu0
      %v9023 = vadd.f32 0.0, %v9022
      %v9024 = vpop.f32.mrf.mxu0
      %9025 = vmatprep.mubr.f32.mxu0 0.0
      %9026 = vmatmul.mubr.f32.gmra.mxu0 %v8776
      %v9027 = vpop.f32.mrf.mxu0
      %v9028 = vadd.f32 0.0, %v9027
      %v9029 = vpop.f32.mrf.mxu0
      %9030 = vmatprep.mubr.f32.mxu0 0.0
      %9031 = vmatmul.mubr.f32.gmra.mxu0 %v8779
      %v9032 = vpop.f32.mrf.mxu0
      %v9033 = vadd.f32 0.0, %v9032
      %v9034 = vpop.f32.mrf.mxu0
      %9035 = vmatprep.mubr.f32.mxu0 0.0
      %9036 = vmatmul.mubr.f32.gmra.mxu0 %v8782
      %v9037 = vpop.f32.mrf.mxu0
      %v9038 = vadd.f32 0.0, %v9037
      %v9039 = vpop.f32.mrf.mxu0
      %9040 = vmatprep.mubr.f32.mxu0 0.0
      %9041 = vmatmul.mubr.f32.gmra.mxu0 %v8785
      %v9042 = vpop.f32.mrf.mxu0
      %v9043 = vadd.f32 0.0, %v9042
      %v9044 = vpop.f32.mrf.mxu0
      %9045 = vmatprep.mubr.f32.mxu0 0.0
      %9046 = vmatmul.mubr.f32.gmra.mxu0 %v8788
      %v9047 = vpop.f32.mrf.mxu0
      %v9048 = vadd.f32 0.0, %v9047
      %v9049 = vpop.f32.mrf.mxu0
      %9050 = vmatprep.mubr.f32.mxu0 0.0
      %9051 = vmatmul.mubr.f32.gmra.mxu0 %v8791
      %v9052 = vpop.f32.mrf.mxu0
      %v9053 = vadd.f32 0.0, %v9052
      %v9054 = vpop.f32.mrf.mxu0
      %9055 = vmatprep.mubr.f32.mxu0 0.0
      %9056 = vmatmul.mubr.f32.gmra.mxu0 %v8794
      %v9057 = vpop.f32.mrf.mxu0
      %v9058 = vadd.f32 0.0, %v9057
      %v9059 = vpop.f32.mrf.mxu0
      %9060 = vmatprep.mubr.f32.mxu0 0.0
      %9061 = vmatmul.mubr.f32.gmra.mxu0 %v8797
      %v9062 = vpop.f32.mrf.mxu0
      %v9063 = vadd.f32 0.0, %v9062
      %v9064 = vpop.f32.mrf.mxu0
      %9065 = vmatprep.mubr.f32.mxu0 0.0
      %9066 = vmatmul.mubr.f32.gmra.mxu0 %v8800
      %v9067 = vpop.f32.mrf.mxu0
      %v9068 = vadd.f32 0.0, %v9067
      %v9069 = vpop.f32.mrf.mxu0
      %9070 = vmatprep.mubr.f32.mxu0 0.0
      %9071 = vmatmul.mubr.f32.gmra.mxu0 %v8803
      %v9072 = vpop.f32.mrf.mxu0
      %v9073 = vadd.f32 0.0, %v9072
      %v9074 = vpop.f32.mrf.mxu0
      %9075 = vmatprep.mubr.f32.mxu0 0.0
      %9076 = vmatmul.mubr.f32.gmra.mxu0 %v8806
      %v9077 = vpop.f32.mrf.mxu0
      %v9078 = vadd.f32 0.0, %v9077
      %v9079 = vpop.f32.mrf.mxu0
      %9080 = vdwg.mxu0
      %v9081 = vadd.f32 %v8601, %v8878
      %v9082 = vadd.f32 %v8602, %v8883
      %v9083 = vadd.f32 %v8603, %v8888
      %v9084 = vadd.f32 %v8604, %v8893
      %v9085 = vadd.f32 %v8605, %v8898
      %v9086 = vadd.f32 %v8606, %v8903
      %v9087 = vadd.f32 %v8607, %v8908
      %v9088 = vadd.f32 %v8608, %v8913
      %v9089 = vadd.f32 %v8609, %v8918
      %v9090 = vadd.f32 %v8610, %v8923
      %v9091 = vadd.f32 %v8611, %v8928
      %v9092 = vadd.f32 %v8612, %v8933
      %v9093 = vadd.f32 %v8613, %v8938
      %v9094 = vadd.f32 %v8614, %v8943
      %v9095 = vadd.f32 %v8615, %v8948
      %v9096 = vadd.f32 %v8616, %v8953
      %v9097 = vadd.f32 %v8617, %v8958
      %v9098 = vadd.f32 %v8618, %v8963
      %v9099 = vadd.f32 %v8619, %v8968
      %v9100 = vadd.f32 %v8620, %v8973
      %v9101 = vadd.f32 %v8621, %v8978
      %v9102 = vadd.f32 %v8622, %v8983
      %v9103 = vadd.f32 %v8623, %v8988
      %v9104 = vadd.f32 %v8624, %v8993
      %v9105 = vadd.f32 %v8625, %v8998
      %v9106 = vadd.f32 %v8626, %v9003
      %v9107 = vadd.f32 %v8627, %v9008
      %v9108 = vadd.f32 %v8628, %v9013
      %v9109 = vadd.f32 %v8629, %v9018
      %v9110 = vadd.f32 %v8630, %v9023
      %v9111 = vadd.f32 %v8631, %v9028
      %v9112 = vadd.f32 %v8632, %v9033
      %v9113 = vadd.f32 %v8633, %v9038
      %v9114 = vadd.f32 %v8634, %v9043
      %v9115 = vadd.f32 %v8635, %v9048
      %v9116 = vadd.f32 %v8636, %v9053
      %v9117 = vadd.f32 %v8637, %v9058
      %v9118 = vadd.f32 %v8638, %v9063
      %v9119 = vadd.f32 %v8639, %v9068
      %v9120 = vadd.f32 %v8640, %v9073
      %v9121 = vadd.f32 %v8641, %v9078
      %v9122 = vld [vmem:[#allocation3 + $0x2b] sm:$0xff]
      %v9123 = vld [vmem:[#allocation3 + $0x33] sm:$0xff]
      %v9124 = vld [vmem:[#allocation3 + $0x3b] sm:$0xff]
      %v9125 = vld [vmem:[#allocation3 + $0x43] sm:$0xff]
      %v9126 = vld [vmem:[#allocation3 + $0x4b] sm:$0xff]
      %v9127 = vld [vmem:[#allocation3 + $0x53] sm:$0xff]
      %v9128 = vld [vmem:[#allocation3 + $0x5b] sm:$0xff]
      %v9129 = vld [vmem:[#allocation3 + $0x63] sm:$0xff]
      %v9130 = vld [vmem:[#allocation3 + $0x6b] sm:$0xff]
      %v9131 = vld [vmem:[#allocation3 + $0x73] sm:$0xff]
      %v9132 = vld [vmem:[#allocation3 + $0x7b] sm:$0xff]
      %v9133 = vld [vmem:[#allocation3 + $0x83] sm:$0xff]
      %v9134 = vld [vmem:[#allocation3 + $0x8b] sm:$0xff]
      %v9135 = vld [vmem:[#allocation3 + $0x93] sm:$0xff]
      %v9136 = vld [vmem:[#allocation3 + $0x9b] sm:$0xff]
      %v9137 = vld [vmem:[#allocation3 + $0xa3] sm:$0xff]
      %v9138 = vld [vmem:[#allocation3 + $0xab] sm:$0xff]
      %v9139 = vld [vmem:[#allocation3 + $0xb3] sm:$0xff]
      %v9140 = vld [vmem:[#allocation3 + $0xbb] sm:$0xff]
      %v9141 = vld [vmem:[#allocation3 + $0xc3] sm:$0xff]
      %v9142 = vld [vmem:[#allocation3 + $0xcb] sm:$0xff]
      %v9143 = vld [vmem:[#allocation3 + $0xd3] sm:$0xff]
      %v9144 = vld [vmem:[#allocation3 + $0xdb] sm:$0xff]
      %v9145 = vld [vmem:[#allocation3 + $0xe3] sm:$0xff]
      %v9146 = vld [vmem:[#allocation3 + $0xeb] sm:$0xff]
      %v9147 = vld [vmem:[#allocation3 + $0xf3] sm:$0xff]
      %v9148 = vld [vmem:[#allocation3 + $0xfb] sm:$0xff]
      %v9149 = vld [vmem:[#allocation3 + $0x103] sm:$0xff]
      %v9150 = vld [vmem:[#allocation3 + $0x10b] sm:$0xff]
      %v9151 = vld [vmem:[#allocation3 + $0x113] sm:$0xff]
      %v9152 = vld [vmem:[#allocation3 + $0x11b] sm:$0xff]
      %v9153 = vld [vmem:[#allocation3 + $0x123] sm:$0xff]
      %v9154 = vld [vmem:[#allocation3 + $0x12b] sm:$0xff]
      %v9155 = vld [vmem:[#allocation3 + $0x133] sm:$0xff]
      %v9156 = vld [vmem:[#allocation3 + $0x13b] sm:$0xff]
      %v9157 = vld [vmem:[#allocation3 + $0x143] sm:$0xff]
      %v9158 = vld [vmem:[#allocation3 + $0x14b] sm:$0xff]
      %v9159 = vld [vmem:[#allocation3 + $0x153] sm:$0xff]
      %v9160 = vld [vmem:[#allocation3 + $0x15b] sm:$0xff]
      %v9161 = vld [vmem:[#allocation3 + $0x163] sm:$0xff]
      %v9162 = vld [vmem:[#allocation3 + $0x16b] sm:$0xf]
      %s9163 = scalar_lea.vmem %s7, 32
      %v9164 = vld [vmem:[%s9163] sm:$0xf]
      %v9166 = vsel %vm771, %v9122, 0
      %v9169 = vsel %vm771, %v9123, 0
      %v9172 = vsel %vm771, %v9124, 0
      %v9175 = vsel %vm771, %v9125, 0
      %v9178 = vsel %vm771, %v9126, 0
      %v9181 = vsel %vm771, %v9127, 0
      %v9184 = vsel %vm771, %v9128, 0
      %v9187 = vsel %vm771, %v9129, 0
      %v9190 = vsel %vm771, %v9130, 0
      %v9193 = vsel %vm771, %v9131, 0
      %v9196 = vsel %vm771, %v9132, 0
      %v9199 = vsel %vm771, %v9133, 0
      %v9202 = vsel %vm771, %v9134, 0
      %v9205 = vsel %vm771, %v9135, 0
      %v9208 = vsel %vm771, %v9136, 0
      %v9211 = vsel %vm771, %v9137, 0
      %v9214 = vsel %vm771, %v9138, 0
      %v9217 = vsel %vm771, %v9139, 0
      %v9220 = vsel %vm771, %v9140, 0
      %v9223 = vsel %vm771, %v9141, 0
      %v9226 = vsel %vm771, %v9142, 0
      %v9229 = vsel %vm771, %v9143, 0
      %v9232 = vsel %vm771, %v9144, 0
      %v9235 = vsel %vm771, %v9145, 0
      %v9238 = vsel %vm771, %v9146, 0
      %v9241 = vsel %vm771, %v9147, 0
      %v9244 = vsel %vm771, %v9148, 0
      %v9247 = vsel %vm771, %v9149, 0
      %v9250 = vsel %vm771, %v9150, 0
      %v9253 = vsel %vm771, %v9151, 0
      %v9256 = vsel %vm771, %v9152, 0
      %v9259 = vsel %vm771, %v9153, 0
      %v9262 = vsel %vm771, %v9154, 0
      %v9265 = vsel %vm771, %v9155, 0
      %v9268 = vsel %vm771, %v9156, 0
      %v9271 = vsel %vm771, %v9157, 0
      %v9274 = vsel %vm771, %v9158, 0
      %v9277 = vsel %vm771, %v9159, 0
      %v9280 = vsel %vm771, %v9160, 0
      %v9283 = vsel %vm771, %v9161, 0
      %v9286 = vsel %vm771, %v9162, 0
      %v9289 = vsel %vm1069, %v9164, 0
      %9291 = vmatprep.subr.mxu0 0.0
      %9292 = vmatpush1.msra.mxu0 0.0
      %9293 = vmatprep.subr.mxu0 0.0
      %9294 = vmatpush1.msra.mxu0 0.0
      %9295 = vmatprep.subr.mxu0 0.0
      %9296 = vmatpush1.msra.mxu0 0.0
      %9297 = vmatprep.subr.mxu0 0.0
      %9298 = vmatpush1.msra.mxu0 0.0
      %9299 = vmatprep.subr.mxu0 0.0
      %9300 = vmatpush1.msra.mxu0 0.0
      %9301 = vmatprep.subr.mxu0 0.0
      %9302 = vmatpush1.msra.mxu0 0.0
      %9303 = vmatprep.subr.mxu0 0.0
      %9304 = vmatpush1.msra.mxu0 0.0
      %9305 = vmatprep.subr.mxu0 0.0
      %9306 = vmatpush1.msra.mxu0 0.0
      %9307 = vmatprep.subr.mxu0 0.0
      %9308 = vmatpush1.msra.mxu0 0.0
      %9309 = vmatprep.subr.mxu0 0.0
      %9310 = vmatpush1.msra.mxu0 0.0
      %9311 = vmatprep.subr.mxu0 0.0
      %9312 = vmatpush1.msra.mxu0 0.0
      %9313 = vmatprep.subr.mxu0 0.0
      %9314 = vmatpush1.msra.mxu0 0.0
      %9315 = vmatprep.subr.mxu0 0.0
      %9316 = vmatpush1.msra.mxu0 0.0
      %9317 = vmatprep.subr.mxu0 0.0
      %9318 = vmatpush1.msra.mxu0 0.0
      %9319 = vmatprep.subr.mxu0 0.0
      %9320 = vmatpush1.msra.mxu0 0.0
      %9321 = vmatprep.subr.mxu0 0.0
      %9322 = vmatpush1.msra.mxu0 %v9289
      %9323 = vmatprep.subr.mxu0 0.0
      %9324 = vmatpush2.msra.mxu0 0.0
      %9325 = vmatprep.subr.mxu0 0.0
      %9326 = vmatpush2.msra.mxu0 0.0
      %9327 = vmatprep.subr.mxu0 0.0
      %9328 = vmatpush2.msra.mxu0 0.0
      %9329 = vmatprep.subr.mxu0 0.0
      %9330 = vmatpush2.msra.mxu0 0.0
      %9331 = vmatprep.subr.mxu0 0.0
      %9332 = vmatpush2.msra.mxu0 0.0
      %9333 = vmatprep.subr.mxu0 0.0
      %9334 = vmatpush2.msra.mxu0 0.0
      %9335 = vmatprep.subr.mxu0 0.0
      %9336 = vmatpush2.msra.mxu0 0.0
      %9337 = vmatprep.subr.mxu0 0.0
      %9338 = vmatpush2.msra.mxu0 0.0
      %9339 = vmatprep.subr.mxu0 0.0
      %9340 = vmatpush2.msra.mxu0 0.0
      %9341 = vmatprep.subr.mxu0 0.0
      %9342 = vmatpush2.msra.mxu0 0.0
      %9343 = vmatprep.subr.mxu0 0.0
      %9344 = vmatpush2.msra.mxu0 0.0
      %9345 = vmatprep.subr.mxu0 0.0
      %9346 = vmatpush2.msra.mxu0 0.0
      %9347 = vmatprep.subr.mxu0 0.0
      %9348 = vmatpush2.msra.mxu0 0.0
      %9349 = vmatprep.subr.mxu0 0.0
      %9350 = vmatpush2.msra.mxu0 0.0
      %9351 = vmatprep.subr.mxu0 0.0
      %9352 = vmatpush2.msra.mxu0 0.0
      %9353 = vmatprep.subr.mxu0 0.0
      %9354 = vmatpush2.msra.mxu0 0.0
      %9355 = vmatprep.mubr.f32.mxu0 0.0
      %9356 = vmatmul.mubr.f32.gmra.mxu0 %v9166
      %v9357 = vpop.f32.mrf.mxu0
      %v9358 = vadd.f32 0.0, %v9357
      %v9359 = vpop.f32.mrf.mxu0
      %9360 = vmatprep.mubr.f32.mxu0 0.0
      %9361 = vmatmul.mubr.f32.gmra.mxu0 %v9169
      %v9362 = vpop.f32.mrf.mxu0
      %v9363 = vadd.f32 0.0, %v9362
      %v9364 = vpop.f32.mrf.mxu0
      %9365 = vmatprep.mubr.f32.mxu0 0.0
      %9366 = vmatmul.mubr.f32.gmra.mxu0 %v9172
      %v9367 = vpop.f32.mrf.mxu0
      %v9368 = vadd.f32 0.0, %v9367
      %v9369 = vpop.f32.mrf.mxu0
      %9370 = vmatprep.mubr.f32.mxu0 0.0
      %9371 = vmatmul.mubr.f32.gmra.mxu0 %v9175
      %v9372 = vpop.f32.mrf.mxu0
      %v9373 = vadd.f32 0.0, %v9372
      %v9374 = vpop.f32.mrf.mxu0
      %9375 = vmatprep.mubr.f32.mxu0 0.0
      %9376 = vmatmul.mubr.f32.gmra.mxu0 %v9178
      %v9377 = vpop.f32.mrf.mxu0
      %v9378 = vadd.f32 0.0, %v9377
      %v9379 = vpop.f32.mrf.mxu0
      %9380 = vmatprep.mubr.f32.mxu0 0.0
      %9381 = vmatmul.mubr.f32.gmra.mxu0 %v9181
      %v9382 = vpop.f32.mrf.mxu0
      %v9383 = vadd.f32 0.0, %v9382
      %v9384 = vpop.f32.mrf.mxu0
      %9385 = vmatprep.mubr.f32.mxu0 0.0
      %9386 = vmatmul.mubr.f32.gmra.mxu0 %v9184
      %v9387 = vpop.f32.mrf.mxu0
      %v9388 = vadd.f32 0.0, %v9387
      %v9389 = vpop.f32.mrf.mxu0
      %9390 = vmatprep.mubr.f32.mxu0 0.0
      %9391 = vmatmul.mubr.f32.gmra.mxu0 %v9187
      %v9392 = vpop.f32.mrf.mxu0
      %v9393 = vadd.f32 0.0, %v9392
      %v9394 = vpop.f32.mrf.mxu0
      %9395 = vmatprep.mubr.f32.mxu0 0.0
      %9396 = vmatmul.mubr.f32.gmra.mxu0 %v9190
      %v9397 = vpop.f32.mrf.mxu0
      %v9398 = vadd.f32 0.0, %v9397
      %v9399 = vpop.f32.mrf.mxu0
      %9400 = vmatprep.mubr.f32.mxu0 0.0
      %9401 = vmatmul.mubr.f32.gmra.mxu0 %v9193
      %v9402 = vpop.f32.mrf.mxu0
      %v9403 = vadd.f32 0.0, %v9402
      %v9404 = vpop.f32.mrf.mxu0
      %9405 = vmatprep.mubr.f32.mxu0 0.0
      %9406 = vmatmul.mubr.f32.gmra.mxu0 %v9196
      %v9407 = vpop.f32.mrf.mxu0
      %v9408 = vadd.f32 0.0, %v9407
      %v9409 = vpop.f32.mrf.mxu0
      %9410 = vmatprep.mubr.f32.mxu0 0.0
      %9411 = vmatmul.mubr.f32.gmra.mxu0 %v9199
      %v9412 = vpop.f32.mrf.mxu0
      %v9413 = vadd.f32 0.0, %v9412
      %v9414 = vpop.f32.mrf.mxu0
      %9415 = vmatprep.mubr.f32.mxu0 0.0
      %9416 = vmatmul.mubr.f32.gmra.mxu0 %v9202
      %v9417 = vpop.f32.mrf.mxu0
      %v9418 = vadd.f32 0.0, %v9417
      %v9419 = vpop.f32.mrf.mxu0
      %9420 = vmatprep.mubr.f32.mxu0 0.0
      %9421 = vmatmul.mubr.f32.gmra.mxu0 %v9205
      %v9422 = vpop.f32.mrf.mxu0
      %v9423 = vadd.f32 0.0, %v9422
      %v9424 = vpop.f32.mrf.mxu0
      %9425 = vmatprep.mubr.f32.mxu0 0.0
      %9426 = vmatmul.mubr.f32.gmra.mxu0 %v9208
      %v9427 = vpop.f32.mrf.mxu0
      %v9428 = vadd.f32 0.0, %v9427
      %v9429 = vpop.f32.mrf.mxu0
      %9430 = vmatprep.mubr.f32.mxu0 0.0
      %9431 = vmatmul.mubr.f32.gmra.mxu0 %v9211
      %v9432 = vpop.f32.mrf.mxu0
      %v9433 = vadd.f32 0.0, %v9432
      %v9434 = vpop.f32.mrf.mxu0
      %9435 = vmatprep.mubr.f32.mxu0 0.0
      %9436 = vmatmul.mubr.f32.gmra.mxu0 %v9214
      %v9437 = vpop.f32.mrf.mxu0
      %v9438 = vadd.f32 0.0, %v9437
      %v9439 = vpop.f32.mrf.mxu0
      %9440 = vmatprep.mubr.f32.mxu0 0.0
      %9441 = vmatmul.mubr.f32.gmra.mxu0 %v9217
      %v9442 = vpop.f32.mrf.mxu0
      %v9443 = vadd.f32 0.0, %v9442
      %v9444 = vpop.f32.mrf.mxu0
      %9445 = vmatprep.mubr.f32.mxu0 0.0
      %9446 = vmatmul.mubr.f32.gmra.mxu0 %v9220
      %v9447 = vpop.f32.mrf.mxu0
      %v9448 = vadd.f32 0.0, %v9447
      %v9449 = vpop.f32.mrf.mxu0
      %9450 = vmatprep.mubr.f32.mxu0 0.0
      %9451 = vmatmul.mubr.f32.gmra.mxu0 %v9223
      %v9452 = vpop.f32.mrf.mxu0
      %v9453 = vadd.f32 0.0, %v9452
      %v9454 = vpop.f32.mrf.mxu0
      %9455 = vmatprep.mubr.f32.mxu0 0.0
      %9456 = vmatmul.mubr.f32.gmra.mxu0 %v9226
      %v9457 = vpop.f32.mrf.mxu0
      %v9458 = vadd.f32 0.0, %v9457
      %v9459 = vpop.f32.mrf.mxu0
      %9460 = vmatprep.mubr.f32.mxu0 0.0
      %9461 = vmatmul.mubr.f32.gmra.mxu0 %v9229
      %v9462 = vpop.f32.mrf.mxu0
      %v9463 = vadd.f32 0.0, %v9462
      %v9464 = vpop.f32.mrf.mxu0
      %9465 = vmatprep.mubr.f32.mxu0 0.0
      %9466 = vmatmul.mubr.f32.gmra.mxu0 %v9232
      %v9467 = vpop.f32.mrf.mxu0
      %v9468 = vadd.f32 0.0, %v9467
      %v9469 = vpop.f32.mrf.mxu0
      %9470 = vmatprep.mubr.f32.mxu0 0.0
      %9471 = vmatmul.mubr.f32.gmra.mxu0 %v9235
      %v9472 = vpop.f32.mrf.mxu0
      %v9473 = vadd.f32 0.0, %v9472
      %v9474 = vpop.f32.mrf.mxu0
      %9475 = vmatprep.mubr.f32.mxu0 0.0
      %9476 = vmatmul.mubr.f32.gmra.mxu0 %v9238
      %v9477 = vpop.f32.mrf.mxu0
      %v9478 = vadd.f32 0.0, %v9477
      %v9479 = vpop.f32.mrf.mxu0
      %9480 = vmatprep.mubr.f32.mxu0 0.0
      %9481 = vmatmul.mubr.f32.gmra.mxu0 %v9241
      %v9482 = vpop.f32.mrf.mxu0
      %v9483 = vadd.f32 0.0, %v9482
      %v9484 = vpop.f32.mrf.mxu0
      %9485 = vmatprep.mubr.f32.mxu0 0.0
      %9486 = vmatmul.mubr.f32.gmra.mxu0 %v9244
      %v9487 = vpop.f32.mrf.mxu0
      %v9488 = vadd.f32 0.0, %v9487
      %v9489 = vpop.f32.mrf.mxu0
      %9490 = vmatprep.mubr.f32.mxu0 0.0
      %9491 = vmatmul.mubr.f32.gmra.mxu0 %v9247
      %v9492 = vpop.f32.mrf.mxu0
      %v9493 = vadd.f32 0.0, %v9492
      %v9494 = vpop.f32.mrf.mxu0
      %9495 = vmatprep.mubr.f32.mxu0 0.0
      %9496 = vmatmul.mubr.f32.gmra.mxu0 %v9250
      %v9497 = vpop.f32.mrf.mxu0
      %v9498 = vadd.f32 0.0, %v9497
      %v9499 = vpop.f32.mrf.mxu0
      %9500 = vmatprep.mubr.f32.mxu0 0.0
      %9501 = vmatmul.mubr.f32.gmra.mxu0 %v9253
      %v9502 = vpop.f32.mrf.mxu0
      %v9503 = vadd.f32 0.0, %v9502
      %v9504 = vpop.f32.mrf.mxu0
      %9505 = vmatprep.mubr.f32.mxu0 0.0
      %9506 = vmatmul.mubr.f32.gmra.mxu0 %v9256
      %v9507 = vpop.f32.mrf.mxu0
      %v9508 = vadd.f32 0.0, %v9507
      %v9509 = vpop.f32.mrf.mxu0
      %9510 = vmatprep.mubr.f32.mxu0 0.0
      %9511 = vmatmul.mubr.f32.gmra.mxu0 %v9259
      %v9512 = vpop.f32.mrf.mxu0
      %v9513 = vadd.f32 0.0, %v9512
      %v9514 = vpop.f32.mrf.mxu0
      %9515 = vmatprep.mubr.f32.mxu0 0.0
      %9516 = vmatmul.mubr.f32.gmra.mxu0 %v9262
      %v9517 = vpop.f32.mrf.mxu0
      %v9518 = vadd.f32 0.0, %v9517
      %v9519 = vpop.f32.mrf.mxu0
      %9520 = vmatprep.mubr.f32.mxu0 0.0
      %9521 = vmatmul.mubr.f32.gmra.mxu0 %v9265
      %v9522 = vpop.f32.mrf.mxu0
      %v9523 = vadd.f32 0.0, %v9522
      %v9524 = vpop.f32.mrf.mxu0
      %9525 = vmatprep.mubr.f32.mxu0 0.0
      %9526 = vmatmul.mubr.f32.gmra.mxu0 %v9268
      %v9527 = vpop.f32.mrf.mxu0
      %v9528 = vadd.f32 0.0, %v9527
      %v9529 = vpop.f32.mrf.mxu0
      %9530 = vmatprep.mubr.f32.mxu0 0.0
      %9531 = vmatmul.mubr.f32.gmra.mxu0 %v9271
      %v9532 = vpop.f32.mrf.mxu0
      %v9533 = vadd.f32 0.0, %v9532
      %v9534 = vpop.f32.mrf.mxu0
      %9535 = vmatprep.mubr.f32.mxu0 0.0
      %9536 = vmatmul.mubr.f32.gmra.mxu0 %v9274
      %v9537 = vpop.f32.mrf.mxu0
      %v9538 = vadd.f32 0.0, %v9537
      %v9539 = vpop.f32.mrf.mxu0
      %9540 = vmatprep.mubr.f32.mxu0 0.0
      %9541 = vmatmul.mubr.f32.gmra.mxu0 %v9277
      %v9542 = vpop.f32.mrf.mxu0
      %v9543 = vadd.f32 0.0, %v9542
      %v9544 = vpop.f32.mrf.mxu0
      %9545 = vmatprep.mubr.f32.mxu0 0.0
      %9546 = vmatmul.mubr.f32.gmra.mxu0 %v9280
      %v9547 = vpop.f32.mrf.mxu0
      %v9548 = vadd.f32 0.0, %v9547
      %v9549 = vpop.f32.mrf.mxu0
      %9550 = vmatprep.mubr.f32.mxu0 0.0
      %9551 = vmatmul.mubr.f32.gmra.mxu0 %v9283
      %v9552 = vpop.f32.mrf.mxu0
      %v9553 = vadd.f32 0.0, %v9552
      %v9554 = vpop.f32.mrf.mxu0
      %9555 = vmatprep.mubr.f32.mxu0 0.0
      %9556 = vmatmul.mubr.f32.gmra.mxu0 %v9286
      %v9557 = vpop.f32.mrf.mxu0
      %v9558 = vadd.f32 0.0, %v9557
      %v9559 = vpop.f32.mrf.mxu0
      %9560 = vdwg.mxu0
      %v9561 = vadd.f32 %v9081, %v9358
      %v9562 = vadd.f32 %v9082, %v9363
      %v9563 = vadd.f32 %v9083, %v9368
      %v9564 = vadd.f32 %v9084, %v9373
      %v9565 = vadd.f32 %v9085, %v9378
      %v9566 = vadd.f32 %v9086, %v9383
      %v9567 = vadd.f32 %v9087, %v9388
      %v9568 = vadd.f32 %v9088, %v9393
      %v9569 = vadd.f32 %v9089, %v9398
      %v9570 = vadd.f32 %v9090, %v9403
      %v9571 = vadd.f32 %v9091, %v9408
      %v9572 = vadd.f32 %v9092, %v9413
      %v9573 = vadd.f32 %v9093, %v9418
      %v9574 = vadd.f32 %v9094, %v9423
      %v9575 = vadd.f32 %v9095, %v9428
      %v9576 = vadd.f32 %v9096, %v9433
      %v9577 = vadd.f32 %v9097, %v9438
      %v9578 = vadd.f32 %v9098, %v9443
      %v9579 = vadd.f32 %v9099, %v9448
      %v9580 = vadd.f32 %v9100, %v9453
      %v9581 = vadd.f32 %v9101, %v9458
      %v9582 = vadd.f32 %v9102, %v9463
      %v9583 = vadd.f32 %v9103, %v9468
      %v9584 = vadd.f32 %v9104, %v9473
      %v9585 = vadd.f32 %v9105, %v9478
      %v9586 = vadd.f32 %v9106, %v9483
      %v9587 = vadd.f32 %v9107, %v9488
      %v9588 = vadd.f32 %v9108, %v9493
      %v9589 = vadd.f32 %v9109, %v9498
      %v9590 = vadd.f32 %v9110, %v9503
      %v9591 = vadd.f32 %v9111, %v9508
      %v9592 = vadd.f32 %v9112, %v9513
      %v9593 = vadd.f32 %v9113, %v9518
      %v9594 = vadd.f32 %v9114, %v9523
      %v9595 = vadd.f32 %v9115, %v9528
      %v9596 = vadd.f32 %v9116, %v9533
      %v9597 = vadd.f32 %v9117, %v9538
      %v9598 = vadd.f32 %v9118, %v9543
      %v9599 = vadd.f32 %v9119, %v9548
      %v9600 = vadd.f32 %v9120, %v9553
      %v9601 = vadd.f32 %v9121, %v9558
      %v9602 = vadd.f32 %v306, %v9561
      %v9603 = vadd.f32 %v307, %v9562
      %v9604 = vadd.f32 %v308, %v9563
      %v9605 = vadd.f32 %v309, %v9564
      %v9606 = vadd.f32 %v310, %v9565
      %v9607 = vadd.f32 %v311, %v9566
      %v9608 = vadd.f32 %v312, %v9567
      %v9609 = vadd.f32 %v313, %v9568
      %v9610 = vadd.f32 %v314, %v9569
      %v9611 = vadd.f32 %v315, %v9570
      %v9612 = vadd.f32 %v316, %v9571
      %v9613 = vadd.f32 %v317, %v9572
      %v9614 = vadd.f32 %v318, %v9573
      %v9615 = vadd.f32 %v319, %v9574
      %v9616 = vadd.f32 %v320, %v9575
      %v9617 = vadd.f32 %v321, %v9576
      %v9618 = vadd.f32 %v322, %v9577
      %v9619 = vadd.f32 %v323, %v9578
      %v9620 = vadd.f32 %v324, %v9579
      %v9621 = vadd.f32 %v325, %v9580
      %v9622 = vadd.f32 %v326, %v9581
      %v9623 = vadd.f32 %v327, %v9582
      %v9624 = vadd.f32 %v328, %v9583
      %v9625 = vadd.f32 %v329, %v9584
      %v9626 = vadd.f32 %v330, %v9585
      %v9627 = vadd.f32 %v331, %v9586
      %v9628 = vadd.f32 %v332, %v9587
      %v9629 = vadd.f32 %v333, %v9588
      %v9630 = vadd.f32 %v334, %v9589
      %v9631 = vadd.f32 %v335, %v9590
      %v9632 = vadd.f32 %v336, %v9591
      %v9633 = vadd.f32 %v337, %v9592
      %v9634 = vadd.f32 %v338, %v9593
      %v9635 = vadd.f32 %v339, %v9594
      %v9636 = vadd.f32 %v340, %v9595
      %v9637 = vadd.f32 %v341, %v9596
      %v9638 = vadd.f32 %v342, %v9597
      %v9639 = vadd.f32 %v343, %v9598
      %v9640 = vadd.f32 %v344, %v9599
      %v9641 = vadd.f32 %v345, %v9600
      %v9642 = vadd.f32 %v346, %v9601
      %9643 = vst.msk [vmem:[%s305] sm:$0xff] %vm771, %v9602
      %9644 = vst.msk [vmem:[%s305 + $0x8] sm:$0xff] %vm771, %v9603
      %9645 = vst.msk [vmem:[%s305 + $0x10] sm:$0xff] %vm771, %v9604
      %9646 = vst.msk [vmem:[%s305 + $0x18] sm:$0xff] %vm771, %v9605
      %9647 = vst.msk [vmem:[%s305 + $0x20] sm:$0xff] %vm771, %v9606
      %9648 = vst.msk [vmem:[%s305 + $0x28] sm:$0xff] %vm771, %v9607
      %9649 = vst.msk [vmem:[%s305 + $0x30] sm:$0xff] %vm771, %v9608
      %9650 = vst.msk [vmem:[%s305 + $0x38] sm:$0xff] %vm771, %v9609
      %9651 = vst.msk [vmem:[%s305 + $0x40] sm:$0xff] %vm771, %v9610
      %9652 = vst.msk [vmem:[%s305 + $0x48] sm:$0xff] %vm771, %v9611
      %9653 = vst.msk [vmem:[%s305 + $0x50] sm:$0xff] %vm771, %v9612
      %9654 = vst.msk [vmem:[%s305 + $0x58] sm:$0xff] %vm771, %v9613
      %9655 = vst.msk [vmem:[%s305 + $0x60] sm:$0xff] %vm771, %v9614
      %9656 = vst.msk [vmem:[%s305 + $0x68] sm:$0xff] %vm771, %v9615
      %9657 = vst.msk [vmem:[%s305 + $0x70] sm:$0xff] %vm771, %v9616
      %9658 = vst.msk [vmem:[%s305 + $0x78] sm:$0xff] %vm771, %v9617
      %9659 = vst.msk [vmem:[%s305 + $0x80] sm:$0xff] %vm771, %v9618
      %9660 = vst.msk [vmem:[%s305 + $0x88] sm:$0xff] %vm771, %v9619
      %9661 = vst.msk [vmem:[%s305 + $0x90] sm:$0xff] %vm771, %v9620
      %9662 = vst.msk [vmem:[%s305 + $0x98] sm:$0xff] %vm771, %v9621
      %9663 = vst.msk [vmem:[%s305 + $0xa0] sm:$0xff] %vm771, %v9622
      %9664 = vst.msk [vmem:[%s305 + $0xa8] sm:$0xff] %vm771, %v9623
      %9665 = vst.msk [vmem:[%s305 + $0xb0] sm:$0xff] %vm771, %v9624
      %9666 = vst.msk [vmem:[%s305 + $0xb8] sm:$0xff] %vm771, %v9625
      %9667 = vst.msk [vmem:[%s305 + $0xc0] sm:$0xff] %vm771, %v9626
      %9668 = vst.msk [vmem:[%s305 + $0xc8] sm:$0xff] %vm771, %v9627
      %9669 = vst.msk [vmem:[%s305 + $0xd0] sm:$0xff] %vm771, %v9628
      %9670 = vst.msk [vmem:[%s305 + $0xd8] sm:$0xff] %vm771, %v9629
      %9671 = vst.msk [vmem:[%s305 + $0xe0] sm:$0xff] %vm771, %v9630
      %9672 = vst.msk [vmem:[%s305 + $0xe8] sm:$0xff] %vm771, %v9631
      %9673 = vst.msk [vmem:[%s305 + $0xf0] sm:$0xff] %vm771, %v9632
      %9674 = vst.msk [vmem:[%s305 + $0xf8] sm:$0xff] %vm771, %v9633
      %9675 = vst.msk [vmem:[%s305 + $0x100] sm:$0xff] %vm771, %v9634
      %9676 = vst.msk [vmem:[%s305 + $0x108] sm:$0xff] %vm771, %v9635
      %9677 = vst.msk [vmem:[%s305 + $0x110] sm:$0xff] %vm771, %v9636
      %9678 = vst.msk [vmem:[%s305 + $0x118] sm:$0xff] %vm771, %v9637
      %9679 = vst.msk [vmem:[%s305 + $0x120] sm:$0xff] %vm771, %v9638
      %9680 = vst.msk [vmem:[%s305 + $0x128] sm:$0xff] %vm771, %v9639
      %9681 = vst.msk [vmem:[%s305 + $0x130] sm:$0xff] %vm771, %v9640
      %9682 = vst.msk [vmem:[%s305 + $0x138] sm:$0xff] %vm771, %v9641
      %9683 = vst.msk [vmem:[%s305 + $0x140] sm:$0xf] %vm818, %v9642
      %p9684 = scmp.lt.s32.totalorder %s19, 1
      %s9685 = scalar_select %p9684, %s19, 1
      %s9686 = smul.addr %s9685, 41
      %s9687 = smul.addr %s9686, 8
      %s9688 = scalar_lea.vmem %s8, %s9687
      // Predicated region
      $region53: #{basic_block_forward.1} parent=51 // pred_check
        %p9689 = pneg %p210
      $region54: #{basic_block_forward.1} parent=51 // pred_check_branch
        %9691 = sbr.rel (%p9689) target = $region56
      $region55: #{basic_block_forward.1} parent=51 // pred_region
        _
      $region56: #{basic_block_forward.1} parent=51 // pred_fallthru
        _
    $region52: #{basic_block_forward.1} parent=5 // pred_fallthru
      _
    %p9692 = scmp.le.s32.totalorder 2, %s14
    // Predicated region
    $region57: #{basic_block_forward.1} parent=5 // pred_check
      %p9693 = pneg %p9692
    $region58: #{basic_block_forward.1} parent=5 // pred_check_branch
      %9695 = sbr.rel (%p9693) target = $region60
    $region59: #{basic_block_forward.1} parent=5 // pred_region
      %s9696 = ssub.s32 %s14, 2
      // Predicated region
      $region61: #{basic_block_forward.1} parent=59 // pred_check
        %p9697 = pneg %p216
      $region62: #{basic_block_forward.1} parent=59 // pred_check_branch
        %9699 = sbr.rel (%p9697) target = $region64
      $region63: #{basic_block_forward.1} parent=59 // pred_region
        %p9700 = scmp.lt.s32.totalorder %s20, 1
        %s9701 = scalar_select %p9700, %s20, 1
        %s9702 = smul.addr %s9701, 41
        %s9703 = smul.addr %s9702, 8
        %s9704 = scalar_lea.vmem %s8, %s9703
      $region64: #{basic_block_forward.1} parent=59 // pred_fallthru
        _
    $region60: #{basic_block_forward.1} parent=5 // pred_fallthru
      _
  $region6: #{basic_block_forward.1} parent=0 // loop_footer
    %s18 = sadd.s32 1, %s14
  $region7: #{basic_block_forward.1} parent=0 // loop_footer_branch
    %13 = sbr.rel target = $region3
  $region8: #{basic_block_forward.1} parent=0 // loop_exit
    _

</llo_original>
